<compile_context>
chip_gen: v6e
topology: v6e:2x2x1
jax: 0.10.0
libtpu: 0.0.40
codegen_flags: <defaults>
</compile_context>

<pallas_src>
from functools import partial

import jax
import jax.numpy as jnp
from jax.experimental import pallas as pl
from jax.experimental.pallas import tpu as pltpu

NUM_KPS = 25 + 42        # num_body_kps + num_hand_kps = 67
KP_PAD = 128             # keypoint channels padded to one lane-dense register


def _round_up(x, m):
    return (x + m - 1) // m * m


# ---------------- kernel 1: row-tiled matmul + bias + ReLU (bf16 MXU) ---------

def _matmul_bias_relu_kernel(x_ref, w_ref, b_ref, o_ref):
    acc = jnp.dot(x_ref[...], w_ref[...], preferred_element_type=jnp.float32)
    o_ref[...] = jnp.maximum(acc + b_ref[...], 0.0).astype(o_ref.dtype)


def matmul_bias_relu(x, w, b, *, out_dtype=jnp.float32, max_tm=512):
    """relu(x @ w + b): x (M, K) f32, w (K, N), b (N,) -> (M, N) out_dtype.
    MXU inputs are cast to bf16 (f32 accumulation).  N must be lane-dense."""
    M, K = x.shape
    N = w.shape[1]
    assert N % 128 == 0, "N must be lane-dense (multiple of 128)"
    tm = min(max_tm, _round_up(M, 16))      # 16-row granule is safe for f32/bf16
    Mp = _round_up(M, tm)
    xp = jnp.pad(x, ((0, Mp - M), (0, 0))).astype(jnp.bfloat16)
    wp = w.astype(jnp.bfloat16)
    bp = b.astype(jnp.float32).reshape(1, N)
    out = pl.pallas_call(
        _matmul_bias_relu_kernel,
        out_shape=jax.ShapeDtypeStruct((Mp, N), out_dtype),
        grid_spec=pltpu.PrefetchScalarGridSpec(
            num_scalar_prefetch=0,
            grid=(Mp // tm,),
            in_specs=[
                pl.BlockSpec((tm, K), lambda i: (i, 0)),
                pl.BlockSpec((K, N), lambda i: (0, 0)),
                pl.BlockSpec((1, N), lambda i: (0, 0)),
            ],
            out_specs=pl.BlockSpec((tm, N), lambda i: (i, 0)),
        ),
        compiler_params=pltpu.CompilerParams(
            dimension_semantics=("parallel",)),
    )(xp, wp, bp)
    return out[:M]


# ------ kernel 2: fused 3x3 conv (pad=1) + bias + ReLU + masked MSE loss ------

def _conv3x3_relu_mse_kernel(x_ref, w_ref, b_ref, lab_ref, cmask_ref, kmask_ref,
                             o_ref, *, wp, n_rows, inv_hw):
    # x_ref:     (Hp*Wp, C)   bf16 zero-padded NHWC activations, rows flattened
    # w_ref:     (9, C, KP)   bf16 per-tap weight matrices (kh*3+kw, Cin, Cout)
    # b_ref:     (1, KP)      f32  bias (padded keypoint channels are zero)
    # lab_ref:   (Ho*Wp, KP)  f32  labels on the same padded-column row grid
    # cmask_ref: (Ho*Wp, 1)   f32  1.0 on real output columns, 0.0 on pad columns
    # kmask_ref: (1, 1, KP)   f32  per-keypoint label mask for this batch element
    # o_ref:     (1, 1, KP)   f32  masked per-keypoint spatial-mean MSE
    acc = jnp.zeros((n_rows, KP_PAD), jnp.float32)
    for dh in range(3):
        for dw in range(3):
            # conv tap (dh, dw) == flat-row offset dh*Wp + dw on the padded grid
            xs = x_ref[pl.ds(dh * wp + dw, n_rows), :]
            acc = acc + jnp.dot(xs, w_ref[dh * 3 + dw],
                                preferred_element_type=jnp.float32)
    pred = jnp.maximum(acc + b_ref[...], 0.0)                 # fused ReLU
    d = (pred - lab_ref[...]) * cmask_ref[...]                # drop pad columns
    per_kp = jnp.sum(d * d, axis=0, keepdims=True) * inv_hw   # spatial mean
    o_ref[...] = (per_kp * kmask_ref[0]).reshape(o_ref.shape)


def conv3x3_relu_mse(h_nhwc, w_conv, b_conv, label_map, label_mask):
    """h_nhwc: (B, Ho, Wo, C) bf16/f32.  w_conv: (NUM_KPS, C, 3, 3) (PyTorch
    Conv2d layout).  label_map: (B, NUM_KPS, Ho, Wo).  label_mask: (B, NUM_KPS).
    Returns the scalar pose loss (ReLU'ed conv output vs. label, masked MSE)."""
    B, Ho, Wo, C = h_nhwc.shape
    Wp = _round_up(Wo + 2, 8)          # padded row width: 1 left + >=1 right pad
    Hp = Ho + 3                        # 1 top pad + 2 bottom pad (conv + slack)
    n_rows = Ho * Wp
    assert Hp * Wp >= n_rows + 2 * Wp + 2   # last tap's slice stays in bounds

    x_pad = jnp.pad(h_nhwc, ((0, 0), (1, 2), (1, Wp - Wo - 1), (0, 0)))
    x_flat = x_pad.reshape(B * Hp * Wp, C).astype(jnp.bfloat16)

    lab = jnp.transpose(label_map, (0, 2, 3, 1))                   # NHWC
    lab = jnp.pad(lab, ((0, 0), (0, 0), (0, Wp - Wo), (0, KP_PAD - NUM_KPS)))
    lab_flat = lab.reshape(B * n_rows, KP_PAD).astype(jnp.float32)

    cmask = jnp.tile((jnp.arange(Wp) < Wo).astype(jnp.float32), Ho)
    cmask = cmask.reshape(n_rows, 1)

    kmask = jnp.pad(label_mask.astype(jnp.float32),
                    ((0, 0), (0, KP_PAD - NUM_KPS))).reshape(B, 1, KP_PAD)

    w_taps = jnp.transpose(w_conv, (2, 3, 1, 0)).reshape(9, C, NUM_KPS)
    w_taps = jnp.pad(w_taps, ((0, 0), (0, 0), (0, KP_PAD - NUM_KPS)))
    w_taps = w_taps.astype(jnp.bfloat16)
    bias = jnp.pad(b_conv, (0, KP_PAD - NUM_KPS)).astype(jnp.float32)
    bias = bias.reshape(1, KP_PAD)

    per_batch = pl.pallas_call(
        partial(_conv3x3_relu_mse_kernel, wp=Wp, n_rows=n_rows,
                inv_hw=1.0 / (Ho * Wo)),
        out_shape=jax.ShapeDtypeStruct((B, 1, KP_PAD), jnp.float32),
        grid_spec=pltpu.PrefetchScalarGridSpec(
            num_scalar_prefetch=0,
            grid=(B,),
            in_specs=[
                pl.BlockSpec((Hp * Wp, C), lambda b: (b, 0)),
                pl.BlockSpec((9, C, KP_PAD), lambda b: (0, 0, 0)),
                pl.BlockSpec((1, KP_PAD), lambda b: (0, 0)),
                pl.BlockSpec((n_rows, KP_PAD), lambda b: (b, 0)),
                pl.BlockSpec((n_rows, 1), lambda b: (0, 0)),
                pl.BlockSpec((1, 1, KP_PAD), lambda b: (b, 0, 0)),
            ],
            out_specs=pl.BlockSpec((1, 1, KP_PAD), lambda b: (b, 0, 0)),
        ),
        compiler_params=pltpu.CompilerParams(
            dimension_semantics=("parallel",)),
    )(x_flat, w_taps, bias, lab_flat, cmask, kmask)
    # padded keypoint lanes carry zeros (zero weights/bias/mask), so sum over all
    # 128 lanes == sum over the 67 real keypoints; then mean over batch.
    return jnp.mean(jnp.sum(per_batch[:, 0, :], axis=-1))


# --------- ConvTranspose2d(k=3, s=2, p=0) + ReLU via subpixel decomposition ---

def conv_transpose3x3_s2_relu(x_nchw, w_t, b_t):
    """x: (B, Cin, H, W); w_t: (Cin, Cout, 3, 3) (PyTorch ConvTranspose2d layout).
    Returns NHWC activations (B, 2H+1, 2W+1, Cout) in bf16.  Only the non-zero
    taps of the zero-dilated input are fed to the MXU (one matmul, 4 parities)."""
    B, Cin, H, W = x_nchw.shape
    Cout = w_t.shape[1]
    Ho, Wo = 2 * H + 1, 2 * W + 1

    x = jnp.transpose(x_nchw, (0, 2, 3, 1))                    # NHWC (tiny)
    x_tl = jnp.pad(x, ((0, 0), (1, 1), (1, 1), (0, 0)))
    # 2x2 input neighbourhoods = all taps that can hit a given output pixel.
    patches = jnp.concatenate(
        [x_tl[:, i:i + H + 1, j:j + W + 1, :] for i in (0, 1) for j in (0, 1)],
        axis=-1)                                               # (B, H+1, W+1, 4*Cin)
    p_flat = patches.reshape(B * (H + 1) * (W + 1), 4 * Cin)

    def tap(kh, kw):
        return w_t[:, :, kh, kw]                               # (Cin, Cout)

    z = jnp.zeros((Cin, Cout), w_t.dtype)
    # column blocks = output parity [even/even | even/odd | odd/even | odd/odd];
    # row blocks   = patch slots [x(m-1,n-1); x(m-1,n); x(m,n-1); x(m,n)]
    w_cat = jnp.concatenate([
        jnp.concatenate([tap(2, 2), z,         z,         z        ], axis=1),
        jnp.concatenate([tap(2, 0), tap(2, 1), z,         z        ], axis=1),
        jnp.concatenate([tap(0, 2), z,         tap(1, 2), z        ], axis=1),
        jnp.concatenate([tap(0, 0), tap(0, 1), tap(1, 0), tap(1, 1)], axis=1),
    ], axis=0)                                                 # (4*Cin, 4*Cout)
    b_cat = jnp.tile(b_t, 4)

    out = matmul_bias_relu(p_flat, w_cat, b_cat,
                           out_dtype=jnp.bfloat16)             # (M, 4*Cout)
    out = out.reshape(B, H + 1, W + 1, 2, 2, Cout)
    out = jnp.transpose(out, (0, 1, 3, 2, 4, 5))               # interleave parities
    out = out.reshape(B, 2 * H + 2, 2 * W + 2, Cout)
    return out[:, :Ho, :Wo, :]                                 # drop garbage row/col


# --------------------------- PoseEstimator forward ----------------------------

def init_params(key, in_channel):
    k1, k2, k3, k4 = jax.random.split(key, 4)
    return dict(
        wt=jax.random.normal(k1, (in_channel, 128, 3, 3), jnp.float32) * 0.05,
        bt=jax.random.normal(k2, (128,), jnp.float32) * 0.05,
        wc=jax.random.normal(k3, (NUM_KPS, 128, 3, 3), jnp.float32) * 0.05,
        bc=jax.random.normal(k4, (NUM_KPS,), jnp.float32) * 0.05,
    )


@partial(jax.jit, static_argnames=("sample_rate",))
def pose_estimator_forward(params, feat_map, label_map, label_mask, *, sample_rate):
    x = feat_map[::sample_rate]                                # batch subsample
    h = conv_transpose3x3_s2_relu(x, params["wt"], params["bt"])
    return conv3x3_relu_mse(h, params["wc"], params["bc"], label_map, label_mask)


def _reference_loss(params, feat_map, label_map, label_mask, sample_rate):
    """Pure-XLA reference mirroring the PyTorch module (sanity check only)."""
    x = feat_map[::sample_rate]
    w1 = jnp.flip(params["wt"], axis=(2, 3)).transpose(1, 0, 2, 3)  # (Cout,Cin,3,3)
    h = jax.lax.conv_general_dilated(
        x, w1, window_strides=(1, 1), padding=((2, 2), (2, 2)),
        lhs_dilation=(2, 2), dimension_numbers=("NCHW", "OIHW", "NCHW"))
    h = jnp.maximum(h + params["bt"][None, :, None, None], 0.0)
    p = jax.lax.conv_general_dilated(
        h, params["wc"], window_strides=(1, 1), padding=((1, 1), (1, 1)),
        dimension_numbers=("NCHW", "OIHW", "NCHW"))
    p = jnp.maximum(p + params["bc"][None, :, None, None], 0.0)
    d = (p - label_map) ** 2 * label_mask[:, :, None, None]
    return d.reshape(d.shape[0], d.shape[1], -1).mean(-1).sum(-1).mean()


if __name__ == "__main__":
    key = jax.random.PRNGKey(0)
    k_feat, k_label, k_mask, k_param = jax.random.split(key, 4)

    N, Cin, H, W = 4, 4, 8, 8
    sample_rate = 2
    B = (N + sample_rate - 1) // sample_rate                   # 2
    Ho = Wo = 2 * H + 1                                        # 17

    feat_map = jax.random.normal(k_feat, (N, Cin, H, W), jnp.float32)
    label_map = jax.random.uniform(k_label, (B, NUM_KPS, Ho, Wo), jnp.float32)
    label_mask = (jax.random.uniform(k_mask, (B, NUM_KPS)) > 0.3).astype(jnp.float32)
    params = init_params(k_param, Cin)

    loss = pose_estimator_forward(params, feat_map, label_map, label_mask,
                                  sample_rate=sample_rate)
    loss = jax.block_until_ready(loss)
    assert loss.shape == () and bool(jnp.isfinite(loss))

    ref = _reference_loss(params, feat_map, label_map, label_mask, sample_rate)
    ref = float(jax.block_until_ready(ref))
    assert abs(float(loss) - ref) <= 0.05 * abs(ref) + 1e-3, (float(loss), ref)
    print("KERNEL_OK")
</pallas_src>

<mosaic_0001>
module attributes {stable_mosaic.version = 11 : i64} {
  func.func @_matmul_bias_relu_kernel(%arg0: i32, %arg1: memref<176x16xbf16, #tpu.memory_space<vmem>>, %arg2: memref<16x512xbf16, #tpu.memory_space<vmem>>, %arg3: memref<1x512xf32, #tpu.memory_space<vmem>>, %arg4: memref<176x512xbf16, #tpu.memory_space<vmem>>) attributes {dimension_semantics = [#tpu.dimension_semantics<parallel>], iteration_bounds = array<i64: 1>, scalar_prefetch = 0 : i64, scratch_operands = 0 : i64, tpu.core_type = #tpu.core_type<tc>, window_params = [{transform_indices = @transform_0, window_bounds = array<i64: 176, 16>}, {pipeline_mode = #tpu.pipeline_mode<synchronous>, transform_indices = @transform_1, window_bounds = array<i64: 16, 512>}, {pipeline_mode = #tpu.pipeline_mode<synchronous>, transform_indices = @transform_2, window_bounds = array<i64: 1, 512>}, {transform_indices = @transform_3, window_bounds = array<i64: 176, 512>}]} {
    %c0 = arith.constant 0 : index
    %c0_0 = arith.constant 0 : index
    %0 = vector.load %arg1[%c0, %c0_0] : memref<176x16xbf16, #tpu.memory_space<vmem>>, vector<176x16xbf16>
    %c0_1 = arith.constant 0 : index
    %c0_2 = arith.constant 0 : index
    %1 = vector.load %arg2[%c0_1, %c0_2] : memref<16x512xbf16, #tpu.memory_space<vmem>>, vector<16x512xbf16>
    %cst = arith.constant dense<0.000000e+00> : vector<176x512xf32>
    %2 = tpu.matmul %0, %1, %cst {dimension_numbers = #tpu.dot_dimension_numbers<[1], [0], [0], [1], [0, 0, 1, 1], [], []>} : vector<176x16xbf16>, vector<16x512xbf16>, vector<176x512xf32> -> vector<176x512xf32>
    %c0_3 = arith.constant 0 : index
    %c0_4 = arith.constant 0 : index
    %3 = vector.load %arg3[%c0_3, %c0_4] : memref<1x512xf32, #tpu.memory_space<vmem>>, vector<1x512xf32>
    %4 = vector.broadcast %3 : vector<1x512xf32> to vector<176x512xf32>
    %5 = arith.addf %2, %4 : vector<176x512xf32>
    %cst_5 = arith.constant 0.000000e+00 : f32
    %6 = vector.broadcast %cst_5 : f32 to vector<176x512xf32>
    %7 = arith.maximumf %5, %6 : vector<176x512xf32>
    %8 = arith.truncf %7 : vector<176x512xf32> to vector<176x512xbf16>
    %c0_6 = arith.constant 0 : index
    %c0_7 = arith.constant 0 : index
    %9 = vector.load %arg4[%c0_6, %c0_7] : memref<176x512xbf16, #tpu.memory_space<vmem>>, vector<176x512xbf16>
    tpu.vector_store %arg4[%c0_6, %c0_7], %8 {strides = array<i32>} : memref<176x512xbf16, #tpu.memory_space<vmem>>, vector<176x512xbf16>,
    return
  }
  func.func @transform_0(%arg0: i32) -> (i32, i32) {
    %c0_i32 = arith.constant 0 : i32
    %c0_i32_0 = arith.constant 0 : i32
    return %arg0, %c0_i32 : i32, i32
  }
  func.func @transform_1(%arg0: i32) -> (i32, i32) {
    %c0_i32 = arith.constant 0 : i32
    %c0_i32_0 = arith.constant 0 : i32
    %c0_i32_1 = arith.constant 0 : i32
    return %c0_i32, %c0_i32_0 : i32, i32
  }
  func.func @transform_2(%arg0: i32) -> (i32, i32) {
    %c0_i32 = arith.constant 0 : i32
    %c0_i32_0 = arith.constant 0 : i32
    %c0_i32_1 = arith.constant 0 : i32
    return %c0_i32, %c0_i32_0 : i32, i32
  }
  func.func @transform_3(%arg0: i32) -> (i32, i32) {
    %c0_i32 = arith.constant 0 : i32
    %c0_i32_0 = arith.constant 0 : i32
    return %arg0, %c0_i32 : i32, i32
  }
}

module attributes {stable_mosaic.version = 11 : i64} {
  func.func @_conv3x3_relu_mse_kernel(%arg0: i32, %arg1: memref<480x128xbf16, #tpu.memory_space<vmem>>, %arg2: memref<9x128x128xbf16, #tpu.memory_space<vmem>>, %arg3: memref<1x128xf32, #tpu.memory_space<vmem>>, %arg4: memref<408x128xf32, #tpu.memory_space<vmem>>, %arg5: memref<408x1xf32, #tpu.memory_space<vmem>>, %arg6: memref<1x1x128xf32, #tpu.memory_space<vmem>>, %arg7: memref<1x1x128xf32, #tpu.memory_space<vmem>>) attributes {dimension_semantics = [#tpu.dimension_semantics<parallel>], iteration_bounds = array<i64: 2>, scalar_prefetch = 0 : i64, scratch_operands = 0 : i64, tpu.core_type = #tpu.core_type<tc>, window_params = [{transform_indices = @transform_0, window_bounds = array<i64: 480, 128>}, {pipeline_mode = #tpu.pipeline_mode<synchronous>, transform_indices = @transform_1, window_bounds = array<i64: 9, 128, 128>}, {pipeline_mode = #tpu.pipeline_mode<synchronous>, transform_indices = @transform_2, window_bounds = array<i64: 1, 128>}, {transform_indices = @transform_3, window_bounds = array<i64: 408, 128>}, {pipeline_mode = #tpu.pipeline_mode<synchronous>, transform_indices = @transform_4, window_bounds = array<i64: 408, 1>}, {transform_indices = @transform_5, window_bounds = array<i64: 1, 1, 128>}, {transform_indices = @transform_6, window_bounds = array<i64: 1, 1, 128>}]} {
    %cst = arith.constant 0.000000e+00 : f32
    %0 = vector.broadcast %cst : f32 to vector<408x128xf32>
    %c0 = arith.constant 0 : index
    %c0_0 = arith.constant 0 : index
    %1 = vector.load %arg1[%c0, %c0_0] : memref<480x128xbf16, #tpu.memory_space<vmem>>, vector<408x128xbf16>
    %c0_1 = arith.constant 0 : index
    %c0_2 = arith.constant 0 : index
    %c0_3 = arith.constant 0 : index
    %2 = vector.load %arg2[%c0_1, %c0_2, %c0_3] : memref<9x128x128xbf16, #tpu.memory_space<vmem>>, vector<1x128x128xbf16>
    %3 = vector.shape_cast %2 : vector<1x128x128xbf16> to vector<128x128xbf16>
    %cst_4 = arith.constant dense<0.000000e+00> : vector<408x128xf32>
    %4 = tpu.matmul %1, %3, %cst_4 {dimension_numbers = #tpu.dot_dimension_numbers<[1], [0], [0], [1], [0, 0, 1, 1], [], []>} : vector<408x128xbf16>, vector<128x128xbf16>, vector<408x128xf32> -> vector<408x128xf32>
    %5 = arith.addf %0, %4 : vector<408x128xf32>
    %c1 = arith.constant 1 : index
    %c0_5 = arith.constant 0 : index
    %6 = vector.load %arg1[%c1, %c0_5] : memref<480x128xbf16, #tpu.memory_space<vmem>>, vector<408x128xbf16>
    %c1_6 = arith.constant 1 : index
    %c0_7 = arith.constant 0 : index
    %c0_8 = arith.constant 0 : index
    %7 = vector.load %arg2[%c1_6, %c0_7, %c0_8] : memref<9x128x128xbf16, #tpu.memory_space<vmem>>, vector<1x128x128xbf16>
    %8 = vector.shape_cast %7 : vector<1x128x128xbf16> to vector<128x128xbf16>
    %cst_9 = arith.constant dense<0.000000e+00> : vector<408x128xf32>
    %9 = tpu.matmul %6, %8, %cst_9 {dimension_numbers = #tpu.dot_dimension_numbers<[1], [0], [0], [1], [0, 0, 1, 1], [], []>} : vector<408x128xbf16>, vector<128x128xbf16>, vector<408x128xf32> -> vector<408x128xf32>
    %10 = arith.addf %5, %9 : vector<408x128xf32>
    %c2 = arith.constant 2 : index
    %c0_10 = arith.constant 0 : index
    %11 = vector.load %arg1[%c2, %c0_10] : memref<480x128xbf16, #tpu.memory_space<vmem>>, vector<408x128xbf16>
    %c2_11 = arith.constant 2 : index
    %c0_12 = arith.constant 0 : index
    %c0_13 = arith.constant 0 : index
    %12 = vector.load %arg2[%c2_11, %c0_12, %c0_13] : memref<9x128x128xbf16, #tpu.memory_space<vmem>>, vector<1x128x128xbf16>
    %13 = vector.shape_cast %12 : vector<1x128x128xbf16> to vector<128x128xbf16>
    %cst_14 = arith.constant dense<0.000000e+00> : vector<408x128xf32>
    %14 = tpu.matmul %11, %13, %cst_14 {dimension_numbers = #tpu.dot_dimension_numbers<[1], [0], [0], [1], [0, 0, 1, 1], [], []>} : vector<408x128xbf16>, vector<128x128xbf16>, vector<408x128xf32> -> vector<408x128xf32>
    %15 = arith.addf %10, %14 : vector<408x128xf32>
    %c24 = arith.constant 24 : index
    %c0_15 = arith.constant 0 : index
    %16 = vector.load %arg1[%c24, %c0_15] : memref<480x128xbf16, #tpu.memory_space<vmem>>, vector<408x128xbf16>
    %c3 = arith.constant 3 : index
    %c0_16 = arith.constant 0 : index
    %c0_17 = arith.constant 0 : index
    %17 = vector.load %arg2[%c3, %c0_16, %c0_17] : memref<9x128x128xbf16, #tpu.memory_space<vmem>>, vector<1x128x128xbf16>
    %18 = vector.shape_cast %17 : vector<1x128x128xbf16> to vector<128x128xbf16>
    %cst_18 = arith.constant dense<0.000000e+00> : vector<408x128xf32>
    %19 = tpu.matmul %16, %18, %cst_18 {dimension_numbers = #tpu.dot_dimension_numbers<[1], [0], [0], [1], [0, 0, 1, 1], [], []>} : vector<408x128xbf16>, vector<128x128xbf16>, vector<408x128xf32> -> vector<408x128xf32>
    %20 = arith.addf %15, %19 : vector<408x128xf32>
    %c25 = arith.constant 25 : index
    %c0_19 = arith.constant 0 : index
    %21 = vector.load %arg1[%c25, %c0_19] : memref<480x128xbf16, #tpu.memory_space<vmem>>, vector<408x128xbf16>
    %c4 = arith.constant 4 : index
    %c0_20 = arith.constant 0 : index
    %c0_21 = arith.constant 0 : index
    %22 = vector.load %arg2[%c4, %c0_20, %c0_21] : memref<9x128x128xbf16, #tpu.memory_space<vmem>>, vector<1x128x128xbf16>
    %23 = vector.shape_cast %22 : vector<1x128x128xbf16> to vector<128x128xbf16>
    %cst_22 = arith.constant dense<0.000000e+00> : vector<408x128xf32>
    %24 = tpu.matmul %21, %23, %cst_22 {dimension_numbers = #tpu.dot_dimension_numbers<[1], [0], [0], [1], [0, 0, 1, 1], [], []>} : vector<408x128xbf16>, vector<128x128xbf16>, vector<408x128xf32> -> vector<408x128xf32>
    %25 = arith.addf %20, %24 : vector<408x128xf32>
    %c26 = arith.constant 26 : index
    %c0_23 = arith.constant 0 : index
    %26 = vector.load %arg1[%c26, %c0_23] : memref<480x128xbf16, #tpu.memory_space<vmem>>, vector<408x128xbf16>
    %c5 = arith.constant 5 : index
    %c0_24 = arith.constant 0 : index
    %c0_25 = arith.constant 0 : index
    %27 = vector.load %arg2[%c5, %c0_24, %c0_25] : memref<9x128x128xbf16, #tpu.memory_space<vmem>>, vector<1x128x128xbf16>
    %28 = vector.shape_cast %27 : vector<1x128x128xbf16> to vector<128x128xbf16>
    %cst_26 = arith.constant dense<0.000000e+00> : vector<408x128xf32>
    %29 = tpu.matmul %26, %28, %cst_26 {dimension_numbers = #tpu.dot_dimension_numbers<[1], [0], [0], [1], [0, 0, 1, 1], [], []>} : vector<408x128xbf16>, vector<128x128xbf16>, vector<408x128xf32> -> vector<408x128xf32>
    %30 = arith.addf %25, %29 : vector<408x128xf32>
    %c48 = arith.constant 48 : index
    %c0_27 = arith.constant 0 : index
    %31 = vector.load %arg1[%c48, %c0_27] : memref<480x128xbf16, #tpu.memory_space<vmem>>, vector<408x128xbf16>
    %c6 = arith.constant 6 : index
    %c0_28 = arith.constant 0 : index
    %c0_29 = arith.constant 0 : index
    %32 = vector.load %arg2[%c6, %c0_28, %c0_29] : memref<9x128x128xbf16, #tpu.memory_space<vmem>>, vector<1x128x128xbf16>
    %33 = vector.shape_cast %32 : vector<1x128x128xbf16> to vector<128x128xbf16>
    %cst_30 = arith.constant dense<0.000000e+00> : vector<408x128xf32>
    %34 = tpu.matmul %31, %33, %cst_30 {dimension_numbers = #tpu.dot_dimension_numbers<[1], [0], [0], [1], [0, 0, 1, 1], [], []>} : vector<408x128xbf16>, vector<128x128xbf16>, vector<408x128xf32> -> vector<408x128xf32>
    %35 = arith.addf %30, %34 : vector<408x128xf32>
    %c49 = arith.constant 49 : index
    %c0_31 = arith.constant 0 : index
    %36 = vector.load %arg1[%c49, %c0_31] : memref<480x128xbf16, #tpu.memory_space<vmem>>, vector<408x128xbf16>
    %c7 = arith.constant 7 : index
    %c0_32 = arith.constant 0 : index
    %c0_33 = arith.constant 0 : index
    %37 = vector.load %arg2[%c7, %c0_32, %c0_33] : memref<9x128x128xbf16, #tpu.memory_space<vmem>>, vector<1x128x128xbf16>
    %38 = vector.shape_cast %37 : vector<1x128x128xbf16> to vector<128x128xbf16>
    %cst_34 = arith.constant dense<0.000000e+00> : vector<408x128xf32>
    %39 = tpu.matmul %36, %38, %cst_34 {dimension_numbers = #tpu.dot_dimension_numbers<[1], [0], [0], [1], [0, 0, 1, 1], [], []>} : vector<408x128xbf16>, vector<128x128xbf16>, vector<408x128xf32> -> vector<408x128xf32>
    %40 = arith.addf %35, %39 : vector<408x128xf32>
    %c50 = arith.constant 50 : index
    %c0_35 = arith.constant 0 : index
    %41 = vector.load %arg1[%c50, %c0_35] : memref<480x128xbf16, #tpu.memory_space<vmem>>, vector<408x128xbf16>
    %c8 = arith.constant 8 : index
    %c0_36 = arith.constant 0 : index
    %c0_37 = arith.constant 0 : index
    %42 = vector.load %arg2[%c8, %c0_36, %c0_37] : memref<9x128x128xbf16, #tpu.memory_space<vmem>>, vector<1x128x128xbf16>
    %43 = vector.shape_cast %42 : vector<1x128x128xbf16> to vector<128x128xbf16>
    %cst_38 = arith.constant dense<0.000000e+00> : vector<408x128xf32>
    %44 = tpu.matmul %41, %43, %cst_38 {dimension_numbers = #tpu.dot_dimension_numbers<[1], [0], [0], [1], [0, 0, 1, 1], [], []>} : vector<408x128xbf16>, vector<128x128xbf16>, vector<408x128xf32> -> vector<408x128xf32>
    %45 = arith.addf %40, %44 : vector<408x128xf32>
    %c0_39 = arith.constant 0 : index
    %c0_40 = arith.constant 0 : index
    %46 = vector.load %arg3[%c0_39, %c0_40] : memref<1x128xf32, #tpu.memory_space<vmem>>, vector<1x128xf32>
    %47 = vector.broadcast %46 : vector<1x128xf32> to vector<408x128xf32>
    %48 = arith.addf %45, %47 : vector<408x128xf32>
    %cst_41 = arith.constant 0.000000e+00 : f32
    %49 = vector.broadcast %cst_41 : f32 to vector<408x128xf32>
    %50 = arith.maximumf %48, %49 : vector<408x128xf32>
    %c0_42 = arith.constant 0 : index
    %c0_43 = arith.constant 0 : index
    %51 = vector.load %arg4[%c0_42, %c0_43] : memref<408x128xf32, #tpu.memory_space<vmem>>, vector<408x128xf32>
    %52 = arith.subf %50, %51 : vector<408x128xf32>
    %c0_44 = arith.constant 0 : index
    %c0_45 = arith.constant 0 : index
    %53 = vector.load %arg5[%c0_44, %c0_45] : memref<408x1xf32, #tpu.memory_space<vmem>>, vector<408x1xf32>
    %54 = vector.broadcast %53 : vector<408x1xf32> to vector<408x128xf32>
    %55 = arith.mulf %52, %54 : vector<408x128xf32>
    %56 = arith.mulf %55, %55 : vector<408x128xf32>
    %cst_46 = arith.constant dense<0.000000e+00> : vector<128xf32>
    %57 = vector.multi_reduction <add>, %56, %cst_46 [0] : vector<408x128xf32> to vector<128xf32>
    %58 = vector.shape_cast %57 : vector<128xf32> to vector<1x128xf32>
    %cst_47 = arith.constant 0.00346020772 : f32
    %59 = vector.broadcast %cst_47 : f32 to vector<1x128xf32>
    %60 = arith.mulf %58, %59 : vector<1x128xf32>
    %c0_48 = arith.constant 0 : index
    %c0_49 = arith.constant 0 : index
    %c0_50 = arith.constant 0 : index
    %61 = vector.load %arg6[%c0_48, %c0_49, %c0_50] : memref<1x1x128xf32, #tpu.memory_space<vmem>>, vector<1x1x128xf32>
    %62 = vector.shape_cast %61 : vector<1x1x128xf32> to vector<1x128xf32>
    %63 = arith.mulf %60, %62 : vector<1x128xf32>
    %64 = vector.shape_cast %63 : vector<1x128xf32> to vector<1x1x128xf32>
    %c0_51 = arith.constant 0 : index
    %c0_52 = arith.constant 0 : index
    %c0_53 = arith.constant 0 : index
    %65 = vector.load %arg7[%c0_51, %c0_52, %c0_53] : memref<1x1x128xf32, #tpu.memory_space<vmem>>, vector<1x1x128xf32>
    tpu.vector_store %arg7[%c0_51, %c0_52, %c0_53], %64 {strides = array<i32>} : memref<1x1x128xf32, #tpu.memory_space<vmem>>, vector<1x1x128xf32>,
    return
  }
  func.func @transform_0(%arg0: i32) -> (i32, i32) {
    %c0_i32 = arith.constant 0 : i32
    %c0_i32_0 = arith.constant 0 : i32
    return %arg0, %c0_i32 : i32, i32
  }
  func.func @transform_1(%arg0: i32) -> (i32, i32, i32) {
    %c0_i32 = arith.constant 0 : i32
    %c0_i32_0 = arith.constant 0 : i32
    %c0_i32_1 = arith.constant 0 : i32
    %c0_i32_2 = arith.constant 0 : i32
    return %c0_i32, %c0_i32_0, %c0_i32_1 : i32, i32, i32
  }
  func.func @transform_2(%arg0: i32) -> (i32, i32) {
    %c0_i32 = arith.constant 0 : i32
    %c0_i32_0 = arith.constant 0 : i32
    %c0_i32_1 = arith.constant 0 : i32
    return %c0_i32, %c0_i32_0 : i32, i32
  }
  func.func @transform_3(%arg0: i32) -> (i32, i32) {
    %c0_i32 = arith.constant 0 : i32
    %c0_i32_0 = arith.constant 0 : i32
    return %arg0, %c0_i32 : i32, i32
  }
  func.func @transform_4(%arg0: i32) -> (i32, i32) {
    %c0_i32 = arith.constant 0 : i32
    %c0_i32_0 = arith.constant 0 : i32
    %c0_i32_1 = arith.constant 0 : i32
    return %c0_i32, %c0_i32_0 : i32, i32
  }
  func.func @transform_5(%arg0: i32) -> (i32, i32, i32) {
    %c0_i32 = arith.constant 0 : i32
    %c0_i32_0 = arith.constant 0 : i32
    %c0_i32_1 = arith.constant 0 : i32
    return %arg0, %c0_i32, %c0_i32_0 : i32, i32, i32
  }
  func.func @transform_6(%arg0: i32) -> (i32, i32, i32) {
    %c0_i32 = arith.constant 0 : i32
    %c0_i32_0 = arith.constant 0 : i32
    %c0_i32_1 = arith.constant 0 : i32
    return %arg0, %c0_i32, %c0_i32_0 : i32, i32, i32
  }
}

</mosaic_0001>

<llo_original>
// kernel: tile.13
$region0: #{tile.13}
  #allocation0 [shape = 's32[1]{0}', space=sflag, size = 0x4, scoped, tag = 'scoped memory for tile.13']
  %s0 = inlined_call_operand.vmem [shape: f32[128], index: 0, kind: input, shape index: {}]
  %s1 = inlined_call_operand.vmem [shape: f32[4,128], index: 1, kind: output, shape index: {}]
  // Predicated region
  $region2: #{tile.13} parent=0 // pred_check
    _
  $region3: #{tile.13} parent=0 // pred_check_branch
    %3 = sbr.rel (0) target = $region5
  $region4: #{tile.13} parent=0 // pred_region
    _
  $region5: #{tile.13} parent=0 // pred_fallthru
    _
  %v4 = vld [vmem:[%s0] ss:$0 sm:$0xff]
  %5 = vst [vmem:[%s1] sm:$0xf] %v4

// kernel: pose_estimator_forward.2
$region0: #{pose_estimator_forward.2}
  #allocation0 [shape = 'u32[]', space=smem, size = 0x4, offset = 0x4, fixed_abs, tag = 'smem constant byte address 0x4 - core index']
  #allocation1 [shape = 'u32[144,128]{1,0:T(1,128)}', space=vmem, size = 0x12000, scoped, tag = 'internal scratch']
  %s0 = inlined_call_operand.vmem [shape: bf16[176,16], index: 0, kind: input, shape index: {}]
  %s1 = inlined_call_operand.vmem [shape: bf16[16,512], index: 1, kind: input, shape index: {}]
  %s2 = inlined_call_operand.vmem [shape: f32[1,512], index: 2, kind: input, shape index: {}]
  %s3 = inlined_call_operand.vmem [shape: bf16[176,512], index: 3, kind: output, shape index: {}]
  %s4 = sld [smem:[#allocation0]]
  $region22: #{pose_estimator_forward.2} parent=0
    _
  %s6 = ssub.s32 1, %s4
  %s7 = scalar_select 0, %s6, %s4
  // Predicated region
  $region2: #{pose_estimator_forward.2} parent=0 // pred_check
    _
  $region3: #{pose_estimator_forward.2} parent=0 // pred_check_branch
    %9 = sbr.rel (0) target = $region5
  $region4: #{pose_estimator_forward.2} parent=0 // pred_region
    _
  $region5: #{pose_estimator_forward.2} parent=0 // pred_fallthru
    _
  // Predicated region
  $region6: #{pose_estimator_forward.2} parent=0 // pred_check
    _
  $region7: #{pose_estimator_forward.2} parent=0 // pred_check_branch
    %11 = sbr.rel (0) target = $region9
  $region8: #{pose_estimator_forward.2} parent=0 // pred_region
    _
  $region9: #{pose_estimator_forward.2} parent=0 // pred_fallthru
    _
  // Predicated region
  $region10: #{pose_estimator_forward.2} parent=0 // pred_check
    _
  $region11: #{pose_estimator_forward.2} parent=0 // pred_check_branch
    %13 = sbr.rel (0) target = $region13
  $region12: #{pose_estimator_forward.2} parent=0 // pred_region
    _
  $region13: #{pose_estimator_forward.2} parent=0 // pred_fallthru
    _
  %v15 = vld [vmem:[%s0] sm:$0xf]
  %v16 = vld [vmem:[%s0 + $0x4] sm:$0xf]
  %v17 = vld [vmem:[%s0 + $0x8] sm:$0xf]
  %v18 = vld [vmem:[%s0 + $0xc] sm:$0xf]
  %v19 = vld [vmem:[%s0 + $0x10] sm:$0xf]
  %v20 = vld [vmem:[%s0 + $0x14] sm:$0xf]
  %v21 = vld [vmem:[%s0 + $0x18] sm:$0xf]
  %v22 = vld [vmem:[%s0 + $0x1c] sm:$0xf]
  %v23 = vld [vmem:[%s0 + $0x20] sm:$0xf]
  %v24 = vld [vmem:[%s0 + $0x24] sm:$0xf]
  %v25 = vld [vmem:[%s0 + $0x28] sm:$0xf]
  %v26 = vld [vmem:[%s0 + $0x2c] sm:$0xf]
  %v27 = vld [vmem:[%s0 + $0x30] sm:$0xf]
  %v28 = vld [vmem:[%s0 + $0x34] sm:$0xf]
  %v29 = vld [vmem:[%s0 + $0x38] sm:$0xf]
  %v30 = vld [vmem:[%s0 + $0x3c] sm:$0xf]
  %v31 = vld [vmem:[%s0 + $0x40] sm:$0xf]
  %v32 = vld [vmem:[%s0 + $0x44] sm:$0xf]
  %v33 = vld [vmem:[%s0 + $0x48] sm:$0xf]
  %v34 = vld [vmem:[%s0 + $0x4c] sm:$0xf]
  %v35 = vld [vmem:[%s0 + $0x50] sm:$0xf]
  %v36 = vld [vmem:[%s0 + $0x54] sm:$0xf]
  %v37 = vld [vmem:[%s1] sm:$0xff]
  %v38 = vld [vmem:[%s1 + $0x8] sm:$0xff]
  %v39 = vld [vmem:[%s1 + $0x10] sm:$0xff]
  %v40 = vld [vmem:[%s1 + $0x18] sm:$0xff]
  %v41 = vld [vmem:[%s2] sm:$0xf]
  %v43 = vlaneseq
  %v44 = vshrl.u32 %v43, 7
  %v45 = vsub.s32 0, %v44
  %v46 = vrot.slane %v41, %v45
  %v47 = vlaneseq
  %v48 = vshrl.u32 %v47, 7
  %v49 = vsub.s32 1, %v48
  %v50 = vrot.slane %v41, %v49
  %v51 = vlaneseq
  %v52 = vshrl.u32 %v51, 7
  %v53 = vsub.s32 2, %v52
  %v54 = vrot.slane %v41, %v53
  %v55 = vlaneseq
  %v56 = vshrl.u32 %v55, 7
  %v57 = vsub.s32 3, %v56
  %v58 = vrot.slane %v41, %v57
  %v85 = vunpack.c.l.b16 %v15
  %v86 = vunpack.c.l.b16 %v16
  %v87 = vunpack.c.l.b16 %v17
  %v88 = vunpack.c.l.b16 %v18
  %v89 = vunpack.c.l.b16 %v19
  %v90 = vunpack.c.l.b16 %v20
  %v91 = vunpack.c.l.b16 %v21
  %v92 = vunpack.c.l.b16 %v22
  %v93 = vunpack.c.l.b16 %v23
  %v94 = vunpack.c.l.b16 %v24
  %v95 = vunpack.c.l.b16 %v25
  %v96 = vunpack.c.l.b16 %v26
  %v97 = vunpack.c.l.b16 %v27
  %v98 = vunpack.c.l.b16 %v28
  %v99 = vunpack.c.l.b16 %v29
  %v100 = vunpack.c.l.b16 %v30
  %v101 = vunpack.c.l.b16 %v31
  %v102 = vunpack.c.l.b16 %v32
  %v103 = vunpack.c.l.b16 %v33
  %v104 = vunpack.c.l.b16 %v34
  %v105 = vunpack.c.l.b16 %v35
  %v106 = vunpack.c.l.b16 %v36
  %v107 = vpack.c.b16 %v86, %v85
  %v108 = vpack.c.b16 %v88, %v87
  %v109 = vpack.c.b16 %v90, %v89
  %v110 = vpack.c.b16 %v92, %v91
  %v111 = vpack.c.b16 %v94, %v93
  %v112 = vpack.c.b16 %v96, %v95
  %v113 = vpack.c.b16 %v98, %v97
  %v114 = vpack.c.b16 %v100, %v99
  %v115 = vpack.c.b16 %v102, %v101
  %v116 = vpack.c.b16 %v104, %v103
  %v117 = vpack.c.b16 %v106, %v105
  %v122 = vunpack.c.l.b16 %v37
  %v123 = vunpack.c.h.b16 %v37
  %v124 = vunpack.c.l.b16 %v38
  %v125 = vunpack.c.h.b16 %v38
  %v126 = vunpack.c.l.b16 %v39
  %v127 = vunpack.c.h.b16 %v39
  %v128 = vunpack.c.l.b16 %v40
  %v129 = vunpack.c.h.b16 %v40
  %v130 = vpack.c.b16 %v126, %v122
  %v131 = vpack.c.b16 %v127, %v123
  %v132 = vpack.c.b16 %v128, %v124
  %v133 = vpack.c.b16 %v129, %v125
  %vm138 = vcmask 130048
  %v140 = vsel %vm138, %v107, 0
  %v143 = vsel %vm138, %v108, 0
  %v146 = vsel %vm138, %v109, 0
  %v149 = vsel %vm138, %v110, 0
  %v152 = vsel %vm138, %v111, 0
  %v155 = vsel %vm138, %v112, 0
  %v158 = vsel %vm138, %v113, 0
  %v161 = vsel %vm138, %v114, 0
  %v164 = vsel %vm138, %v115, 0
  %v167 = vsel %vm138, %v116, 0
  %v170 = vsel %vm138, %v117, 0
  %172 = vmatprep.subr.bf16.mxu0 0
  %173 = vmatpush1.bf16.msra.mxu0 0
  %174 = vmatprep.subr.bf16.mxu0 0
  %175 = vmatpush1.bf16.msra.mxu0 0
  %176 = vmatprep.subr.bf16.mxu0 0
  %177 = vmatpush1.bf16.msra.mxu0 0
  %178 = vmatprep.subr.bf16.mxu0 0
  %179 = vmatpush1.bf16.msra.mxu0 0
  %180 = vmatprep.subr.bf16.mxu0 0
  %181 = vmatpush1.bf16.msra.mxu0 0
  %182 = vmatprep.subr.bf16.mxu0 0
  %183 = vmatpush1.bf16.msra.mxu0 0
  %184 = vmatprep.subr.bf16.mxu0 0
  %185 = vmatpush1.bf16.msra.mxu0 0
  %186 = vmatprep.subr.bf16.mxu0 %v131
  %187 = vmatpush1.bf16.msra.mxu0 %v130
  %188 = vmatprep.subr.bf16.mxu0 0
  %189 = vmatpush2.bf16.msra.mxu0 0
  %190 = vmatprep.subr.bf16.mxu0 0
  %191 = vmatpush2.bf16.msra.mxu0 0
  %192 = vmatprep.subr.bf16.mxu0 0
  %193 = vmatpush2.bf16.msra.mxu0 0
  %194 = vmatprep.subr.bf16.mxu0 0
  %195 = vmatpush2.bf16.msra.mxu0 0
  %196 = vmatprep.subr.bf16.mxu0 0
  %197 = vmatpush2.bf16.msra.mxu0 0
  %198 = vmatprep.subr.bf16.mxu0 0
  %199 = vmatpush2.bf16.msra.mxu0 0
  %200 = vmatprep.subr.bf16.mxu0 0
  %201 = vmatpush2.bf16.msra.mxu0 0
  %202 = vmatprep.subr.bf16.mxu0 0
  %203 = vmatpush2.bf16.msra.mxu0 0
  %204 = vmatprep.mubr.bf16.mxu0 0
  %205 = vmatmul.mubr.bf16.gmra.mxu0 %v140
  %v206 = vpop.f32.mrf.mxu0
  %v207 = vadd.f32 %v46, %v206
  %v208 = vpop.f32.mrf.mxu0
  %v209 = vadd.f32 %v50, %v208
  %v210 = vpop.f32.mrf.mxu0
  %v211 = vadd.f32 %v46, %v210
  %v212 = vpop.f32.mrf.mxu0
  %v213 = vadd.f32 %v50, %v212
  %214 = vmatprep.mubr.bf16.mxu0 0
  %215 = vmatmul.mubr.bf16.gmra.mxu0 %v143
  %v216 = vpop.f32.mrf.mxu0
  %v217 = vadd.f32 %v46, %v216
  %v218 = vpop.f32.mrf.mxu0
  %v219 = vadd.f32 %v50, %v218
  %v220 = vpop.f32.mrf.mxu0
  %v221 = vadd.f32 %v46, %v220
  %v222 = vpop.f32.mrf.mxu0
  %v223 = vadd.f32 %v50, %v222
  %224 = vmatprep.mubr.bf16.mxu0 0
  %225 = vmatmul.mubr.bf16.gmra.mxu0 %v146
  %v226 = vpop.f32.mrf.mxu0
  %v227 = vadd.f32 %v46, %v226
  %v228 = vpop.f32.mrf.mxu0
  %v229 = vadd.f32 %v50, %v228
  %v230 = vpop.f32.mrf.mxu0
  %v231 = vadd.f32 %v46, %v230
  %v232 = vpop.f32.mrf.mxu0
  %v233 = vadd.f32 %v50, %v232
  %234 = vmatprep.mubr.bf16.mxu0 0
  %235 = vmatmul.mubr.bf16.gmra.mxu0 %v149
  %v236 = vpop.f32.mrf.mxu0
  %v237 = vadd.f32 %v46, %v236
  %v238 = vpop.f32.mrf.mxu0
  %v239 = vadd.f32 %v50, %v238
  %v240 = vpop.f32.mrf.mxu0
  %v241 = vadd.f32 %v46, %v240
  %v242 = vpop.f32.mrf.mxu0
  %v243 = vadd.f32 %v50, %v242
  %244 = vmatprep.mubr.bf16.mxu0 0
  %245 = vmatmul.mubr.bf16.gmra.mxu0 %v152
  %v246 = vpop.f32.mrf.mxu0
  %v247 = vadd.f32 %v46, %v246
  %v248 = vpop.f32.mrf.mxu0
  %v249 = vadd.f32 %v50, %v248
  %v250 = vpop.f32.mrf.mxu0
  %v251 = vadd.f32 %v46, %v250
  %v252 = vpop.f32.mrf.mxu0
  %v253 = vadd.f32 %v50, %v252
  %254 = vmatprep.mubr.bf16.mxu0 0
  %255 = vmatmul.mubr.bf16.gmra.mxu0 %v155
  %v256 = vpop.f32.mrf.mxu0
  %v257 = vadd.f32 %v46, %v256
  %v258 = vpop.f32.mrf.mxu0
  %v259 = vadd.f32 %v50, %v258
  %v260 = vpop.f32.mrf.mxu0
  %v261 = vadd.f32 %v46, %v260
  %v262 = vpop.f32.mrf.mxu0
  %v263 = vadd.f32 %v50, %v262
  %264 = vmatprep.mubr.bf16.mxu0 0
  %265 = vmatmul.mubr.bf16.gmra.mxu0 %v158
  %v266 = vpop.f32.mrf.mxu0
  %v267 = vadd.f32 %v46, %v266
  %v268 = vpop.f32.mrf.mxu0
  %v269 = vadd.f32 %v50, %v268
  %v270 = vpop.f32.mrf.mxu0
  %v271 = vadd.f32 %v46, %v270
  %v272 = vpop.f32.mrf.mxu0
  %v273 = vadd.f32 %v50, %v272
  %274 = vmatprep.mubr.bf16.mxu0 0
  %275 = vmatmul.mubr.bf16.gmra.mxu0 %v161
  %v276 = vpop.f32.mrf.mxu0
  %v277 = vadd.f32 %v46, %v276
  %v278 = vpop.f32.mrf.mxu0
  %v279 = vadd.f32 %v50, %v278
  %v280 = vpop.f32.mrf.mxu0
  %v281 = vadd.f32 %v46, %v280
  %v282 = vpop.f32.mrf.mxu0
  %v283 = vadd.f32 %v50, %v282
  %284 = vmatprep.mubr.bf16.mxu0 0
  %285 = vmatmul.mubr.bf16.gmra.mxu0 %v164
  %v286 = vpop.f32.mrf.mxu0
  %v287 = vadd.f32 %v46, %v286
  %v288 = vpop.f32.mrf.mxu0
  %v289 = vadd.f32 %v50, %v288
  %v290 = vpop.f32.mrf.mxu0
  %v291 = vadd.f32 %v46, %v290
  %v292 = vpop.f32.mrf.mxu0
  %v293 = vadd.f32 %v50, %v292
  %294 = vmatprep.mubr.bf16.mxu0 0
  %295 = vmatmul.mubr.bf16.gmra.mxu0 %v167
  %v296 = vpop.f32.mrf.mxu0
  %v297 = vadd.f32 %v46, %v296
  %v298 = vpop.f32.mrf.mxu0
  %v299 = vadd.f32 %v50, %v298
  %v300 = vpop.f32.mrf.mxu0
  %v301 = vadd.f32 %v46, %v300
  %v302 = vpop.f32.mrf.mxu0
  %v303 = vadd.f32 %v50, %v302
  %304 = vmatprep.mubr.bf16.mxu0 0
  %305 = vmatmul.mubr.bf16.gmra.mxu0 %v170
  %v306 = vpop.f32.mrf.mxu0
  %v307 = vadd.f32 %v46, %v306
  %v308 = vpop.f32.mrf.mxu0
  %v309 = vadd.f32 %v50, %v308
  %v310 = vpop.f32.mrf.mxu0
  %v311 = vadd.f32 %v46, %v310
  %v312 = vpop.f32.mrf.mxu0
  %v313 = vadd.f32 %v50, %v312
  %314 = vdwg.mxu0
  %315 = vmatprep.subr.bf16.mxu0 0
  %316 = vmatpush1.bf16.msra.mxu0 0
  %317 = vmatprep.subr.bf16.mxu0 0
  %318 = vmatpush1.bf16.msra.mxu0 0
  %319 = vmatprep.subr.bf16.mxu0 0
  %320 = vmatpush1.bf16.msra.mxu0 0
  %321 = vmatprep.subr.bf16.mxu0 0
  %322 = vmatpush1.bf16.msra.mxu0 0
  %323 = vmatprep.subr.bf16.mxu0 0
  %324 = vmatpush1.bf16.msra.mxu0 0
  %325 = vmatprep.subr.bf16.mxu0 0
  %326 = vmatpush1.bf16.msra.mxu0 0
  %327 = vmatprep.subr.bf16.mxu0 0
  %328 = vmatpush1.bf16.msra.mxu0 0
  %329 = vmatprep.subr.bf16.mxu0 %v133
  %330 = vmatpush1.bf16.msra.mxu0 %v132
  %331 = vmatprep.subr.bf16.mxu0 0
  %332 = vmatpush2.bf16.msra.mxu0 0
  %333 = vmatprep.subr.bf16.mxu0 0
  %334 = vmatpush2.bf16.msra.mxu0 0
  %335 = vmatprep.subr.bf16.mxu0 0
  %336 = vmatpush2.bf16.msra.mxu0 0
  %337 = vmatprep.subr.bf16.mxu0 0
  %338 = vmatpush2.bf16.msra.mxu0 0
  %339 = vmatprep.subr.bf16.mxu0 0
  %340 = vmatpush2.bf16.msra.mxu0 0
  %341 = vmatprep.subr.bf16.mxu0 0
  %342 = vmatpush2.bf16.msra.mxu0 0
  %343 = vmatprep.subr.bf16.mxu0 0
  %344 = vmatpush2.bf16.msra.mxu0 0
  %345 = vmatprep.subr.bf16.mxu0 0
  %346 = vmatpush2.bf16.msra.mxu0 0
  %347 = vmatprep.mubr.bf16.mxu0 0
  %348 = vmatmul.mubr.bf16.gmra.mxu0 %v140
  %v349 = vpop.f32.mrf.mxu0
  %v350 = vadd.f32 %v54, %v349
  %v351 = vpop.f32.mrf.mxu0
  %v352 = vadd.f32 %v58, %v351
  %v353 = vpop.f32.mrf.mxu0
  %v354 = vadd.f32 %v54, %v353
  %v355 = vpop.f32.mrf.mxu0
  %v356 = vadd.f32 %v58, %v355
  %357 = vmatprep.mubr.bf16.mxu0 0
  %358 = vmatmul.mubr.bf16.gmra.mxu0 %v143
  %v359 = vpop.f32.mrf.mxu0
  %v360 = vadd.f32 %v54, %v359
  %v361 = vpop.f32.mrf.mxu0
  %v362 = vadd.f32 %v58, %v361
  %v363 = vpop.f32.mrf.mxu0
  %v364 = vadd.f32 %v54, %v363
  %v365 = vpop.f32.mrf.mxu0
  %v366 = vadd.f32 %v58, %v365
  %367 = vmatprep.mubr.bf16.mxu0 0
  %368 = vmatmul.mubr.bf16.gmra.mxu0 %v146
  %v369 = vpop.f32.mrf.mxu0
  %v370 = vadd.f32 %v54, %v369
  %v371 = vpop.f32.mrf.mxu0
  %v372 = vadd.f32 %v58, %v371
  %v373 = vpop.f32.mrf.mxu0
  %v374 = vadd.f32 %v54, %v373
  %v375 = vpop.f32.mrf.mxu0
  %v376 = vadd.f32 %v58, %v375
  %377 = vmatprep.mubr.bf16.mxu0 0
  %378 = vmatmul.mubr.bf16.gmra.mxu0 %v149
  %v379 = vpop.f32.mrf.mxu0
  %v380 = vadd.f32 %v54, %v379
  %v381 = vpop.f32.mrf.mxu0
  %v382 = vadd.f32 %v58, %v381
  %v383 = vpop.f32.mrf.mxu0
  %v384 = vadd.f32 %v54, %v383
  %v385 = vpop.f32.mrf.mxu0
  %v386 = vadd.f32 %v58, %v385
  %387 = vmatprep.mubr.bf16.mxu0 0
  %388 = vmatmul.mubr.bf16.gmra.mxu0 %v152
  %v389 = vpop.f32.mrf.mxu0
  %v390 = vadd.f32 %v54, %v389
  %v391 = vpop.f32.mrf.mxu0
  %v392 = vadd.f32 %v58, %v391
  %v393 = vpop.f32.mrf.mxu0
  %v394 = vadd.f32 %v54, %v393
  %v395 = vpop.f32.mrf.mxu0
  %v396 = vadd.f32 %v58, %v395
  %397 = vmatprep.mubr.bf16.mxu0 0
  %398 = vmatmul.mubr.bf16.gmra.mxu0 %v155
  %v399 = vpop.f32.mrf.mxu0
  %v400 = vadd.f32 %v54, %v399
  %v401 = vpop.f32.mrf.mxu0
  %v402 = vadd.f32 %v58, %v401
  %v403 = vpop.f32.mrf.mxu0
  %v404 = vadd.f32 %v54, %v403
  %v405 = vpop.f32.mrf.mxu0
  %v406 = vadd.f32 %v58, %v405
  %407 = vmatprep.mubr.bf16.mxu0 0
  %408 = vmatmul.mubr.bf16.gmra.mxu0 %v158
  %v409 = vpop.f32.mrf.mxu0
  %v410 = vadd.f32 %v54, %v409
  %v411 = vpop.f32.mrf.mxu0
  %v412 = vadd.f32 %v58, %v411
  %v413 = vpop.f32.mrf.mxu0
  %v414 = vadd.f32 %v54, %v413
  %v415 = vpop.f32.mrf.mxu0
  %v416 = vadd.f32 %v58, %v415
  %417 = vmatprep.mubr.bf16.mxu0 0
  %418 = vmatmul.mubr.bf16.gmra.mxu0 %v161
  %v419 = vpop.f32.mrf.mxu0
  %v420 = vadd.f32 %v54, %v419
  %v421 = vpop.f32.mrf.mxu0
  %v422 = vadd.f32 %v58, %v421
  %v423 = vpop.f32.mrf.mxu0
  %v424 = vadd.f32 %v54, %v423
  %v425 = vpop.f32.mrf.mxu0
  %v426 = vadd.f32 %v58, %v425
  %427 = vmatprep.mubr.bf16.mxu0 0
  %428 = vmatmul.mubr.bf16.gmra.mxu0 %v164
  %v429 = vpop.f32.mrf.mxu0
  %v430 = vadd.f32 %v54, %v429
  %v431 = vpop.f32.mrf.mxu0
  %v432 = vadd.f32 %v58, %v431
  %v433 = vpop.f32.mrf.mxu0
  %v434 = vadd.f32 %v54, %v433
  %v435 = vpop.f32.mrf.mxu0
  %v436 = vadd.f32 %v58, %v435
  %437 = vmatprep.mubr.bf16.mxu0 0
  %438 = vmatmul.mubr.bf16.gmra.mxu0 %v167
  %v439 = vpop.f32.mrf.mxu0
  %v440 = vadd.f32 %v54, %v439
  %v441 = vpop.f32.mrf.mxu0
  %v442 = vadd.f32 %v58, %v441
  %v443 = vpop.f32.mrf.mxu0
  %v444 = vadd.f32 %v54, %v443
  %v445 = vpop.f32.mrf.mxu0
  %v446 = vadd.f32 %v58, %v445
  %447 = vmatprep.mubr.bf16.mxu0 0
  %448 = vmatmul.mubr.bf16.gmra.mxu0 %v170
  %v449 = vpop.f32.mrf.mxu0
  %v450 = vadd.f32 %v54, %v449
  %v451 = vpop.f32.mrf.mxu0
  %v452 = vadd.f32 %v58, %v451
  %v453 = vpop.f32.mrf.mxu0
  %v454 = vadd.f32 %v54, %v453
  %v455 = vpop.f32.mrf.mxu0
  %v456 = vadd.f32 %v58, %v455
  %457 = vdwg.mxu0
  %v458 = vmax.f32 %v207, 0.0
  %v459 = vmax.f32 %v209, 0.0
  %v460 = vmax.f32 %v350, 0.0
  %v461 = vmax.f32 %v352, 0.0
  %v462 = vmax.f32 %v211, 0.0
  %v463 = vmax.f32 %v213, 0.0
  %v464 = vmax.f32 %v354, 0.0
  %v465 = vmax.f32 %v356, 0.0
  %v466 = vmax.f32 %v217, 0.0
  %v467 = vmax.f32 %v219, 0.0
  %v468 = vmax.f32 %v360, 0.0
  %v469 = vmax.f32 %v362, 0.0
  %v470 = vmax.f32 %v221, 0.0
  %v471 = vmax.f32 %v223, 0.0
  %v472 = vmax.f32 %v364, 0.0
  %v473 = vmax.f32 %v366, 0.0
  %v474 = vmax.f32 %v227, 0.0
  %v475 = vmax.f32 %v229, 0.0
  %v476 = vmax.f32 %v370, 0.0
  %v477 = vmax.f32 %v372, 0.0
  %v478 = vmax.f32 %v231, 0.0
  %v479 = vmax.f32 %v233, 0.0
  %v480 = vmax.f32 %v374, 0.0
  %v481 = vmax.f32 %v376, 0.0
  %v482 = vmax.f32 %v237, 0.0
  %v483 = vmax.f32 %v239, 0.0
  %v484 = vmax.f32 %v380, 0.0
  %v485 = vmax.f32 %v382, 0.0
  %v486 = vmax.f32 %v241, 0.0
  %v487 = vmax.f32 %v243, 0.0
  %v488 = vmax.f32 %v384, 0.0
  %v489 = vmax.f32 %v386, 0.0
  %v490 = vmax.f32 %v247, 0.0
  %v491 = vmax.f32 %v249, 0.0
  %v492 = vmax.f32 %v390, 0.0
  %v493 = vmax.f32 %v392, 0.0
  %v494 = vmax.f32 %v251, 0.0
  %v495 = vmax.f32 %v253, 0.0
  %v496 = vmax.f32 %v394, 0.0
  %v497 = vmax.f32 %v396, 0.0
  %v498 = vmax.f32 %v257, 0.0
  %v499 = vmax.f32 %v259, 0.0
  %v500 = vmax.f32 %v400, 0.0
  %v501 = vmax.f32 %v402, 0.0
  %v502 = vmax.f32 %v261, 0.0
  %v503 = vmax.f32 %v263, 0.0
  %v504 = vmax.f32 %v404, 0.0
  %v505 = vmax.f32 %v406, 0.0
  %v506 = vmax.f32 %v267, 0.0
  %v507 = vmax.f32 %v269, 0.0
  %v508 = vmax.f32 %v410, 0.0
  %v509 = vmax.f32 %v412, 0.0
  %v510 = vmax.f32 %v271, 0.0
  %v511 = vmax.f32 %v273, 0.0
  %v512 = vmax.f32 %v414, 0.0
  %v513 = vmax.f32 %v416, 0.0
  %v514 = vmax.f32 %v277, 0.0
  %v515 = vmax.f32 %v279, 0.0
  %v516 = vmax.f32 %v420, 0.0
  %v517 = vmax.f32 %v422, 0.0
  %v518 = vmax.f32 %v281, 0.0
  %v519 = vmax.f32 %v283, 0.0
  %v520 = vmax.f32 %v424, 0.0
  %v521 = vmax.f32 %v426, 0.0
  %v522 = vmax.f32 %v287, 0.0
  %v523 = vmax.f32 %v289, 0.0
  %v524 = vmax.f32 %v430, 0.0
  %v525 = vmax.f32 %v432, 0.0
  %v526 = vmax.f32 %v291, 0.0
  %v527 = vmax.f32 %v293, 0.0
  %v528 = vmax.f32 %v434, 0.0
  %v529 = vmax.f32 %v436, 0.0
  %v530 = vmax.f32 %v297, 0.0
  %v531 = vmax.f32 %v299, 0.0
  %v532 = vmax.f32 %v440, 0.0
  %v533 = vmax.f32 %v442, 0.0
  %v534 = vmax.f32 %v301, 0.0
  %v535 = vmax.f32 %v303, 0.0
  %v536 = vmax.f32 %v444, 0.0
  %v537 = vmax.f32 %v446, 0.0
  %v538 = vmax.f32 %v307, 0.0
  %v539 = vmax.f32 %v309, 0.0
  %v540 = vmax.f32 %v450, 0.0
  %v541 = vmax.f32 %v452, 0.0
  %v542 = vmax.f32 %v311, 0.0
  %v543 = vmax.f32 %v313, 0.0
  %v544 = vmax.f32 %v454, 0.0
  %v545 = vmax.f32 %v456, 0.0
  %v546 = vpack.c.bf16 %v462, %v458
  %v547 = vpack.c.bf16 %v463, %v459
  %v548 = vpack.c.bf16 %v464, %v460
  %v549 = vpack.c.bf16 %v465, %v461
  %v550 = vpack.c.bf16 %v470, %v466
  %v551 = vpack.c.bf16 %v471, %v467
  %v552 = vpack.c.bf16 %v472, %v468
  %v553 = vpack.c.bf16 %v473, %v469
  %v554 = vpack.c.bf16 %v478, %v474
  %v555 = vpack.c.bf16 %v479, %v475
  %v556 = vpack.c.bf16 %v480, %v476
  %v557 = vpack.c.bf16 %v481, %v477
  %v558 = vpack.c.bf16 %v486, %v482
  %v559 = vpack.c.bf16 %v487, %v483
  %v560 = vpack.c.bf16 %v488, %v484
  %v561 = vpack.c.bf16 %v489, %v485
  %v562 = vpack.c.bf16 %v494, %v490
  %v563 = vpack.c.bf16 %v495, %v491
  %v564 = vpack.c.bf16 %v496, %v492
  %v565 = vpack.c.bf16 %v497, %v493
  %v566 = vpack.c.bf16 %v502, %v498
  %v567 = vpack.c.bf16 %v503, %v499
  %v568 = vpack.c.bf16 %v504, %v500
  %v569 = vpack.c.bf16 %v505, %v501
  %v570 = vpack.c.bf16 %v510, %v506
  %v571 = vpack.c.bf16 %v511, %v507
  %v572 = vpack.c.bf16 %v512, %v508
  %v573 = vpack.c.bf16 %v513, %v509
  %v574 = vpack.c.bf16 %v518, %v514
  %v575 = vpack.c.bf16 %v519, %v515
  %v576 = vpack.c.bf16 %v520, %v516
  %v577 = vpack.c.bf16 %v521, %v517
  %v578 = vpack.c.bf16 %v526, %v522
  %v579 = vpack.c.bf16 %v527, %v523
  %v580 = vpack.c.bf16 %v528, %v524
  %v581 = vpack.c.bf16 %v529, %v525
  %v582 = vpack.c.bf16 %v534, %v530
  %v583 = vpack.c.bf16 %v535, %v531
  %v584 = vpack.c.bf16 %v536, %v532
  %v585 = vpack.c.bf16 %v537, %v533
  %v586 = vpack.c.bf16 %v542, %v538
  %v587 = vpack.c.bf16 %v543, %v539
  %v588 = vpack.c.bf16 %v544, %v540
  %v589 = vpack.c.bf16 %v545, %v541
  %v634 = vunpack.c.l.b16 %v546
  %v635 = vunpack.c.l.b16 %v547
  %v636 = vunpack.c.l.b16 %v548
  %v637 = vunpack.c.l.b16 %v549
  %v638 = vunpack.c.h.b16 %v546
  %v639 = vunpack.c.h.b16 %v547
  %v640 = vunpack.c.h.b16 %v548
  %v641 = vunpack.c.h.b16 %v549
  %v642 = vunpack.c.l.b16 %v550
  %v643 = vunpack.c.l.b16 %v551
  %v644 = vunpack.c.l.b16 %v552
  %v645 = vunpack.c.l.b16 %v553
  %v646 = vunpack.c.h.b16 %v550
  %v647 = vunpack.c.h.b16 %v551
  %v648 = vunpack.c.h.b16 %v552
  %v649 = vunpack.c.h.b16 %v553
  %v650 = vunpack.c.l.b16 %v554
  %v651 = vunpack.c.l.b16 %v555
  %v652 = vunpack.c.l.b16 %v556
  %v653 = vunpack.c.l.b16 %v557
  %v654 = vunpack.c.h.b16 %v554
  %v655 = vunpack.c.h.b16 %v555
  %v656 = vunpack.c.h.b16 %v556
  %v657 = vunpack.c.h.b16 %v557
  %v658 = vunpack.c.l.b16 %v558
  %v659 = vunpack.c.l.b16 %v559
  %v660 = vunpack.c.l.b16 %v560
  %v661 = vunpack.c.l.b16 %v561
  %v662 = vunpack.c.h.b16 %v558
  %v663 = vunpack.c.h.b16 %v559
  %v664 = vunpack.c.h.b16 %v560
  %v665 = vunpack.c.h.b16 %v561
  %v666 = vunpack.c.l.b16 %v562
  %v667 = vunpack.c.l.b16 %v563
  %v668 = vunpack.c.l.b16 %v564
  %v669 = vunpack.c.l.b16 %v565
  %v670 = vunpack.c.h.b16 %v562
  %v671 = vunpack.c.h.b16 %v563
  %v672 = vunpack.c.h.b16 %v564
  %v673 = vunpack.c.h.b16 %v565
  %v674 = vunpack.c.l.b16 %v566
  %v675 = vunpack.c.l.b16 %v567
  %v676 = vunpack.c.l.b16 %v568
  %v677 = vunpack.c.l.b16 %v569
  %v678 = vunpack.c.h.b16 %v566
  %v679 = vunpack.c.h.b16 %v567
  %v680 = vunpack.c.h.b16 %v568
  %v681 = vunpack.c.h.b16 %v569
  %v682 = vunpack.c.l.b16 %v570
  %v683 = vunpack.c.l.b16 %v571
  %v684 = vunpack.c.l.b16 %v572
  %v685 = vunpack.c.l.b16 %v573
  %v686 = vunpack.c.h.b16 %v570
  %v687 = vunpack.c.h.b16 %v571
  %v688 = vunpack.c.h.b16 %v572
  %v689 = vunpack.c.h.b16 %v573
  %v690 = vunpack.c.l.b16 %v574
  %v691 = vunpack.c.l.b16 %v575
  %v692 = vunpack.c.l.b16 %v576
  %v693 = vunpack.c.l.b16 %v577
  %v694 = vunpack.c.h.b16 %v574
  %v695 = vunpack.c.h.b16 %v575
  %v696 = vunpack.c.h.b16 %v576
  %v697 = vunpack.c.h.b16 %v577
  %v698 = vunpack.c.l.b16 %v578
  %v699 = vunpack.c.l.b16 %v579
  %v700 = vunpack.c.l.b16 %v580
  %v701 = vunpack.c.l.b16 %v581
  %v702 = vunpack.c.h.b16 %v578
  %v703 = vunpack.c.h.b16 %v579
  %v704 = vunpack.c.h.b16 %v580
  %v705 = vunpack.c.h.b16 %v581
  %v706 = vunpack.c.l.b16 %v582
  %v707 = vunpack.c.l.b16 %v583
  %v708 = vunpack.c.l.b16 %v584
  %v709 = vunpack.c.l.b16 %v585
  %v710 = vunpack.c.h.b16 %v582
  %v711 = vunpack.c.h.b16 %v583
  %v712 = vunpack.c.h.b16 %v584
  %v713 = vunpack.c.h.b16 %v585
  %v714 = vunpack.c.l.b16 %v586
  %v715 = vunpack.c.l.b16 %v587
  %v716 = vunpack.c.l.b16 %v588
  %v717 = vunpack.c.l.b16 %v589
  %v718 = vunpack.c.h.b16 %v586
  %v719 = vunpack.c.h.b16 %v587
  %v720 = vunpack.c.h.b16 %v588
  %v721 = vunpack.c.h.b16 %v589
  %v722 = vpack.c.b16 %v635, %v634
  %v723 = vpack.c.b16 %v637, %v636
  %v724 = vpack.c.b16 %v639, %v638
  %v725 = vpack.c.b16 %v641, %v640
  %v726 = vpack.c.b16 %v643, %v642
  %v727 = vpack.c.b16 %v645, %v644
  %v728 = vpack.c.b16 %v647, %v646
  %v729 = vpack.c.b16 %v649, %v648
  %v730 = vpack.c.b16 %v651, %v650
  %v731 = vpack.c.b16 %v653, %v652
  %v732 = vpack.c.b16 %v655, %v654
  %v733 = vpack.c.b16 %v657, %v656
  %v734 = vpack.c.b16 %v659, %v658
  %v735 = vpack.c.b16 %v661, %v660
  %v736 = vpack.c.b16 %v663, %v662
  %v737 = vpack.c.b16 %v665, %v664
  %v738 = vpack.c.b16 %v667, %v666
  %v739 = vpack.c.b16 %v669, %v668
  %v740 = vpack.c.b16 %v671, %v670
  %v741 = vpack.c.b16 %v673, %v672
  %v742 = vpack.c.b16 %v675, %v674
  %v743 = vpack.c.b16 %v677, %v676
  %v744 = vpack.c.b16 %v679, %v678
  %v745 = vpack.c.b16 %v681, %v680
  %v746 = vpack.c.b16 %v683, %v682
  %v747 = vpack.c.b16 %v685, %v684
  %v748 = vpack.c.b16 %v687, %v686
  %v749 = vpack.c.b16 %v689, %v688
  %v750 = vpack.c.b16 %v691, %v690
  %v751 = vpack.c.b16 %v693, %v692
  %v752 = vpack.c.b16 %v695, %v694
  %v753 = vpack.c.b16 %v697, %v696
  %v754 = vpack.c.b16 %v699, %v698
  %v755 = vpack.c.b16 %v701, %v700
  %v756 = vpack.c.b16 %v703, %v702
  %v757 = vpack.c.b16 %v705, %v704
  %v758 = vpack.c.b16 %v707, %v706
  %v759 = vpack.c.b16 %v709, %v708
  %v760 = vpack.c.b16 %v711, %v710
  %v761 = vpack.c.b16 %v713, %v712
  %v762 = vpack.c.b16 %v715, %v714
  %v763 = vpack.c.b16 %v717, %v716
  %v764 = vpack.c.b16 %v719, %v718
  %v765 = vpack.c.b16 %v721, %v720
  %810 = vst [vmem:[%s3] sm:$0xff] %v722
  %811 = vst [vmem:[%s3 + $0x8] sm:$0xff] %v723
  %812 = vst [vmem:[%s3 + $0x10] sm:$0xff] %v724
  %813 = vst [vmem:[%s3 + $0x18] sm:$0xff] %v725
  %814 = vst [vmem:[%s3 + $0x20] sm:$0xff] %v726
  %815 = vst [vmem:[%s3 + $0x28] sm:$0xff] %v727
  %816 = vst [vmem:[%s3 + $0x30] sm:$0xff] %v728
  %817 = vst [vmem:[%s3 + $0x38] sm:$0xff] %v729
  %818 = vst [vmem:[%s3 + $0x40] sm:$0xff] %v730
  %819 = vst [vmem:[%s3 + $0x48] sm:$0xff] %v731
  %820 = vst [vmem:[%s3 + $0x50] sm:$0xff] %v732
  %821 = vst [vmem:[%s3 + $0x58] sm:$0xff] %v733
  %822 = vst [vmem:[%s3 + $0x60] sm:$0xff] %v734
  %823 = vst [vmem:[%s3 + $0x68] sm:$0xff] %v735
  %824 = vst [vmem:[%s3 + $0x70] sm:$0xff] %v736
  %825 = vst [vmem:[%s3 + $0x78] sm:$0xff] %v737
  %826 = vst [vmem:[%s3 + $0x80] sm:$0xff] %v738
  %827 = vst [vmem:[%s3 + $0x88] sm:$0xff] %v739
  %828 = vst [vmem:[%s3 + $0x90] sm:$0xff] %v740
  %829 = vst [vmem:[%s3 + $0x98] sm:$0xff] %v741
  %830 = vst [vmem:[%s3 + $0xa0] sm:$0xff] %v742
  %831 = vst [vmem:[%s3 + $0xa8] sm:$0xff] %v743
  %832 = vst [vmem:[%s3 + $0xb0] sm:$0xff] %v744
  %833 = vst [vmem:[%s3 + $0xb8] sm:$0xff] %v745
  %834 = vst [vmem:[%s3 + $0xc0] sm:$0xff] %v746
  %835 = vst [vmem:[%s3 + $0xc8] sm:$0xff] %v747
  %836 = vst [vmem:[%s3 + $0xd0] sm:$0xff] %v748
  %837 = vst [vmem:[%s3 + $0xd8] sm:$0xff] %v749
  %838 = vst [vmem:[%s3 + $0xe0] sm:$0xff] %v750
  %839 = vst [vmem:[%s3 + $0xe8] sm:$0xff] %v751
  %840 = vst [vmem:[%s3 + $0xf0] sm:$0xff] %v752
  %841 = vst [vmem:[%s3 + $0xf8] sm:$0xff] %v753
  %842 = vst [vmem:[%s3 + $0x100] sm:$0xff] %v754
  %843 = vst [vmem:[%s3 + $0x108] sm:$0xff] %v755
  %844 = vst [vmem:[%s3 + $0x110] sm:$0xff] %v756
  %845 = vst [vmem:[%s3 + $0x118] sm:$0xff] %v757
  %846 = vst [vmem:[%s3 + $0x120] sm:$0xff] %v758
  %847 = vst [vmem:[%s3 + $0x128] sm:$0xff] %v759
  %848 = vst [vmem:[%s3 + $0x130] sm:$0xff] %v760
  %849 = vst [vmem:[%s3 + $0x138] sm:$0xff] %v761
  %850 = vst [vmem:[%s3 + $0x140] sm:$0xff] %v762
  %851 = vst [vmem:[%s3 + $0x148] sm:$0xff] %v763
  %852 = vst [vmem:[%s3 + $0x150] sm:$0xff] %v764
  %853 = vst [vmem:[%s3 + $0x158] sm:$0xff] %v765
  // Predicated region
  $region14: #{pose_estimator_forward.2} parent=0 // pred_check
    _
  $region15: #{pose_estimator_forward.2} parent=0 // pred_check_branch
    %855 = sbr.rel (0) target = $region17
  $region16: #{pose_estimator_forward.2} parent=0 // pred_region
    _
  $region17: #{pose_estimator_forward.2} parent=0 // pred_fallthru
    _
  // Predicated region
  $region18: #{pose_estimator_forward.2} parent=0 // pred_check
    _
  $region19: #{pose_estimator_forward.2} parent=0 // pred_check_branch
    %857 = sbr.rel (0) target = $region21
  $region20: #{pose_estimator_forward.2} parent=0 // pred_region
    _
  $region21: #{pose_estimator_forward.2} parent=0 // pred_fallthru
    _

// kernel: tile.18
$region0: #{tile.18}
  #allocation0 [shape = 's32[1]{0}', space=sflag, size = 0x4, scoped, tag = 'scoped memory for tile.18']
  %s0 = inlined_call_operand.vmem [shape: f32[24], index: 0, kind: input, shape index: {}]
  %s1 = inlined_call_operand.vmem [shape: f32[17,24], index: 1, kind: output, shape index: {}]
  // Predicated region
  $region2: #{tile.18} parent=0 // pred_check
    _
  $region3: #{tile.18} parent=0 // pred_check_branch
    %3 = sbr.rel (0) target = $region5
  $region4: #{tile.18} parent=0 // pred_region
    _
  $region5: #{tile.18} parent=0 // pred_fallthru
    _
  %v4 = vld [vmem:[%s0] ss:$0 sm:$0xff]
  %5 = vst [vmem:[%s1] sm:$0xff] %v4
  %s6 = scalar_lea.vmem %s1, 8
  %7 = vst [vmem:[%s6] sm:$0xff] %v4
  %s8 = scalar_lea.vmem %s1, 16
  %9 = vst [vmem:[%s8] sm:$0xff] %v4

// kernel: tile.0
$region0: #{tile.0}
  %s0 = inlined_call_operand.vmem [shape: f32[17,24], index: 0, kind: input, shape index: {}]
  %s1 = inlined_call_operand.vmem [shape: f32[408,1], index: 1, kind: output, shape index: {}]
  %v2 = vld [vmem:[%s0] sm:$0xff]
  %vm3 = vcmask 7168
  %4 = vst.msk [vmem:[%s1] ss:$24 sm:$0xf] %vm3, %v2
  %5 = vst.msk [vmem:[%s1] ss:$24 sm:$0xf0] %vm3, %v2
  %s6 = scalar_lea.vmem %s0, 8
  %v7 = vld [vmem:[%s6] sm:$0xff]
  %vm8 = vcmask 7168
  %s9 = scalar_lea.vmem %s1, 192
  %10 = vst.msk [vmem:[%s9] ss:$24 sm:$0xf] %vm8, %v7
  %s11 = scalar_lea.vmem %s1, 192
  %12 = vst.msk [vmem:[%s11] ss:$24 sm:$0xf0] %vm8, %v7
  %s13 = scalar_lea.vmem %s0, 16
  %v14 = vld [vmem:[%s13] sm:$0x1]
  %vm15 = vcmask 7168
  %s16 = scalar_lea.vmem %s1, 384
  %17 = vst.msk [vmem:[%s16] sm:$0x1] %vm15, %v14
  %v18 = vld.sshfl [vmem:[%s0] sm:$0xff pattern:$0x56741230]
  %19 = vrot.lane.b32.xlu0 %v18, 127
  %v20 = vpop.permute.xlu0 %19
  %vm21 = vcmask 7168
  %s22 = scalar_lea.vmem %s1, 1
  %23 = vst.msk [vmem:[%s22] ss:$72 sm:$0x3] %vm21, %v20
  %s24 = scalar_lea.vmem %s1, 97
  %25 = vst.msk [vmem:[%s24] ss:$-24 sm:$0xc] %vm21, %v20
  %s26 = scalar_lea.vmem %s1, 4294967105
  %27 = vst.msk [vmem:[%s26] ss:$72 sm:$0x30] %vm21, %v20
  %s28 = scalar_lea.vmem %s1, 289
  %29 = vst.msk [vmem:[%s28] ss:$-24 sm:$0xc0] %vm21, %v20
  %s30 = scalar_lea.vmem %s0, 8
  %v31 = vld.sshfl [vmem:[%s30] sm:$0xff pattern:$0x56741230]
  %32 = vrot.lane.b32.xlu0 %v31, 127
  %v33 = vpop.permute.xlu0 %32
  %vm34 = vcmask 7168
  %s35 = scalar_lea.vmem %s1, 193
  %36 = vst.msk [vmem:[%s35] ss:$72 sm:$0x3] %vm34, %v33
  %s37 = scalar_lea.vmem %s1, 289
  %38 = vst.msk [vmem:[%s37] ss:$-24 sm:$0xc] %vm34, %v33
  %s39 = scalar_lea.vmem %s1, 1
  %40 = vst.msk [vmem:[%s39] ss:$72 sm:$0x30] %vm34, %v33
  %s41 = scalar_lea.vmem %s1, 481
  %42 = vst.msk [vmem:[%s41] ss:$-24 sm:$0xc0] %vm34, %v33
  %s43 = scalar_lea.vmem %s0, 16
  %v44 = vld [vmem:[%s43] sm:$0x1]
  %45 = vrot.lane.b32.xlu0 %v44, 127
  %v46 = vpop.permute.xlu0 %45
  %vm47 = vcmask 7168
  %s48 = scalar_lea.vmem %s1, 385
  %49 = vst.msk [vmem:[%s48] sm:$0x1] %vm47, %v46
  %v50 = vld.sshfl [vmem:[%s0] sm:$0xff pattern:$0x56741230]
  %51 = vrot.lane.b32.xlu0 %v50, 126
  %v52 = vpop.permute.xlu0 %51
  %vm53 = vcmask 7168
  %s54 = scalar_lea.vmem %s1, 2
  %55 = vst.msk [vmem:[%s54] ss:$72 sm:$0x3] %vm53, %v52
  %s56 = scalar_lea.vmem %s1, 98
  %57 = vst.msk [vmem:[%s56] ss:$-24 sm:$0xc] %vm53, %v52
  %s58 = scalar_lea.vmem %s1, 4294967106
  %59 = vst.msk [vmem:[%s58] ss:$72 sm:$0x30] %vm53, %v52
  %s60 = scalar_lea.vmem %s1, 290
  %61 = vst.msk [vmem:[%s60] ss:$-24 sm:$0xc0] %vm53, %v52
  %s62 = scalar_lea.vmem %s0, 8
  %v63 = vld.sshfl [vmem:[%s62] sm:$0xff pattern:$0x56741230]
  %64 = vrot.lane.b32.xlu0 %v63, 126
  %v65 = vpop.permute.xlu0 %64
  %vm66 = vcmask 7168
  %s67 = scalar_lea.vmem %s1, 194
  %68 = vst.msk [vmem:[%s67] ss:$72 sm:$0x3] %vm66, %v65
  %s69 = scalar_lea.vmem %s1, 290
  %70 = vst.msk [vmem:[%s69] ss:$-24 sm:$0xc] %vm66, %v65
  %s71 = scalar_lea.vmem %s1, 2
  %72 = vst.msk [vmem:[%s71] ss:$72 sm:$0x30] %vm66, %v65
  %s73 = scalar_lea.vmem %s1, 482
  %74 = vst.msk [vmem:[%s73] ss:$-24 sm:$0xc0] %vm66, %v65
  %s75 = scalar_lea.vmem %s0, 16
  %v76 = vld [vmem:[%s75] sm:$0x1]
  %77 = vrot.lane.b32.xlu0 %v76, 126
  %v78 = vpop.permute.xlu0 %77
  %vm79 = vcmask 7168
  %s80 = scalar_lea.vmem %s1, 386
  %81 = vst.msk [vmem:[%s80] sm:$0x1] %vm79, %v78
  %v82 = vld.sshfl [vmem:[%s0] sm:$0xff pattern:$0x56741230]
  %83 = vrot.lane.b32.xlu0 %v82, 125
  %v84 = vpop.permute.xlu0 %83
  %vm85 = vcmask 7168
  %s86 = scalar_lea.vmem %s1, 3
  %87 = vst.msk [vmem:[%s86] ss:$72 sm:$0x3] %vm85, %v84
  %s88 = scalar_lea.vmem %s1, 99
  %89 = vst.msk [vmem:[%s88] ss:$-24 sm:$0xc] %vm85, %v84
  %s90 = scalar_lea.vmem %s1, 4294967107
  %91 = vst.msk [vmem:[%s90] ss:$72 sm:$0x30] %vm85, %v84
  %s92 = scalar_lea.vmem %s1, 291
  %93 = vst.msk [vmem:[%s92] ss:$-24 sm:$0xc0] %vm85, %v84
  %s94 = scalar_lea.vmem %s0, 8
  %v95 = vld.sshfl [vmem:[%s94] sm:$0xff pattern:$0x56741230]
  %96 = vrot.lane.b32.xlu0 %v95, 125
  %v97 = vpop.permute.xlu0 %96
  %vm98 = vcmask 7168
  %s99 = scalar_lea.vmem %s1, 195
  %100 = vst.msk [vmem:[%s99] ss:$72 sm:$0x3] %vm98, %v97
  %s101 = scalar_lea.vmem %s1, 291
  %102 = vst.msk [vmem:[%s101] ss:$-24 sm:$0xc] %vm98, %v97
  %s103 = scalar_lea.vmem %s1, 3
  %104 = vst.msk [vmem:[%s103] ss:$72 sm:$0x30] %vm98, %v97
  %s105 = scalar_lea.vmem %s1, 483
  %106 = vst.msk [vmem:[%s105] ss:$-24 sm:$0xc0] %vm98, %v97
  %s107 = scalar_lea.vmem %s0, 16
  %v108 = vld [vmem:[%s107] sm:$0x1]
  %109 = vrot.lane.b32.xlu0 %v108, 125
  %v110 = vpop.permute.xlu0 %109
  %vm111 = vcmask 7168
  %s112 = scalar_lea.vmem %s1, 387
  %113 = vst.msk [vmem:[%s112] sm:$0x1] %vm111, %v110
  %v114 = vld.sshfl [vmem:[%s0] sm:$0xff pattern:$0x56741230]
  %115 = vrot.lane.b32.xlu0 %v114, 124
  %v116 = vpop.permute.xlu0 %115
  %vm117 = vcmask 7168
  %s118 = scalar_lea.vmem %s1, 4
  %119 = vst.msk [vmem:[%s118] ss:$72 sm:$0x3] %vm117, %v116
  %s120 = scalar_lea.vmem %s1, 100
  %121 = vst.msk [vmem:[%s120] ss:$-24 sm:$0xc] %vm117, %v116
  %s122 = scalar_lea.vmem %s1, 4294967108
  %123 = vst.msk [vmem:[%s122] ss:$72 sm:$0x30] %vm117, %v116
  %s124 = scalar_lea.vmem %s1, 292
  %125 = vst.msk [vmem:[%s124] ss:$-24 sm:$0xc0] %vm117, %v116
  %s126 = scalar_lea.vmem %s0, 8
  %v127 = vld.sshfl [vmem:[%s126] sm:$0xff pattern:$0x56741230]
  %128 = vrot.lane.b32.xlu0 %v127, 124
  %v129 = vpop.permute.xlu0 %128
  %vm130 = vcmask 7168
  %s131 = scalar_lea.vmem %s1, 196
  %132 = vst.msk [vmem:[%s131] ss:$72 sm:$0x3] %vm130, %v129
  %s133 = scalar_lea.vmem %s1, 292
  %134 = vst.msk [vmem:[%s133] ss:$-24 sm:$0xc] %vm130, %v129
  %s135 = scalar_lea.vmem %s1, 4
  %136 = vst.msk [vmem:[%s135] ss:$72 sm:$0x30] %vm130, %v129
  %s137 = scalar_lea.vmem %s1, 484
  %138 = vst.msk [vmem:[%s137] ss:$-24 sm:$0xc0] %vm130, %v129
  %s139 = scalar_lea.vmem %s0, 16
  %v140 = vld [vmem:[%s139] sm:$0x1]
  %141 = vrot.lane.b32.xlu0 %v140, 124
  %v142 = vpop.permute.xlu0 %141
  %vm143 = vcmask 7168
  %s144 = scalar_lea.vmem %s1, 388
  %145 = vst.msk [vmem:[%s144] sm:$0x1] %vm143, %v142
  %v146 = vld.sshfl [vmem:[%s0] sm:$0xff pattern:$0x56741230]
  %147 = vrot.lane.b32.xlu0 %v146, 123
  %v148 = vpop.permute.xlu0 %147
  %vm149 = vcmask 7168
  %s150 = scalar_lea.vmem %s1, 5
  %151 = vst.msk [vmem:[%s150] ss:$72 sm:$0x3] %vm149, %v148
  %s152 = scalar_lea.vmem %s1, 101
  %153 = vst.msk [vmem:[%s152] ss:$-24 sm:$0xc] %vm149, %v148
  %s154 = scalar_lea.vmem %s1, 4294967109
  %155 = vst.msk [vmem:[%s154] ss:$72 sm:$0x30] %vm149, %v148
  %s156 = scalar_lea.vmem %s1, 293
  %157 = vst.msk [vmem:[%s156] ss:$-24 sm:$0xc0] %vm149, %v148
  %s158 = scalar_lea.vmem %s0, 8
  %v159 = vld.sshfl [vmem:[%s158] sm:$0xff pattern:$0x56741230]
  %160 = vrot.lane.b32.xlu0 %v159, 123
  %v161 = vpop.permute.xlu0 %160
  %vm162 = vcmask 7168
  %s163 = scalar_lea.vmem %s1, 197
  %164 = vst.msk [vmem:[%s163] ss:$72 sm:$0x3] %vm162, %v161
  %s165 = scalar_lea.vmem %s1, 293
  %166 = vst.msk [vmem:[%s165] ss:$-24 sm:$0xc] %vm162, %v161
  %s167 = scalar_lea.vmem %s1, 5
  %168 = vst.msk [vmem:[%s167] ss:$72 sm:$0x30] %vm162, %v161
  %s169 = scalar_lea.vmem %s1, 485
  %170 = vst.msk [vmem:[%s169] ss:$-24 sm:$0xc0] %vm162, %v161
  %s171 = scalar_lea.vmem %s0, 16
  %v172 = vld [vmem:[%s171] sm:$0x1]
  %173 = vrot.lane.b32.xlu0 %v172, 123
  %v174 = vpop.permute.xlu0 %173
  %vm175 = vcmask 7168
  %s176 = scalar_lea.vmem %s1, 389
  %177 = vst.msk [vmem:[%s176] sm:$0x1] %vm175, %v174
  %v178 = vld.sshfl [vmem:[%s0] sm:$0xff pattern:$0x56741230]
  %179 = vrot.lane.b32.xlu0 %v178, 122
  %v180 = vpop.permute.xlu0 %179
  %vm181 = vcmask 7168
  %s182 = scalar_lea.vmem %s1, 6
  %183 = vst.msk [vmem:[%s182] ss:$72 sm:$0x3] %vm181, %v180
  %s184 = scalar_lea.vmem %s1, 102
  %185 = vst.msk [vmem:[%s184] ss:$-24 sm:$0xc] %vm181, %v180
  %s186 = scalar_lea.vmem %s1, 4294967110
  %187 = vst.msk [vmem:[%s186] ss:$72 sm:$0x30] %vm181, %v180
  %s188 = scalar_lea.vmem %s1, 294
  %189 = vst.msk [vmem:[%s188] ss:$-24 sm:$0xc0] %vm181, %v180
  %s190 = scalar_lea.vmem %s0, 8
  %v191 = vld.sshfl [vmem:[%s190] sm:$0xff pattern:$0x56741230]
  %192 = vrot.lane.b32.xlu0 %v191, 122
  %v193 = vpop.permute.xlu0 %192
  %vm194 = vcmask 7168
  %s195 = scalar_lea.vmem %s1, 198
  %196 = vst.msk [vmem:[%s195] ss:$72 sm:$0x3] %vm194, %v193
  %s197 = scalar_lea.vmem %s1, 294
  %198 = vst.msk [vmem:[%s197] ss:$-24 sm:$0xc] %vm194, %v193
  %s199 = scalar_lea.vmem %s1, 6
  %200 = vst.msk [vmem:[%s199] ss:$72 sm:$0x30] %vm194, %v193
  %s201 = scalar_lea.vmem %s1, 486
  %202 = vst.msk [vmem:[%s201] ss:$-24 sm:$0xc0] %vm194, %v193
  %s203 = scalar_lea.vmem %s0, 16
  %v204 = vld [vmem:[%s203] sm:$0x1]
  %205 = vrot.lane.b32.xlu0 %v204, 122
  %v206 = vpop.permute.xlu0 %205
  %vm207 = vcmask 7168
  %s208 = scalar_lea.vmem %s1, 390
  %209 = vst.msk [vmem:[%s208] sm:$0x1] %vm207, %v206
  %v210 = vld.sshfl [vmem:[%s0] sm:$0xff pattern:$0x56741230]
  %211 = vrot.lane.b32.xlu0 %v210, 121
  %v212 = vpop.permute.xlu0 %211
  %vm213 = vcmask 7168
  %s214 = scalar_lea.vmem %s1, 7
  %215 = vst.msk [vmem:[%s214] ss:$72 sm:$0x3] %vm213, %v212
  %s216 = scalar_lea.vmem %s1, 103
  %217 = vst.msk [vmem:[%s216] ss:$-24 sm:$0xc] %vm213, %v212
  %s218 = scalar_lea.vmem %s1, 4294967111
  %219 = vst.msk [vmem:[%s218] ss:$72 sm:$0x30] %vm213, %v212
  %s220 = scalar_lea.vmem %s1, 295
  %221 = vst.msk [vmem:[%s220] ss:$-24 sm:$0xc0] %vm213, %v212
  %s222 = scalar_lea.vmem %s0, 8
  %v223 = vld.sshfl [vmem:[%s222] sm:$0xff pattern:$0x56741230]
  %224 = vrot.lane.b32.xlu0 %v223, 121
  %v225 = vpop.permute.xlu0 %224
  %vm226 = vcmask 7168
  %s227 = scalar_lea.vmem %s1, 199
  %228 = vst.msk [vmem:[%s227] ss:$72 sm:$0x3] %vm226, %v225
  %s229 = scalar_lea.vmem %s1, 295
  %230 = vst.msk [vmem:[%s229] ss:$-24 sm:$0xc] %vm226, %v225
  %s231 = scalar_lea.vmem %s1, 7
  %232 = vst.msk [vmem:[%s231] ss:$72 sm:$0x30] %vm226, %v225
  %s233 = scalar_lea.vmem %s1, 487
  %234 = vst.msk [vmem:[%s233] ss:$-24 sm:$0xc0] %vm226, %v225
  %s235 = scalar_lea.vmem %s0, 16
  %v236 = vld [vmem:[%s235] sm:$0x1]
  %237 = vrot.lane.b32.xlu0 %v236, 121
  %v238 = vpop.permute.xlu0 %237
  %vm239 = vcmask 7168
  %s240 = scalar_lea.vmem %s1, 391
  %241 = vst.msk [vmem:[%s240] sm:$0x1] %vm239, %v238
  %v242 = vld.sshfl [vmem:[%s0] sm:$0xff pattern:$0x67452301]
  %243 = vrot.lane.b32.xlu0 %v242, 120
  %v244 = vpop.permute.xlu0 %243
  %vm245 = vcmask 7168
  %s246 = scalar_lea.vmem %s1, 32
  %247 = vst.msk [vmem:[%s246] ss:$-24 sm:$0x3] %vm245, %v244
  %s248 = scalar_lea.vmem %s1, 128
  %249 = vst.msk [vmem:[%s248] ss:$-24 sm:$0xc] %vm245, %v244
  %s250 = scalar_lea.vmem %s1, 224
  %251 = vst.msk [vmem:[%s250] ss:$-24 sm:$0x30] %vm245, %v244
  %s252 = scalar_lea.vmem %s1, 320
  %253 = vst.msk [vmem:[%s252] ss:$-24 sm:$0xc0] %vm245, %v244
  %s254 = scalar_lea.vmem %s0, 8
  %v255 = vld.sshfl [vmem:[%s254] sm:$0xff pattern:$0x67452301]
  %256 = vrot.lane.b32.xlu0 %v255, 120
  %v257 = vpop.permute.xlu0 %256
  %vm258 = vcmask 7168
  %s259 = scalar_lea.vmem %s1, 224
  %260 = vst.msk [vmem:[%s259] ss:$-24 sm:$0x3] %vm258, %v257
  %s261 = scalar_lea.vmem %s1, 320
  %262 = vst.msk [vmem:[%s261] ss:$-24 sm:$0xc] %vm258, %v257
  %s263 = scalar_lea.vmem %s1, 416
  %264 = vst.msk [vmem:[%s263] ss:$-24 sm:$0x30] %vm258, %v257
  %s265 = scalar_lea.vmem %s1, 512
  %266 = vst.msk [vmem:[%s265] ss:$-24 sm:$0xc0] %vm258, %v257
  %s267 = scalar_lea.vmem %s0, 16
  %v268 = vld [vmem:[%s267] sm:$0x1]
  %269 = vrot.lane.b32.xlu0 %v268, 120
  %v270 = vpop.permute.xlu0 %269
  %vm271 = vcmask 7168
  %s272 = scalar_lea.vmem %s1, 392
  %273 = vst.msk [vmem:[%s272] sm:$0x1] %vm271, %v270
  %v274 = vld.sshfl [vmem:[%s0] sm:$0xff pattern:$0x67452301]
  %275 = vrot.lane.b32.xlu0 %v274, 119
  %v276 = vpop.permute.xlu0 %275
  %vm277 = vcmask 7168
  %s278 = scalar_lea.vmem %s1, 33
  %279 = vst.msk [vmem:[%s278] ss:$-24 sm:$0x3] %vm277, %v276
  %s280 = scalar_lea.vmem %s1, 129
  %281 = vst.msk [vmem:[%s280] ss:$-24 sm:$0xc] %vm277, %v276
  %s282 = scalar_lea.vmem %s1, 225
  %283 = vst.msk [vmem:[%s282] ss:$-24 sm:$0x30] %vm277, %v276
  %s284 = scalar_lea.vmem %s1, 321
  %285 = vst.msk [vmem:[%s284] ss:$-24 sm:$0xc0] %vm277, %v276
  %s286 = scalar_lea.vmem %s0, 8
  %v287 = vld.sshfl [vmem:[%s286] sm:$0xff pattern:$0x67452301]
  %288 = vrot.lane.b32.xlu0 %v287, 119
  %v289 = vpop.permute.xlu0 %288
  %vm290 = vcmask 7168
  %s291 = scalar_lea.vmem %s1, 225
  %292 = vst.msk [vmem:[%s291] ss:$-24 sm:$0x3] %vm290, %v289
  %s293 = scalar_lea.vmem %s1, 321
  %294 = vst.msk [vmem:[%s293] ss:$-24 sm:$0xc] %vm290, %v289
  %s295 = scalar_lea.vmem %s1, 417
  %296 = vst.msk [vmem:[%s295] ss:$-24 sm:$0x30] %vm290, %v289
  %s297 = scalar_lea.vmem %s1, 513
  %298 = vst.msk [vmem:[%s297] ss:$-24 sm:$0xc0] %vm290, %v289
  %s299 = scalar_lea.vmem %s0, 16
  %v300 = vld [vmem:[%s299] sm:$0x1]
  %301 = vrot.lane.b32.xlu0 %v300, 119
  %v302 = vpop.permute.xlu0 %301
  %vm303 = vcmask 7168
  %s304 = scalar_lea.vmem %s1, 393
  %305 = vst.msk [vmem:[%s304] sm:$0x1] %vm303, %v302
  %v306 = vld.sshfl [vmem:[%s0] sm:$0xff pattern:$0x67452301]
  %307 = vrot.lane.b32.xlu0 %v306, 118
  %v308 = vpop.permute.xlu0 %307
  %vm309 = vcmask 7168
  %s310 = scalar_lea.vmem %s1, 34
  %311 = vst.msk [vmem:[%s310] ss:$-24 sm:$0x3] %vm309, %v308
  %s312 = scalar_lea.vmem %s1, 130
  %313 = vst.msk [vmem:[%s312] ss:$-24 sm:$0xc] %vm309, %v308
  %s314 = scalar_lea.vmem %s1, 226
  %315 = vst.msk [vmem:[%s314] ss:$-24 sm:$0x30] %vm309, %v308
  %s316 = scalar_lea.vmem %s1, 322
  %317 = vst.msk [vmem:[%s316] ss:$-24 sm:$0xc0] %vm309, %v308
  %s318 = scalar_lea.vmem %s0, 8
  %v319 = vld.sshfl [vmem:[%s318] sm:$0xff pattern:$0x67452301]
  %320 = vrot.lane.b32.xlu0 %v319, 118
  %v321 = vpop.permute.xlu0 %320
  %vm322 = vcmask 7168
  %s323 = scalar_lea.vmem %s1, 226
  %324 = vst.msk [vmem:[%s323] ss:$-24 sm:$0x3] %vm322, %v321
  %s325 = scalar_lea.vmem %s1, 322
  %326 = vst.msk [vmem:[%s325] ss:$-24 sm:$0xc] %vm322, %v321
  %s327 = scalar_lea.vmem %s1, 418
  %328 = vst.msk [vmem:[%s327] ss:$-24 sm:$0x30] %vm322, %v321
  %s329 = scalar_lea.vmem %s1, 514
  %330 = vst.msk [vmem:[%s329] ss:$-24 sm:$0xc0] %vm322, %v321
  %s331 = scalar_lea.vmem %s0, 16
  %v332 = vld [vmem:[%s331] sm:$0x1]
  %333 = vrot.lane.b32.xlu0 %v332, 118
  %v334 = vpop.permute.xlu0 %333
  %vm335 = vcmask 7168
  %s336 = scalar_lea.vmem %s1, 394
  %337 = vst.msk [vmem:[%s336] sm:$0x1] %vm335, %v334
  %v338 = vld.sshfl [vmem:[%s0] sm:$0xff pattern:$0x67452301]
  %339 = vrot.lane.b32.xlu0 %v338, 117
  %v340 = vpop.permute.xlu0 %339
  %vm341 = vcmask 7168
  %s342 = scalar_lea.vmem %s1, 35
  %343 = vst.msk [vmem:[%s342] ss:$-24 sm:$0x3] %vm341, %v340
  %s344 = scalar_lea.vmem %s1, 131
  %345 = vst.msk [vmem:[%s344] ss:$-24 sm:$0xc] %vm341, %v340
  %s346 = scalar_lea.vmem %s1, 227
  %347 = vst.msk [vmem:[%s346] ss:$-24 sm:$0x30] %vm341, %v340
  %s348 = scalar_lea.vmem %s1, 323
  %349 = vst.msk [vmem:[%s348] ss:$-24 sm:$0xc0] %vm341, %v340
  %s350 = scalar_lea.vmem %s0, 8
  %v351 = vld.sshfl [vmem:[%s350] sm:$0xff pattern:$0x67452301]
  %352 = vrot.lane.b32.xlu0 %v351, 117
  %v353 = vpop.permute.xlu0 %352
  %vm354 = vcmask 7168
  %s355 = scalar_lea.vmem %s1, 227
  %356 = vst.msk [vmem:[%s355] ss:$-24 sm:$0x3] %vm354, %v353
  %s357 = scalar_lea.vmem %s1, 323
  %358 = vst.msk [vmem:[%s357] ss:$-24 sm:$0xc] %vm354, %v353
  %s359 = scalar_lea.vmem %s1, 419
  %360 = vst.msk [vmem:[%s359] ss:$-24 sm:$0x30] %vm354, %v353
  %s361 = scalar_lea.vmem %s1, 515
  %362 = vst.msk [vmem:[%s361] ss:$-24 sm:$0xc0] %vm354, %v353
  %s363 = scalar_lea.vmem %s0, 16
  %v364 = vld [vmem:[%s363] sm:$0x1]
  %365 = vrot.lane.b32.xlu0 %v364, 117
  %v366 = vpop.permute.xlu0 %365
  %vm367 = vcmask 7168
  %s368 = scalar_lea.vmem %s1, 395
  %369 = vst.msk [vmem:[%s368] sm:$0x1] %vm367, %v366
  %v370 = vld.sshfl [vmem:[%s0] sm:$0xff pattern:$0x67452301]
  %371 = vrot.lane.b32.xlu0 %v370, 116
  %v372 = vpop.permute.xlu0 %371
  %vm373 = vcmask 7168
  %s374 = scalar_lea.vmem %s1, 36
  %375 = vst.msk [vmem:[%s374] ss:$-24 sm:$0x3] %vm373, %v372
  %s376 = scalar_lea.vmem %s1, 132
  %377 = vst.msk [vmem:[%s376] ss:$-24 sm:$0xc] %vm373, %v372
  %s378 = scalar_lea.vmem %s1, 228
  %379 = vst.msk [vmem:[%s378] ss:$-24 sm:$0x30] %vm373, %v372
  %s380 = scalar_lea.vmem %s1, 324
  %381 = vst.msk [vmem:[%s380] ss:$-24 sm:$0xc0] %vm373, %v372
  %s382 = scalar_lea.vmem %s0, 8
  %v383 = vld.sshfl [vmem:[%s382] sm:$0xff pattern:$0x67452301]
  %384 = vrot.lane.b32.xlu0 %v383, 116
  %v385 = vpop.permute.xlu0 %384
  %vm386 = vcmask 7168
  %s387 = scalar_lea.vmem %s1, 228
  %388 = vst.msk [vmem:[%s387] ss:$-24 sm:$0x3] %vm386, %v385
  %s389 = scalar_lea.vmem %s1, 324
  %390 = vst.msk [vmem:[%s389] ss:$-24 sm:$0xc] %vm386, %v385
  %s391 = scalar_lea.vmem %s1, 420
  %392 = vst.msk [vmem:[%s391] ss:$-24 sm:$0x30] %vm386, %v385
  %s393 = scalar_lea.vmem %s1, 516
  %394 = vst.msk [vmem:[%s393] ss:$-24 sm:$0xc0] %vm386, %v385
  %s395 = scalar_lea.vmem %s0, 16
  %v396 = vld [vmem:[%s395] sm:$0x1]
  %397 = vrot.lane.b32.xlu0 %v396, 116
  %v398 = vpop.permute.xlu0 %397
  %vm399 = vcmask 7168
  %s400 = scalar_lea.vmem %s1, 396
  %401 = vst.msk [vmem:[%s400] sm:$0x1] %vm399, %v398
  %v402 = vld.sshfl [vmem:[%s0] sm:$0xff pattern:$0x67452301]
  %403 = vrot.lane.b32.xlu0 %v402, 115
  %v404 = vpop.permute.xlu0 %403
  %vm405 = vcmask 7168
  %s406 = scalar_lea.vmem %s1, 37
  %407 = vst.msk [vmem:[%s406] ss:$-24 sm:$0x3] %vm405, %v404
  %s408 = scalar_lea.vmem %s1, 133
  %409 = vst.msk [vmem:[%s408] ss:$-24 sm:$0xc] %vm405, %v404
  %s410 = scalar_lea.vmem %s1, 229
  %411 = vst.msk [vmem:[%s410] ss:$-24 sm:$0x30] %vm405, %v404
  %s412 = scalar_lea.vmem %s1, 325
  %413 = vst.msk [vmem:[%s412] ss:$-24 sm:$0xc0] %vm405, %v404
  %s414 = scalar_lea.vmem %s0, 8
  %v415 = vld.sshfl [vmem:[%s414] sm:$0xff pattern:$0x67452301]
  %416 = vrot.lane.b32.xlu0 %v415, 115
  %v417 = vpop.permute.xlu0 %416
  %vm418 = vcmask 7168
  %s419 = scalar_lea.vmem %s1, 229
  %420 = vst.msk [vmem:[%s419] ss:$-24 sm:$0x3] %vm418, %v417
  %s421 = scalar_lea.vmem %s1, 325
  %422 = vst.msk [vmem:[%s421] ss:$-24 sm:$0xc] %vm418, %v417
  %s423 = scalar_lea.vmem %s1, 421
  %424 = vst.msk [vmem:[%s423] ss:$-24 sm:$0x30] %vm418, %v417
  %s425 = scalar_lea.vmem %s1, 517
  %426 = vst.msk [vmem:[%s425] ss:$-24 sm:$0xc0] %vm418, %v417
  %s427 = scalar_lea.vmem %s0, 16
  %v428 = vld [vmem:[%s427] sm:$0x1]
  %429 = vrot.lane.b32.xlu0 %v428, 115
  %v430 = vpop.permute.xlu0 %429
  %vm431 = vcmask 7168
  %s432 = scalar_lea.vmem %s1, 397
  %433 = vst.msk [vmem:[%s432] sm:$0x1] %vm431, %v430
  %v434 = vld.sshfl [vmem:[%s0] sm:$0xff pattern:$0x67452301]
  %435 = vrot.lane.b32.xlu0 %v434, 114
  %v436 = vpop.permute.xlu0 %435
  %vm437 = vcmask 7168
  %s438 = scalar_lea.vmem %s1, 38
  %439 = vst.msk [vmem:[%s438] ss:$-24 sm:$0x3] %vm437, %v436
  %s440 = scalar_lea.vmem %s1, 134
  %441 = vst.msk [vmem:[%s440] ss:$-24 sm:$0xc] %vm437, %v436
  %s442 = scalar_lea.vmem %s1, 230
  %443 = vst.msk [vmem:[%s442] ss:$-24 sm:$0x30] %vm437, %v436
  %s444 = scalar_lea.vmem %s1, 326
  %445 = vst.msk [vmem:[%s444] ss:$-24 sm:$0xc0] %vm437, %v436
  %s446 = scalar_lea.vmem %s0, 8
  %v447 = vld.sshfl [vmem:[%s446] sm:$0xff pattern:$0x67452301]
  %448 = vrot.lane.b32.xlu0 %v447, 114
  %v449 = vpop.permute.xlu0 %448
  %vm450 = vcmask 7168
  %s451 = scalar_lea.vmem %s1, 230
  %452 = vst.msk [vmem:[%s451] ss:$-24 sm:$0x3] %vm450, %v449
  %s453 = scalar_lea.vmem %s1, 326
  %454 = vst.msk [vmem:[%s453] ss:$-24 sm:$0xc] %vm450, %v449
  %s455 = scalar_lea.vmem %s1, 422
  %456 = vst.msk [vmem:[%s455] ss:$-24 sm:$0x30] %vm450, %v449
  %s457 = scalar_lea.vmem %s1, 518
  %458 = vst.msk [vmem:[%s457] ss:$-24 sm:$0xc0] %vm450, %v449
  %s459 = scalar_lea.vmem %s0, 16
  %v460 = vld [vmem:[%s459] sm:$0x1]
  %461 = vrot.lane.b32.xlu0 %v460, 114
  %v462 = vpop.permute.xlu0 %461
  %vm463 = vcmask 7168
  %s464 = scalar_lea.vmem %s1, 398
  %465 = vst.msk [vmem:[%s464] sm:$0x1] %vm463, %v462
  %v466 = vld.sshfl [vmem:[%s0] sm:$0xff pattern:$0x67452301]
  %467 = vrot.lane.b32.xlu0 %v466, 113
  %v468 = vpop.permute.xlu0 %467
  %vm469 = vcmask 7168
  %s470 = scalar_lea.vmem %s1, 39
  %471 = vst.msk [vmem:[%s470] ss:$-24 sm:$0x3] %vm469, %v468
  %s472 = scalar_lea.vmem %s1, 135
  %473 = vst.msk [vmem:[%s472] ss:$-24 sm:$0xc] %vm469, %v468
  %s474 = scalar_lea.vmem %s1, 231
  %475 = vst.msk [vmem:[%s474] ss:$-24 sm:$0x30] %vm469, %v468
  %s476 = scalar_lea.vmem %s1, 327
  %477 = vst.msk [vmem:[%s476] ss:$-24 sm:$0xc0] %vm469, %v468
  %s478 = scalar_lea.vmem %s0, 8
  %v479 = vld.sshfl [vmem:[%s478] sm:$0xff pattern:$0x67452301]
  %480 = vrot.lane.b32.xlu0 %v479, 113
  %v481 = vpop.permute.xlu0 %480
  %vm482 = vcmask 7168
  %s483 = scalar_lea.vmem %s1, 231
  %484 = vst.msk [vmem:[%s483] ss:$-24 sm:$0x3] %vm482, %v481
  %s485 = scalar_lea.vmem %s1, 327
  %486 = vst.msk [vmem:[%s485] ss:$-24 sm:$0xc] %vm482, %v481
  %s487 = scalar_lea.vmem %s1, 423
  %488 = vst.msk [vmem:[%s487] ss:$-24 sm:$0x30] %vm482, %v481
  %s489 = scalar_lea.vmem %s1, 519
  %490 = vst.msk [vmem:[%s489] ss:$-24 sm:$0xc0] %vm482, %v481
  %s491 = scalar_lea.vmem %s0, 16
  %v492 = vld [vmem:[%s491] sm:$0x1]
  %493 = vrot.lane.b32.xlu0 %v492, 113
  %v494 = vpop.permute.xlu0 %493
  %vm495 = vcmask 7168
  %s496 = scalar_lea.vmem %s1, 399
  %497 = vst.msk [vmem:[%s496] sm:$0x1] %vm495, %v494
  %v498 = vld.sshfl [vmem:[%s0] sm:$0xff pattern:$0x74563012]
  %499 = vrot.lane.b32.xlu0 %v498, 112
  %v500 = vpop.permute.xlu0 %499
  %vm501 = vcmask 7168
  %s502 = scalar_lea.vmem %s1, 64
  %503 = vst.msk [vmem:[%s502] ss:$-24 sm:$0x7] %vm501, %v500
  %s504 = scalar_lea.vmem %s1, 4294967168
  %505 = vst.msk [vmem:[%s504] ss:$72 sm:$0x18] %vm501, %v500
  %s506 = scalar_lea.vmem %s1, 256
  %507 = vst.msk [vmem:[%s506] ss:$-24 sm:$0x60] %vm501, %v500
  %s508 = scalar_lea.vmem %s1, 177
  %509 = vst.msk [vmem:[%s508] sm:$0x80] %vm501, %v500
  %s510 = scalar_lea.vmem %s0, 8
  %v511 = vld.sshfl [vmem:[%s510] sm:$0xff pattern:$0x74563012]
  %512 = vrot.lane.b32.xlu0 %v511, 112
  %v513 = vpop.permute.xlu0 %512
  %vm514 = vcmask 7168
  %s515 = scalar_lea.vmem %s1, 256
  %516 = vst.msk [vmem:[%s515] ss:$-24 sm:$0x7] %vm514, %v513
  %s517 = scalar_lea.vmem %s1, 64
  %518 = vst.msk [vmem:[%s517] ss:$72 sm:$0x18] %vm514, %v513
  %s519 = scalar_lea.vmem %s1, 448
  %520 = vst.msk [vmem:[%s519] ss:$-24 sm:$0x60] %vm514, %v513
  %s521 = scalar_lea.vmem %s1, 369
  %522 = vst.msk [vmem:[%s521] sm:$0x80] %vm514, %v513
  %s523 = scalar_lea.vmem %s0, 16
  %v524 = vld [vmem:[%s523] sm:$0x1]
  %525 = vrot.lane.b32.xlu0 %v524, 112
  %v526 = vpop.permute.xlu0 %525
  %vm527 = vcmask 7168
  %s528 = scalar_lea.vmem %s1, 400
  %529 = vst.msk [vmem:[%s528] sm:$0x1] %vm527, %v526
  %v530 = vld.sshfl [vmem:[%s0] sm:$0xff pattern:$0x74563012]
  %531 = vrot.lane.b32.xlu0 %v530, 111
  %v532 = vpop.permute.xlu0 %531
  %vm533 = vcmask 7168
  %s534 = scalar_lea.vmem %s1, 65
  %535 = vst.msk [vmem:[%s534] ss:$-24 sm:$0x7] %vm533, %v532
  %s536 = scalar_lea.vmem %s1, 4294967169
  %537 = vst.msk [vmem:[%s536] ss:$72 sm:$0x18] %vm533, %v532
  %s538 = scalar_lea.vmem %s1, 257
  %539 = vst.msk [vmem:[%s538] ss:$-24 sm:$0x60] %vm533, %v532
  %s540 = scalar_lea.vmem %s1, 178
  %541 = vst.msk [vmem:[%s540] sm:$0x80] %vm533, %v532
  %s542 = scalar_lea.vmem %s0, 8
  %v543 = vld.sshfl [vmem:[%s542] sm:$0xff pattern:$0x74563012]
  %544 = vrot.lane.b32.xlu0 %v543, 111
  %v545 = vpop.permute.xlu0 %544
  %vm546 = vcmask 7168
  %s547 = scalar_lea.vmem %s1, 257
  %548 = vst.msk [vmem:[%s547] ss:$-24 sm:$0x7] %vm546, %v545
  %s549 = scalar_lea.vmem %s1, 65
  %550 = vst.msk [vmem:[%s549] ss:$72 sm:$0x18] %vm546, %v545
  %s551 = scalar_lea.vmem %s1, 449
  %552 = vst.msk [vmem:[%s551] ss:$-24 sm:$0x60] %vm546, %v545
  %s553 = scalar_lea.vmem %s1, 370
  %554 = vst.msk [vmem:[%s553] sm:$0x80] %vm546, %v545
  %s555 = scalar_lea.vmem %s0, 16
  %v556 = vld [vmem:[%s555] sm:$0x1]
  %557 = vrot.lane.b32.xlu0 %v556, 111
  %v558 = vpop.permute.xlu0 %557
  %vm559 = vcmask 7168
  %s560 = scalar_lea.vmem %s1, 401
  %561 = vst.msk [vmem:[%s560] sm:$0x1] %vm559, %v558
  %v562 = vld.sshfl [vmem:[%s0] sm:$0xff pattern:$0x74563012]
  %563 = vrot.lane.b32.xlu0 %v562, 110
  %v564 = vpop.permute.xlu0 %563
  %vm565 = vcmask 7168
  %s566 = scalar_lea.vmem %s1, 66
  %567 = vst.msk [vmem:[%s566] ss:$-24 sm:$0x7] %vm565, %v564
  %s568 = scalar_lea.vmem %s1, 4294967170
  %569 = vst.msk [vmem:[%s568] ss:$72 sm:$0x18] %vm565, %v564
  %s570 = scalar_lea.vmem %s1, 258
  %571 = vst.msk [vmem:[%s570] ss:$-24 sm:$0x60] %vm565, %v564
  %s572 = scalar_lea.vmem %s1, 179
  %573 = vst.msk [vmem:[%s572] sm:$0x80] %vm565, %v564
  %s574 = scalar_lea.vmem %s0, 8
  %v575 = vld.sshfl [vmem:[%s574] sm:$0xff pattern:$0x74563012]
  %576 = vrot.lane.b32.xlu0 %v575, 110
  %v577 = vpop.permute.xlu0 %576
  %vm578 = vcmask 7168
  %s579 = scalar_lea.vmem %s1, 258
  %580 = vst.msk [vmem:[%s579] ss:$-24 sm:$0x7] %vm578, %v577
  %s581 = scalar_lea.vmem %s1, 66
  %582 = vst.msk [vmem:[%s581] ss:$72 sm:$0x18] %vm578, %v577
  %s583 = scalar_lea.vmem %s1, 450
  %584 = vst.msk [vmem:[%s583] ss:$-24 sm:$0x60] %vm578, %v577
  %s585 = scalar_lea.vmem %s1, 371
  %586 = vst.msk [vmem:[%s585] sm:$0x80] %vm578, %v577
  %s587 = scalar_lea.vmem %s0, 16
  %v588 = vld [vmem:[%s587] sm:$0x1]
  %589 = vrot.lane.b32.xlu0 %v588, 110
  %v590 = vpop.permute.xlu0 %589
  %vm591 = vcmask 7168
  %s592 = scalar_lea.vmem %s1, 402
  %593 = vst.msk [vmem:[%s592] sm:$0x1] %vm591, %v590
  %v594 = vld.sshfl [vmem:[%s0] sm:$0xff pattern:$0x74563012]
  %595 = vrot.lane.b32.xlu0 %v594, 109
  %v596 = vpop.permute.xlu0 %595
  %vm597 = vcmask 7168
  %s598 = scalar_lea.vmem %s1, 67
  %599 = vst.msk [vmem:[%s598] ss:$-24 sm:$0x7] %vm597, %v596
  %s600 = scalar_lea.vmem %s1, 4294967171
  %601 = vst.msk [vmem:[%s600] ss:$72 sm:$0x18] %vm597, %v596
  %s602 = scalar_lea.vmem %s1, 259
  %603 = vst.msk [vmem:[%s602] ss:$-24 sm:$0x60] %vm597, %v596
  %s604 = scalar_lea.vmem %s1, 180
  %605 = vst.msk [vmem:[%s604] sm:$0x80] %vm597, %v596
  %s606 = scalar_lea.vmem %s0, 8
  %v607 = vld.sshfl [vmem:[%s606] sm:$0xff pattern:$0x74563012]
  %608 = vrot.lane.b32.xlu0 %v607, 109
  %v609 = vpop.permute.xlu0 %608
  %vm610 = vcmask 7168
  %s611 = scalar_lea.vmem %s1, 259
  %612 = vst.msk [vmem:[%s611] ss:$-24 sm:$0x7] %vm610, %v609
  %s613 = scalar_lea.vmem %s1, 67
  %614 = vst.msk [vmem:[%s613] ss:$72 sm:$0x18] %vm610, %v609
  %s615 = scalar_lea.vmem %s1, 451
  %616 = vst.msk [vmem:[%s615] ss:$-24 sm:$0x60] %vm610, %v609
  %s617 = scalar_lea.vmem %s1, 372
  %618 = vst.msk [vmem:[%s617] sm:$0x80] %vm610, %v609
  %s619 = scalar_lea.vmem %s0, 16
  %v620 = vld [vmem:[%s619] sm:$0x1]
  %621 = vrot.lane.b32.xlu0 %v620, 109
  %v622 = vpop.permute.xlu0 %621
  %vm623 = vcmask 7168
  %s624 = scalar_lea.vmem %s1, 403
  %625 = vst.msk [vmem:[%s624] sm:$0x1] %vm623, %v622
  %v626 = vld.sshfl [vmem:[%s0] sm:$0xff pattern:$0x74563012]
  %627 = vrot.lane.b32.xlu0 %v626, 108
  %v628 = vpop.permute.xlu0 %627
  %vm629 = vcmask 7168
  %s630 = scalar_lea.vmem %s1, 68
  %631 = vst.msk [vmem:[%s630] ss:$-24 sm:$0x7] %vm629, %v628
  %s632 = scalar_lea.vmem %s1, 4294967172
  %633 = vst.msk [vmem:[%s632] ss:$72 sm:$0x18] %vm629, %v628
  %s634 = scalar_lea.vmem %s1, 260
  %635 = vst.msk [vmem:[%s634] ss:$-24 sm:$0x60] %vm629, %v628
  %s636 = scalar_lea.vmem %s1, 181
  %637 = vst.msk [vmem:[%s636] sm:$0x80] %vm629, %v628
  %s638 = scalar_lea.vmem %s0, 8
  %v639 = vld.sshfl [vmem:[%s638] sm:$0xff pattern:$0x74563012]
  %640 = vrot.lane.b32.xlu0 %v639, 108
  %v641 = vpop.permute.xlu0 %640
  %vm642 = vcmask 7168
  %s643 = scalar_lea.vmem %s1, 260
  %644 = vst.msk [vmem:[%s643] ss:$-24 sm:$0x7] %vm642, %v641
  %s645 = scalar_lea.vmem %s1, 68
  %646 = vst.msk [vmem:[%s645] ss:$72 sm:$0x18] %vm642, %v641
  %s647 = scalar_lea.vmem %s1, 452
  %648 = vst.msk [vmem:[%s647] ss:$-24 sm:$0x60] %vm642, %v641
  %s649 = scalar_lea.vmem %s1, 373
  %650 = vst.msk [vmem:[%s649] sm:$0x80] %vm642, %v641
  %s651 = scalar_lea.vmem %s0, 16
  %v652 = vld [vmem:[%s651] sm:$0x1]
  %653 = vrot.lane.b32.xlu0 %v652, 108
  %v654 = vpop.permute.xlu0 %653
  %vm655 = vcmask 7168
  %s656 = scalar_lea.vmem %s1, 404
  %657 = vst.msk [vmem:[%s656] sm:$0x1] %vm655, %v654
  %v658 = vld.sshfl [vmem:[%s0] sm:$0xff pattern:$0x74563012]
  %659 = vrot.lane.b32.xlu0 %v658, 107
  %v660 = vpop.permute.xlu0 %659
  %vm661 = vcmask 7168
  %s662 = scalar_lea.vmem %s1, 69
  %663 = vst.msk [vmem:[%s662] ss:$-24 sm:$0x7] %vm661, %v660
  %s664 = scalar_lea.vmem %s1, 4294967173
  %665 = vst.msk [vmem:[%s664] ss:$72 sm:$0x18] %vm661, %v660
  %s666 = scalar_lea.vmem %s1, 261
  %667 = vst.msk [vmem:[%s666] ss:$-24 sm:$0x60] %vm661, %v660
  %s668 = scalar_lea.vmem %s1, 182
  %669 = vst.msk [vmem:[%s668] sm:$0x80] %vm661, %v660
  %s670 = scalar_lea.vmem %s0, 8
  %v671 = vld.sshfl [vmem:[%s670] sm:$0xff pattern:$0x74563012]
  %672 = vrot.lane.b32.xlu0 %v671, 107
  %v673 = vpop.permute.xlu0 %672
  %vm674 = vcmask 7168
  %s675 = scalar_lea.vmem %s1, 261
  %676 = vst.msk [vmem:[%s675] ss:$-24 sm:$0x7] %vm674, %v673
  %s677 = scalar_lea.vmem %s1, 69
  %678 = vst.msk [vmem:[%s677] ss:$72 sm:$0x18] %vm674, %v673
  %s679 = scalar_lea.vmem %s1, 453
  %680 = vst.msk [vmem:[%s679] ss:$-24 sm:$0x60] %vm674, %v673
  %s681 = scalar_lea.vmem %s1, 374
  %682 = vst.msk [vmem:[%s681] sm:$0x80] %vm674, %v673
  %s683 = scalar_lea.vmem %s0, 16
  %v684 = vld [vmem:[%s683] sm:$0x1]
  %685 = vrot.lane.b32.xlu0 %v684, 107
  %v686 = vpop.permute.xlu0 %685
  %vm687 = vcmask 7168
  %s688 = scalar_lea.vmem %s1, 405
  %689 = vst.msk [vmem:[%s688] sm:$0x1] %vm687, %v686
  %v690 = vld.sshfl [vmem:[%s0] sm:$0xff pattern:$0x74563012]
  %691 = vrot.lane.b32.xlu0 %v690, 106
  %v692 = vpop.permute.xlu0 %691
  %vm693 = vcmask 7168
  %s694 = scalar_lea.vmem %s1, 70
  %695 = vst.msk [vmem:[%s694] ss:$-24 sm:$0x7] %vm693, %v692
  %s696 = scalar_lea.vmem %s1, 4294967174
  %697 = vst.msk [vmem:[%s696] ss:$72 sm:$0x18] %vm693, %v692
  %s698 = scalar_lea.vmem %s1, 262
  %699 = vst.msk [vmem:[%s698] ss:$-24 sm:$0x60] %vm693, %v692
  %s700 = scalar_lea.vmem %s1, 183
  %701 = vst.msk [vmem:[%s700] sm:$0x80] %vm693, %v692
  %s702 = scalar_lea.vmem %s0, 8
  %v703 = vld.sshfl [vmem:[%s702] sm:$0xff pattern:$0x74563012]
  %704 = vrot.lane.b32.xlu0 %v703, 106
  %v705 = vpop.permute.xlu0 %704
  %vm706 = vcmask 7168
  %s707 = scalar_lea.vmem %s1, 262
  %708 = vst.msk [vmem:[%s707] ss:$-24 sm:$0x7] %vm706, %v705
  %s709 = scalar_lea.vmem %s1, 70
  %710 = vst.msk [vmem:[%s709] ss:$72 sm:$0x18] %vm706, %v705
  %s711 = scalar_lea.vmem %s1, 454
  %712 = vst.msk [vmem:[%s711] ss:$-24 sm:$0x60] %vm706, %v705
  %s713 = scalar_lea.vmem %s1, 375
  %714 = vst.msk [vmem:[%s713] sm:$0x80] %vm706, %v705
  %s715 = scalar_lea.vmem %s0, 16
  %v716 = vld [vmem:[%s715] sm:$0x1]
  %717 = vrot.lane.b32.xlu0 %v716, 106
  %v718 = vpop.permute.xlu0 %717
  %vm719 = vcmask 7168
  %s720 = scalar_lea.vmem %s1, 406
  %721 = vst.msk [vmem:[%s720] sm:$0x1] %vm719, %v718
  %v722 = vld.sshfl [vmem:[%s0] sm:$0xff pattern:$0x74563012]
  %723 = vrot.lane.b32.xlu0 %v722, 105
  %v724 = vpop.permute.xlu0 %723
  %vm725 = vcmask 7168
  %s726 = scalar_lea.vmem %s1, 71
  %727 = vst.msk [vmem:[%s726] ss:$-24 sm:$0x7] %vm725, %v724
  %s728 = scalar_lea.vmem %s1, 4294967175
  %729 = vst.msk [vmem:[%s728] ss:$72 sm:$0x18] %vm725, %v724
  %s730 = scalar_lea.vmem %s1, 263
  %731 = vst.msk [vmem:[%s730] ss:$-24 sm:$0x60] %vm725, %v724
  %s732 = scalar_lea.vmem %s1, 184
  %733 = vst.msk [vmem:[%s732] sm:$0x80] %vm725, %v724
  %s734 = scalar_lea.vmem %s0, 8
  %v735 = vld.sshfl [vmem:[%s734] sm:$0xff pattern:$0x74563012]
  %736 = vrot.lane.b32.xlu0 %v735, 105
  %v737 = vpop.permute.xlu0 %736
  %vm738 = vcmask 7168
  %s739 = scalar_lea.vmem %s1, 263
  %740 = vst.msk [vmem:[%s739] ss:$-24 sm:$0x7] %vm738, %v737
  %s741 = scalar_lea.vmem %s1, 71
  %742 = vst.msk [vmem:[%s741] ss:$72 sm:$0x18] %vm738, %v737
  %s743 = scalar_lea.vmem %s1, 455
  %744 = vst.msk [vmem:[%s743] ss:$-24 sm:$0x60] %vm738, %v737
  %s745 = scalar_lea.vmem %s1, 376
  %746 = vst.msk [vmem:[%s745] sm:$0x80] %vm738, %v737
  %s747 = scalar_lea.vmem %s0, 16
  %v748 = vld [vmem:[%s747] sm:$0x1]
  %749 = vrot.lane.b32.xlu0 %v748, 105
  %v750 = vpop.permute.xlu0 %749
  %vm751 = vcmask 7168
  %s752 = scalar_lea.vmem %s1, 407
  %753 = vst.msk [vmem:[%s752] sm:$0x1] %vm751, %v750

// kernel: pose_estimator_forward.3
$region0: #{pose_estimator_forward.3}
  #allocation0 [shape = 'u32[]', space=smem, size = 0x4, offset = 0x4, fixed_abs, tag = 'smem constant byte address 0x4 - core index']
  #allocation1 [shape = 'u32[144,128]{1,0:T(1,128)}', space=vmem, size = 0x12000, scoped, tag = 'internal scratch']
  %s0 = inlined_call_operand.vmem [shape: bf16[960,128], index: 0, kind: input, shape index: {}]
  %s1 = inlined_call_operand.vmem [shape: bf16[9,128,128], index: 1, kind: input, shape index: {}]
  %s2 = inlined_call_operand.vmem [shape: f32[1,128], index: 2, kind: input, shape index: {}]
  %s3 = inlined_call_operand.vmem [shape: f32[816,128], index: 3, kind: input, shape index: {}]
  %s4 = inlined_call_operand.vmem [shape: f32[408,1], index: 4, kind: input, shape index: {}]
  %s5 = inlined_call_operand.vmem [shape: f32[2,1,128], index: 5, kind: input, shape index: {}]
  %s6 = inlined_call_operand.vmem [shape: f32[2,1,128], index: 6, kind: output, shape index: {}]
  %s7 = sld [smem:[#allocation0]]
  $region57: #{pose_estimator_forward.3} parent=0
    _
  %s9 = ssub.s32 1, %s7
  %s10 = scalar_select 0, %s9, %s7
  loop: start=0, step=1, limit=4
  $region2: #{pose_estimator_forward.3} parent=0 // loop_pre_header
    _
  $region3: #{pose_estimator_forward.3} parent=0 // loop_header
    %s12 = sphi 0, %s16
    %p13 = scmp.ge.s32.totalorder %s12, 4
    %s22 = sphi 0, %s24
    %s25 = sphi 0, %s22
    %s26 = sphi 0, %s25
    %s42 = sphi 0, %s26
    %s46 = sphi 0, %s46
    %s48 = sphi 0, %s46
    %s49 = sphi 0, %s48
    %s63 = sphi 0, %s49
    %s67 = sphi 0, %s67
    %s69 = sphi 0, %s67
    %s70 = sphi 0, %s69
    %s84 = sphi 0, %s70
    %s90 = sphi 0, %s92
    %s93 = sphi 0, %s90
    %s94 = sphi 0, %s93
    %s110 = sphi 0, %s94
    %s114 = sphi 0, %s114
    %s116 = sphi 0, %s114
    %s117 = sphi 0, %s116
    %s131 = sphi 0, %s117
    %s137 = sphi 0, %s139
    %s140 = sphi 0, %s137
    %s141 = sphi 0, %s140
    %s157 = sphi 0, %s141
    %s163 = sphi 0, %s165
    %s166 = sphi 0, %s163
    %s167 = sphi 0, %s166
    %s183 = sphi 0, %s167
  $region4: #{pose_estimator_forward.3} parent=0 // loop_header_branch
    %15 = sbr.rel (%p13) target = $region8
  $region5: #{pose_estimator_forward.3} parent=0 // loop_body
    %s17 = ssub.s32 %s12, 1
    %s18 = ssub.s32 %s12, 2
    %s19 = sadd.s32 %s12, 1
    %s20 = ssub.s32 %s12, %s19
    %p21 = scmp.eq.s32.totalorder %s20, 0
    %s23 = sadd.s32 %s22, 1
    %s24 = scalar_select %p21, %s22, %s23
    %p27 = pneg %p21
    %p28 = scmp.eq.s32.totalorder %s12, 1
    %p29 = por %p27, %p28
    %p30 = scmp.ne.s32.totalorder %s22, %s25
    %p31 = scmp.eq.s32.totalorder %s12, 0
    %p32 = por %p30, %p31
    %p33 = scmp.ne.s32.totalorder %s22, %s25
    %p34 = scmp.eq.s32.totalorder %s17, 1
    %p35 = por %p33, %p34
    %p36 = scmp.ne.s32.totalorder %s25, %s26
    %p37 = scmp.eq.s32.totalorder %s17, 0
    %p38 = por %p36, %p37
    %p39 = scmp.ne.s32.totalorder %s25, %s26
    %p40 = scmp.eq.s32.totalorder %s18, 1
    %p41 = por %p39, %p40
    %p43 = scmp.ne.s32.totalorder %s26, %s42
    %p44 = scmp.eq.s32.totalorder %s18, 0
    %p45 = por %p43, %p44
    %s47 = sadd.s32 %s46, 1
    %p50 = scmp.eq.s32.totalorder %s12, 1
    %p51 = scmp.ne.s32.totalorder %s46, %s48
    %p52 = scmp.eq.s32.totalorder %s12, 0
    %p53 = por %p51, %p52
    %p54 = scmp.ne.s32.totalorder %s46, %s48
    %p55 = scmp.eq.s32.totalorder %s17, 1
    %p56 = por %p54, %p55
    %p57 = scmp.ne.s32.totalorder %s48, %s49
    %p58 = scmp.eq.s32.totalorder %s17, 0
    %p59 = por %p57, %p58
    %p60 = scmp.ne.s32.totalorder %s48, %s49
    %p61 = scmp.eq.s32.totalorder %s18, 1
    %p62 = por %p60, %p61
    %p64 = scmp.ne.s32.totalorder %s49, %s63
    %p65 = scmp.eq.s32.totalorder %s18, 0
    %p66 = por %p64, %p65
    %s68 = sadd.s32 %s67, 1
    %p71 = scmp.eq.s32.totalorder %s12, 1
    %p72 = scmp.ne.s32.totalorder %s67, %s69
    %p73 = scmp.eq.s32.totalorder %s12, 0
    %p74 = por %p72, %p73
    %p75 = scmp.ne.s32.totalorder %s67, %s69
    %p76 = scmp.eq.s32.totalorder %s17, 1
    %p77 = por %p75, %p76
    %p78 = scmp.ne.s32.totalorder %s69, %s70
    %p79 = scmp.eq.s32.totalorder %s17, 0
    %p80 = por %p78, %p79
    %p81 = scmp.ne.s32.totalorder %s69, %s70
    %p82 = scmp.eq.s32.totalorder %s18, 1
    %p83 = por %p81, %p82
    %p85 = scmp.ne.s32.totalorder %s70, %s84
    %p86 = scmp.eq.s32.totalorder %s18, 0
    %p87 = por %p85, %p86
    %s88 = ssub.s32 %s12, %s19
    %p89 = scmp.eq.s32.totalorder %s88, 0
    %s91 = sadd.s32 %s90, 1
    %s92 = scalar_select %p89, %s90, %s91
    %p95 = pneg %p89
    %p96 = scmp.eq.s32.totalorder %s12, 1
    %p97 = por %p95, %p96
    %p98 = scmp.ne.s32.totalorder %s90, %s93
    %p99 = scmp.eq.s32.totalorder %s12, 0
    %p100 = por %p98, %p99
    %p101 = scmp.ne.s32.totalorder %s90, %s93
    %p102 = scmp.eq.s32.totalorder %s17, 1
    %p103 = por %p101, %p102
    %p104 = scmp.ne.s32.totalorder %s93, %s94
    %p105 = scmp.eq.s32.totalorder %s17, 0
    %p106 = por %p104, %p105
    %p107 = scmp.ne.s32.totalorder %s93, %s94
    %p108 = scmp.eq.s32.totalorder %s18, 1
    %p109 = por %p107, %p108
    %p111 = scmp.ne.s32.totalorder %s94, %s110
    %p112 = scmp.eq.s32.totalorder %s18, 0
    %p113 = por %p111, %p112
    %s115 = sadd.s32 %s114, 1
    %p118 = scmp.eq.s32.totalorder %s12, 1
    %p119 = scmp.ne.s32.totalorder %s114, %s116
    %p120 = scmp.eq.s32.totalorder %s12, 0
    %p121 = por %p119, %p120
    %p122 = scmp.ne.s32.totalorder %s114, %s116
    %p123 = scmp.eq.s32.totalorder %s17, 1
    %p124 = por %p122, %p123
    %p125 = scmp.ne.s32.totalorder %s116, %s117
    %p126 = scmp.eq.s32.totalorder %s17, 0
    %p127 = por %p125, %p126
    %p128 = scmp.ne.s32.totalorder %s116, %s117
    %p129 = scmp.eq.s32.totalorder %s18, 1
    %p130 = por %p128, %p129
    %p132 = scmp.ne.s32.totalorder %s117, %s131
    %p133 = scmp.eq.s32.totalorder %s18, 0
    %p134 = por %p132, %p133
    %s135 = ssub.s32 %s12, %s19
    %p136 = scmp.eq.s32.totalorder %s135, 0
    %s138 = sadd.s32 %s137, 1
    %s139 = scalar_select %p136, %s137, %s138
    %p142 = pneg %p136
    %p143 = scmp.eq.s32.totalorder %s12, 1
    %p144 = por %p142, %p143
    %p145 = scmp.ne.s32.totalorder %s137, %s140
    %p146 = scmp.eq.s32.totalorder %s12, 0
    %p147 = por %p145, %p146
    %p148 = scmp.ne.s32.totalorder %s137, %s140
    %p149 = scmp.eq.s32.totalorder %s17, 1
    %p150 = por %p148, %p149
    %p151 = scmp.ne.s32.totalorder %s140, %s141
    %p152 = scmp.eq.s32.totalorder %s17, 0
    %p153 = por %p151, %p152
    %p154 = scmp.ne.s32.totalorder %s140, %s141
    %p155 = scmp.eq.s32.totalorder %s18, 1
    %p156 = por %p154, %p155
    %p158 = scmp.ne.s32.totalorder %s141, %s157
    %p159 = scmp.eq.s32.totalorder %s18, 0
    %p160 = por %p158, %p159
    %s161 = ssub.s32 %s12, %s19
    %p162 = scmp.eq.s32.totalorder %s161, 0
    %s164 = sadd.s32 %s163, 1
    %s165 = scalar_select %p162, %s163, %s164
    %p168 = pneg %p162
    %p169 = scmp.eq.s32.totalorder %s12, 1
    %p170 = por %p168, %p169
    %p171 = scmp.ne.s32.totalorder %s163, %s166
    %p172 = scmp.eq.s32.totalorder %s12, 0
    %p173 = por %p171, %p172
    %p174 = scmp.ne.s32.totalorder %s163, %s166
    %p175 = scmp.eq.s32.totalorder %s17, 1
    %p176 = por %p174, %p175
    %p177 = scmp.ne.s32.totalorder %s166, %s167
    %p178 = scmp.eq.s32.totalorder %s17, 0
    %p179 = por %p177, %p178
    %p180 = scmp.ne.s32.totalorder %s166, %s167
    %p181 = scmp.eq.s32.totalorder %s18, 1
    %p182 = por %p180, %p181
    %p184 = scmp.ne.s32.totalorder %s167, %s183
    %p185 = scmp.eq.s32.totalorder %s18, 0
    %p186 = por %p184, %p185
    %p187 = scmp.le.s32.totalorder 1, %s12
    %p188 = scmp.lt.s32.totalorder %s12, 3
    %p189 = pnand %p187, %p188
    %p190 = pneg %p189
    // Predicated region
    $region9: #{pose_estimator_forward.3} parent=5 // pred_check
      _
    $region10: #{pose_estimator_forward.3} parent=5 // pred_check_branch
      %192 = sbr.rel (%p189) target = $region12
    $region11: #{pose_estimator_forward.3} parent=5 // pred_region
      %s193 = ssub.s32 %s12, 1
      // Predicated region
      $region13: #{pose_estimator_forward.3} parent=11 // pred_check
        %p194 = pneg %p59
      $region14: #{pose_estimator_forward.3} parent=11 // pred_check_branch
        %196 = sbr.rel (%p194) target = $region16
      $region15: #{pose_estimator_forward.3} parent=11 // pred_region
        _
      $region16: #{pose_estimator_forward.3} parent=11 // pred_fallthru
        _
      // Predicated region
      $region17: #{pose_estimator_forward.3} parent=11 // pred_check
        %p197 = pneg %p80
      $region18: #{pose_estimator_forward.3} parent=11 // pred_check_branch
        %199 = sbr.rel (%p197) target = $region20
      $region19: #{pose_estimator_forward.3} parent=11 // pred_region
        _
      $region20: #{pose_estimator_forward.3} parent=11 // pred_fallthru
        _
      // Predicated region
      $region21: #{pose_estimator_forward.3} parent=11 // pred_check
        %p200 = pneg %p127
      $region22: #{pose_estimator_forward.3} parent=11 // pred_check_branch
        %202 = sbr.rel (%p200) target = $region24
      $region23: #{pose_estimator_forward.3} parent=11 // pred_region
        _
      $region24: #{pose_estimator_forward.3} parent=11 // pred_fallthru
        _
    $region12: #{pose_estimator_forward.3} parent=5 // pred_fallthru
      _
    %p203 = scmp.lt.s32.totalorder %s12, 2
    // Predicated region
    $region25: #{pose_estimator_forward.3} parent=5 // pred_check
      %p204 = pneg %p203
    $region26: #{pose_estimator_forward.3} parent=5 // pred_check_branch
      %206 = sbr.rel (%p204) target = $region28
    $region27: #{pose_estimator_forward.3} parent=5 // pred_region
      // Predicated region
      $region29: #{pose_estimator_forward.3} parent=27 // pred_check
        %p207 = pneg %p32
      $region30: #{pose_estimator_forward.3} parent=27 // pred_check_branch
        %209 = sbr.rel (%p207) target = $region32
      $region31: #{pose_estimator_forward.3} parent=27 // pred_region
        %s210 = smul.u32 60, %s12
        %p211 = scmp.lt.s32.totalorder %s210, 119
        %s212 = scalar_select %p211, %s210, 119
        %s213 = smul.addr %s212, 4
        %s214 = scalar_lea.vmem %s0, %s213
        %s215 = smul.u32 60, %s12
      $region32: #{pose_estimator_forward.3} parent=27 // pred_fallthru
        _
      // Predicated region
      $region33: #{pose_estimator_forward.3} parent=27 // pred_check
        %p216 = pneg %p100
      $region34: #{pose_estimator_forward.3} parent=27 // pred_check_branch
        %218 = sbr.rel (%p216) target = $region36
      $region35: #{pose_estimator_forward.3} parent=27 // pred_region
        %s219 = smul.u32 51, %s12
        %p220 = scmp.lt.s32.totalorder %s219, 101
        %s221 = scalar_select %p220, %s219, 101
        %s222 = smul.addr %s221, 8
        %s223 = scalar_lea.vmem %s3, %s222
        %s224 = smul.u32 51, %s12
      $region36: #{pose_estimator_forward.3} parent=27 // pred_fallthru
        _
      // Predicated region
      $region37: #{pose_estimator_forward.3} parent=27 // pred_check
        %p225 = pneg %p147
      $region38: #{pose_estimator_forward.3} parent=27 // pred_check_branch
        %227 = sbr.rel (%p225) target = $region40
      $region39: #{pose_estimator_forward.3} parent=27 // pred_region
        %p228 = scmp.lt.s32.totalorder %s12, 1
        %s229 = scalar_select %p228, %s12, 1
        %s230 = scalar_lea.vmem %s5, %s229
      $region40: #{pose_estimator_forward.3} parent=27 // pred_fallthru
        _
    $region28: #{pose_estimator_forward.3} parent=5 // pred_fallthru
      _
    %p231 = scmp.le.s32.totalorder 1, %s12
    %p232 = scmp.lt.s32.totalorder %s12, 3
    %p233 = pnand %p231, %p232
    %p234 = pneg %p233
    // Predicated region
    $region41: #{pose_estimator_forward.3} parent=5 // pred_check
      _
    $region42: #{pose_estimator_forward.3} parent=5 // pred_check_branch
      %236 = sbr.rel (%p233) target = $region44
    $region43: #{pose_estimator_forward.3} parent=5 // pred_region
      %s237 = ssub.s32 %s12, 1
      %s238 = smul.u32 60, %s17
      %p239 = scmp.lt.s32.totalorder %s238, 119
      %s240 = scalar_select %p239, %s238, 119
      %s241 = smul.addr %s240, 4
      %s242 = scalar_lea.vmem %s0, %s241
      %p243 = pneg %p38
      %p244 = pneg %p35
      %p245 = pneg %p59
      %p246 = pneg %p56
      %p247 = pneg %p80
      %p248 = pneg %p77
      %s249 = smul.u32 51, %s17
      %p250 = scmp.lt.s32.totalorder %s249, 101
      %s251 = scalar_select %p250, %s249, 101
      %s252 = smul.addr %s251, 8
      %s253 = scalar_lea.vmem %s3, %s252
      %p254 = pneg %p106
      %p255 = pneg %p103
      %p256 = pneg %p127
      %p257 = pneg %p124
      %p258 = scmp.lt.s32.totalorder %s17, 1
      %s259 = scalar_select %p258, %s17, 1
      %s260 = scalar_lea.vmem %s5, %s259
      %p261 = pneg %p153
      %p262 = pneg %p150
      %p263 = pneg %p179
      %p264 = pneg %p176
      %p265 = scmp.lt.s32.totalorder %s17, 1
      %s266 = scalar_select %p265, %s17, 1
      %s267 = scalar_lea.vmem %s6, %s266
      %s268 = smul.u32 60, %s17
      %p269 = scmp.lt.s32.totalorder %s268, 119
      %s270 = scalar_select %p269, %s268, 119
      %s271 = smul.addr %s270, 4
      %s272 = scalar_lea.vmem %s0, %s271
      %s273 = smul.u32 60, %s17
      %s274 = smul.u32 51, %s17
      %p275 = scmp.lt.s32.totalorder %s274, 101
      %s276 = scalar_select %p275, %s274, 101
      %s277 = smul.addr %s276, 8
      %s278 = scalar_lea.vmem %s3, %s277
      %s279 = smul.u32 51, %s17
      %p280 = scmp.lt.s32.totalorder %s17, 1
      %s281 = scalar_select %p280, %s17, 1
      %s282 = scalar_lea.vmem %s5, %s281
      %p283 = scmp.lt.s32.totalorder %s17, 1
      %s284 = scalar_select %p283, %s17, 1
      %s285 = scalar_lea.vmem %s6, %s284
      %v287 = vld [vmem:[%s272] sm:$0xf]
      %v288 = vld [vmem:[%s272 + $0x4] sm:$0xf]
      %v289 = vld [vmem:[%s272 + $0x8] sm:$0xf]
      %v290 = vld [vmem:[%s272 + $0xc] sm:$0xf]
      %v291 = vld [vmem:[%s272 + $0x10] sm:$0xf]
      %v292 = vld [vmem:[%s272 + $0x14] sm:$0xf]
      %v293 = vld [vmem:[%s272 + $0x18] sm:$0xf]
      %v294 = vld [vmem:[%s272 + $0x1c] sm:$0xf]
      %v295 = vld [vmem:[%s272 + $0x20] sm:$0xf]
      %v296 = vld [vmem:[%s272 + $0x24] sm:$0xf]
      %v297 = vld [vmem:[%s272 + $0x28] sm:$0xf]
      %v298 = vld [vmem:[%s272 + $0x2c] sm:$0xf]
      %v299 = vld [vmem:[%s272 + $0x30] sm:$0xf]
      %v300 = vld [vmem:[%s272 + $0x34] sm:$0xf]
      %v301 = vld [vmem:[%s272 + $0x38] sm:$0xf]
      %v302 = vld [vmem:[%s272 + $0x3c] sm:$0xf]
      %v303 = vld [vmem:[%s272 + $0x40] sm:$0xf]
      %v304 = vld [vmem:[%s272 + $0x44] sm:$0xf]
      %v305 = vld [vmem:[%s272 + $0x48] sm:$0xf]
      %v306 = vld [vmem:[%s272 + $0x4c] sm:$0xf]
      %v307 = vld [vmem:[%s272 + $0x50] sm:$0xf]
      %v308 = vld [vmem:[%s272 + $0x54] sm:$0xf]
      %v309 = vld [vmem:[%s272 + $0x58] sm:$0xf]
      %v310 = vld [vmem:[%s272 + $0x5c] sm:$0xf]
      %v311 = vld [vmem:[%s272 + $0x60] sm:$0xf]
      %v312 = vld [vmem:[%s272 + $0x64] sm:$0xf]
      %v313 = vld [vmem:[%s272 + $0x68] sm:$0xf]
      %v314 = vld [vmem:[%s272 + $0x6c] sm:$0xf]
      %v315 = vld [vmem:[%s272 + $0x70] sm:$0xf]
      %v316 = vld [vmem:[%s272 + $0x74] sm:$0xf]
      %v317 = vld [vmem:[%s272 + $0x78] sm:$0xf]
      %v318 = vld [vmem:[%s272 + $0x7c] sm:$0xf]
      %v319 = vld [vmem:[%s272 + $0x80] sm:$0xf]
      %v320 = vld [vmem:[%s272 + $0x84] sm:$0xf]
      %v321 = vld [vmem:[%s272 + $0x88] sm:$0xf]
      %v322 = vld [vmem:[%s272 + $0x8c] sm:$0xf]
      %v323 = vld [vmem:[%s272 + $0x90] sm:$0xf]
      %v324 = vld [vmem:[%s272 + $0x94] sm:$0xf]
      %v325 = vld [vmem:[%s272 + $0x98] sm:$0xf]
      %v326 = vld [vmem:[%s272 + $0x9c] sm:$0xf]
      %v327 = vld [vmem:[%s272 + $0xa0] sm:$0xf]
      %v328 = vld [vmem:[%s272 + $0xa4] sm:$0xf]
      %v329 = vld [vmem:[%s272 + $0xa8] sm:$0xf]
      %v330 = vld [vmem:[%s272 + $0xac] sm:$0xf]
      %v331 = vld [vmem:[%s272 + $0xb0] sm:$0xf]
      %v332 = vld [vmem:[%s272 + $0xb4] sm:$0xf]
      %v333 = vld [vmem:[%s272 + $0xb8] sm:$0xf]
      %v334 = vld [vmem:[%s272 + $0xbc] sm:$0xf]
      %v335 = vld [vmem:[%s272 + $0xc0] sm:$0xf]
      %v336 = vld [vmem:[%s272 + $0xc4] sm:$0xf]
      %v337 = vld [vmem:[%s272 + $0xc8] sm:$0xf]
      %v338 = vld [vmem:[%s1] sm:$0xf]
      %v339 = vld [vmem:[%s1 + $0x4] sm:$0xf]
      %v340 = vld [vmem:[%s1 + $0x8] sm:$0xf]
      %v341 = vld [vmem:[%s1 + $0xc] sm:$0xf]
      %v342 = vld [vmem:[%s1 + $0x10] sm:$0xf]
      %v343 = vld [vmem:[%s1 + $0x14] sm:$0xf]
      %v344 = vld [vmem:[%s1 + $0x18] sm:$0xf]
      %v345 = vld [vmem:[%s1 + $0x1c] sm:$0xf]
      %v346 = vld [vmem:[%s1 + $0x20] sm:$0xf]
      %v347 = vld [vmem:[%s1 + $0x24] sm:$0xf]
      %v348 = vld [vmem:[%s1 + $0x28] sm:$0xf]
      %v349 = vld [vmem:[%s1 + $0x2c] sm:$0xf]
      %v350 = vld [vmem:[%s1 + $0x30] sm:$0xf]
      %v351 = vld [vmem:[%s1 + $0x34] sm:$0xf]
      %v352 = vld [vmem:[%s1 + $0x38] sm:$0xf]
      %v353 = vld [vmem:[%s1 + $0x3c] sm:$0xf]
      %v354 = vld [vmem:[%s272 + $0xcc] sm:$0x1]
      %s355 = scalar_lea.vmem %s1, 64
      %v356 = vld [vmem:[%s355] sm:$0xf]
      %v357 = vld [vmem:[%s355 + $0x4] sm:$0xf]
      %v358 = vld [vmem:[%s355 + $0x8] sm:$0xf]
      %v359 = vld [vmem:[%s355 + $0xc] sm:$0xf]
      %v360 = vld [vmem:[%s355 + $0x10] sm:$0xf]
      %v361 = vld [vmem:[%s355 + $0x14] sm:$0xf]
      %v362 = vld [vmem:[%s355 + $0x18] sm:$0xf]
      %v363 = vld [vmem:[%s355 + $0x1c] sm:$0xf]
      %v364 = vld [vmem:[%s355 + $0x20] sm:$0xf]
      %v365 = vld [vmem:[%s355 + $0x24] sm:$0xf]
      %v366 = vld [vmem:[%s355 + $0x28] sm:$0xf]
      %v367 = vld [vmem:[%s355 + $0x2c] sm:$0xf]
      %v368 = vld [vmem:[%s355 + $0x30] sm:$0xf]
      %v369 = vld [vmem:[%s355 + $0x34] sm:$0xf]
      %v370 = vld [vmem:[%s355 + $0x38] sm:$0xf]
      %v371 = vld [vmem:[%s355 + $0x3c] sm:$0xf]
      %v424 = vunpack.c.l.b16 %v287
      %v425 = vunpack.c.l.b16 %v288
      %v426 = vunpack.c.l.b16 %v289
      %v427 = vunpack.c.l.b16 %v290
      %v428 = vunpack.c.l.b16 %v291
      %v429 = vunpack.c.l.b16 %v292
      %v430 = vunpack.c.l.b16 %v293
      %v431 = vunpack.c.l.b16 %v294
      %v432 = vunpack.c.l.b16 %v295
      %v433 = vunpack.c.l.b16 %v296
      %v434 = vunpack.c.l.b16 %v297
      %v435 = vunpack.c.l.b16 %v298
      %v436 = vunpack.c.l.b16 %v299
      %v437 = vunpack.c.l.b16 %v300
      %v438 = vunpack.c.l.b16 %v301
      %v439 = vunpack.c.l.b16 %v302
      %v440 = vunpack.c.l.b16 %v303
      %v441 = vunpack.c.l.b16 %v304
      %v442 = vunpack.c.l.b16 %v305
      %v443 = vunpack.c.l.b16 %v306
      %v444 = vunpack.c.l.b16 %v307
      %v445 = vunpack.c.l.b16 %v308
      %v446 = vunpack.c.l.b16 %v309
      %v447 = vunpack.c.l.b16 %v310
      %v448 = vunpack.c.l.b16 %v311
      %v449 = vunpack.c.l.b16 %v312
      %v450 = vunpack.c.l.b16 %v313
      %v451 = vunpack.c.l.b16 %v314
      %v452 = vunpack.c.l.b16 %v315
      %v453 = vunpack.c.l.b16 %v316
      %v454 = vunpack.c.l.b16 %v317
      %v455 = vunpack.c.l.b16 %v318
      %v456 = vunpack.c.l.b16 %v319
      %v457 = vunpack.c.l.b16 %v320
      %v458 = vunpack.c.l.b16 %v321
      %v459 = vunpack.c.l.b16 %v322
      %v460 = vunpack.c.l.b16 %v323
      %v461 = vunpack.c.l.b16 %v324
      %v462 = vunpack.c.l.b16 %v325
      %v463 = vunpack.c.l.b16 %v326
      %v464 = vunpack.c.l.b16 %v327
      %v465 = vunpack.c.l.b16 %v328
      %v466 = vunpack.c.l.b16 %v329
      %v467 = vunpack.c.l.b16 %v330
      %v468 = vunpack.c.l.b16 %v331
      %v469 = vunpack.c.l.b16 %v332
      %v470 = vunpack.c.l.b16 %v333
      %v471 = vunpack.c.l.b16 %v334
      %v472 = vunpack.c.l.b16 %v335
      %v473 = vunpack.c.l.b16 %v336
      %v474 = vunpack.c.l.b16 %v337
      %v475 = vunpack.c.l.b16 %v354
      %v476 = vpack.c.b16 %v425, %v424
      %v477 = vpack.c.b16 %v427, %v426
      %v478 = vpack.c.b16 %v429, %v428
      %v479 = vpack.c.b16 %v431, %v430
      %v480 = vpack.c.b16 %v433, %v432
      %v481 = vpack.c.b16 %v435, %v434
      %v482 = vpack.c.b16 %v437, %v436
      %v483 = vpack.c.b16 %v439, %v438
      %v484 = vpack.c.b16 %v441, %v440
      %v485 = vpack.c.b16 %v443, %v442
      %v486 = vpack.c.b16 %v445, %v444
      %v487 = vpack.c.b16 %v447, %v446
      %v488 = vpack.c.b16 %v449, %v448
      %v489 = vpack.c.b16 %v451, %v450
      %v490 = vpack.c.b16 %v453, %v452
      %v491 = vpack.c.b16 %v455, %v454
      %v492 = vpack.c.b16 %v457, %v456
      %v493 = vpack.c.b16 %v459, %v458
      %v494 = vpack.c.b16 %v461, %v460
      %v495 = vpack.c.b16 %v463, %v462
      %v496 = vpack.c.b16 %v465, %v464
      %v497 = vpack.c.b16 %v467, %v466
      %v498 = vpack.c.b16 %v469, %v468
      %v499 = vpack.c.b16 %v471, %v470
      %v500 = vpack.c.b16 %v473, %v472
      %v501 = vpack.c.b16 %v475, %v474
      %vm502 = vsmask.f32 7424
      %v504 = vshrl.u32 %v476, 16
      %v506 = vshll.u32 %v476, 16
      %v508 = vrot.slane %v506, 1
      %v509 = vor.u32 %v504, %v508
      %v511 = vshll.u32 %v477, 16
      %v513 = vrot.slane %v511, 1
      %v514 = vsel %vm502, %v509, %v513
      %v515 = vshrl.u32 %v477, 16
      %v517 = vor.u32 %v515, %v513
      %v519 = vshll.u32 %v478, 16
      %v521 = vrot.slane %v519, 1
      %v522 = vsel %vm502, %v517, %v521
      %v523 = vshrl.u32 %v478, 16
      %v525 = vor.u32 %v523, %v521
      %v527 = vshll.u32 %v479, 16
      %v529 = vrot.slane %v527, 1
      %v530 = vsel %vm502, %v525, %v529
      %v531 = vshrl.u32 %v479, 16
      %v533 = vor.u32 %v531, %v529
      %v535 = vshll.u32 %v480, 16
      %v537 = vrot.slane %v535, 1
      %v538 = vsel %vm502, %v533, %v537
      %v539 = vshrl.u32 %v480, 16
      %v541 = vor.u32 %v539, %v537
      %v543 = vshll.u32 %v481, 16
      %v545 = vrot.slane %v543, 1
      %v546 = vsel %vm502, %v541, %v545
      %v547 = vshrl.u32 %v481, 16
      %v549 = vor.u32 %v547, %v545
      %v551 = vshll.u32 %v482, 16
      %v553 = vrot.slane %v551, 1
      %v554 = vsel %vm502, %v549, %v553
      %v555 = vshrl.u32 %v482, 16
      %v557 = vor.u32 %v555, %v553
      %v559 = vshll.u32 %v483, 16
      %v561 = vrot.slane %v559, 1
      %v562 = vsel %vm502, %v557, %v561
      %v563 = vshrl.u32 %v483, 16
      %v565 = vor.u32 %v563, %v561
      %v567 = vshll.u32 %v484, 16
      %v569 = vrot.slane %v567, 1
      %v570 = vsel %vm502, %v565, %v569
      %v571 = vshrl.u32 %v484, 16
      %v573 = vor.u32 %v571, %v569
      %v575 = vshll.u32 %v485, 16
      %v577 = vrot.slane %v575, 1
      %v578 = vsel %vm502, %v573, %v577
      %v579 = vshrl.u32 %v485, 16
      %v581 = vor.u32 %v579, %v577
      %v583 = vshll.u32 %v486, 16
      %v585 = vrot.slane %v583, 1
      %v586 = vsel %vm502, %v581, %v585
      %v587 = vshrl.u32 %v486, 16
      %v589 = vor.u32 %v587, %v585
      %v591 = vshll.u32 %v487, 16
      %v593 = vrot.slane %v591, 1
      %v594 = vsel %vm502, %v589, %v593
      %v595 = vshrl.u32 %v487, 16
      %v597 = vor.u32 %v595, %v593
      %v599 = vshll.u32 %v488, 16
      %v601 = vrot.slane %v599, 1
      %v602 = vsel %vm502, %v597, %v601
      %v603 = vshrl.u32 %v488, 16
      %v605 = vor.u32 %v603, %v601
      %v607 = vshll.u32 %v489, 16
      %v609 = vrot.slane %v607, 1
      %v610 = vsel %vm502, %v605, %v609
      %v611 = vshrl.u32 %v489, 16
      %v613 = vor.u32 %v611, %v609
      %v615 = vshll.u32 %v490, 16
      %v617 = vrot.slane %v615, 1
      %v618 = vsel %vm502, %v613, %v617
      %v619 = vshrl.u32 %v490, 16
      %v621 = vor.u32 %v619, %v617
      %v623 = vshll.u32 %v491, 16
      %v625 = vrot.slane %v623, 1
      %v626 = vsel %vm502, %v621, %v625
      %v627 = vshrl.u32 %v491, 16
      %v629 = vor.u32 %v627, %v625
      %v631 = vshll.u32 %v492, 16
      %v633 = vrot.slane %v631, 1
      %v634 = vsel %vm502, %v629, %v633
      %v635 = vshrl.u32 %v492, 16
      %v637 = vor.u32 %v635, %v633
      %v639 = vshll.u32 %v493, 16
      %v641 = vrot.slane %v639, 1
      %v642 = vsel %vm502, %v637, %v641
      %v643 = vshrl.u32 %v493, 16
      %v645 = vor.u32 %v643, %v641
      %v647 = vshll.u32 %v494, 16
      %v649 = vrot.slane %v647, 1
      %v650 = vsel %vm502, %v645, %v649
      %v651 = vshrl.u32 %v494, 16
      %v653 = vor.u32 %v651, %v649
      %v655 = vshll.u32 %v495, 16
      %v657 = vrot.slane %v655, 1
      %v658 = vsel %vm502, %v653, %v657
      %v659 = vshrl.u32 %v495, 16
      %v661 = vor.u32 %v659, %v657
      %v663 = vshll.u32 %v496, 16
      %v665 = vrot.slane %v663, 1
      %v666 = vsel %vm502, %v661, %v665
      %v667 = vshrl.u32 %v496, 16
      %v669 = vor.u32 %v667, %v665
      %v671 = vshll.u32 %v497, 16
      %v673 = vrot.slane %v671, 1
      %v674 = vsel %vm502, %v669, %v673
      %v675 = vshrl.u32 %v497, 16
      %v677 = vor.u32 %v675, %v673
      %v679 = vshll.u32 %v498, 16
      %v681 = vrot.slane %v679, 1
      %v682 = vsel %vm502, %v677, %v681
      %v683 = vshrl.u32 %v498, 16
      %v685 = vor.u32 %v683, %v681
      %v687 = vshll.u32 %v499, 16
      %v689 = vrot.slane %v687, 1
      %v690 = vsel %vm502, %v685, %v689
      %v691 = vshrl.u32 %v499, 16
      %v693 = vor.u32 %v691, %v689
      %v695 = vshll.u32 %v500, 16
      %v697 = vrot.slane %v695, 1
      %v698 = vsel %vm502, %v693, %v697
      %v699 = vshrl.u32 %v500, 16
      %v701 = vor.u32 %v699, %v697
      %v703 = vshll.u32 %v501, 16
      %v705 = vrot.slane %v703, 1
      %v706 = vsel %vm502, %v701, %v705
      %v707 = vshrl.u32 %v501, 16
      %v709 = vor.u32 %v707, %v705
      %v752 = vunpack.c.l.b16 %v356
      %v753 = vunpack.c.l.b16 %v357
      %v754 = vunpack.c.l.b16 %v358
      %v755 = vunpack.c.l.b16 %v359
      %v756 = vunpack.c.l.b16 %v360
      %v757 = vunpack.c.l.b16 %v361
      %v758 = vunpack.c.l.b16 %v362
      %v759 = vunpack.c.l.b16 %v363
      %v760 = vunpack.c.l.b16 %v364
      %v761 = vunpack.c.l.b16 %v365
      %v762 = vunpack.c.l.b16 %v366
      %v763 = vunpack.c.l.b16 %v367
      %v764 = vunpack.c.l.b16 %v368
      %v765 = vunpack.c.l.b16 %v369
      %v766 = vunpack.c.l.b16 %v370
      %v767 = vunpack.c.l.b16 %v371
      %v768 = vpack.c.b16 %v753, %v752
      %v769 = vpack.c.b16 %v755, %v754
      %v770 = vpack.c.b16 %v757, %v756
      %v771 = vpack.c.b16 %v759, %v758
      %v772 = vpack.c.b16 %v761, %v760
      %v773 = vpack.c.b16 %v763, %v762
      %v774 = vpack.c.b16 %v765, %v764
      %v775 = vpack.c.b16 %v767, %v766
      %784 = vmatprep.subr.bf16.mxu0 0
      %785 = vmatpush1.bf16.msra.mxu0 %v775
      %786 = vmatprep.subr.bf16.mxu0 0
      %787 = vmatpush1.bf16.msra.mxu0 %v774
      %788 = vmatprep.subr.bf16.mxu0 0
      %789 = vmatpush1.bf16.msra.mxu0 %v773
      %790 = vmatprep.subr.bf16.mxu0 0
      %791 = vmatpush1.bf16.msra.mxu0 %v772
      %792 = vmatprep.subr.bf16.mxu0 0
      %793 = vmatpush1.bf16.msra.mxu0 %v771
      %794 = vmatprep.subr.bf16.mxu0 0
      %795 = vmatpush1.bf16.msra.mxu0 %v770
      %796 = vmatprep.subr.bf16.mxu0 0
      %797 = vmatpush1.bf16.msra.mxu0 %v769
      %798 = vmatprep.subr.bf16.mxu0 0
      %799 = vmatpush1.bf16.msra.mxu0 %v768
      %800 = vmatprep.subr.bf16.mxu0 0
      %801 = vmatpush2.bf16.msra.mxu0 0
      %802 = vmatprep.subr.bf16.mxu0 0
      %803 = vmatpush2.bf16.msra.mxu0 0
      %804 = vmatprep.subr.bf16.mxu0 0
      %805 = vmatpush2.bf16.msra.mxu0 0
      %806 = vmatprep.subr.bf16.mxu0 0
      %807 = vmatpush2.bf16.msra.mxu0 0
      %808 = vmatprep.subr.bf16.mxu0 0
      %809 = vmatpush2.bf16.msra.mxu0 0
      %810 = vmatprep.subr.bf16.mxu0 0
      %811 = vmatpush2.bf16.msra.mxu0 0
      %812 = vmatprep.subr.bf16.mxu0 0
      %813 = vmatpush2.bf16.msra.mxu0 0
      %814 = vmatprep.subr.bf16.mxu0 0
      %815 = vmatpush2.bf16.msra.mxu0 0
      %816 = vmatprep.mubr.bf16.mxu0 0
      %817 = vmatmul.mubr.bf16.gmra.mxu0 %v514
      %v818 = vpop.f32.mrf.mxu0
      %v819 = vadd.f32 0.0, %v818
      %v820 = vpop.f32.mrf.mxu0
      %v821 = vpop.f32.mrf.mxu0
      %v822 = vadd.f32 0.0, %v821
      %v823 = vpop.f32.mrf.mxu0
      %824 = vmatprep.mubr.bf16.mxu0 0
      %825 = vmatmul.mubr.bf16.gmra.mxu0 %v522
      %v826 = vpop.f32.mrf.mxu0
      %v827 = vadd.f32 0.0, %v826
      %v828 = vpop.f32.mrf.mxu0
      %v829 = vpop.f32.mrf.mxu0
      %v830 = vadd.f32 0.0, %v829
      %v831 = vpop.f32.mrf.mxu0
      %832 = vmatprep.mubr.bf16.mxu0 0
      %833 = vmatmul.mubr.bf16.gmra.mxu0 %v530
      %v834 = vpop.f32.mrf.mxu0
      %v835 = vadd.f32 0.0, %v834
      %v836 = vpop.f32.mrf.mxu0
      %v837 = vpop.f32.mrf.mxu0
      %v838 = vadd.f32 0.0, %v837
      %v839 = vpop.f32.mrf.mxu0
      %840 = vmatprep.mubr.bf16.mxu0 0
      %841 = vmatmul.mubr.bf16.gmra.mxu0 %v538
      %v842 = vpop.f32.mrf.mxu0
      %v843 = vadd.f32 0.0, %v842
      %v844 = vpop.f32.mrf.mxu0
      %v845 = vpop.f32.mrf.mxu0
      %v846 = vadd.f32 0.0, %v845
      %v847 = vpop.f32.mrf.mxu0
      %848 = vmatprep.mubr.bf16.mxu0 0
      %849 = vmatmul.mubr.bf16.gmra.mxu0 %v546
      %v850 = vpop.f32.mrf.mxu0
      %v851 = vadd.f32 0.0, %v850
      %v852 = vpop.f32.mrf.mxu0
      %v853 = vpop.f32.mrf.mxu0
      %v854 = vadd.f32 0.0, %v853
      %v855 = vpop.f32.mrf.mxu0
      %856 = vmatprep.mubr.bf16.mxu0 0
      %857 = vmatmul.mubr.bf16.gmra.mxu0 %v554
      %v858 = vpop.f32.mrf.mxu0
      %v859 = vadd.f32 0.0, %v858
      %v860 = vpop.f32.mrf.mxu0
      %v861 = vpop.f32.mrf.mxu0
      %v862 = vadd.f32 0.0, %v861
      %v863 = vpop.f32.mrf.mxu0
      %864 = vmatprep.mubr.bf16.mxu0 0
      %865 = vmatmul.mubr.bf16.gmra.mxu0 %v562
      %v866 = vpop.f32.mrf.mxu0
      %v867 = vadd.f32 0.0, %v866
      %v868 = vpop.f32.mrf.mxu0
      %v869 = vpop.f32.mrf.mxu0
      %v870 = vadd.f32 0.0, %v869
      %v871 = vpop.f32.mrf.mxu0
      %872 = vmatprep.mubr.bf16.mxu0 0
      %873 = vmatmul.mubr.bf16.gmra.mxu0 %v570
      %v874 = vpop.f32.mrf.mxu0
      %v875 = vadd.f32 0.0, %v874
      %v876 = vpop.f32.mrf.mxu0
      %v877 = vpop.f32.mrf.mxu0
      %v878 = vadd.f32 0.0, %v877
      %v879 = vpop.f32.mrf.mxu0
      %880 = vmatprep.mubr.bf16.mxu0 0
      %881 = vmatmul.mubr.bf16.gmra.mxu0 %v578
      %v882 = vpop.f32.mrf.mxu0
      %v883 = vadd.f32 0.0, %v882
      %v884 = vpop.f32.mrf.mxu0
      %v885 = vpop.f32.mrf.mxu0
      %v886 = vadd.f32 0.0, %v885
      %v887 = vpop.f32.mrf.mxu0
      %888 = vmatprep.mubr.bf16.mxu0 0
      %889 = vmatmul.mubr.bf16.gmra.mxu0 %v586
      %v890 = vpop.f32.mrf.mxu0
      %v891 = vadd.f32 0.0, %v890
      %v892 = vpop.f32.mrf.mxu0
      %v893 = vpop.f32.mrf.mxu0
      %v894 = vadd.f32 0.0, %v893
      %v895 = vpop.f32.mrf.mxu0
      %896 = vmatprep.mubr.bf16.mxu0 0
      %897 = vmatmul.mubr.bf16.gmra.mxu0 %v594
      %v898 = vpop.f32.mrf.mxu0
      %v899 = vadd.f32 0.0, %v898
      %v900 = vpop.f32.mrf.mxu0
      %v901 = vpop.f32.mrf.mxu0
      %v902 = vadd.f32 0.0, %v901
      %v903 = vpop.f32.mrf.mxu0
      %904 = vmatprep.mubr.bf16.mxu0 0
      %905 = vmatmul.mubr.bf16.gmra.mxu0 %v602
      %v906 = vpop.f32.mrf.mxu0
      %v907 = vadd.f32 0.0, %v906
      %v908 = vpop.f32.mrf.mxu0
      %v909 = vpop.f32.mrf.mxu0
      %v910 = vadd.f32 0.0, %v909
      %v911 = vpop.f32.mrf.mxu0
      %912 = vmatprep.mubr.bf16.mxu0 0
      %913 = vmatmul.mubr.bf16.gmra.mxu0 %v610
      %v914 = vpop.f32.mrf.mxu0
      %v915 = vadd.f32 0.0, %v914
      %v916 = vpop.f32.mrf.mxu0
      %v917 = vpop.f32.mrf.mxu0
      %v918 = vadd.f32 0.0, %v917
      %v919 = vpop.f32.mrf.mxu0
      %920 = vmatprep.mubr.bf16.mxu0 0
      %921 = vmatmul.mubr.bf16.gmra.mxu0 %v618
      %v922 = vpop.f32.mrf.mxu0
      %v923 = vadd.f32 0.0, %v922
      %v924 = vpop.f32.mrf.mxu0
      %v925 = vpop.f32.mrf.mxu0
      %v926 = vadd.f32 0.0, %v925
      %v927 = vpop.f32.mrf.mxu0
      %928 = vmatprep.mubr.bf16.mxu0 0
      %929 = vmatmul.mubr.bf16.gmra.mxu0 %v626
      %v930 = vpop.f32.mrf.mxu0
      %v931 = vadd.f32 0.0, %v930
      %v932 = vpop.f32.mrf.mxu0
      %v933 = vpop.f32.mrf.mxu0
      %v934 = vadd.f32 0.0, %v933
      %v935 = vpop.f32.mrf.mxu0
      %936 = vmatprep.mubr.bf16.mxu0 0
      %937 = vmatmul.mubr.bf16.gmra.mxu0 %v634
      %v938 = vpop.f32.mrf.mxu0
      %v939 = vadd.f32 0.0, %v938
      %v940 = vpop.f32.mrf.mxu0
      %v941 = vpop.f32.mrf.mxu0
      %v942 = vadd.f32 0.0, %v941
      %v943 = vpop.f32.mrf.mxu0
      %944 = vmatprep.mubr.bf16.mxu0 0
      %945 = vmatmul.mubr.bf16.gmra.mxu0 %v642
      %v946 = vpop.f32.mrf.mxu0
      %v947 = vadd.f32 0.0, %v946
      %v948 = vpop.f32.mrf.mxu0
      %v949 = vpop.f32.mrf.mxu0
      %v950 = vadd.f32 0.0, %v949
      %v951 = vpop.f32.mrf.mxu0
      %952 = vmatprep.mubr.bf16.mxu0 0
      %953 = vmatmul.mubr.bf16.gmra.mxu0 %v650
      %v954 = vpop.f32.mrf.mxu0
      %v955 = vadd.f32 0.0, %v954
      %v956 = vpop.f32.mrf.mxu0
      %v957 = vpop.f32.mrf.mxu0
      %v958 = vadd.f32 0.0, %v957
      %v959 = vpop.f32.mrf.mxu0
      %960 = vmatprep.mubr.bf16.mxu0 0
      %961 = vmatmul.mubr.bf16.gmra.mxu0 %v658
      %v962 = vpop.f32.mrf.mxu0
      %v963 = vadd.f32 0.0, %v962
      %v964 = vpop.f32.mrf.mxu0
      %v965 = vpop.f32.mrf.mxu0
      %v966 = vadd.f32 0.0, %v965
      %v967 = vpop.f32.mrf.mxu0
      %968 = vmatprep.mubr.bf16.mxu0 0
      %969 = vmatmul.mubr.bf16.gmra.mxu0 %v666
      %v970 = vpop.f32.mrf.mxu0
      %v971 = vadd.f32 0.0, %v970
      %v972 = vpop.f32.mrf.mxu0
      %v973 = vpop.f32.mrf.mxu0
      %v974 = vadd.f32 0.0, %v973
      %v975 = vpop.f32.mrf.mxu0
      %976 = vmatprep.mubr.bf16.mxu0 0
      %977 = vmatmul.mubr.bf16.gmra.mxu0 %v674
      %v978 = vpop.f32.mrf.mxu0
      %v979 = vadd.f32 0.0, %v978
      %v980 = vpop.f32.mrf.mxu0
      %v981 = vpop.f32.mrf.mxu0
      %v982 = vadd.f32 0.0, %v981
      %v983 = vpop.f32.mrf.mxu0
      %984 = vmatprep.mubr.bf16.mxu0 0
      %985 = vmatmul.mubr.bf16.gmra.mxu0 %v682
      %v986 = vpop.f32.mrf.mxu0
      %v987 = vadd.f32 0.0, %v986
      %v988 = vpop.f32.mrf.mxu0
      %v989 = vpop.f32.mrf.mxu0
      %v990 = vadd.f32 0.0, %v989
      %v991 = vpop.f32.mrf.mxu0
      %992 = vmatprep.mubr.bf16.mxu0 0
      %993 = vmatmul.mubr.bf16.gmra.mxu0 %v690
      %v994 = vpop.f32.mrf.mxu0
      %v995 = vadd.f32 0.0, %v994
      %v996 = vpop.f32.mrf.mxu0
      %v997 = vpop.f32.mrf.mxu0
      %v998 = vadd.f32 0.0, %v997
      %v999 = vpop.f32.mrf.mxu0
      %1000 = vmatprep.mubr.bf16.mxu0 0
      %1001 = vmatmul.mubr.bf16.gmra.mxu0 %v698
      %v1002 = vpop.f32.mrf.mxu0
      %v1003 = vadd.f32 0.0, %v1002
      %v1004 = vpop.f32.mrf.mxu0
      %v1005 = vpop.f32.mrf.mxu0
      %v1006 = vadd.f32 0.0, %v1005
      %v1007 = vpop.f32.mrf.mxu0
      %1008 = vmatprep.mubr.bf16.mxu0 0
      %1009 = vmatmul.mubr.bf16.gmra.mxu0 %v706
      %v1010 = vpop.f32.mrf.mxu0
      %v1011 = vadd.f32 0.0, %v1010
      %v1012 = vpop.f32.mrf.mxu0
      %v1013 = vpop.f32.mrf.mxu0
      %v1014 = vadd.f32 0.0, %v1013
      %v1015 = vpop.f32.mrf.mxu0
      %1016 = vmatprep.mubr.bf16.mxu0 0
      %1017 = vmatmul.mubr.bf16.gmra.mxu0 %v709
      %v1018 = vpop.f32.mrf.mxu0
      %v1019 = vadd.f32 0.0, %v1018
      %v1020 = vpop.f32.mrf.mxu0
      %v1021 = vpop.f32.mrf.mxu0
      %v1022 = vpop.f32.mrf.mxu0
      %1023 = vdwg.mxu0
      %v1024 = vpack.c.b16 %v474, %v474
      %v1067 = vunpack.c.l.b16 %v338
      %v1068 = vunpack.c.l.b16 %v339
      %v1069 = vunpack.c.l.b16 %v340
      %v1070 = vunpack.c.l.b16 %v341
      %v1071 = vunpack.c.l.b16 %v342
      %v1072 = vunpack.c.l.b16 %v343
      %v1073 = vunpack.c.l.b16 %v344
      %v1074 = vunpack.c.l.b16 %v345
      %v1075 = vunpack.c.l.b16 %v346
      %v1076 = vunpack.c.l.b16 %v347
      %v1077 = vunpack.c.l.b16 %v348
      %v1078 = vunpack.c.l.b16 %v349
      %v1079 = vunpack.c.l.b16 %v350
      %v1080 = vunpack.c.l.b16 %v351
      %v1081 = vunpack.c.l.b16 %v352
      %v1082 = vunpack.c.l.b16 %v353
      %v1083 = vpack.c.b16 %v1068, %v1067
      %v1084 = vpack.c.b16 %v1070, %v1069
      %v1085 = vpack.c.b16 %v1072, %v1071
      %v1086 = vpack.c.b16 %v1074, %v1073
      %v1087 = vpack.c.b16 %v1076, %v1075
      %v1088 = vpack.c.b16 %v1078, %v1077
      %v1089 = vpack.c.b16 %v1080, %v1079
      %v1090 = vpack.c.b16 %v1082, %v1081
      %1099 = vmatprep.subr.bf16.mxu0 0
      %1100 = vmatpush1.bf16.msra.mxu0 %v1090
      %1101 = vmatprep.subr.bf16.mxu0 0
      %1102 = vmatpush1.bf16.msra.mxu0 %v1089
      %1103 = vmatprep.subr.bf16.mxu0 0
      %1104 = vmatpush1.bf16.msra.mxu0 %v1088
      %1105 = vmatprep.subr.bf16.mxu0 0
      %1106 = vmatpush1.bf16.msra.mxu0 %v1087
      %1107 = vmatprep.subr.bf16.mxu0 0
      %1108 = vmatpush1.bf16.msra.mxu0 %v1086
      %1109 = vmatprep.subr.bf16.mxu0 0
      %1110 = vmatpush1.bf16.msra.mxu0 %v1085
      %1111 = vmatprep.subr.bf16.mxu0 0
      %1112 = vmatpush1.bf16.msra.mxu0 %v1084
      %1113 = vmatprep.subr.bf16.mxu0 0
      %1114 = vmatpush1.bf16.msra.mxu0 %v1083
      %1115 = vmatprep.subr.bf16.mxu0 0
      %1116 = vmatpush2.bf16.msra.mxu0 0
      %1117 = vmatprep.subr.bf16.mxu0 0
      %1118 = vmatpush2.bf16.msra.mxu0 0
      %1119 = vmatprep.subr.bf16.mxu0 0
      %1120 = vmatpush2.bf16.msra.mxu0 0
      %1121 = vmatprep.subr.bf16.mxu0 0
      %1122 = vmatpush2.bf16.msra.mxu0 0
      %1123 = vmatprep.subr.bf16.mxu0 0
      %1124 = vmatpush2.bf16.msra.mxu0 0
      %1125 = vmatprep.subr.bf16.mxu0 0
      %1126 = vmatpush2.bf16.msra.mxu0 0
      %1127 = vmatprep.subr.bf16.mxu0 0
      %1128 = vmatpush2.bf16.msra.mxu0 0
      %1129 = vmatprep.subr.bf16.mxu0 0
      %1130 = vmatpush2.bf16.msra.mxu0 0
      %1131 = vmatprep.mubr.bf16.mxu0 0
      %1132 = vmatmul.mubr.bf16.gmra.mxu0 %v476
      %v1133 = vpop.f32.mrf.mxu0
      %v1134 = vadd.f32 %v819, %v1133
      %v1135 = vpop.f32.mrf.mxu0
      %v1136 = vpop.f32.mrf.mxu0
      %v1137 = vadd.f32 %v822, %v1136
      %v1138 = vpop.f32.mrf.mxu0
      %1139 = vmatprep.mubr.bf16.mxu0 0
      %1140 = vmatmul.mubr.bf16.gmra.mxu0 %v477
      %v1141 = vpop.f32.mrf.mxu0
      %v1142 = vadd.f32 %v827, %v1141
      %v1143 = vpop.f32.mrf.mxu0
      %v1144 = vpop.f32.mrf.mxu0
      %v1145 = vadd.f32 %v830, %v1144
      %v1146 = vpop.f32.mrf.mxu0
      %1147 = vmatprep.mubr.bf16.mxu0 0
      %1148 = vmatmul.mubr.bf16.gmra.mxu0 %v478
      %v1149 = vpop.f32.mrf.mxu0
      %v1150 = vadd.f32 %v835, %v1149
      %v1151 = vpop.f32.mrf.mxu0
      %v1152 = vpop.f32.mrf.mxu0
      %v1153 = vadd.f32 %v838, %v1152
      %v1154 = vpop.f32.mrf.mxu0
      %1155 = vmatprep.mubr.bf16.mxu0 0
      %1156 = vmatmul.mubr.bf16.gmra.mxu0 %v479
      %v1157 = vpop.f32.mrf.mxu0
      %v1158 = vadd.f32 %v843, %v1157
      %v1159 = vpop.f32.mrf.mxu0
      %v1160 = vpop.f32.mrf.mxu0
      %v1161 = vadd.f32 %v846, %v1160
      %v1162 = vpop.f32.mrf.mxu0
      %1163 = vmatprep.mubr.bf16.mxu0 0
      %1164 = vmatmul.mubr.bf16.gmra.mxu0 %v480
      %v1165 = vpop.f32.mrf.mxu0
      %v1166 = vadd.f32 %v851, %v1165
      %v1167 = vpop.f32.mrf.mxu0
      %v1168 = vpop.f32.mrf.mxu0
      %v1169 = vadd.f32 %v854, %v1168
      %v1170 = vpop.f32.mrf.mxu0
      %1171 = vmatprep.mubr.bf16.mxu0 0
      %1172 = vmatmul.mubr.bf16.gmra.mxu0 %v481
      %v1173 = vpop.f32.mrf.mxu0
      %v1174 = vadd.f32 %v859, %v1173
      %v1175 = vpop.f32.mrf.mxu0
      %v1176 = vpop.f32.mrf.mxu0
      %v1177 = vadd.f32 %v862, %v1176
      %v1178 = vpop.f32.mrf.mxu0
      %1179 = vmatprep.mubr.bf16.mxu0 0
      %1180 = vmatmul.mubr.bf16.gmra.mxu0 %v482
      %v1181 = vpop.f32.mrf.mxu0
      %v1182 = vadd.f32 %v867, %v1181
      %v1183 = vpop.f32.mrf.mxu0
      %v1184 = vpop.f32.mrf.mxu0
      %v1185 = vadd.f32 %v870, %v1184
      %v1186 = vpop.f32.mrf.mxu0
      %1187 = vmatprep.mubr.bf16.mxu0 0
      %1188 = vmatmul.mubr.bf16.gmra.mxu0 %v483
      %v1189 = vpop.f32.mrf.mxu0
      %v1190 = vadd.f32 %v875, %v1189
      %v1191 = vpop.f32.mrf.mxu0
      %v1192 = vpop.f32.mrf.mxu0
      %v1193 = vadd.f32 %v878, %v1192
      %v1194 = vpop.f32.mrf.mxu0
      %1195 = vmatprep.mubr.bf16.mxu0 0
      %1196 = vmatmul.mubr.bf16.gmra.mxu0 %v484
      %v1197 = vpop.f32.mrf.mxu0
      %v1198 = vadd.f32 %v883, %v1197
      %v1199 = vpop.f32.mrf.mxu0
      %v1200 = vpop.f32.mrf.mxu0
      %v1201 = vadd.f32 %v886, %v1200
      %v1202 = vpop.f32.mrf.mxu0
      %1203 = vmatprep.mubr.bf16.mxu0 0
      %1204 = vmatmul.mubr.bf16.gmra.mxu0 %v485
      %v1205 = vpop.f32.mrf.mxu0
      %v1206 = vadd.f32 %v891, %v1205
      %v1207 = vpop.f32.mrf.mxu0
      %v1208 = vpop.f32.mrf.mxu0
      %v1209 = vadd.f32 %v894, %v1208
      %v1210 = vpop.f32.mrf.mxu0
      %1211 = vmatprep.mubr.bf16.mxu0 0
      %1212 = vmatmul.mubr.bf16.gmra.mxu0 %v486
      %v1213 = vpop.f32.mrf.mxu0
      %v1214 = vadd.f32 %v899, %v1213
      %v1215 = vpop.f32.mrf.mxu0
      %v1216 = vpop.f32.mrf.mxu0
      %v1217 = vadd.f32 %v902, %v1216
      %v1218 = vpop.f32.mrf.mxu0
      %1219 = vmatprep.mubr.bf16.mxu0 0
      %1220 = vmatmul.mubr.bf16.gmra.mxu0 %v487
      %v1221 = vpop.f32.mrf.mxu0
      %v1222 = vadd.f32 %v907, %v1221
      %v1223 = vpop.f32.mrf.mxu0
      %v1224 = vpop.f32.mrf.mxu0
      %v1225 = vadd.f32 %v910, %v1224
      %v1226 = vpop.f32.mrf.mxu0
      %1227 = vmatprep.mubr.bf16.mxu0 0
      %1228 = vmatmul.mubr.bf16.gmra.mxu0 %v488
      %v1229 = vpop.f32.mrf.mxu0
      %v1230 = vadd.f32 %v915, %v1229
      %v1231 = vpop.f32.mrf.mxu0
      %v1232 = vpop.f32.mrf.mxu0
      %v1233 = vadd.f32 %v918, %v1232
      %v1234 = vpop.f32.mrf.mxu0
      %1235 = vmatprep.mubr.bf16.mxu0 0
      %1236 = vmatmul.mubr.bf16.gmra.mxu0 %v489
      %v1237 = vpop.f32.mrf.mxu0
      %v1238 = vadd.f32 %v923, %v1237
      %v1239 = vpop.f32.mrf.mxu0
      %v1240 = vpop.f32.mrf.mxu0
      %v1241 = vadd.f32 %v926, %v1240
      %v1242 = vpop.f32.mrf.mxu0
      %1243 = vmatprep.mubr.bf16.mxu0 0
      %1244 = vmatmul.mubr.bf16.gmra.mxu0 %v490
      %v1245 = vpop.f32.mrf.mxu0
      %v1246 = vadd.f32 %v931, %v1245
      %v1247 = vpop.f32.mrf.mxu0
      %v1248 = vpop.f32.mrf.mxu0
      %v1249 = vadd.f32 %v934, %v1248
      %v1250 = vpop.f32.mrf.mxu0
      %1251 = vmatprep.mubr.bf16.mxu0 0
      %1252 = vmatmul.mubr.bf16.gmra.mxu0 %v491
      %v1253 = vpop.f32.mrf.mxu0
      %v1254 = vadd.f32 %v939, %v1253
      %v1255 = vpop.f32.mrf.mxu0
      %v1256 = vpop.f32.mrf.mxu0
      %v1257 = vadd.f32 %v942, %v1256
      %v1258 = vpop.f32.mrf.mxu0
      %1259 = vmatprep.mubr.bf16.mxu0 0
      %1260 = vmatmul.mubr.bf16.gmra.mxu0 %v492
      %v1261 = vpop.f32.mrf.mxu0
      %v1262 = vadd.f32 %v947, %v1261
      %v1263 = vpop.f32.mrf.mxu0
      %v1264 = vpop.f32.mrf.mxu0
      %v1265 = vadd.f32 %v950, %v1264
      %v1266 = vpop.f32.mrf.mxu0
      %1267 = vmatprep.mubr.bf16.mxu0 0
      %1268 = vmatmul.mubr.bf16.gmra.mxu0 %v493
      %v1269 = vpop.f32.mrf.mxu0
      %v1270 = vadd.f32 %v955, %v1269
      %v1271 = vpop.f32.mrf.mxu0
      %v1272 = vpop.f32.mrf.mxu0
      %v1273 = vadd.f32 %v958, %v1272
      %v1274 = vpop.f32.mrf.mxu0
      %1275 = vmatprep.mubr.bf16.mxu0 0
      %1276 = vmatmul.mubr.bf16.gmra.mxu0 %v494
      %v1277 = vpop.f32.mrf.mxu0
      %v1278 = vadd.f32 %v963, %v1277
      %v1279 = vpop.f32.mrf.mxu0
      %v1280 = vpop.f32.mrf.mxu0
      %v1281 = vadd.f32 %v966, %v1280
      %v1282 = vpop.f32.mrf.mxu0
      %1283 = vmatprep.mubr.bf16.mxu0 0
      %1284 = vmatmul.mubr.bf16.gmra.mxu0 %v495
      %v1285 = vpop.f32.mrf.mxu0
      %v1286 = vadd.f32 %v971, %v1285
      %v1287 = vpop.f32.mrf.mxu0
      %v1288 = vpop.f32.mrf.mxu0
      %v1289 = vadd.f32 %v974, %v1288
      %v1290 = vpop.f32.mrf.mxu0
      %1291 = vmatprep.mubr.bf16.mxu0 0
      %1292 = vmatmul.mubr.bf16.gmra.mxu0 %v496
      %v1293 = vpop.f32.mrf.mxu0
      %v1294 = vadd.f32 %v979, %v1293
      %v1295 = vpop.f32.mrf.mxu0
      %v1296 = vpop.f32.mrf.mxu0
      %v1297 = vadd.f32 %v982, %v1296
      %v1298 = vpop.f32.mrf.mxu0
      %1299 = vmatprep.mubr.bf16.mxu0 0
      %1300 = vmatmul.mubr.bf16.gmra.mxu0 %v497
      %v1301 = vpop.f32.mrf.mxu0
      %v1302 = vadd.f32 %v987, %v1301
      %v1303 = vpop.f32.mrf.mxu0
      %v1304 = vpop.f32.mrf.mxu0
      %v1305 = vadd.f32 %v990, %v1304
      %v1306 = vpop.f32.mrf.mxu0
      %1307 = vmatprep.mubr.bf16.mxu0 0
      %1308 = vmatmul.mubr.bf16.gmra.mxu0 %v498
      %v1309 = vpop.f32.mrf.mxu0
      %v1310 = vadd.f32 %v995, %v1309
      %v1311 = vpop.f32.mrf.mxu0
      %v1312 = vpop.f32.mrf.mxu0
      %v1313 = vadd.f32 %v998, %v1312
      %v1314 = vpop.f32.mrf.mxu0
      %1315 = vmatprep.mubr.bf16.mxu0 0
      %1316 = vmatmul.mubr.bf16.gmra.mxu0 %v499
      %v1317 = vpop.f32.mrf.mxu0
      %v1318 = vadd.f32 %v1003, %v1317
      %v1319 = vpop.f32.mrf.mxu0
      %v1320 = vpop.f32.mrf.mxu0
      %v1321 = vadd.f32 %v1006, %v1320
      %v1322 = vpop.f32.mrf.mxu0
      %1323 = vmatprep.mubr.bf16.mxu0 0
      %1324 = vmatmul.mubr.bf16.gmra.mxu0 %v500
      %v1325 = vpop.f32.mrf.mxu0
      %v1326 = vadd.f32 %v1011, %v1325
      %v1327 = vpop.f32.mrf.mxu0
      %v1328 = vpop.f32.mrf.mxu0
      %v1329 = vadd.f32 %v1014, %v1328
      %v1330 = vpop.f32.mrf.mxu0
      %1331 = vmatprep.mubr.bf16.mxu0 0
      %1332 = vmatmul.mubr.bf16.gmra.mxu0 %v1024
      %v1333 = vpop.f32.mrf.mxu0
      %v1334 = vadd.f32 %v1019, %v1333
      %v1335 = vpop.f32.mrf.mxu0
      %v1336 = vpop.f32.mrf.mxu0
      %v1337 = vpop.f32.mrf.mxu0
      %1338 = vdwg.mxu0
      %v1339 = vld [vmem:[%s272] sm:$0xe]
      %s1340 = scalar_lea.vmem %s1, 128
      %v1341 = vld [vmem:[%s1340] sm:$0xf]
      %v1342 = vld [vmem:[%s1340 + $0x4] sm:$0xf]
      %v1343 = vld [vmem:[%s1340 + $0x8] sm:$0xf]
      %v1344 = vld [vmem:[%s1340 + $0xc] sm:$0xf]
      %v1345 = vld [vmem:[%s1340 + $0x10] sm:$0xf]
      %v1346 = vld [vmem:[%s1340 + $0x14] sm:$0xf]
      %v1347 = vld [vmem:[%s1340 + $0x18] sm:$0xf]
      %v1348 = vld [vmem:[%s1340 + $0x1c] sm:$0xf]
      %v1349 = vld [vmem:[%s1340 + $0x20] sm:$0xf]
      %v1350 = vld [vmem:[%s1340 + $0x24] sm:$0xf]
      %v1351 = vld [vmem:[%s1340 + $0x28] sm:$0xf]
      %v1352 = vld [vmem:[%s1340 + $0x2c] sm:$0xf]
      %v1353 = vld [vmem:[%s1340 + $0x30] sm:$0xf]
      %v1354 = vld [vmem:[%s1340 + $0x34] sm:$0xf]
      %v1355 = vld [vmem:[%s1340 + $0x38] sm:$0xf]
      %v1356 = vld [vmem:[%s1340 + $0x3c] sm:$0xf]
      %v1358 = vunpack.c.l.b16 %v1339
      %v1359 = vpack.c.b16 %v425, %v1358
      %vm1360 = vcmask 1046528
      %v1361 = vrot.slane %v1359, 1
      %v1362 = vrot.slane %v477, 1
      %v1363 = vsel %vm1360, %v1361, %v1362
      %v1364 = vrot.slane %v478, 1
      %v1365 = vsel %vm1360, %v1362, %v1364
      %v1366 = vrot.slane %v479, 1
      %v1367 = vsel %vm1360, %v1364, %v1366
      %v1368 = vrot.slane %v480, 1
      %v1369 = vsel %vm1360, %v1366, %v1368
      %v1370 = vrot.slane %v481, 1
      %v1371 = vsel %vm1360, %v1368, %v1370
      %v1372 = vrot.slane %v482, 1
      %v1373 = vsel %vm1360, %v1370, %v1372
      %v1374 = vrot.slane %v483, 1
      %v1375 = vsel %vm1360, %v1372, %v1374
      %v1376 = vrot.slane %v484, 1
      %v1377 = vsel %vm1360, %v1374, %v1376
      %v1378 = vrot.slane %v485, 1
      %v1379 = vsel %vm1360, %v1376, %v1378
      %v1380 = vrot.slane %v486, 1
      %v1381 = vsel %vm1360, %v1378, %v1380
      %v1382 = vrot.slane %v487, 1
      %v1383 = vsel %vm1360, %v1380, %v1382
      %v1384 = vrot.slane %v488, 1
      %v1385 = vsel %vm1360, %v1382, %v1384
      %v1386 = vrot.slane %v489, 1
      %v1387 = vsel %vm1360, %v1384, %v1386
      %v1388 = vrot.slane %v490, 1
      %v1389 = vsel %vm1360, %v1386, %v1388
      %v1390 = vrot.slane %v491, 1
      %v1391 = vsel %vm1360, %v1388, %v1390
      %v1392 = vrot.slane %v492, 1
      %v1393 = vsel %vm1360, %v1390, %v1392
      %v1394 = vrot.slane %v493, 1
      %v1395 = vsel %vm1360, %v1392, %v1394
      %v1396 = vrot.slane %v494, 1
      %v1397 = vsel %vm1360, %v1394, %v1396
      %v1398 = vrot.slane %v495, 1
      %v1399 = vsel %vm1360, %v1396, %v1398
      %v1400 = vrot.slane %v496, 1
      %v1401 = vsel %vm1360, %v1398, %v1400
      %v1402 = vrot.slane %v497, 1
      %v1403 = vsel %vm1360, %v1400, %v1402
      %v1404 = vrot.slane %v498, 1
      %v1405 = vsel %vm1360, %v1402, %v1404
      %v1406 = vrot.slane %v499, 1
      %v1407 = vsel %vm1360, %v1404, %v1406
      %v1408 = vrot.slane %v500, 1
      %v1409 = vsel %vm1360, %v1406, %v1408
      %v1410 = vrot.slane %v501, 1
      %v1411 = vsel %vm1360, %v1408, %v1410
      %v1454 = vunpack.c.l.b16 %v1341
      %v1455 = vunpack.c.l.b16 %v1342
      %v1456 = vunpack.c.l.b16 %v1343
      %v1457 = vunpack.c.l.b16 %v1344
      %v1458 = vunpack.c.l.b16 %v1345
      %v1459 = vunpack.c.l.b16 %v1346
      %v1460 = vunpack.c.l.b16 %v1347
      %v1461 = vunpack.c.l.b16 %v1348
      %v1462 = vunpack.c.l.b16 %v1349
      %v1463 = vunpack.c.l.b16 %v1350
      %v1464 = vunpack.c.l.b16 %v1351
      %v1465 = vunpack.c.l.b16 %v1352
      %v1466 = vunpack.c.l.b16 %v1353
      %v1467 = vunpack.c.l.b16 %v1354
      %v1468 = vunpack.c.l.b16 %v1355
      %v1469 = vunpack.c.l.b16 %v1356
      %v1470 = vpack.c.b16 %v1455, %v1454
      %v1471 = vpack.c.b16 %v1457, %v1456
      %v1472 = vpack.c.b16 %v1459, %v1458
      %v1473 = vpack.c.b16 %v1461, %v1460
      %v1474 = vpack.c.b16 %v1463, %v1462
      %v1475 = vpack.c.b16 %v1465, %v1464
      %v1476 = vpack.c.b16 %v1467, %v1466
      %v1477 = vpack.c.b16 %v1469, %v1468
      %1486 = vmatprep.subr.bf16.mxu0 0
      %1487 = vmatpush1.bf16.msra.mxu0 %v1477
      %1488 = vmatprep.subr.bf16.mxu0 0
      %1489 = vmatpush1.bf16.msra.mxu0 %v1476
      %1490 = vmatprep.subr.bf16.mxu0 0
      %1491 = vmatpush1.bf16.msra.mxu0 %v1475
      %1492 = vmatprep.subr.bf16.mxu0 0
      %1493 = vmatpush1.bf16.msra.mxu0 %v1474
      %1494 = vmatprep.subr.bf16.mxu0 0
      %1495 = vmatpush1.bf16.msra.mxu0 %v1473
      %1496 = vmatprep.subr.bf16.mxu0 0
      %1497 = vmatpush1.bf16.msra.mxu0 %v1472
      %1498 = vmatprep.subr.bf16.mxu0 0
      %1499 = vmatpush1.bf16.msra.mxu0 %v1471
      %1500 = vmatprep.subr.bf16.mxu0 0
      %1501 = vmatpush1.bf16.msra.mxu0 %v1470
      %1502 = vmatprep.subr.bf16.mxu0 0
      %1503 = vmatpush2.bf16.msra.mxu0 0
      %1504 = vmatprep.subr.bf16.mxu0 0
      %1505 = vmatpush2.bf16.msra.mxu0 0
      %1506 = vmatprep.subr.bf16.mxu0 0
      %1507 = vmatpush2.bf16.msra.mxu0 0
      %1508 = vmatprep.subr.bf16.mxu0 0
      %1509 = vmatpush2.bf16.msra.mxu0 0
      %1510 = vmatprep.subr.bf16.mxu0 0
      %1511 = vmatpush2.bf16.msra.mxu0 0
      %1512 = vmatprep.subr.bf16.mxu0 0
      %1513 = vmatpush2.bf16.msra.mxu0 0
      %1514 = vmatprep.subr.bf16.mxu0 0
      %1515 = vmatpush2.bf16.msra.mxu0 0
      %1516 = vmatprep.subr.bf16.mxu0 0
      %1517 = vmatpush2.bf16.msra.mxu0 0
      %1518 = vmatprep.mubr.bf16.mxu0 0
      %1519 = vmatmul.mubr.bf16.gmra.mxu0 %v1363
      %v1520 = vpop.f32.mrf.mxu0
      %v1521 = vadd.f32 0.0, %v1520
      %v1522 = vpop.f32.mrf.mxu0
      %v1523 = vpop.f32.mrf.mxu0
      %v1524 = vadd.f32 0.0, %v1523
      %v1525 = vpop.f32.mrf.mxu0
      %1526 = vmatprep.mubr.bf16.mxu0 0
      %1527 = vmatmul.mubr.bf16.gmra.mxu0 %v1365
      %v1528 = vpop.f32.mrf.mxu0
      %v1529 = vadd.f32 0.0, %v1528
      %v1530 = vpop.f32.mrf.mxu0
      %v1531 = vpop.f32.mrf.mxu0
      %v1532 = vadd.f32 0.0, %v1531
      %v1533 = vpop.f32.mrf.mxu0
      %1534 = vmatprep.mubr.bf16.mxu0 0
      %1535 = vmatmul.mubr.bf16.gmra.mxu0 %v1367
      %v1536 = vpop.f32.mrf.mxu0
      %v1537 = vadd.f32 0.0, %v1536
      %v1538 = vpop.f32.mrf.mxu0
      %v1539 = vpop.f32.mrf.mxu0
      %v1540 = vadd.f32 0.0, %v1539
      %v1541 = vpop.f32.mrf.mxu0
      %1542 = vmatprep.mubr.bf16.mxu0 0
      %1543 = vmatmul.mubr.bf16.gmra.mxu0 %v1369
      %v1544 = vpop.f32.mrf.mxu0
      %v1545 = vadd.f32 0.0, %v1544
      %v1546 = vpop.f32.mrf.mxu0
      %v1547 = vpop.f32.mrf.mxu0
      %v1548 = vadd.f32 0.0, %v1547
      %v1549 = vpop.f32.mrf.mxu0
      %1550 = vmatprep.mubr.bf16.mxu0 0
      %1551 = vmatmul.mubr.bf16.gmra.mxu0 %v1371
      %v1552 = vpop.f32.mrf.mxu0
      %v1553 = vadd.f32 0.0, %v1552
      %v1554 = vpop.f32.mrf.mxu0
      %v1555 = vpop.f32.mrf.mxu0
      %v1556 = vadd.f32 0.0, %v1555
      %v1557 = vpop.f32.mrf.mxu0
      %1558 = vmatprep.mubr.bf16.mxu0 0
      %1559 = vmatmul.mubr.bf16.gmra.mxu0 %v1373
      %v1560 = vpop.f32.mrf.mxu0
      %v1561 = vadd.f32 0.0, %v1560
      %v1562 = vpop.f32.mrf.mxu0
      %v1563 = vpop.f32.mrf.mxu0
      %v1564 = vadd.f32 0.0, %v1563
      %v1565 = vpop.f32.mrf.mxu0
      %1566 = vmatprep.mubr.bf16.mxu0 0
      %1567 = vmatmul.mubr.bf16.gmra.mxu0 %v1375
      %v1568 = vpop.f32.mrf.mxu0
      %v1569 = vadd.f32 0.0, %v1568
      %v1570 = vpop.f32.mrf.mxu0
      %v1571 = vpop.f32.mrf.mxu0
      %v1572 = vadd.f32 0.0, %v1571
      %v1573 = vpop.f32.mrf.mxu0
      %1574 = vmatprep.mubr.bf16.mxu0 0
      %1575 = vmatmul.mubr.bf16.gmra.mxu0 %v1377
      %v1576 = vpop.f32.mrf.mxu0
      %v1577 = vadd.f32 0.0, %v1576
      %v1578 = vpop.f32.mrf.mxu0
      %v1579 = vpop.f32.mrf.mxu0
      %v1580 = vadd.f32 0.0, %v1579
      %v1581 = vpop.f32.mrf.mxu0
      %1582 = vmatprep.mubr.bf16.mxu0 0
      %1583 = vmatmul.mubr.bf16.gmra.mxu0 %v1379
      %v1584 = vpop.f32.mrf.mxu0
      %v1585 = vadd.f32 0.0, %v1584
      %v1586 = vpop.f32.mrf.mxu0
      %v1587 = vpop.f32.mrf.mxu0
      %v1588 = vadd.f32 0.0, %v1587
      %v1589 = vpop.f32.mrf.mxu0
      %1590 = vmatprep.mubr.bf16.mxu0 0
      %1591 = vmatmul.mubr.bf16.gmra.mxu0 %v1381
      %v1592 = vpop.f32.mrf.mxu0
      %v1593 = vadd.f32 0.0, %v1592
      %v1594 = vpop.f32.mrf.mxu0
      %v1595 = vpop.f32.mrf.mxu0
      %v1596 = vadd.f32 0.0, %v1595
      %v1597 = vpop.f32.mrf.mxu0
      %1598 = vmatprep.mubr.bf16.mxu0 0
      %1599 = vmatmul.mubr.bf16.gmra.mxu0 %v1383
      %v1600 = vpop.f32.mrf.mxu0
      %v1601 = vadd.f32 0.0, %v1600
      %v1602 = vpop.f32.mrf.mxu0
      %v1603 = vpop.f32.mrf.mxu0
      %v1604 = vadd.f32 0.0, %v1603
      %v1605 = vpop.f32.mrf.mxu0
      %1606 = vmatprep.mubr.bf16.mxu0 0
      %1607 = vmatmul.mubr.bf16.gmra.mxu0 %v1385
      %v1608 = vpop.f32.mrf.mxu0
      %v1609 = vadd.f32 0.0, %v1608
      %v1610 = vpop.f32.mrf.mxu0
      %v1611 = vpop.f32.mrf.mxu0
      %v1612 = vadd.f32 0.0, %v1611
      %v1613 = vpop.f32.mrf.mxu0
      %1614 = vmatprep.mubr.bf16.mxu0 0
      %1615 = vmatmul.mubr.bf16.gmra.mxu0 %v1387
      %v1616 = vpop.f32.mrf.mxu0
      %v1617 = vadd.f32 0.0, %v1616
      %v1618 = vpop.f32.mrf.mxu0
      %v1619 = vpop.f32.mrf.mxu0
      %v1620 = vadd.f32 0.0, %v1619
      %v1621 = vpop.f32.mrf.mxu0
      %1622 = vmatprep.mubr.bf16.mxu0 0
      %1623 = vmatmul.mubr.bf16.gmra.mxu0 %v1389
      %v1624 = vpop.f32.mrf.mxu0
      %v1625 = vadd.f32 0.0, %v1624
      %v1626 = vpop.f32.mrf.mxu0
      %v1627 = vpop.f32.mrf.mxu0
      %v1628 = vadd.f32 0.0, %v1627
      %v1629 = vpop.f32.mrf.mxu0
      %1630 = vmatprep.mubr.bf16.mxu0 0
      %1631 = vmatmul.mubr.bf16.gmra.mxu0 %v1391
      %v1632 = vpop.f32.mrf.mxu0
      %v1633 = vadd.f32 0.0, %v1632
      %v1634 = vpop.f32.mrf.mxu0
      %v1635 = vpop.f32.mrf.mxu0
      %v1636 = vadd.f32 0.0, %v1635
      %v1637 = vpop.f32.mrf.mxu0
      %1638 = vmatprep.mubr.bf16.mxu0 0
      %1639 = vmatmul.mubr.bf16.gmra.mxu0 %v1393
      %v1640 = vpop.f32.mrf.mxu0
      %v1641 = vadd.f32 0.0, %v1640
      %v1642 = vpop.f32.mrf.mxu0
      %v1643 = vpop.f32.mrf.mxu0
      %v1644 = vadd.f32 0.0, %v1643
      %v1645 = vpop.f32.mrf.mxu0
      %1646 = vmatprep.mubr.bf16.mxu0 0
      %1647 = vmatmul.mubr.bf16.gmra.mxu0 %v1395
      %v1648 = vpop.f32.mrf.mxu0
      %v1649 = vadd.f32 0.0, %v1648
      %v1650 = vpop.f32.mrf.mxu0
      %v1651 = vpop.f32.mrf.mxu0
      %v1652 = vadd.f32 0.0, %v1651
      %v1653 = vpop.f32.mrf.mxu0
      %1654 = vmatprep.mubr.bf16.mxu0 0
      %1655 = vmatmul.mubr.bf16.gmra.mxu0 %v1397
      %v1656 = vpop.f32.mrf.mxu0
      %v1657 = vadd.f32 0.0, %v1656
      %v1658 = vpop.f32.mrf.mxu0
      %v1659 = vpop.f32.mrf.mxu0
      %v1660 = vadd.f32 0.0, %v1659
      %v1661 = vpop.f32.mrf.mxu0
      %1662 = vmatprep.mubr.bf16.mxu0 0
      %1663 = vmatmul.mubr.bf16.gmra.mxu0 %v1399
      %v1664 = vpop.f32.mrf.mxu0
      %v1665 = vadd.f32 0.0, %v1664
      %v1666 = vpop.f32.mrf.mxu0
      %v1667 = vpop.f32.mrf.mxu0
      %v1668 = vadd.f32 0.0, %v1667
      %v1669 = vpop.f32.mrf.mxu0
      %1670 = vmatprep.mubr.bf16.mxu0 0
      %1671 = vmatmul.mubr.bf16.gmra.mxu0 %v1401
      %v1672 = vpop.f32.mrf.mxu0
      %v1673 = vadd.f32 0.0, %v1672
      %v1674 = vpop.f32.mrf.mxu0
      %v1675 = vpop.f32.mrf.mxu0
      %v1676 = vadd.f32 0.0, %v1675
      %v1677 = vpop.f32.mrf.mxu0
      %1678 = vmatprep.mubr.bf16.mxu0 0
      %1679 = vmatmul.mubr.bf16.gmra.mxu0 %v1403
      %v1680 = vpop.f32.mrf.mxu0
      %v1681 = vadd.f32 0.0, %v1680
      %v1682 = vpop.f32.mrf.mxu0
      %v1683 = vpop.f32.mrf.mxu0
      %v1684 = vadd.f32 0.0, %v1683
      %v1685 = vpop.f32.mrf.mxu0
      %1686 = vmatprep.mubr.bf16.mxu0 0
      %1687 = vmatmul.mubr.bf16.gmra.mxu0 %v1405
      %v1688 = vpop.f32.mrf.mxu0
      %v1689 = vadd.f32 0.0, %v1688
      %v1690 = vpop.f32.mrf.mxu0
      %v1691 = vpop.f32.mrf.mxu0
      %v1692 = vadd.f32 0.0, %v1691
      %v1693 = vpop.f32.mrf.mxu0
      %1694 = vmatprep.mubr.bf16.mxu0 0
      %1695 = vmatmul.mubr.bf16.gmra.mxu0 %v1407
      %v1696 = vpop.f32.mrf.mxu0
      %v1697 = vadd.f32 0.0, %v1696
      %v1698 = vpop.f32.mrf.mxu0
      %v1699 = vpop.f32.mrf.mxu0
      %v1700 = vadd.f32 0.0, %v1699
      %v1701 = vpop.f32.mrf.mxu0
      %1702 = vmatprep.mubr.bf16.mxu0 0
      %1703 = vmatmul.mubr.bf16.gmra.mxu0 %v1409
      %v1704 = vpop.f32.mrf.mxu0
      %v1705 = vadd.f32 0.0, %v1704
      %v1706 = vpop.f32.mrf.mxu0
      %v1707 = vpop.f32.mrf.mxu0
      %v1708 = vadd.f32 0.0, %v1707
      %v1709 = vpop.f32.mrf.mxu0
      %1710 = vmatprep.mubr.bf16.mxu0 0
      %1711 = vmatmul.mubr.bf16.gmra.mxu0 %v1411
      %v1712 = vpop.f32.mrf.mxu0
      %v1713 = vadd.f32 0.0, %v1712
      %v1714 = vpop.f32.mrf.mxu0
      %v1715 = vpop.f32.mrf.mxu0
      %v1716 = vadd.f32 0.0, %v1715
      %v1717 = vpop.f32.mrf.mxu0
      %1718 = vmatprep.mubr.bf16.mxu0 0
      %1719 = vmatmul.mubr.bf16.gmra.mxu0 %v1410
      %v1720 = vpop.f32.mrf.mxu0
      %v1721 = vadd.f32 0.0, %v1720
      %v1722 = vpop.f32.mrf.mxu0
      %v1723 = vpop.f32.mrf.mxu0
      %v1724 = vpop.f32.mrf.mxu0
      %1725 = vdwg.mxu0
      %v1726 = vadd.f32 %v1134, %v1521
      %v1727 = vadd.f32 %v1137, %v1524
      %v1728 = vadd.f32 %v1142, %v1529
      %v1729 = vadd.f32 %v1145, %v1532
      %v1730 = vadd.f32 %v1150, %v1537
      %v1731 = vadd.f32 %v1153, %v1540
      %v1732 = vadd.f32 %v1158, %v1545
      %v1733 = vadd.f32 %v1161, %v1548
      %v1734 = vadd.f32 %v1166, %v1553
      %v1735 = vadd.f32 %v1169, %v1556
      %v1736 = vadd.f32 %v1174, %v1561
      %v1737 = vadd.f32 %v1177, %v1564
      %v1738 = vadd.f32 %v1182, %v1569
      %v1739 = vadd.f32 %v1185, %v1572
      %v1740 = vadd.f32 %v1190, %v1577
      %v1741 = vadd.f32 %v1193, %v1580
      %v1742 = vadd.f32 %v1198, %v1585
      %v1743 = vadd.f32 %v1201, %v1588
      %v1744 = vadd.f32 %v1206, %v1593
      %v1745 = vadd.f32 %v1209, %v1596
      %v1746 = vadd.f32 %v1214, %v1601
      %v1747 = vadd.f32 %v1217, %v1604
      %v1748 = vadd.f32 %v1222, %v1609
      %v1749 = vadd.f32 %v1225, %v1612
      %v1750 = vadd.f32 %v1230, %v1617
      %v1751 = vadd.f32 %v1233, %v1620
      %v1752 = vadd.f32 %v1238, %v1625
      %v1753 = vadd.f32 %v1241, %v1628
      %v1754 = vadd.f32 %v1246, %v1633
      %v1755 = vadd.f32 %v1249, %v1636
      %v1756 = vadd.f32 %v1254, %v1641
      %v1757 = vadd.f32 %v1257, %v1644
      %v1758 = vadd.f32 %v1262, %v1649
      %v1759 = vadd.f32 %v1265, %v1652
      %v1760 = vadd.f32 %v1270, %v1657
      %v1761 = vadd.f32 %v1273, %v1660
      %v1762 = vadd.f32 %v1278, %v1665
      %v1763 = vadd.f32 %v1281, %v1668
      %v1764 = vadd.f32 %v1286, %v1673
      %v1765 = vadd.f32 %v1289, %v1676
      %v1766 = vadd.f32 %v1294, %v1681
      %v1767 = vadd.f32 %v1297, %v1684
      %v1768 = vadd.f32 %v1302, %v1689
      %v1769 = vadd.f32 %v1305, %v1692
      %v1770 = vadd.f32 %v1310, %v1697
      %v1771 = vadd.f32 %v1313, %v1700
      %v1772 = vadd.f32 %v1318, %v1705
      %v1773 = vadd.f32 %v1321, %v1708
      %v1774 = vadd.f32 %v1326, %v1713
      %v1775 = vadd.f32 %v1329, %v1716
      %v1776 = vadd.f32 %v1334, %v1721
      %v1777 = vld [vmem:[%s272 + $0xc] sm:$0xf]
      %v1778 = vld [vmem:[%s272 + $0x10] sm:$0xf]
      %v1779 = vld [vmem:[%s272 + $0x14] sm:$0xf]
      %v1780 = vld [vmem:[%s272 + $0x18] sm:$0xf]
      %v1781 = vld [vmem:[%s272 + $0x1c] sm:$0xf]
      %v1782 = vld [vmem:[%s272 + $0x20] sm:$0xf]
      %v1783 = vld [vmem:[%s272 + $0x24] sm:$0xf]
      %v1784 = vld [vmem:[%s272 + $0x28] sm:$0xf]
      %v1785 = vld [vmem:[%s272 + $0x2c] sm:$0xf]
      %v1786 = vld [vmem:[%s272 + $0x30] sm:$0xf]
      %v1787 = vld [vmem:[%s272 + $0x34] sm:$0xf]
      %v1788 = vld [vmem:[%s272 + $0x38] sm:$0xf]
      %v1789 = vld [vmem:[%s272 + $0x3c] sm:$0xf]
      %v1790 = vld [vmem:[%s272 + $0x40] sm:$0xf]
      %v1791 = vld [vmem:[%s272 + $0x44] sm:$0xf]
      %v1792 = vld [vmem:[%s272 + $0x48] sm:$0xf]
      %v1793 = vld [vmem:[%s272 + $0x4c] sm:$0xf]
      %v1794 = vld [vmem:[%s272 + $0x50] sm:$0xf]
      %v1795 = vld [vmem:[%s272 + $0x54] sm:$0xf]
      %v1796 = vld [vmem:[%s272 + $0x58] sm:$0xf]
      %v1797 = vld [vmem:[%s272 + $0x5c] sm:$0xf]
      %v1798 = vld [vmem:[%s272 + $0x60] sm:$0xf]
      %v1799 = vld [vmem:[%s272 + $0x64] sm:$0xf]
      %v1800 = vld [vmem:[%s272 + $0x68] sm:$0xf]
      %v1801 = vld [vmem:[%s272 + $0x6c] sm:$0xf]
      %v1802 = vld [vmem:[%s272 + $0x70] sm:$0xf]
      %v1803 = vld [vmem:[%s272 + $0x74] sm:$0xf]
      %v1804 = vld [vmem:[%s272 + $0x78] sm:$0xf]
      %v1805 = vld [vmem:[%s272 + $0x7c] sm:$0xf]
      %v1806 = vld [vmem:[%s272 + $0x80] sm:$0xf]
      %v1807 = vld [vmem:[%s272 + $0x84] sm:$0xf]
      %v1808 = vld [vmem:[%s272 + $0x88] sm:$0xf]
      %v1809 = vld [vmem:[%s272 + $0x8c] sm:$0xf]
      %v1810 = vld [vmem:[%s272 + $0x90] sm:$0xf]
      %v1811 = vld [vmem:[%s272 + $0x94] sm:$0xf]
      %v1812 = vld [vmem:[%s272 + $0x98] sm:$0xf]
      %v1813 = vld [vmem:[%s272 + $0x9c] sm:$0xf]
      %v1814 = vld [vmem:[%s272 + $0xa0] sm:$0xf]
      %v1815 = vld [vmem:[%s272 + $0xa4] sm:$0xf]
      %v1816 = vld [vmem:[%s272 + $0xa8] sm:$0xf]
      %v1817 = vld [vmem:[%s272 + $0xac] sm:$0xf]
      %v1818 = vld [vmem:[%s272 + $0xb0] sm:$0xf]
      %v1819 = vld [vmem:[%s272 + $0xb4] sm:$0xf]
      %v1820 = vld [vmem:[%s272 + $0xb8] sm:$0xf]
      %v1821 = vld [vmem:[%s272 + $0xbc] sm:$0xf]
      %v1822 = vld [vmem:[%s272 + $0xc0] sm:$0xf]
      %v1823 = vld [vmem:[%s272 + $0xc4] sm:$0xf]
      %v1824 = vld [vmem:[%s272 + $0xc8] sm:$0xf]
      %v1825 = vld [vmem:[%s272 + $0xcc] sm:$0xf]
      %v1826 = vld [vmem:[%s272 + $0xd0] sm:$0xf]
      %v1827 = vld [vmem:[%s272 + $0xd4] sm:$0xf]
      %s1828 = scalar_lea.vmem %s1, 192
      %v1829 = vld [vmem:[%s1828] sm:$0xf]
      %v1830 = vld [vmem:[%s1828 + $0x4] sm:$0xf]
      %v1831 = vld [vmem:[%s1828 + $0x8] sm:$0xf]
      %v1832 = vld [vmem:[%s1828 + $0xc] sm:$0xf]
      %v1833 = vld [vmem:[%s1828 + $0x10] sm:$0xf]
      %v1834 = vld [vmem:[%s1828 + $0x14] sm:$0xf]
      %v1835 = vld [vmem:[%s1828 + $0x18] sm:$0xf]
      %v1836 = vld [vmem:[%s1828 + $0x1c] sm:$0xf]
      %v1837 = vld [vmem:[%s1828 + $0x20] sm:$0xf]
      %v1838 = vld [vmem:[%s1828 + $0x24] sm:$0xf]
      %v1839 = vld [vmem:[%s1828 + $0x28] sm:$0xf]
      %v1840 = vld [vmem:[%s1828 + $0x2c] sm:$0xf]
      %v1841 = vld [vmem:[%s1828 + $0x30] sm:$0xf]
      %v1842 = vld [vmem:[%s1828 + $0x34] sm:$0xf]
      %v1843 = vld [vmem:[%s1828 + $0x38] sm:$0xf]
      %v1844 = vld [vmem:[%s1828 + $0x3c] sm:$0xf]
      %v1896 = vunpack.c.l.b16 %v1777
      %v1897 = vunpack.c.l.b16 %v1778
      %v1898 = vunpack.c.l.b16 %v1779
      %v1899 = vunpack.c.l.b16 %v1780
      %v1900 = vunpack.c.l.b16 %v1781
      %v1901 = vunpack.c.l.b16 %v1782
      %v1902 = vunpack.c.l.b16 %v1783
      %v1903 = vunpack.c.l.b16 %v1784
      %v1904 = vunpack.c.l.b16 %v1785
      %v1905 = vunpack.c.l.b16 %v1786
      %v1906 = vunpack.c.l.b16 %v1787
      %v1907 = vunpack.c.l.b16 %v1788
      %v1908 = vunpack.c.l.b16 %v1789
      %v1909 = vunpack.c.l.b16 %v1790
      %v1910 = vunpack.c.l.b16 %v1791
      %v1911 = vunpack.c.l.b16 %v1792
      %v1912 = vunpack.c.l.b16 %v1793
      %v1913 = vunpack.c.l.b16 %v1794
      %v1914 = vunpack.c.l.b16 %v1795
      %v1915 = vunpack.c.l.b16 %v1796
      %v1916 = vunpack.c.l.b16 %v1797
      %v1917 = vunpack.c.l.b16 %v1798
      %v1918 = vunpack.c.l.b16 %v1799
      %v1919 = vunpack.c.l.b16 %v1800
      %v1920 = vunpack.c.l.b16 %v1801
      %v1921 = vunpack.c.l.b16 %v1802
      %v1922 = vunpack.c.l.b16 %v1803
      %v1923 = vunpack.c.l.b16 %v1804
      %v1924 = vunpack.c.l.b16 %v1805
      %v1925 = vunpack.c.l.b16 %v1806
      %v1926 = vunpack.c.l.b16 %v1807
      %v1927 = vunpack.c.l.b16 %v1808
      %v1928 = vunpack.c.l.b16 %v1809
      %v1929 = vunpack.c.l.b16 %v1810
      %v1930 = vunpack.c.l.b16 %v1811
      %v1931 = vunpack.c.l.b16 %v1812
      %v1932 = vunpack.c.l.b16 %v1813
      %v1933 = vunpack.c.l.b16 %v1814
      %v1934 = vunpack.c.l.b16 %v1815
      %v1935 = vunpack.c.l.b16 %v1816
      %v1936 = vunpack.c.l.b16 %v1817
      %v1937 = vunpack.c.l.b16 %v1818
      %v1938 = vunpack.c.l.b16 %v1819
      %v1939 = vunpack.c.l.b16 %v1820
      %v1940 = vunpack.c.l.b16 %v1821
      %v1941 = vunpack.c.l.b16 %v1822
      %v1942 = vunpack.c.l.b16 %v1823
      %v1943 = vunpack.c.l.b16 %v1824
      %v1944 = vunpack.c.l.b16 %v1825
      %v1945 = vunpack.c.l.b16 %v1826
      %v1946 = vunpack.c.l.b16 %v1827
      %v1947 = vpack.c.b16 %v1897, %v1896
      %v1948 = vpack.c.b16 %v1899, %v1898
      %v1949 = vpack.c.b16 %v1901, %v1900
      %v1950 = vpack.c.b16 %v1903, %v1902
      %v1951 = vpack.c.b16 %v1905, %v1904
      %v1952 = vpack.c.b16 %v1907, %v1906
      %v1953 = vpack.c.b16 %v1909, %v1908
      %v1954 = vpack.c.b16 %v1911, %v1910
      %v1955 = vpack.c.b16 %v1913, %v1912
      %v1956 = vpack.c.b16 %v1915, %v1914
      %v1957 = vpack.c.b16 %v1917, %v1916
      %v1958 = vpack.c.b16 %v1919, %v1918
      %v1959 = vpack.c.b16 %v1921, %v1920
      %v1960 = vpack.c.b16 %v1923, %v1922
      %v1961 = vpack.c.b16 %v1925, %v1924
      %v1962 = vpack.c.b16 %v1927, %v1926
      %v1963 = vpack.c.b16 %v1929, %v1928
      %v1964 = vpack.c.b16 %v1931, %v1930
      %v1965 = vpack.c.b16 %v1933, %v1932
      %v1966 = vpack.c.b16 %v1935, %v1934
      %v1967 = vpack.c.b16 %v1937, %v1936
      %v1968 = vpack.c.b16 %v1939, %v1938
      %v1969 = vpack.c.b16 %v1941, %v1940
      %v1970 = vpack.c.b16 %v1943, %v1942
      %v1971 = vpack.c.b16 %v1945, %v1944
      %v1972 = vpack.c.b16 %v1946, %v1946
      %v2015 = vunpack.c.l.b16 %v1829
      %v2016 = vunpack.c.l.b16 %v1830
      %v2017 = vunpack.c.l.b16 %v1831
      %v2018 = vunpack.c.l.b16 %v1832
      %v2019 = vunpack.c.l.b16 %v1833
      %v2020 = vunpack.c.l.b16 %v1834
      %v2021 = vunpack.c.l.b16 %v1835
      %v2022 = vunpack.c.l.b16 %v1836
      %v2023 = vunpack.c.l.b16 %v1837
      %v2024 = vunpack.c.l.b16 %v1838
      %v2025 = vunpack.c.l.b16 %v1839
      %v2026 = vunpack.c.l.b16 %v1840
      %v2027 = vunpack.c.l.b16 %v1841
      %v2028 = vunpack.c.l.b16 %v1842
      %v2029 = vunpack.c.l.b16 %v1843
      %v2030 = vunpack.c.l.b16 %v1844
      %v2031 = vpack.c.b16 %v2016, %v2015
      %v2032 = vpack.c.b16 %v2018, %v2017
      %v2033 = vpack.c.b16 %v2020, %v2019
      %v2034 = vpack.c.b16 %v2022, %v2021
      %v2035 = vpack.c.b16 %v2024, %v2023
      %v2036 = vpack.c.b16 %v2026, %v2025
      %v2037 = vpack.c.b16 %v2028, %v2027
      %v2038 = vpack.c.b16 %v2030, %v2029
      %2047 = vmatprep.subr.bf16.mxu0 0
      %2048 = vmatpush1.bf16.msra.mxu0 %v2038
      %2049 = vmatprep.subr.bf16.mxu0 0
      %2050 = vmatpush1.bf16.msra.mxu0 %v2037
      %2051 = vmatprep.subr.bf16.mxu0 0
      %2052 = vmatpush1.bf16.msra.mxu0 %v2036
      %2053 = vmatprep.subr.bf16.mxu0 0
      %2054 = vmatpush1.bf16.msra.mxu0 %v2035
      %2055 = vmatprep.subr.bf16.mxu0 0
      %2056 = vmatpush1.bf16.msra.mxu0 %v2034
      %2057 = vmatprep.subr.bf16.mxu0 0
      %2058 = vmatpush1.bf16.msra.mxu0 %v2033
      %2059 = vmatprep.subr.bf16.mxu0 0
      %2060 = vmatpush1.bf16.msra.mxu0 %v2032
      %2061 = vmatprep.subr.bf16.mxu0 0
      %2062 = vmatpush1.bf16.msra.mxu0 %v2031
      %2063 = vmatprep.subr.bf16.mxu0 0
      %2064 = vmatpush2.bf16.msra.mxu0 0
      %2065 = vmatprep.subr.bf16.mxu0 0
      %2066 = vmatpush2.bf16.msra.mxu0 0
      %2067 = vmatprep.subr.bf16.mxu0 0
      %2068 = vmatpush2.bf16.msra.mxu0 0
      %2069 = vmatprep.subr.bf16.mxu0 0
      %2070 = vmatpush2.bf16.msra.mxu0 0
      %2071 = vmatprep.subr.bf16.mxu0 0
      %2072 = vmatpush2.bf16.msra.mxu0 0
      %2073 = vmatprep.subr.bf16.mxu0 0
      %2074 = vmatpush2.bf16.msra.mxu0 0
      %2075 = vmatprep.subr.bf16.mxu0 0
      %2076 = vmatpush2.bf16.msra.mxu0 0
      %2077 = vmatprep.subr.bf16.mxu0 0
      %2078 = vmatpush2.bf16.msra.mxu0 0
      %2079 = vmatprep.mubr.bf16.mxu0 0
      %2080 = vmatmul.mubr.bf16.gmra.mxu0 %v1947
      %v2081 = vpop.f32.mrf.mxu0
      %v2082 = vadd.f32 0.0, %v2081
      %v2083 = vpop.f32.mrf.mxu0
      %v2084 = vpop.f32.mrf.mxu0
      %v2085 = vadd.f32 0.0, %v2084
      %v2086 = vpop.f32.mrf.mxu0
      %2087 = vmatprep.mubr.bf16.mxu0 0
      %2088 = vmatmul.mubr.bf16.gmra.mxu0 %v1948
      %v2089 = vpop.f32.mrf.mxu0
      %v2090 = vadd.f32 0.0, %v2089
      %v2091 = vpop.f32.mrf.mxu0
      %v2092 = vpop.f32.mrf.mxu0
      %v2093 = vadd.f32 0.0, %v2092
      %v2094 = vpop.f32.mrf.mxu0
      %2095 = vmatprep.mubr.bf16.mxu0 0
      %2096 = vmatmul.mubr.bf16.gmra.mxu0 %v1949
      %v2097 = vpop.f32.mrf.mxu0
      %v2098 = vadd.f32 0.0, %v2097
      %v2099 = vpop.f32.mrf.mxu0
      %v2100 = vpop.f32.mrf.mxu0
      %v2101 = vadd.f32 0.0, %v2100
      %v2102 = vpop.f32.mrf.mxu0
      %2103 = vmatprep.mubr.bf16.mxu0 0
      %2104 = vmatmul.mubr.bf16.gmra.mxu0 %v1950
      %v2105 = vpop.f32.mrf.mxu0
      %v2106 = vadd.f32 0.0, %v2105
      %v2107 = vpop.f32.mrf.mxu0
      %v2108 = vpop.f32.mrf.mxu0
      %v2109 = vadd.f32 0.0, %v2108
      %v2110 = vpop.f32.mrf.mxu0
      %2111 = vmatprep.mubr.bf16.mxu0 0
      %2112 = vmatmul.mubr.bf16.gmra.mxu0 %v1951
      %v2113 = vpop.f32.mrf.mxu0
      %v2114 = vadd.f32 0.0, %v2113
      %v2115 = vpop.f32.mrf.mxu0
      %v2116 = vpop.f32.mrf.mxu0
      %v2117 = vadd.f32 0.0, %v2116
      %v2118 = vpop.f32.mrf.mxu0
      %2119 = vmatprep.mubr.bf16.mxu0 0
      %2120 = vmatmul.mubr.bf16.gmra.mxu0 %v1952
      %v2121 = vpop.f32.mrf.mxu0
      %v2122 = vadd.f32 0.0, %v2121
      %v2123 = vpop.f32.mrf.mxu0
      %v2124 = vpop.f32.mrf.mxu0
      %v2125 = vadd.f32 0.0, %v2124
      %v2126 = vpop.f32.mrf.mxu0
      %2127 = vmatprep.mubr.bf16.mxu0 0
      %2128 = vmatmul.mubr.bf16.gmra.mxu0 %v1953
      %v2129 = vpop.f32.mrf.mxu0
      %v2130 = vadd.f32 0.0, %v2129
      %v2131 = vpop.f32.mrf.mxu0
      %v2132 = vpop.f32.mrf.mxu0
      %v2133 = vadd.f32 0.0, %v2132
      %v2134 = vpop.f32.mrf.mxu0
      %2135 = vmatprep.mubr.bf16.mxu0 0
      %2136 = vmatmul.mubr.bf16.gmra.mxu0 %v1954
      %v2137 = vpop.f32.mrf.mxu0
      %v2138 = vadd.f32 0.0, %v2137
      %v2139 = vpop.f32.mrf.mxu0
      %v2140 = vpop.f32.mrf.mxu0
      %v2141 = vadd.f32 0.0, %v2140
      %v2142 = vpop.f32.mrf.mxu0
      %2143 = vmatprep.mubr.bf16.mxu0 0
      %2144 = vmatmul.mubr.bf16.gmra.mxu0 %v1955
      %v2145 = vpop.f32.mrf.mxu0
      %v2146 = vadd.f32 0.0, %v2145
      %v2147 = vpop.f32.mrf.mxu0
      %v2148 = vpop.f32.mrf.mxu0
      %v2149 = vadd.f32 0.0, %v2148
      %v2150 = vpop.f32.mrf.mxu0
      %2151 = vmatprep.mubr.bf16.mxu0 0
      %2152 = vmatmul.mubr.bf16.gmra.mxu0 %v1956
      %v2153 = vpop.f32.mrf.mxu0
      %v2154 = vadd.f32 0.0, %v2153
      %v2155 = vpop.f32.mrf.mxu0
      %v2156 = vpop.f32.mrf.mxu0
      %v2157 = vadd.f32 0.0, %v2156
      %v2158 = vpop.f32.mrf.mxu0
      %2159 = vmatprep.mubr.bf16.mxu0 0
      %2160 = vmatmul.mubr.bf16.gmra.mxu0 %v1957
      %v2161 = vpop.f32.mrf.mxu0
      %v2162 = vadd.f32 0.0, %v2161
      %v2163 = vpop.f32.mrf.mxu0
      %v2164 = vpop.f32.mrf.mxu0
      %v2165 = vadd.f32 0.0, %v2164
      %v2166 = vpop.f32.mrf.mxu0
      %2167 = vmatprep.mubr.bf16.mxu0 0
      %2168 = vmatmul.mubr.bf16.gmra.mxu0 %v1958
      %v2169 = vpop.f32.mrf.mxu0
      %v2170 = vadd.f32 0.0, %v2169
      %v2171 = vpop.f32.mrf.mxu0
      %v2172 = vpop.f32.mrf.mxu0
      %v2173 = vadd.f32 0.0, %v2172
      %v2174 = vpop.f32.mrf.mxu0
      %2175 = vmatprep.mubr.bf16.mxu0 0
      %2176 = vmatmul.mubr.bf16.gmra.mxu0 %v1959
      %v2177 = vpop.f32.mrf.mxu0
      %v2178 = vadd.f32 0.0, %v2177
      %v2179 = vpop.f32.mrf.mxu0
      %v2180 = vpop.f32.mrf.mxu0
      %v2181 = vadd.f32 0.0, %v2180
      %v2182 = vpop.f32.mrf.mxu0
      %2183 = vmatprep.mubr.bf16.mxu0 0
      %2184 = vmatmul.mubr.bf16.gmra.mxu0 %v1960
      %v2185 = vpop.f32.mrf.mxu0
      %v2186 = vadd.f32 0.0, %v2185
      %v2187 = vpop.f32.mrf.mxu0
      %v2188 = vpop.f32.mrf.mxu0
      %v2189 = vadd.f32 0.0, %v2188
      %v2190 = vpop.f32.mrf.mxu0
      %2191 = vmatprep.mubr.bf16.mxu0 0
      %2192 = vmatmul.mubr.bf16.gmra.mxu0 %v1961
      %v2193 = vpop.f32.mrf.mxu0
      %v2194 = vadd.f32 0.0, %v2193
      %v2195 = vpop.f32.mrf.mxu0
      %v2196 = vpop.f32.mrf.mxu0
      %v2197 = vadd.f32 0.0, %v2196
      %v2198 = vpop.f32.mrf.mxu0
      %2199 = vmatprep.mubr.bf16.mxu0 0
      %2200 = vmatmul.mubr.bf16.gmra.mxu0 %v1962
      %v2201 = vpop.f32.mrf.mxu0
      %v2202 = vadd.f32 0.0, %v2201
      %v2203 = vpop.f32.mrf.mxu0
      %v2204 = vpop.f32.mrf.mxu0
      %v2205 = vadd.f32 0.0, %v2204
      %v2206 = vpop.f32.mrf.mxu0
      %2207 = vmatprep.mubr.bf16.mxu0 0
      %2208 = vmatmul.mubr.bf16.gmra.mxu0 %v1963
      %v2209 = vpop.f32.mrf.mxu0
      %v2210 = vadd.f32 0.0, %v2209
      %v2211 = vpop.f32.mrf.mxu0
      %v2212 = vpop.f32.mrf.mxu0
      %v2213 = vadd.f32 0.0, %v2212
      %v2214 = vpop.f32.mrf.mxu0
      %2215 = vmatprep.mubr.bf16.mxu0 0
      %2216 = vmatmul.mubr.bf16.gmra.mxu0 %v1964
      %v2217 = vpop.f32.mrf.mxu0
      %v2218 = vadd.f32 0.0, %v2217
      %v2219 = vpop.f32.mrf.mxu0
      %v2220 = vpop.f32.mrf.mxu0
      %v2221 = vadd.f32 0.0, %v2220
      %v2222 = vpop.f32.mrf.mxu0
      %2223 = vmatprep.mubr.bf16.mxu0 0
      %2224 = vmatmul.mubr.bf16.gmra.mxu0 %v1965
      %v2225 = vpop.f32.mrf.mxu0
      %v2226 = vadd.f32 0.0, %v2225
      %v2227 = vpop.f32.mrf.mxu0
      %v2228 = vpop.f32.mrf.mxu0
      %v2229 = vadd.f32 0.0, %v2228
      %v2230 = vpop.f32.mrf.mxu0
      %2231 = vmatprep.mubr.bf16.mxu0 0
      %2232 = vmatmul.mubr.bf16.gmra.mxu0 %v1966
      %v2233 = vpop.f32.mrf.mxu0
      %v2234 = vadd.f32 0.0, %v2233
      %v2235 = vpop.f32.mrf.mxu0
      %v2236 = vpop.f32.mrf.mxu0
      %v2237 = vadd.f32 0.0, %v2236
      %v2238 = vpop.f32.mrf.mxu0
      %2239 = vmatprep.mubr.bf16.mxu0 0
      %2240 = vmatmul.mubr.bf16.gmra.mxu0 %v1967
      %v2241 = vpop.f32.mrf.mxu0
      %v2242 = vadd.f32 0.0, %v2241
      %v2243 = vpop.f32.mrf.mxu0
      %v2244 = vpop.f32.mrf.mxu0
      %v2245 = vadd.f32 0.0, %v2244
      %v2246 = vpop.f32.mrf.mxu0
      %2247 = vmatprep.mubr.bf16.mxu0 0
      %2248 = vmatmul.mubr.bf16.gmra.mxu0 %v1968
      %v2249 = vpop.f32.mrf.mxu0
      %v2250 = vadd.f32 0.0, %v2249
      %v2251 = vpop.f32.mrf.mxu0
      %v2252 = vpop.f32.mrf.mxu0
      %v2253 = vadd.f32 0.0, %v2252
      %v2254 = vpop.f32.mrf.mxu0
      %2255 = vmatprep.mubr.bf16.mxu0 0
      %2256 = vmatmul.mubr.bf16.gmra.mxu0 %v1969
      %v2257 = vpop.f32.mrf.mxu0
      %v2258 = vadd.f32 0.0, %v2257
      %v2259 = vpop.f32.mrf.mxu0
      %v2260 = vpop.f32.mrf.mxu0
      %v2261 = vadd.f32 0.0, %v2260
      %v2262 = vpop.f32.mrf.mxu0
      %2263 = vmatprep.mubr.bf16.mxu0 0
      %2264 = vmatmul.mubr.bf16.gmra.mxu0 %v1970
      %v2265 = vpop.f32.mrf.mxu0
      %v2266 = vadd.f32 0.0, %v2265
      %v2267 = vpop.f32.mrf.mxu0
      %v2268 = vpop.f32.mrf.mxu0
      %v2269 = vadd.f32 0.0, %v2268
      %v2270 = vpop.f32.mrf.mxu0
      %2271 = vmatprep.mubr.bf16.mxu0 0
      %2272 = vmatmul.mubr.bf16.gmra.mxu0 %v1971
      %v2273 = vpop.f32.mrf.mxu0
      %v2274 = vadd.f32 0.0, %v2273
      %v2275 = vpop.f32.mrf.mxu0
      %v2276 = vpop.f32.mrf.mxu0
      %v2277 = vadd.f32 0.0, %v2276
      %v2278 = vpop.f32.mrf.mxu0
      %2279 = vmatprep.mubr.bf16.mxu0 0
      %2280 = vmatmul.mubr.bf16.gmra.mxu0 %v1972
      %v2281 = vpop.f32.mrf.mxu0
      %v2282 = vadd.f32 0.0, %v2281
      %v2283 = vpop.f32.mrf.mxu0
      %v2284 = vpop.f32.mrf.mxu0
      %v2285 = vpop.f32.mrf.mxu0
      %2286 = vdwg.mxu0
      %v2287 = vadd.f32 %v1726, %v2082
      %v2288 = vadd.f32 %v1727, %v2085
      %v2289 = vadd.f32 %v1728, %v2090
      %v2290 = vadd.f32 %v1729, %v2093
      %v2291 = vadd.f32 %v1730, %v2098
      %v2292 = vadd.f32 %v1731, %v2101
      %v2293 = vadd.f32 %v1732, %v2106
      %v2294 = vadd.f32 %v1733, %v2109
      %v2295 = vadd.f32 %v1734, %v2114
      %v2296 = vadd.f32 %v1735, %v2117
      %v2297 = vadd.f32 %v1736, %v2122
      %v2298 = vadd.f32 %v1737, %v2125
      %v2299 = vadd.f32 %v1738, %v2130
      %v2300 = vadd.f32 %v1739, %v2133
      %v2301 = vadd.f32 %v1740, %v2138
      %v2302 = vadd.f32 %v1741, %v2141
      %v2303 = vadd.f32 %v1742, %v2146
      %v2304 = vadd.f32 %v1743, %v2149
      %v2305 = vadd.f32 %v1744, %v2154
      %v2306 = vadd.f32 %v1745, %v2157
      %v2307 = vadd.f32 %v1746, %v2162
      %v2308 = vadd.f32 %v1747, %v2165
      %v2309 = vadd.f32 %v1748, %v2170
      %v2310 = vadd.f32 %v1749, %v2173
      %v2311 = vadd.f32 %v1750, %v2178
      %v2312 = vadd.f32 %v1751, %v2181
      %v2313 = vadd.f32 %v1752, %v2186
      %v2314 = vadd.f32 %v1753, %v2189
      %v2315 = vadd.f32 %v1754, %v2194
      %v2316 = vadd.f32 %v1755, %v2197
      %v2317 = vadd.f32 %v1756, %v2202
      %v2318 = vadd.f32 %v1757, %v2205
      %v2319 = vadd.f32 %v1758, %v2210
      %v2320 = vadd.f32 %v1759, %v2213
      %v2321 = vadd.f32 %v1760, %v2218
      %v2322 = vadd.f32 %v1761, %v2221
      %v2323 = vadd.f32 %v1762, %v2226
      %v2324 = vadd.f32 %v1763, %v2229
      %v2325 = vadd.f32 %v1764, %v2234
      %v2326 = vadd.f32 %v1765, %v2237
      %v2327 = vadd.f32 %v1766, %v2242
      %v2328 = vadd.f32 %v1767, %v2245
      %v2329 = vadd.f32 %v1768, %v2250
      %v2330 = vadd.f32 %v1769, %v2253
      %v2331 = vadd.f32 %v1770, %v2258
      %v2332 = vadd.f32 %v1771, %v2261
      %v2333 = vadd.f32 %v1772, %v2266
      %v2334 = vadd.f32 %v1773, %v2269
      %v2335 = vadd.f32 %v1774, %v2274
      %v2336 = vadd.f32 %v1775, %v2277
      %v2337 = vadd.f32 %v1776, %v2282
      %v2338 = vld [vmem:[%s272 + $0xc] sm:$0xf]
      %v2339 = vld [vmem:[%s272 + $0x10] sm:$0xf]
      %v2340 = vld [vmem:[%s272 + $0x14] sm:$0xf]
      %v2341 = vld [vmem:[%s272 + $0x18] sm:$0xf]
      %v2342 = vld [vmem:[%s272 + $0x1c] sm:$0xf]
      %v2343 = vld [vmem:[%s272 + $0x20] sm:$0xf]
      %v2344 = vld [vmem:[%s272 + $0x24] sm:$0xf]
      %v2345 = vld [vmem:[%s272 + $0x28] sm:$0xf]
      %v2346 = vld [vmem:[%s272 + $0x2c] sm:$0xf]
      %v2347 = vld [vmem:[%s272 + $0x30] sm:$0xf]
      %v2348 = vld [vmem:[%s272 + $0x34] sm:$0xf]
      %v2349 = vld [vmem:[%s272 + $0x38] sm:$0xf]
      %v2350 = vld [vmem:[%s272 + $0x3c] sm:$0xf]
      %v2351 = vld [vmem:[%s272 + $0x40] sm:$0xf]
      %v2352 = vld [vmem:[%s272 + $0x44] sm:$0xf]
      %v2353 = vld [vmem:[%s272 + $0x48] sm:$0xf]
      %v2354 = vld [vmem:[%s272 + $0x4c] sm:$0xf]
      %v2355 = vld [vmem:[%s272 + $0x50] sm:$0xf]
      %v2356 = vld [vmem:[%s272 + $0x54] sm:$0xf]
      %v2357 = vld [vmem:[%s272 + $0x58] sm:$0xf]
      %v2358 = vld [vmem:[%s272 + $0x5c] sm:$0xf]
      %v2359 = vld [vmem:[%s272 + $0x60] sm:$0xf]
      %v2360 = vld [vmem:[%s272 + $0x64] sm:$0xf]
      %v2361 = vld [vmem:[%s272 + $0x68] sm:$0xf]
      %v2362 = vld [vmem:[%s272 + $0x6c] sm:$0xf]
      %v2363 = vld [vmem:[%s272 + $0x70] sm:$0xf]
      %v2364 = vld [vmem:[%s272 + $0x74] sm:$0xf]
      %v2365 = vld [vmem:[%s272 + $0x78] sm:$0xf]
      %v2366 = vld [vmem:[%s272 + $0x7c] sm:$0xf]
      %v2367 = vld [vmem:[%s272 + $0x80] sm:$0xf]
      %v2368 = vld [vmem:[%s272 + $0x84] sm:$0xf]
      %v2369 = vld [vmem:[%s272 + $0x88] sm:$0xf]
      %v2370 = vld [vmem:[%s272 + $0x8c] sm:$0xf]
      %v2371 = vld [vmem:[%s272 + $0x90] sm:$0xf]
      %v2372 = vld [vmem:[%s272 + $0x94] sm:$0xf]
      %v2373 = vld [vmem:[%s272 + $0x98] sm:$0xf]
      %v2374 = vld [vmem:[%s272 + $0x9c] sm:$0xf]
      %v2375 = vld [vmem:[%s272 + $0xa0] sm:$0xf]
      %v2376 = vld [vmem:[%s272 + $0xa4] sm:$0xf]
      %v2377 = vld [vmem:[%s272 + $0xa8] sm:$0xf]
      %v2378 = vld [vmem:[%s272 + $0xac] sm:$0xf]
      %v2379 = vld [vmem:[%s272 + $0xb0] sm:$0xf]
      %v2380 = vld [vmem:[%s272 + $0xb4] sm:$0xf]
      %v2381 = vld [vmem:[%s272 + $0xb8] sm:$0xf]
      %v2382 = vld [vmem:[%s272 + $0xbc] sm:$0xf]
      %v2383 = vld [vmem:[%s272 + $0xc0] sm:$0xf]
      %v2384 = vld [vmem:[%s272 + $0xc4] sm:$0xf]
      %v2385 = vld [vmem:[%s272 + $0xc8] sm:$0xf]
      %v2386 = vld [vmem:[%s272 + $0xcc] sm:$0xf]
      %v2387 = vld [vmem:[%s272 + $0xd0] sm:$0xf]
      %v2388 = vld [vmem:[%s272 + $0xd4] sm:$0xf]
      %v2389 = vld [vmem:[%s272 + $0xd8] sm:$0x1]
      %s2390 = scalar_lea.vmem %s1, 256
      %v2391 = vld [vmem:[%s2390] sm:$0xf]
      %v2392 = vld [vmem:[%s2390 + $0x4] sm:$0xf]
      %v2393 = vld [vmem:[%s2390 + $0x8] sm:$0xf]
      %v2394 = vld [vmem:[%s2390 + $0xc] sm:$0xf]
      %v2395 = vld [vmem:[%s2390 + $0x10] sm:$0xf]
      %v2396 = vld [vmem:[%s2390 + $0x14] sm:$0xf]
      %v2397 = vld [vmem:[%s2390 + $0x18] sm:$0xf]
      %v2398 = vld [vmem:[%s2390 + $0x1c] sm:$0xf]
      %v2399 = vld [vmem:[%s2390 + $0x20] sm:$0xf]
      %v2400 = vld [vmem:[%s2390 + $0x24] sm:$0xf]
      %v2401 = vld [vmem:[%s2390 + $0x28] sm:$0xf]
      %v2402 = vld [vmem:[%s2390 + $0x2c] sm:$0xf]
      %v2403 = vld [vmem:[%s2390 + $0x30] sm:$0xf]
      %v2404 = vld [vmem:[%s2390 + $0x34] sm:$0xf]
      %v2405 = vld [vmem:[%s2390 + $0x38] sm:$0xf]
      %v2406 = vld [vmem:[%s2390 + $0x3c] sm:$0xf]
      %v2459 = vunpack.c.l.b16 %v2338
      %v2460 = vunpack.c.l.b16 %v2339
      %v2461 = vunpack.c.l.b16 %v2340
      %v2462 = vunpack.c.l.b16 %v2341
      %v2463 = vunpack.c.l.b16 %v2342
      %v2464 = vunpack.c.l.b16 %v2343
      %v2465 = vunpack.c.l.b16 %v2344
      %v2466 = vunpack.c.l.b16 %v2345
      %v2467 = vunpack.c.l.b16 %v2346
      %v2468 = vunpack.c.l.b16 %v2347
      %v2469 = vunpack.c.l.b16 %v2348
      %v2470 = vunpack.c.l.b16 %v2349
      %v2471 = vunpack.c.l.b16 %v2350
      %v2472 = vunpack.c.l.b16 %v2351
      %v2473 = vunpack.c.l.b16 %v2352
      %v2474 = vunpack.c.l.b16 %v2353
      %v2475 = vunpack.c.l.b16 %v2354
      %v2476 = vunpack.c.l.b16 %v2355
      %v2477 = vunpack.c.l.b16 %v2356
      %v2478 = vunpack.c.l.b16 %v2357
      %v2479 = vunpack.c.l.b16 %v2358
      %v2480 = vunpack.c.l.b16 %v2359
      %v2481 = vunpack.c.l.b16 %v2360
      %v2482 = vunpack.c.l.b16 %v2361
      %v2483 = vunpack.c.l.b16 %v2362
      %v2484 = vunpack.c.l.b16 %v2363
      %v2485 = vunpack.c.l.b16 %v2364
      %v2486 = vunpack.c.l.b16 %v2365
      %v2487 = vunpack.c.l.b16 %v2366
      %v2488 = vunpack.c.l.b16 %v2367
      %v2489 = vunpack.c.l.b16 %v2368
      %v2490 = vunpack.c.l.b16 %v2369
      %v2491 = vunpack.c.l.b16 %v2370
      %v2492 = vunpack.c.l.b16 %v2371
      %v2493 = vunpack.c.l.b16 %v2372
      %v2494 = vunpack.c.l.b16 %v2373
      %v2495 = vunpack.c.l.b16 %v2374
      %v2496 = vunpack.c.l.b16 %v2375
      %v2497 = vunpack.c.l.b16 %v2376
      %v2498 = vunpack.c.l.b16 %v2377
      %v2499 = vunpack.c.l.b16 %v2378
      %v2500 = vunpack.c.l.b16 %v2379
      %v2501 = vunpack.c.l.b16 %v2380
      %v2502 = vunpack.c.l.b16 %v2381
      %v2503 = vunpack.c.l.b16 %v2382
      %v2504 = vunpack.c.l.b16 %v2383
      %v2505 = vunpack.c.l.b16 %v2384
      %v2506 = vunpack.c.l.b16 %v2385
      %v2507 = vunpack.c.l.b16 %v2386
      %v2508 = vunpack.c.l.b16 %v2387
      %v2509 = vunpack.c.l.b16 %v2388
      %v2510 = vunpack.c.l.b16 %v2389
      %v2511 = vpack.c.b16 %v2460, %v2459
      %v2512 = vpack.c.b16 %v2462, %v2461
      %v2513 = vpack.c.b16 %v2464, %v2463
      %v2514 = vpack.c.b16 %v2466, %v2465
      %v2515 = vpack.c.b16 %v2468, %v2467
      %v2516 = vpack.c.b16 %v2470, %v2469
      %v2517 = vpack.c.b16 %v2472, %v2471
      %v2518 = vpack.c.b16 %v2474, %v2473
      %v2519 = vpack.c.b16 %v2476, %v2475
      %v2520 = vpack.c.b16 %v2478, %v2477
      %v2521 = vpack.c.b16 %v2480, %v2479
      %v2522 = vpack.c.b16 %v2482, %v2481
      %v2523 = vpack.c.b16 %v2484, %v2483
      %v2524 = vpack.c.b16 %v2486, %v2485
      %v2525 = vpack.c.b16 %v2488, %v2487
      %v2526 = vpack.c.b16 %v2490, %v2489
      %v2527 = vpack.c.b16 %v2492, %v2491
      %v2528 = vpack.c.b16 %v2494, %v2493
      %v2529 = vpack.c.b16 %v2496, %v2495
      %v2530 = vpack.c.b16 %v2498, %v2497
      %v2531 = vpack.c.b16 %v2500, %v2499
      %v2532 = vpack.c.b16 %v2502, %v2501
      %v2533 = vpack.c.b16 %v2504, %v2503
      %v2534 = vpack.c.b16 %v2506, %v2505
      %v2535 = vpack.c.b16 %v2508, %v2507
      %v2536 = vpack.c.b16 %v2510, %v2509
      %v2538 = vshrl.u32 %v2511, 16
      %v2540 = vshll.u32 %v2511, 16
      %v2542 = vrot.slane %v2540, 1
      %v2543 = vor.u32 %v2538, %v2542
      %v2545 = vshll.u32 %v2512, 16
      %v2547 = vrot.slane %v2545, 1
      %v2548 = vsel %vm502, %v2543, %v2547
      %v2549 = vshrl.u32 %v2512, 16
      %v2551 = vor.u32 %v2549, %v2547
      %v2553 = vshll.u32 %v2513, 16
      %v2555 = vrot.slane %v2553, 1
      %v2556 = vsel %vm502, %v2551, %v2555
      %v2557 = vshrl.u32 %v2513, 16
      %v2559 = vor.u32 %v2557, %v2555
      %v2561 = vshll.u32 %v2514, 16
      %v2563 = vrot.slane %v2561, 1
      %v2564 = vsel %vm502, %v2559, %v2563
      %v2565 = vshrl.u32 %v2514, 16
      %v2567 = vor.u32 %v2565, %v2563
      %v2569 = vshll.u32 %v2515, 16
      %v2571 = vrot.slane %v2569, 1
      %v2572 = vsel %vm502, %v2567, %v2571
      %v2573 = vshrl.u32 %v2515, 16
      %v2575 = vor.u32 %v2573, %v2571
      %v2577 = vshll.u32 %v2516, 16
      %v2579 = vrot.slane %v2577, 1
      %v2580 = vsel %vm502, %v2575, %v2579
      %v2581 = vshrl.u32 %v2516, 16
      %v2583 = vor.u32 %v2581, %v2579
      %v2585 = vshll.u32 %v2517, 16
      %v2587 = vrot.slane %v2585, 1
      %v2588 = vsel %vm502, %v2583, %v2587
      %v2589 = vshrl.u32 %v2517, 16
      %v2591 = vor.u32 %v2589, %v2587
      %v2593 = vshll.u32 %v2518, 16
      %v2595 = vrot.slane %v2593, 1
      %v2596 = vsel %vm502, %v2591, %v2595
      %v2597 = vshrl.u32 %v2518, 16
      %v2599 = vor.u32 %v2597, %v2595
      %v2601 = vshll.u32 %v2519, 16
      %v2603 = vrot.slane %v2601, 1
      %v2604 = vsel %vm502, %v2599, %v2603
      %v2605 = vshrl.u32 %v2519, 16
      %v2607 = vor.u32 %v2605, %v2603
      %v2609 = vshll.u32 %v2520, 16
      %v2611 = vrot.slane %v2609, 1
      %v2612 = vsel %vm502, %v2607, %v2611
      %v2613 = vshrl.u32 %v2520, 16
      %v2615 = vor.u32 %v2613, %v2611
      %v2617 = vshll.u32 %v2521, 16
      %v2619 = vrot.slane %v2617, 1
      %v2620 = vsel %vm502, %v2615, %v2619
      %v2621 = vshrl.u32 %v2521, 16
      %v2623 = vor.u32 %v2621, %v2619
      %v2625 = vshll.u32 %v2522, 16
      %v2627 = vrot.slane %v2625, 1
      %v2628 = vsel %vm502, %v2623, %v2627
      %v2629 = vshrl.u32 %v2522, 16
      %v2631 = vor.u32 %v2629, %v2627
      %v2633 = vshll.u32 %v2523, 16
      %v2635 = vrot.slane %v2633, 1
      %v2636 = vsel %vm502, %v2631, %v2635
      %v2637 = vshrl.u32 %v2523, 16
      %v2639 = vor.u32 %v2637, %v2635
      %v2641 = vshll.u32 %v2524, 16
      %v2643 = vrot.slane %v2641, 1
      %v2644 = vsel %vm502, %v2639, %v2643
      %v2645 = vshrl.u32 %v2524, 16
      %v2647 = vor.u32 %v2645, %v2643
      %v2649 = vshll.u32 %v2525, 16
      %v2651 = vrot.slane %v2649, 1
      %v2652 = vsel %vm502, %v2647, %v2651
      %v2653 = vshrl.u32 %v2525, 16
      %v2655 = vor.u32 %v2653, %v2651
      %v2657 = vshll.u32 %v2526, 16
      %v2659 = vrot.slane %v2657, 1
      %v2660 = vsel %vm502, %v2655, %v2659
      %v2661 = vshrl.u32 %v2526, 16
      %v2663 = vor.u32 %v2661, %v2659
      %v2665 = vshll.u32 %v2527, 16
      %v2667 = vrot.slane %v2665, 1
      %v2668 = vsel %vm502, %v2663, %v2667
      %v2669 = vshrl.u32 %v2527, 16
      %v2671 = vor.u32 %v2669, %v2667
      %v2673 = vshll.u32 %v2528, 16
      %v2675 = vrot.slane %v2673, 1
      %v2676 = vsel %vm502, %v2671, %v2675
      %v2677 = vshrl.u32 %v2528, 16
      %v2679 = vor.u32 %v2677, %v2675
      %v2681 = vshll.u32 %v2529, 16
      %v2683 = vrot.slane %v2681, 1
      %v2684 = vsel %vm502, %v2679, %v2683
      %v2685 = vshrl.u32 %v2529, 16
      %v2687 = vor.u32 %v2685, %v2683
      %v2689 = vshll.u32 %v2530, 16
      %v2691 = vrot.slane %v2689, 1
      %v2692 = vsel %vm502, %v2687, %v2691
      %v2693 = vshrl.u32 %v2530, 16
      %v2695 = vor.u32 %v2693, %v2691
      %v2697 = vshll.u32 %v2531, 16
      %v2699 = vrot.slane %v2697, 1
      %v2700 = vsel %vm502, %v2695, %v2699
      %v2701 = vshrl.u32 %v2531, 16
      %v2703 = vor.u32 %v2701, %v2699
      %v2705 = vshll.u32 %v2532, 16
      %v2707 = vrot.slane %v2705, 1
      %v2708 = vsel %vm502, %v2703, %v2707
      %v2709 = vshrl.u32 %v2532, 16
      %v2711 = vor.u32 %v2709, %v2707
      %v2713 = vshll.u32 %v2533, 16
      %v2715 = vrot.slane %v2713, 1
      %v2716 = vsel %vm502, %v2711, %v2715
      %v2717 = vshrl.u32 %v2533, 16
      %v2719 = vor.u32 %v2717, %v2715
      %v2721 = vshll.u32 %v2534, 16
      %v2723 = vrot.slane %v2721, 1
      %v2724 = vsel %vm502, %v2719, %v2723
      %v2725 = vshrl.u32 %v2534, 16
      %v2727 = vor.u32 %v2725, %v2723
      %v2729 = vshll.u32 %v2535, 16
      %v2731 = vrot.slane %v2729, 1
      %v2732 = vsel %vm502, %v2727, %v2731
      %v2733 = vshrl.u32 %v2535, 16
      %v2735 = vor.u32 %v2733, %v2731
      %v2737 = vshll.u32 %v2536, 16
      %v2739 = vrot.slane %v2737, 1
      %v2740 = vsel %vm502, %v2735, %v2739
      %v2741 = vshrl.u32 %v2536, 16
      %v2743 = vor.u32 %v2741, %v2739
      %v2786 = vunpack.c.l.b16 %v2391
      %v2787 = vunpack.c.l.b16 %v2392
      %v2788 = vunpack.c.l.b16 %v2393
      %v2789 = vunpack.c.l.b16 %v2394
      %v2790 = vunpack.c.l.b16 %v2395
      %v2791 = vunpack.c.l.b16 %v2396
      %v2792 = vunpack.c.l.b16 %v2397
      %v2793 = vunpack.c.l.b16 %v2398
      %v2794 = vunpack.c.l.b16 %v2399
      %v2795 = vunpack.c.l.b16 %v2400
      %v2796 = vunpack.c.l.b16 %v2401
      %v2797 = vunpack.c.l.b16 %v2402
      %v2798 = vunpack.c.l.b16 %v2403
      %v2799 = vunpack.c.l.b16 %v2404
      %v2800 = vunpack.c.l.b16 %v2405
      %v2801 = vunpack.c.l.b16 %v2406
      %v2802 = vpack.c.b16 %v2787, %v2786
      %v2803 = vpack.c.b16 %v2789, %v2788
      %v2804 = vpack.c.b16 %v2791, %v2790
      %v2805 = vpack.c.b16 %v2793, %v2792
      %v2806 = vpack.c.b16 %v2795, %v2794
      %v2807 = vpack.c.b16 %v2797, %v2796
      %v2808 = vpack.c.b16 %v2799, %v2798
      %v2809 = vpack.c.b16 %v2801, %v2800
      %2818 = vmatprep.subr.bf16.mxu0 0
      %2819 = vmatpush1.bf16.msra.mxu0 %v2809
      %2820 = vmatprep.subr.bf16.mxu0 0
      %2821 = vmatpush1.bf16.msra.mxu0 %v2808
      %2822 = vmatprep.subr.bf16.mxu0 0
      %2823 = vmatpush1.bf16.msra.mxu0 %v2807
      %2824 = vmatprep.subr.bf16.mxu0 0
      %2825 = vmatpush1.bf16.msra.mxu0 %v2806
      %2826 = vmatprep.subr.bf16.mxu0 0
      %2827 = vmatpush1.bf16.msra.mxu0 %v2805
      %2828 = vmatprep.subr.bf16.mxu0 0
      %2829 = vmatpush1.bf16.msra.mxu0 %v2804
      %2830 = vmatprep.subr.bf16.mxu0 0
      %2831 = vmatpush1.bf16.msra.mxu0 %v2803
      %2832 = vmatprep.subr.bf16.mxu0 0
      %2833 = vmatpush1.bf16.msra.mxu0 %v2802
      %2834 = vmatprep.subr.bf16.mxu0 0
      %2835 = vmatpush2.bf16.msra.mxu0 0
      %2836 = vmatprep.subr.bf16.mxu0 0
      %2837 = vmatpush2.bf16.msra.mxu0 0
      %2838 = vmatprep.subr.bf16.mxu0 0
      %2839 = vmatpush2.bf16.msra.mxu0 0
      %2840 = vmatprep.subr.bf16.mxu0 0
      %2841 = vmatpush2.bf16.msra.mxu0 0
      %2842 = vmatprep.subr.bf16.mxu0 0
      %2843 = vmatpush2.bf16.msra.mxu0 0
      %2844 = vmatprep.subr.bf16.mxu0 0
      %2845 = vmatpush2.bf16.msra.mxu0 0
      %2846 = vmatprep.subr.bf16.mxu0 0
      %2847 = vmatpush2.bf16.msra.mxu0 0
      %2848 = vmatprep.subr.bf16.mxu0 0
      %2849 = vmatpush2.bf16.msra.mxu0 0
      %2850 = vmatprep.mubr.bf16.mxu0 0
      %2851 = vmatmul.mubr.bf16.gmra.mxu0 %v2548
      %v2852 = vpop.f32.mrf.mxu0
      %v2853 = vadd.f32 0.0, %v2852
      %v2854 = vpop.f32.mrf.mxu0
      %v2855 = vpop.f32.mrf.mxu0
      %v2856 = vadd.f32 0.0, %v2855
      %v2857 = vpop.f32.mrf.mxu0
      %2858 = vmatprep.mubr.bf16.mxu0 0
      %2859 = vmatmul.mubr.bf16.gmra.mxu0 %v2556
      %v2860 = vpop.f32.mrf.mxu0
      %v2861 = vadd.f32 0.0, %v2860
      %v2862 = vpop.f32.mrf.mxu0
      %v2863 = vpop.f32.mrf.mxu0
      %v2864 = vadd.f32 0.0, %v2863
      %v2865 = vpop.f32.mrf.mxu0
      %2866 = vmatprep.mubr.bf16.mxu0 0
      %2867 = vmatmul.mubr.bf16.gmra.mxu0 %v2564
      %v2868 = vpop.f32.mrf.mxu0
      %v2869 = vadd.f32 0.0, %v2868
      %v2870 = vpop.f32.mrf.mxu0
      %v2871 = vpop.f32.mrf.mxu0
      %v2872 = vadd.f32 0.0, %v2871
      %v2873 = vpop.f32.mrf.mxu0
      %2874 = vmatprep.mubr.bf16.mxu0 0
      %2875 = vmatmul.mubr.bf16.gmra.mxu0 %v2572
      %v2876 = vpop.f32.mrf.mxu0
      %v2877 = vadd.f32 0.0, %v2876
      %v2878 = vpop.f32.mrf.mxu0
      %v2879 = vpop.f32.mrf.mxu0
      %v2880 = vadd.f32 0.0, %v2879
      %v2881 = vpop.f32.mrf.mxu0
      %2882 = vmatprep.mubr.bf16.mxu0 0
      %2883 = vmatmul.mubr.bf16.gmra.mxu0 %v2580
      %v2884 = vpop.f32.mrf.mxu0
      %v2885 = vadd.f32 0.0, %v2884
      %v2886 = vpop.f32.mrf.mxu0
      %v2887 = vpop.f32.mrf.mxu0
      %v2888 = vadd.f32 0.0, %v2887
      %v2889 = vpop.f32.mrf.mxu0
      %2890 = vmatprep.mubr.bf16.mxu0 0
      %2891 = vmatmul.mubr.bf16.gmra.mxu0 %v2588
      %v2892 = vpop.f32.mrf.mxu0
      %v2893 = vadd.f32 0.0, %v2892
      %v2894 = vpop.f32.mrf.mxu0
      %v2895 = vpop.f32.mrf.mxu0
      %v2896 = vadd.f32 0.0, %v2895
      %v2897 = vpop.f32.mrf.mxu0
      %2898 = vmatprep.mubr.bf16.mxu0 0
      %2899 = vmatmul.mubr.bf16.gmra.mxu0 %v2596
      %v2900 = vpop.f32.mrf.mxu0
      %v2901 = vadd.f32 0.0, %v2900
      %v2902 = vpop.f32.mrf.mxu0
      %v2903 = vpop.f32.mrf.mxu0
      %v2904 = vadd.f32 0.0, %v2903
      %v2905 = vpop.f32.mrf.mxu0
      %2906 = vmatprep.mubr.bf16.mxu0 0
      %2907 = vmatmul.mubr.bf16.gmra.mxu0 %v2604
      %v2908 = vpop.f32.mrf.mxu0
      %v2909 = vadd.f32 0.0, %v2908
      %v2910 = vpop.f32.mrf.mxu0
      %v2911 = vpop.f32.mrf.mxu0
      %v2912 = vadd.f32 0.0, %v2911
      %v2913 = vpop.f32.mrf.mxu0
      %2914 = vmatprep.mubr.bf16.mxu0 0
      %2915 = vmatmul.mubr.bf16.gmra.mxu0 %v2612
      %v2916 = vpop.f32.mrf.mxu0
      %v2917 = vadd.f32 0.0, %v2916
      %v2918 = vpop.f32.mrf.mxu0
      %v2919 = vpop.f32.mrf.mxu0
      %v2920 = vadd.f32 0.0, %v2919
      %v2921 = vpop.f32.mrf.mxu0
      %2922 = vmatprep.mubr.bf16.mxu0 0
      %2923 = vmatmul.mubr.bf16.gmra.mxu0 %v2620
      %v2924 = vpop.f32.mrf.mxu0
      %v2925 = vadd.f32 0.0, %v2924
      %v2926 = vpop.f32.mrf.mxu0
      %v2927 = vpop.f32.mrf.mxu0
      %v2928 = vadd.f32 0.0, %v2927
      %v2929 = vpop.f32.mrf.mxu0
      %2930 = vmatprep.mubr.bf16.mxu0 0
      %2931 = vmatmul.mubr.bf16.gmra.mxu0 %v2628
      %v2932 = vpop.f32.mrf.mxu0
      %v2933 = vadd.f32 0.0, %v2932
      %v2934 = vpop.f32.mrf.mxu0
      %v2935 = vpop.f32.mrf.mxu0
      %v2936 = vadd.f32 0.0, %v2935
      %v2937 = vpop.f32.mrf.mxu0
      %2938 = vmatprep.mubr.bf16.mxu0 0
      %2939 = vmatmul.mubr.bf16.gmra.mxu0 %v2636
      %v2940 = vpop.f32.mrf.mxu0
      %v2941 = vadd.f32 0.0, %v2940
      %v2942 = vpop.f32.mrf.mxu0
      %v2943 = vpop.f32.mrf.mxu0
      %v2944 = vadd.f32 0.0, %v2943
      %v2945 = vpop.f32.mrf.mxu0
      %2946 = vmatprep.mubr.bf16.mxu0 0
      %2947 = vmatmul.mubr.bf16.gmra.mxu0 %v2644
      %v2948 = vpop.f32.mrf.mxu0
      %v2949 = vadd.f32 0.0, %v2948
      %v2950 = vpop.f32.mrf.mxu0
      %v2951 = vpop.f32.mrf.mxu0
      %v2952 = vadd.f32 0.0, %v2951
      %v2953 = vpop.f32.mrf.mxu0
      %2954 = vmatprep.mubr.bf16.mxu0 0
      %2955 = vmatmul.mubr.bf16.gmra.mxu0 %v2652
      %v2956 = vpop.f32.mrf.mxu0
      %v2957 = vadd.f32 0.0, %v2956
      %v2958 = vpop.f32.mrf.mxu0
      %v2959 = vpop.f32.mrf.mxu0
      %v2960 = vadd.f32 0.0, %v2959
      %v2961 = vpop.f32.mrf.mxu0
      %2962 = vmatprep.mubr.bf16.mxu0 0
      %2963 = vmatmul.mubr.bf16.gmra.mxu0 %v2660
      %v2964 = vpop.f32.mrf.mxu0
      %v2965 = vadd.f32 0.0, %v2964
      %v2966 = vpop.f32.mrf.mxu0
      %v2967 = vpop.f32.mrf.mxu0
      %v2968 = vadd.f32 0.0, %v2967
      %v2969 = vpop.f32.mrf.mxu0
      %2970 = vmatprep.mubr.bf16.mxu0 0
      %2971 = vmatmul.mubr.bf16.gmra.mxu0 %v2668
      %v2972 = vpop.f32.mrf.mxu0
      %v2973 = vadd.f32 0.0, %v2972
      %v2974 = vpop.f32.mrf.mxu0
      %v2975 = vpop.f32.mrf.mxu0
      %v2976 = vadd.f32 0.0, %v2975
      %v2977 = vpop.f32.mrf.mxu0
      %2978 = vmatprep.mubr.bf16.mxu0 0
      %2979 = vmatmul.mubr.bf16.gmra.mxu0 %v2676
      %v2980 = vpop.f32.mrf.mxu0
      %v2981 = vadd.f32 0.0, %v2980
      %v2982 = vpop.f32.mrf.mxu0
      %v2983 = vpop.f32.mrf.mxu0
      %v2984 = vadd.f32 0.0, %v2983
      %v2985 = vpop.f32.mrf.mxu0
      %2986 = vmatprep.mubr.bf16.mxu0 0
      %2987 = vmatmul.mubr.bf16.gmra.mxu0 %v2684
      %v2988 = vpop.f32.mrf.mxu0
      %v2989 = vadd.f32 0.0, %v2988
      %v2990 = vpop.f32.mrf.mxu0
      %v2991 = vpop.f32.mrf.mxu0
      %v2992 = vadd.f32 0.0, %v2991
      %v2993 = vpop.f32.mrf.mxu0
      %2994 = vmatprep.mubr.bf16.mxu0 0
      %2995 = vmatmul.mubr.bf16.gmra.mxu0 %v2692
      %v2996 = vpop.f32.mrf.mxu0
      %v2997 = vadd.f32 0.0, %v2996
      %v2998 = vpop.f32.mrf.mxu0
      %v2999 = vpop.f32.mrf.mxu0
      %v3000 = vadd.f32 0.0, %v2999
      %v3001 = vpop.f32.mrf.mxu0
      %3002 = vmatprep.mubr.bf16.mxu0 0
      %3003 = vmatmul.mubr.bf16.gmra.mxu0 %v2700
      %v3004 = vpop.f32.mrf.mxu0
      %v3005 = vadd.f32 0.0, %v3004
      %v3006 = vpop.f32.mrf.mxu0
      %v3007 = vpop.f32.mrf.mxu0
      %v3008 = vadd.f32 0.0, %v3007
      %v3009 = vpop.f32.mrf.mxu0
      %3010 = vmatprep.mubr.bf16.mxu0 0
      %3011 = vmatmul.mubr.bf16.gmra.mxu0 %v2708
      %v3012 = vpop.f32.mrf.mxu0
      %v3013 = vadd.f32 0.0, %v3012
      %v3014 = vpop.f32.mrf.mxu0
      %v3015 = vpop.f32.mrf.mxu0
      %v3016 = vadd.f32 0.0, %v3015
      %v3017 = vpop.f32.mrf.mxu0
      %3018 = vmatprep.mubr.bf16.mxu0 0
      %3019 = vmatmul.mubr.bf16.gmra.mxu0 %v2716
      %v3020 = vpop.f32.mrf.mxu0
      %v3021 = vadd.f32 0.0, %v3020
      %v3022 = vpop.f32.mrf.mxu0
      %v3023 = vpop.f32.mrf.mxu0
      %v3024 = vadd.f32 0.0, %v3023
      %v3025 = vpop.f32.mrf.mxu0
      %3026 = vmatprep.mubr.bf16.mxu0 0
      %3027 = vmatmul.mubr.bf16.gmra.mxu0 %v2724
      %v3028 = vpop.f32.mrf.mxu0
      %v3029 = vadd.f32 0.0, %v3028
      %v3030 = vpop.f32.mrf.mxu0
      %v3031 = vpop.f32.mrf.mxu0
      %v3032 = vadd.f32 0.0, %v3031
      %v3033 = vpop.f32.mrf.mxu0
      %3034 = vmatprep.mubr.bf16.mxu0 0
      %3035 = vmatmul.mubr.bf16.gmra.mxu0 %v2732
      %v3036 = vpop.f32.mrf.mxu0
      %v3037 = vadd.f32 0.0, %v3036
      %v3038 = vpop.f32.mrf.mxu0
      %v3039 = vpop.f32.mrf.mxu0
      %v3040 = vadd.f32 0.0, %v3039
      %v3041 = vpop.f32.mrf.mxu0
      %3042 = vmatprep.mubr.bf16.mxu0 0
      %3043 = vmatmul.mubr.bf16.gmra.mxu0 %v2740
      %v3044 = vpop.f32.mrf.mxu0
      %v3045 = vadd.f32 0.0, %v3044
      %v3046 = vpop.f32.mrf.mxu0
      %v3047 = vpop.f32.mrf.mxu0
      %v3048 = vadd.f32 0.0, %v3047
      %v3049 = vpop.f32.mrf.mxu0
      %3050 = vmatprep.mubr.bf16.mxu0 0
      %3051 = vmatmul.mubr.bf16.gmra.mxu0 %v2743
      %v3052 = vpop.f32.mrf.mxu0
      %v3053 = vadd.f32 0.0, %v3052
      %v3054 = vpop.f32.mrf.mxu0
      %v3055 = vpop.f32.mrf.mxu0
      %v3056 = vpop.f32.mrf.mxu0
      %3057 = vdwg.mxu0
      %v3058 = vadd.f32 %v2287, %v2853
      %v3059 = vadd.f32 %v2288, %v2856
      %v3060 = vadd.f32 %v2289, %v2861
      %v3061 = vadd.f32 %v2290, %v2864
      %v3062 = vadd.f32 %v2291, %v2869
      %v3063 = vadd.f32 %v2292, %v2872
      %v3064 = vadd.f32 %v2293, %v2877
      %v3065 = vadd.f32 %v2294, %v2880
      %v3066 = vadd.f32 %v2295, %v2885
      %v3067 = vadd.f32 %v2296, %v2888
      %v3068 = vadd.f32 %v2297, %v2893
      %v3069 = vadd.f32 %v2298, %v2896
      %v3070 = vadd.f32 %v2299, %v2901
      %v3071 = vadd.f32 %v2300, %v2904
      %v3072 = vadd.f32 %v2301, %v2909
      %v3073 = vadd.f32 %v2302, %v2912
      %v3074 = vadd.f32 %v2303, %v2917
      %v3075 = vadd.f32 %v2304, %v2920
      %v3076 = vadd.f32 %v2305, %v2925
      %v3077 = vadd.f32 %v2306, %v2928
      %v3078 = vadd.f32 %v2307, %v2933
      %v3079 = vadd.f32 %v2308, %v2936
      %v3080 = vadd.f32 %v2309, %v2941
      %v3081 = vadd.f32 %v2310, %v2944
      %v3082 = vadd.f32 %v2311, %v2949
      %v3083 = vadd.f32 %v2312, %v2952
      %v3084 = vadd.f32 %v2313, %v2957
      %v3085 = vadd.f32 %v2314, %v2960
      %v3086 = vadd.f32 %v2315, %v2965
      %v3087 = vadd.f32 %v2316, %v2968
      %v3088 = vadd.f32 %v2317, %v2973
      %v3089 = vadd.f32 %v2318, %v2976
      %v3090 = vadd.f32 %v2319, %v2981
      %v3091 = vadd.f32 %v2320, %v2984
      %v3092 = vadd.f32 %v2321, %v2989
      %v3093 = vadd.f32 %v2322, %v2992
      %v3094 = vadd.f32 %v2323, %v2997
      %v3095 = vadd.f32 %v2324, %v3000
      %v3096 = vadd.f32 %v2325, %v3005
      %v3097 = vadd.f32 %v2326, %v3008
      %v3098 = vadd.f32 %v2327, %v3013
      %v3099 = vadd.f32 %v2328, %v3016
      %v3100 = vadd.f32 %v2329, %v3021
      %v3101 = vadd.f32 %v2330, %v3024
      %v3102 = vadd.f32 %v2331, %v3029
      %v3103 = vadd.f32 %v2332, %v3032
      %v3104 = vadd.f32 %v2333, %v3037
      %v3105 = vadd.f32 %v2334, %v3040
      %v3106 = vadd.f32 %v2335, %v3045
      %v3107 = vadd.f32 %v2336, %v3048
      %v3108 = vadd.f32 %v2337, %v3053
      %v3109 = vld [vmem:[%s272 + $0xc] sm:$0xe]
      %s3110 = scalar_lea.vmem %s1, 320
      %v3111 = vld [vmem:[%s3110] sm:$0xf]
      %v3112 = vld [vmem:[%s3110 + $0x4] sm:$0xf]
      %v3113 = vld [vmem:[%s3110 + $0x8] sm:$0xf]
      %v3114 = vld [vmem:[%s3110 + $0xc] sm:$0xf]
      %v3115 = vld [vmem:[%s3110 + $0x10] sm:$0xf]
      %v3116 = vld [vmem:[%s3110 + $0x14] sm:$0xf]
      %v3117 = vld [vmem:[%s3110 + $0x18] sm:$0xf]
      %v3118 = vld [vmem:[%s3110 + $0x1c] sm:$0xf]
      %v3119 = vld [vmem:[%s3110 + $0x20] sm:$0xf]
      %v3120 = vld [vmem:[%s3110 + $0x24] sm:$0xf]
      %v3121 = vld [vmem:[%s3110 + $0x28] sm:$0xf]
      %v3122 = vld [vmem:[%s3110 + $0x2c] sm:$0xf]
      %v3123 = vld [vmem:[%s3110 + $0x30] sm:$0xf]
      %v3124 = vld [vmem:[%s3110 + $0x34] sm:$0xf]
      %v3125 = vld [vmem:[%s3110 + $0x38] sm:$0xf]
      %v3126 = vld [vmem:[%s3110 + $0x3c] sm:$0xf]
      %v3128 = vunpack.c.l.b16 %v3109
      %v3129 = vpack.c.b16 %v2460, %v3128
      %v3130 = vrot.slane %v3129, 1
      %v3131 = vrot.slane %v2512, 1
      %v3132 = vsel %vm1360, %v3130, %v3131
      %v3133 = vrot.slane %v2513, 1
      %v3134 = vsel %vm1360, %v3131, %v3133
      %v3135 = vrot.slane %v2514, 1
      %v3136 = vsel %vm1360, %v3133, %v3135
      %v3137 = vrot.slane %v2515, 1
      %v3138 = vsel %vm1360, %v3135, %v3137
      %v3139 = vrot.slane %v2516, 1
      %v3140 = vsel %vm1360, %v3137, %v3139
      %v3141 = vrot.slane %v2517, 1
      %v3142 = vsel %vm1360, %v3139, %v3141
      %v3143 = vrot.slane %v2518, 1
      %v3144 = vsel %vm1360, %v3141, %v3143
      %v3145 = vrot.slane %v2519, 1
      %v3146 = vsel %vm1360, %v3143, %v3145
      %v3147 = vrot.slane %v2520, 1
      %v3148 = vsel %vm1360, %v3145, %v3147
      %v3149 = vrot.slane %v2521, 1
      %v3150 = vsel %vm1360, %v3147, %v3149
      %v3151 = vrot.slane %v2522, 1
      %v3152 = vsel %vm1360, %v3149, %v3151
      %v3153 = vrot.slane %v2523, 1
      %v3154 = vsel %vm1360, %v3151, %v3153
      %v3155 = vrot.slane %v2524, 1
      %v3156 = vsel %vm1360, %v3153, %v3155
      %v3157 = vrot.slane %v2525, 1
      %v3158 = vsel %vm1360, %v3155, %v3157
      %v3159 = vrot.slane %v2526, 1
      %v3160 = vsel %vm1360, %v3157, %v3159
      %v3161 = vrot.slane %v2527, 1
      %v3162 = vsel %vm1360, %v3159, %v3161
      %v3163 = vrot.slane %v2528, 1
      %v3164 = vsel %vm1360, %v3161, %v3163
      %v3165 = vrot.slane %v2529, 1
      %v3166 = vsel %vm1360, %v3163, %v3165
      %v3167 = vrot.slane %v2530, 1
      %v3168 = vsel %vm1360, %v3165, %v3167
      %v3169 = vrot.slane %v2531, 1
      %v3170 = vsel %vm1360, %v3167, %v3169
      %v3171 = vrot.slane %v2532, 1
      %v3172 = vsel %vm1360, %v3169, %v3171
      %v3173 = vrot.slane %v2533, 1
      %v3174 = vsel %vm1360, %v3171, %v3173
      %v3175 = vrot.slane %v2534, 1
      %v3176 = vsel %vm1360, %v3173, %v3175
      %v3177 = vrot.slane %v2535, 1
      %v3178 = vsel %vm1360, %v3175, %v3177
      %v3179 = vrot.slane %v2536, 1
      %v3180 = vsel %vm1360, %v3177, %v3179
      %v3223 = vunpack.c.l.b16 %v3111
      %v3224 = vunpack.c.l.b16 %v3112
      %v3225 = vunpack.c.l.b16 %v3113
      %v3226 = vunpack.c.l.b16 %v3114
      %v3227 = vunpack.c.l.b16 %v3115
      %v3228 = vunpack.c.l.b16 %v3116
      %v3229 = vunpack.c.l.b16 %v3117
      %v3230 = vunpack.c.l.b16 %v3118
      %v3231 = vunpack.c.l.b16 %v3119
      %v3232 = vunpack.c.l.b16 %v3120
      %v3233 = vunpack.c.l.b16 %v3121
      %v3234 = vunpack.c.l.b16 %v3122
      %v3235 = vunpack.c.l.b16 %v3123
      %v3236 = vunpack.c.l.b16 %v3124
      %v3237 = vunpack.c.l.b16 %v3125
      %v3238 = vunpack.c.l.b16 %v3126
      %v3239 = vpack.c.b16 %v3224, %v3223
      %v3240 = vpack.c.b16 %v3226, %v3225
      %v3241 = vpack.c.b16 %v3228, %v3227
      %v3242 = vpack.c.b16 %v3230, %v3229
      %v3243 = vpack.c.b16 %v3232, %v3231
      %v3244 = vpack.c.b16 %v3234, %v3233
      %v3245 = vpack.c.b16 %v3236, %v3235
      %v3246 = vpack.c.b16 %v3238, %v3237
      %3255 = vmatprep.subr.bf16.mxu0 0
      %3256 = vmatpush1.bf16.msra.mxu0 %v3246
      %3257 = vmatprep.subr.bf16.mxu0 0
      %3258 = vmatpush1.bf16.msra.mxu0 %v3245
      %3259 = vmatprep.subr.bf16.mxu0 0
      %3260 = vmatpush1.bf16.msra.mxu0 %v3244
      %3261 = vmatprep.subr.bf16.mxu0 0
      %3262 = vmatpush1.bf16.msra.mxu0 %v3243
      %3263 = vmatprep.subr.bf16.mxu0 0
      %3264 = vmatpush1.bf16.msra.mxu0 %v3242
      %3265 = vmatprep.subr.bf16.mxu0 0
      %3266 = vmatpush1.bf16.msra.mxu0 %v3241
      %3267 = vmatprep.subr.bf16.mxu0 0
      %3268 = vmatpush1.bf16.msra.mxu0 %v3240
      %3269 = vmatprep.subr.bf16.mxu0 0
      %3270 = vmatpush1.bf16.msra.mxu0 %v3239
      %3271 = vmatprep.subr.bf16.mxu0 0
      %3272 = vmatpush2.bf16.msra.mxu0 0
      %3273 = vmatprep.subr.bf16.mxu0 0
      %3274 = vmatpush2.bf16.msra.mxu0 0
      %3275 = vmatprep.subr.bf16.mxu0 0
      %3276 = vmatpush2.bf16.msra.mxu0 0
      %3277 = vmatprep.subr.bf16.mxu0 0
      %3278 = vmatpush2.bf16.msra.mxu0 0
      %3279 = vmatprep.subr.bf16.mxu0 0
      %3280 = vmatpush2.bf16.msra.mxu0 0
      %3281 = vmatprep.subr.bf16.mxu0 0
      %3282 = vmatpush2.bf16.msra.mxu0 0
      %3283 = vmatprep.subr.bf16.mxu0 0
      %3284 = vmatpush2.bf16.msra.mxu0 0
      %3285 = vmatprep.subr.bf16.mxu0 0
      %3286 = vmatpush2.bf16.msra.mxu0 0
      %3287 = vmatprep.mubr.bf16.mxu0 0
      %3288 = vmatmul.mubr.bf16.gmra.mxu0 %v3132
      %v3289 = vpop.f32.mrf.mxu0
      %v3290 = vadd.f32 0.0, %v3289
      %v3291 = vpop.f32.mrf.mxu0
      %v3292 = vpop.f32.mrf.mxu0
      %v3293 = vadd.f32 0.0, %v3292
      %v3294 = vpop.f32.mrf.mxu0
      %3295 = vmatprep.mubr.bf16.mxu0 0
      %3296 = vmatmul.mubr.bf16.gmra.mxu0 %v3134
      %v3297 = vpop.f32.mrf.mxu0
      %v3298 = vadd.f32 0.0, %v3297
      %v3299 = vpop.f32.mrf.mxu0
      %v3300 = vpop.f32.mrf.mxu0
      %v3301 = vadd.f32 0.0, %v3300
      %v3302 = vpop.f32.mrf.mxu0
      %3303 = vmatprep.mubr.bf16.mxu0 0
      %3304 = vmatmul.mubr.bf16.gmra.mxu0 %v3136
      %v3305 = vpop.f32.mrf.mxu0
      %v3306 = vadd.f32 0.0, %v3305
      %v3307 = vpop.f32.mrf.mxu0
      %v3308 = vpop.f32.mrf.mxu0
      %v3309 = vadd.f32 0.0, %v3308
      %v3310 = vpop.f32.mrf.mxu0
      %3311 = vmatprep.mubr.bf16.mxu0 0
      %3312 = vmatmul.mubr.bf16.gmra.mxu0 %v3138
      %v3313 = vpop.f32.mrf.mxu0
      %v3314 = vadd.f32 0.0, %v3313
      %v3315 = vpop.f32.mrf.mxu0
      %v3316 = vpop.f32.mrf.mxu0
      %v3317 = vadd.f32 0.0, %v3316
      %v3318 = vpop.f32.mrf.mxu0
      %3319 = vmatprep.mubr.bf16.mxu0 0
      %3320 = vmatmul.mubr.bf16.gmra.mxu0 %v3140
      %v3321 = vpop.f32.mrf.mxu0
      %v3322 = vadd.f32 0.0, %v3321
      %v3323 = vpop.f32.mrf.mxu0
      %v3324 = vpop.f32.mrf.mxu0
      %v3325 = vadd.f32 0.0, %v3324
      %v3326 = vpop.f32.mrf.mxu0
      %3327 = vmatprep.mubr.bf16.mxu0 0
      %3328 = vmatmul.mubr.bf16.gmra.mxu0 %v3142
      %v3329 = vpop.f32.mrf.mxu0
      %v3330 = vadd.f32 0.0, %v3329
      %v3331 = vpop.f32.mrf.mxu0
      %v3332 = vpop.f32.mrf.mxu0
      %v3333 = vadd.f32 0.0, %v3332
      %v3334 = vpop.f32.mrf.mxu0
      %3335 = vmatprep.mubr.bf16.mxu0 0
      %3336 = vmatmul.mubr.bf16.gmra.mxu0 %v3144
      %v3337 = vpop.f32.mrf.mxu0
      %v3338 = vadd.f32 0.0, %v3337
      %v3339 = vpop.f32.mrf.mxu0
      %v3340 = vpop.f32.mrf.mxu0
      %v3341 = vadd.f32 0.0, %v3340
      %v3342 = vpop.f32.mrf.mxu0
      %3343 = vmatprep.mubr.bf16.mxu0 0
      %3344 = vmatmul.mubr.bf16.gmra.mxu0 %v3146
      %v3345 = vpop.f32.mrf.mxu0
      %v3346 = vadd.f32 0.0, %v3345
      %v3347 = vpop.f32.mrf.mxu0
      %v3348 = vpop.f32.mrf.mxu0
      %v3349 = vadd.f32 0.0, %v3348
      %v3350 = vpop.f32.mrf.mxu0
      %3351 = vmatprep.mubr.bf16.mxu0 0
      %3352 = vmatmul.mubr.bf16.gmra.mxu0 %v3148
      %v3353 = vpop.f32.mrf.mxu0
      %v3354 = vadd.f32 0.0, %v3353
      %v3355 = vpop.f32.mrf.mxu0
      %v3356 = vpop.f32.mrf.mxu0
      %v3357 = vadd.f32 0.0, %v3356
      %v3358 = vpop.f32.mrf.mxu0
      %3359 = vmatprep.mubr.bf16.mxu0 0
      %3360 = vmatmul.mubr.bf16.gmra.mxu0 %v3150
      %v3361 = vpop.f32.mrf.mxu0
      %v3362 = vadd.f32 0.0, %v3361
      %v3363 = vpop.f32.mrf.mxu0
      %v3364 = vpop.f32.mrf.mxu0
      %v3365 = vadd.f32 0.0, %v3364
      %v3366 = vpop.f32.mrf.mxu0
      %3367 = vmatprep.mubr.bf16.mxu0 0
      %3368 = vmatmul.mubr.bf16.gmra.mxu0 %v3152
      %v3369 = vpop.f32.mrf.mxu0
      %v3370 = vadd.f32 0.0, %v3369
      %v3371 = vpop.f32.mrf.mxu0
      %v3372 = vpop.f32.mrf.mxu0
      %v3373 = vadd.f32 0.0, %v3372
      %v3374 = vpop.f32.mrf.mxu0
      %3375 = vmatprep.mubr.bf16.mxu0 0
      %3376 = vmatmul.mubr.bf16.gmra.mxu0 %v3154
      %v3377 = vpop.f32.mrf.mxu0
      %v3378 = vadd.f32 0.0, %v3377
      %v3379 = vpop.f32.mrf.mxu0
      %v3380 = vpop.f32.mrf.mxu0
      %v3381 = vadd.f32 0.0, %v3380
      %v3382 = vpop.f32.mrf.mxu0
      %3383 = vmatprep.mubr.bf16.mxu0 0
      %3384 = vmatmul.mubr.bf16.gmra.mxu0 %v3156
      %v3385 = vpop.f32.mrf.mxu0
      %v3386 = vadd.f32 0.0, %v3385
      %v3387 = vpop.f32.mrf.mxu0
      %v3388 = vpop.f32.mrf.mxu0
      %v3389 = vadd.f32 0.0, %v3388
      %v3390 = vpop.f32.mrf.mxu0
      %3391 = vmatprep.mubr.bf16.mxu0 0
      %3392 = vmatmul.mubr.bf16.gmra.mxu0 %v3158
      %v3393 = vpop.f32.mrf.mxu0
      %v3394 = vadd.f32 0.0, %v3393
      %v3395 = vpop.f32.mrf.mxu0
      %v3396 = vpop.f32.mrf.mxu0
      %v3397 = vadd.f32 0.0, %v3396
      %v3398 = vpop.f32.mrf.mxu0
      %3399 = vmatprep.mubr.bf16.mxu0 0
      %3400 = vmatmul.mubr.bf16.gmra.mxu0 %v3160
      %v3401 = vpop.f32.mrf.mxu0
      %v3402 = vadd.f32 0.0, %v3401
      %v3403 = vpop.f32.mrf.mxu0
      %v3404 = vpop.f32.mrf.mxu0
      %v3405 = vadd.f32 0.0, %v3404
      %v3406 = vpop.f32.mrf.mxu0
      %3407 = vmatprep.mubr.bf16.mxu0 0
      %3408 = vmatmul.mubr.bf16.gmra.mxu0 %v3162
      %v3409 = vpop.f32.mrf.mxu0
      %v3410 = vadd.f32 0.0, %v3409
      %v3411 = vpop.f32.mrf.mxu0
      %v3412 = vpop.f32.mrf.mxu0
      %v3413 = vadd.f32 0.0, %v3412
      %v3414 = vpop.f32.mrf.mxu0
      %3415 = vmatprep.mubr.bf16.mxu0 0
      %3416 = vmatmul.mubr.bf16.gmra.mxu0 %v3164
      %v3417 = vpop.f32.mrf.mxu0
      %v3418 = vadd.f32 0.0, %v3417
      %v3419 = vpop.f32.mrf.mxu0
      %v3420 = vpop.f32.mrf.mxu0
      %v3421 = vadd.f32 0.0, %v3420
      %v3422 = vpop.f32.mrf.mxu0
      %3423 = vmatprep.mubr.bf16.mxu0 0
      %3424 = vmatmul.mubr.bf16.gmra.mxu0 %v3166
      %v3425 = vpop.f32.mrf.mxu0
      %v3426 = vadd.f32 0.0, %v3425
      %v3427 = vpop.f32.mrf.mxu0
      %v3428 = vpop.f32.mrf.mxu0
      %v3429 = vadd.f32 0.0, %v3428
      %v3430 = vpop.f32.mrf.mxu0
      %3431 = vmatprep.mubr.bf16.mxu0 0
      %3432 = vmatmul.mubr.bf16.gmra.mxu0 %v3168
      %v3433 = vpop.f32.mrf.mxu0
      %v3434 = vadd.f32 0.0, %v3433
      %v3435 = vpop.f32.mrf.mxu0
      %v3436 = vpop.f32.mrf.mxu0
      %v3437 = vadd.f32 0.0, %v3436
      %v3438 = vpop.f32.mrf.mxu0
      %3439 = vmatprep.mubr.bf16.mxu0 0
      %3440 = vmatmul.mubr.bf16.gmra.mxu0 %v3170
      %v3441 = vpop.f32.mrf.mxu0
      %v3442 = vadd.f32 0.0, %v3441
      %v3443 = vpop.f32.mrf.mxu0
      %v3444 = vpop.f32.mrf.mxu0
      %v3445 = vadd.f32 0.0, %v3444
      %v3446 = vpop.f32.mrf.mxu0
      %3447 = vmatprep.mubr.bf16.mxu0 0
      %3448 = vmatmul.mubr.bf16.gmra.mxu0 %v3172
      %v3449 = vpop.f32.mrf.mxu0
      %v3450 = vadd.f32 0.0, %v3449
      %v3451 = vpop.f32.mrf.mxu0
      %v3452 = vpop.f32.mrf.mxu0
      %v3453 = vadd.f32 0.0, %v3452
      %v3454 = vpop.f32.mrf.mxu0
      %3455 = vmatprep.mubr.bf16.mxu0 0
      %3456 = vmatmul.mubr.bf16.gmra.mxu0 %v3174
      %v3457 = vpop.f32.mrf.mxu0
      %v3458 = vadd.f32 0.0, %v3457
      %v3459 = vpop.f32.mrf.mxu0
      %v3460 = vpop.f32.mrf.mxu0
      %v3461 = vadd.f32 0.0, %v3460
      %v3462 = vpop.f32.mrf.mxu0
      %3463 = vmatprep.mubr.bf16.mxu0 0
      %3464 = vmatmul.mubr.bf16.gmra.mxu0 %v3176
      %v3465 = vpop.f32.mrf.mxu0
      %v3466 = vadd.f32 0.0, %v3465
      %v3467 = vpop.f32.mrf.mxu0
      %v3468 = vpop.f32.mrf.mxu0
      %v3469 = vadd.f32 0.0, %v3468
      %v3470 = vpop.f32.mrf.mxu0
      %3471 = vmatprep.mubr.bf16.mxu0 0
      %3472 = vmatmul.mubr.bf16.gmra.mxu0 %v3178
      %v3473 = vpop.f32.mrf.mxu0
      %v3474 = vadd.f32 0.0, %v3473
      %v3475 = vpop.f32.mrf.mxu0
      %v3476 = vpop.f32.mrf.mxu0
      %v3477 = vadd.f32 0.0, %v3476
      %v3478 = vpop.f32.mrf.mxu0
      %3479 = vmatprep.mubr.bf16.mxu0 0
      %3480 = vmatmul.mubr.bf16.gmra.mxu0 %v3180
      %v3481 = vpop.f32.mrf.mxu0
      %v3482 = vadd.f32 0.0, %v3481
      %v3483 = vpop.f32.mrf.mxu0
      %v3484 = vpop.f32.mrf.mxu0
      %v3485 = vadd.f32 0.0, %v3484
      %v3486 = vpop.f32.mrf.mxu0
      %3487 = vmatprep.mubr.bf16.mxu0 0
      %3488 = vmatmul.mubr.bf16.gmra.mxu0 %v3179
      %v3489 = vpop.f32.mrf.mxu0
      %v3490 = vadd.f32 0.0, %v3489
      %v3491 = vpop.f32.mrf.mxu0
      %v3492 = vpop.f32.mrf.mxu0
      %v3493 = vpop.f32.mrf.mxu0
      %3494 = vdwg.mxu0
      %v3495 = vadd.f32 %v3058, %v3290
      %v3496 = vadd.f32 %v3059, %v3293
      %v3497 = vadd.f32 %v3060, %v3298
      %v3498 = vadd.f32 %v3061, %v3301
      %v3499 = vadd.f32 %v3062, %v3306
      %v3500 = vadd.f32 %v3063, %v3309
      %v3501 = vadd.f32 %v3064, %v3314
      %v3502 = vadd.f32 %v3065, %v3317
      %v3503 = vadd.f32 %v3066, %v3322
      %v3504 = vadd.f32 %v3067, %v3325
      %v3505 = vadd.f32 %v3068, %v3330
      %v3506 = vadd.f32 %v3069, %v3333
      %v3507 = vadd.f32 %v3070, %v3338
      %v3508 = vadd.f32 %v3071, %v3341
      %v3509 = vadd.f32 %v3072, %v3346
      %v3510 = vadd.f32 %v3073, %v3349
      %v3511 = vadd.f32 %v3074, %v3354
      %v3512 = vadd.f32 %v3075, %v3357
      %v3513 = vadd.f32 %v3076, %v3362
      %v3514 = vadd.f32 %v3077, %v3365
      %v3515 = vadd.f32 %v3078, %v3370
      %v3516 = vadd.f32 %v3079, %v3373
      %v3517 = vadd.f32 %v3080, %v3378
      %v3518 = vadd.f32 %v3081, %v3381
      %v3519 = vadd.f32 %v3082, %v3386
      %v3520 = vadd.f32 %v3083, %v3389
      %v3521 = vadd.f32 %v3084, %v3394
      %v3522 = vadd.f32 %v3085, %v3397
      %v3523 = vadd.f32 %v3086, %v3402
      %v3524 = vadd.f32 %v3087, %v3405
      %v3525 = vadd.f32 %v3088, %v3410
      %v3526 = vadd.f32 %v3089, %v3413
      %v3527 = vadd.f32 %v3090, %v3418
      %v3528 = vadd.f32 %v3091, %v3421
      %v3529 = vadd.f32 %v3092, %v3426
      %v3530 = vadd.f32 %v3093, %v3429
      %v3531 = vadd.f32 %v3094, %v3434
      %v3532 = vadd.f32 %v3095, %v3437
      %v3533 = vadd.f32 %v3096, %v3442
      %v3534 = vadd.f32 %v3097, %v3445
      %v3535 = vadd.f32 %v3098, %v3450
      %v3536 = vadd.f32 %v3099, %v3453
      %v3537 = vadd.f32 %v3100, %v3458
      %v3538 = vadd.f32 %v3101, %v3461
      %v3539 = vadd.f32 %v3102, %v3466
      %v3540 = vadd.f32 %v3103, %v3469
      %v3541 = vadd.f32 %v3104, %v3474
      %v3542 = vadd.f32 %v3105, %v3477
      %v3543 = vadd.f32 %v3106, %v3482
      %v3544 = vadd.f32 %v3107, %v3485
      %v3545 = vadd.f32 %v3108, %v3490
      %v3546 = vld [vmem:[%s272 + $0x18] sm:$0xf]
      %v3547 = vld [vmem:[%s272 + $0x1c] sm:$0xf]
      %v3548 = vld [vmem:[%s272 + $0x20] sm:$0xf]
      %v3549 = vld [vmem:[%s272 + $0x24] sm:$0xf]
      %v3550 = vld [vmem:[%s272 + $0x28] sm:$0xf]
      %v3551 = vld [vmem:[%s272 + $0x2c] sm:$0xf]
      %v3552 = vld [vmem:[%s272 + $0x30] sm:$0xf]
      %v3553 = vld [vmem:[%s272 + $0x34] sm:$0xf]
      %v3554 = vld [vmem:[%s272 + $0x38] sm:$0xf]
      %v3555 = vld [vmem:[%s272 + $0x3c] sm:$0xf]
      %v3556 = vld [vmem:[%s272 + $0x40] sm:$0xf]
      %v3557 = vld [vmem:[%s272 + $0x44] sm:$0xf]
      %v3558 = vld [vmem:[%s272 + $0x48] sm:$0xf]
      %v3559 = vld [vmem:[%s272 + $0x4c] sm:$0xf]
      %v3560 = vld [vmem:[%s272 + $0x50] sm:$0xf]
      %v3561 = vld [vmem:[%s272 + $0x54] sm:$0xf]
      %v3562 = vld [vmem:[%s272 + $0x58] sm:$0xf]
      %v3563 = vld [vmem:[%s272 + $0x5c] sm:$0xf]
      %v3564 = vld [vmem:[%s272 + $0x60] sm:$0xf]
      %v3565 = vld [vmem:[%s272 + $0x64] sm:$0xf]
      %v3566 = vld [vmem:[%s272 + $0x68] sm:$0xf]
      %v3567 = vld [vmem:[%s272 + $0x6c] sm:$0xf]
      %v3568 = vld [vmem:[%s272 + $0x70] sm:$0xf]
      %v3569 = vld [vmem:[%s272 + $0x74] sm:$0xf]
      %v3570 = vld [vmem:[%s272 + $0x78] sm:$0xf]
      %v3571 = vld [vmem:[%s272 + $0x7c] sm:$0xf]
      %v3572 = vld [vmem:[%s272 + $0x80] sm:$0xf]
      %v3573 = vld [vmem:[%s272 + $0x84] sm:$0xf]
      %v3574 = vld [vmem:[%s272 + $0x88] sm:$0xf]
      %v3575 = vld [vmem:[%s272 + $0x8c] sm:$0xf]
      %v3576 = vld [vmem:[%s272 + $0x90] sm:$0xf]
      %v3577 = vld [vmem:[%s272 + $0x94] sm:$0xf]
      %v3578 = vld [vmem:[%s272 + $0x98] sm:$0xf]
      %v3579 = vld [vmem:[%s272 + $0x9c] sm:$0xf]
      %v3580 = vld [vmem:[%s272 + $0xa0] sm:$0xf]
      %v3581 = vld [vmem:[%s272 + $0xa4] sm:$0xf]
      %v3582 = vld [vmem:[%s272 + $0xa8] sm:$0xf]
      %v3583 = vld [vmem:[%s272 + $0xac] sm:$0xf]
      %v3584 = vld [vmem:[%s272 + $0xb0] sm:$0xf]
      %v3585 = vld [vmem:[%s272 + $0xb4] sm:$0xf]
      %v3586 = vld [vmem:[%s272 + $0xb8] sm:$0xf]
      %v3587 = vld [vmem:[%s272 + $0xbc] sm:$0xf]
      %v3588 = vld [vmem:[%s272 + $0xc0] sm:$0xf]
      %v3589 = vld [vmem:[%s272 + $0xc4] sm:$0xf]
      %v3590 = vld [vmem:[%s272 + $0xc8] sm:$0xf]
      %v3591 = vld [vmem:[%s272 + $0xcc] sm:$0xf]
      %v3592 = vld [vmem:[%s272 + $0xd0] sm:$0xf]
      %v3593 = vld [vmem:[%s272 + $0xd4] sm:$0xf]
      %v3594 = vld [vmem:[%s272 + $0xd8] sm:$0xf]
      %v3595 = vld [vmem:[%s272 + $0xdc] sm:$0xf]
      %v3596 = vld [vmem:[%s272 + $0xe0] sm:$0xf]
      %s3597 = scalar_lea.vmem %s1, 384
      %v3598 = vld [vmem:[%s3597] sm:$0xf]
      %v3599 = vld [vmem:[%s3597 + $0x4] sm:$0xf]
      %v3600 = vld [vmem:[%s3597 + $0x8] sm:$0xf]
      %v3601 = vld [vmem:[%s3597 + $0xc] sm:$0xf]
      %v3602 = vld [vmem:[%s3597 + $0x10] sm:$0xf]
      %v3603 = vld [vmem:[%s3597 + $0x14] sm:$0xf]
      %v3604 = vld [vmem:[%s3597 + $0x18] sm:$0xf]
      %v3605 = vld [vmem:[%s3597 + $0x1c] sm:$0xf]
      %v3606 = vld [vmem:[%s3597 + $0x20] sm:$0xf]
      %v3607 = vld [vmem:[%s3597 + $0x24] sm:$0xf]
      %v3608 = vld [vmem:[%s3597 + $0x28] sm:$0xf]
      %v3609 = vld [vmem:[%s3597 + $0x2c] sm:$0xf]
      %v3610 = vld [vmem:[%s3597 + $0x30] sm:$0xf]
      %v3611 = vld [vmem:[%s3597 + $0x34] sm:$0xf]
      %v3612 = vld [vmem:[%s3597 + $0x38] sm:$0xf]
      %v3613 = vld [vmem:[%s3597 + $0x3c] sm:$0xf]
      %v3665 = vunpack.c.l.b16 %v3546
      %v3666 = vunpack.c.l.b16 %v3547
      %v3667 = vunpack.c.l.b16 %v3548
      %v3668 = vunpack.c.l.b16 %v3549
      %v3669 = vunpack.c.l.b16 %v3550
      %v3670 = vunpack.c.l.b16 %v3551
      %v3671 = vunpack.c.l.b16 %v3552
      %v3672 = vunpack.c.l.b16 %v3553
      %v3673 = vunpack.c.l.b16 %v3554
      %v3674 = vunpack.c.l.b16 %v3555
      %v3675 = vunpack.c.l.b16 %v3556
      %v3676 = vunpack.c.l.b16 %v3557
      %v3677 = vunpack.c.l.b16 %v3558
      %v3678 = vunpack.c.l.b16 %v3559
      %v3679 = vunpack.c.l.b16 %v3560
      %v3680 = vunpack.c.l.b16 %v3561
      %v3681 = vunpack.c.l.b16 %v3562
      %v3682 = vunpack.c.l.b16 %v3563
      %v3683 = vunpack.c.l.b16 %v3564
      %v3684 = vunpack.c.l.b16 %v3565
      %v3685 = vunpack.c.l.b16 %v3566
      %v3686 = vunpack.c.l.b16 %v3567
      %v3687 = vunpack.c.l.b16 %v3568
      %v3688 = vunpack.c.l.b16 %v3569
      %v3689 = vunpack.c.l.b16 %v3570
      %v3690 = vunpack.c.l.b16 %v3571
      %v3691 = vunpack.c.l.b16 %v3572
      %v3692 = vunpack.c.l.b16 %v3573
      %v3693 = vunpack.c.l.b16 %v3574
      %v3694 = vunpack.c.l.b16 %v3575
      %v3695 = vunpack.c.l.b16 %v3576
      %v3696 = vunpack.c.l.b16 %v3577
      %v3697 = vunpack.c.l.b16 %v3578
      %v3698 = vunpack.c.l.b16 %v3579
      %v3699 = vunpack.c.l.b16 %v3580
      %v3700 = vunpack.c.l.b16 %v3581
      %v3701 = vunpack.c.l.b16 %v3582
      %v3702 = vunpack.c.l.b16 %v3583
      %v3703 = vunpack.c.l.b16 %v3584
      %v3704 = vunpack.c.l.b16 %v3585
      %v3705 = vunpack.c.l.b16 %v3586
      %v3706 = vunpack.c.l.b16 %v3587
      %v3707 = vunpack.c.l.b16 %v3588
      %v3708 = vunpack.c.l.b16 %v3589
      %v3709 = vunpack.c.l.b16 %v3590
      %v3710 = vunpack.c.l.b16 %v3591
      %v3711 = vunpack.c.l.b16 %v3592
      %v3712 = vunpack.c.l.b16 %v3593
      %v3713 = vunpack.c.l.b16 %v3594
      %v3714 = vunpack.c.l.b16 %v3595
      %v3715 = vunpack.c.l.b16 %v3596
      %v3716 = vpack.c.b16 %v3666, %v3665
      %v3717 = vpack.c.b16 %v3668, %v3667
      %v3718 = vpack.c.b16 %v3670, %v3669
      %v3719 = vpack.c.b16 %v3672, %v3671
      %v3720 = vpack.c.b16 %v3674, %v3673
      %v3721 = vpack.c.b16 %v3676, %v3675
      %v3722 = vpack.c.b16 %v3678, %v3677
      %v3723 = vpack.c.b16 %v3680, %v3679
      %v3724 = vpack.c.b16 %v3682, %v3681
      %v3725 = vpack.c.b16 %v3684, %v3683
      %v3726 = vpack.c.b16 %v3686, %v3685
      %v3727 = vpack.c.b16 %v3688, %v3687
      %v3728 = vpack.c.b16 %v3690, %v3689
      %v3729 = vpack.c.b16 %v3692, %v3691
      %v3730 = vpack.c.b16 %v3694, %v3693
      %v3731 = vpack.c.b16 %v3696, %v3695
      %v3732 = vpack.c.b16 %v3698, %v3697
      %v3733 = vpack.c.b16 %v3700, %v3699
      %v3734 = vpack.c.b16 %v3702, %v3701
      %v3735 = vpack.c.b16 %v3704, %v3703
      %v3736 = vpack.c.b16 %v3706, %v3705
      %v3737 = vpack.c.b16 %v3708, %v3707
      %v3738 = vpack.c.b16 %v3710, %v3709
      %v3739 = vpack.c.b16 %v3712, %v3711
      %v3740 = vpack.c.b16 %v3714, %v3713
      %v3741 = vpack.c.b16 %v3715, %v3715
      %v3784 = vunpack.c.l.b16 %v3598
      %v3785 = vunpack.c.l.b16 %v3599
      %v3786 = vunpack.c.l.b16 %v3600
      %v3787 = vunpack.c.l.b16 %v3601
      %v3788 = vunpack.c.l.b16 %v3602
      %v3789 = vunpack.c.l.b16 %v3603
      %v3790 = vunpack.c.l.b16 %v3604
      %v3791 = vunpack.c.l.b16 %v3605
      %v3792 = vunpack.c.l.b16 %v3606
      %v3793 = vunpack.c.l.b16 %v3607
      %v3794 = vunpack.c.l.b16 %v3608
      %v3795 = vunpack.c.l.b16 %v3609
      %v3796 = vunpack.c.l.b16 %v3610
      %v3797 = vunpack.c.l.b16 %v3611
      %v3798 = vunpack.c.l.b16 %v3612
      %v3799 = vunpack.c.l.b16 %v3613
      %v3800 = vpack.c.b16 %v3785, %v3784
      %v3801 = vpack.c.b16 %v3787, %v3786
      %v3802 = vpack.c.b16 %v3789, %v3788
      %v3803 = vpack.c.b16 %v3791, %v3790
      %v3804 = vpack.c.b16 %v3793, %v3792
      %v3805 = vpack.c.b16 %v3795, %v3794
      %v3806 = vpack.c.b16 %v3797, %v3796
      %v3807 = vpack.c.b16 %v3799, %v3798
      %3816 = vmatprep.subr.bf16.mxu0 0
      %3817 = vmatpush1.bf16.msra.mxu0 %v3807
      %3818 = vmatprep.subr.bf16.mxu0 0
      %3819 = vmatpush1.bf16.msra.mxu0 %v3806
      %3820 = vmatprep.subr.bf16.mxu0 0
      %3821 = vmatpush1.bf16.msra.mxu0 %v3805
      %3822 = vmatprep.subr.bf16.mxu0 0
      %3823 = vmatpush1.bf16.msra.mxu0 %v3804
      %3824 = vmatprep.subr.bf16.mxu0 0
      %3825 = vmatpush1.bf16.msra.mxu0 %v3803
      %3826 = vmatprep.subr.bf16.mxu0 0
      %3827 = vmatpush1.bf16.msra.mxu0 %v3802
      %3828 = vmatprep.subr.bf16.mxu0 0
      %3829 = vmatpush1.bf16.msra.mxu0 %v3801
      %3830 = vmatprep.subr.bf16.mxu0 0
      %3831 = vmatpush1.bf16.msra.mxu0 %v3800
      %3832 = vmatprep.subr.bf16.mxu0 0
      %3833 = vmatpush2.bf16.msra.mxu0 0
      %3834 = vmatprep.subr.bf16.mxu0 0
      %3835 = vmatpush2.bf16.msra.mxu0 0
      %3836 = vmatprep.subr.bf16.mxu0 0
      %3837 = vmatpush2.bf16.msra.mxu0 0
      %3838 = vmatprep.subr.bf16.mxu0 0
      %3839 = vmatpush2.bf16.msra.mxu0 0
      %3840 = vmatprep.subr.bf16.mxu0 0
      %3841 = vmatpush2.bf16.msra.mxu0 0
      %3842 = vmatprep.subr.bf16.mxu0 0
      %3843 = vmatpush2.bf16.msra.mxu0 0
      %3844 = vmatprep.subr.bf16.mxu0 0
      %3845 = vmatpush2.bf16.msra.mxu0 0
      %3846 = vmatprep.subr.bf16.mxu0 0
      %3847 = vmatpush2.bf16.msra.mxu0 0
      %3848 = vmatprep.mubr.bf16.mxu0 0
      %3849 = vmatmul.mubr.bf16.gmra.mxu0 %v3716
      %v3850 = vpop.f32.mrf.mxu0
      %v3851 = vadd.f32 0.0, %v3850
      %v3852 = vpop.f32.mrf.mxu0
      %v3853 = vpop.f32.mrf.mxu0
      %v3854 = vadd.f32 0.0, %v3853
      %v3855 = vpop.f32.mrf.mxu0
      %3856 = vmatprep.mubr.bf16.mxu0 0
      %3857 = vmatmul.mubr.bf16.gmra.mxu0 %v3717
      %v3858 = vpop.f32.mrf.mxu0
      %v3859 = vadd.f32 0.0, %v3858
      %v3860 = vpop.f32.mrf.mxu0
      %v3861 = vpop.f32.mrf.mxu0
      %v3862 = vadd.f32 0.0, %v3861
      %v3863 = vpop.f32.mrf.mxu0
      %3864 = vmatprep.mubr.bf16.mxu0 0
      %3865 = vmatmul.mubr.bf16.gmra.mxu0 %v3718
      %v3866 = vpop.f32.mrf.mxu0
      %v3867 = vadd.f32 0.0, %v3866
      %v3868 = vpop.f32.mrf.mxu0
      %v3869 = vpop.f32.mrf.mxu0
      %v3870 = vadd.f32 0.0, %v3869
      %v3871 = vpop.f32.mrf.mxu0
      %3872 = vmatprep.mubr.bf16.mxu0 0
      %3873 = vmatmul.mubr.bf16.gmra.mxu0 %v3719
      %v3874 = vpop.f32.mrf.mxu0
      %v3875 = vadd.f32 0.0, %v3874
      %v3876 = vpop.f32.mrf.mxu0
      %v3877 = vpop.f32.mrf.mxu0
      %v3878 = vadd.f32 0.0, %v3877
      %v3879 = vpop.f32.mrf.mxu0
      %3880 = vmatprep.mubr.bf16.mxu0 0
      %3881 = vmatmul.mubr.bf16.gmra.mxu0 %v3720
      %v3882 = vpop.f32.mrf.mxu0
      %v3883 = vadd.f32 0.0, %v3882
      %v3884 = vpop.f32.mrf.mxu0
      %v3885 = vpop.f32.mrf.mxu0
      %v3886 = vadd.f32 0.0, %v3885
      %v3887 = vpop.f32.mrf.mxu0
      %3888 = vmatprep.mubr.bf16.mxu0 0
      %3889 = vmatmul.mubr.bf16.gmra.mxu0 %v3721
      %v3890 = vpop.f32.mrf.mxu0
      %v3891 = vadd.f32 0.0, %v3890
      %v3892 = vpop.f32.mrf.mxu0
      %v3893 = vpop.f32.mrf.mxu0
      %v3894 = vadd.f32 0.0, %v3893
      %v3895 = vpop.f32.mrf.mxu0
      %3896 = vmatprep.mubr.bf16.mxu0 0
      %3897 = vmatmul.mubr.bf16.gmra.mxu0 %v3722
      %v3898 = vpop.f32.mrf.mxu0
      %v3899 = vadd.f32 0.0, %v3898
      %v3900 = vpop.f32.mrf.mxu0
      %v3901 = vpop.f32.mrf.mxu0
      %v3902 = vadd.f32 0.0, %v3901
      %v3903 = vpop.f32.mrf.mxu0
      %3904 = vmatprep.mubr.bf16.mxu0 0
      %3905 = vmatmul.mubr.bf16.gmra.mxu0 %v3723
      %v3906 = vpop.f32.mrf.mxu0
      %v3907 = vadd.f32 0.0, %v3906
      %v3908 = vpop.f32.mrf.mxu0
      %v3909 = vpop.f32.mrf.mxu0
      %v3910 = vadd.f32 0.0, %v3909
      %v3911 = vpop.f32.mrf.mxu0
      %3912 = vmatprep.mubr.bf16.mxu0 0
      %3913 = vmatmul.mubr.bf16.gmra.mxu0 %v3724
      %v3914 = vpop.f32.mrf.mxu0
      %v3915 = vadd.f32 0.0, %v3914
      %v3916 = vpop.f32.mrf.mxu0
      %v3917 = vpop.f32.mrf.mxu0
      %v3918 = vadd.f32 0.0, %v3917
      %v3919 = vpop.f32.mrf.mxu0
      %3920 = vmatprep.mubr.bf16.mxu0 0
      %3921 = vmatmul.mubr.bf16.gmra.mxu0 %v3725
      %v3922 = vpop.f32.mrf.mxu0
      %v3923 = vadd.f32 0.0, %v3922
      %v3924 = vpop.f32.mrf.mxu0
      %v3925 = vpop.f32.mrf.mxu0
      %v3926 = vadd.f32 0.0, %v3925
      %v3927 = vpop.f32.mrf.mxu0
      %3928 = vmatprep.mubr.bf16.mxu0 0
      %3929 = vmatmul.mubr.bf16.gmra.mxu0 %v3726
      %v3930 = vpop.f32.mrf.mxu0
      %v3931 = vadd.f32 0.0, %v3930
      %v3932 = vpop.f32.mrf.mxu0
      %v3933 = vpop.f32.mrf.mxu0
      %v3934 = vadd.f32 0.0, %v3933
      %v3935 = vpop.f32.mrf.mxu0
      %3936 = vmatprep.mubr.bf16.mxu0 0
      %3937 = vmatmul.mubr.bf16.gmra.mxu0 %v3727
      %v3938 = vpop.f32.mrf.mxu0
      %v3939 = vadd.f32 0.0, %v3938
      %v3940 = vpop.f32.mrf.mxu0
      %v3941 = vpop.f32.mrf.mxu0
      %v3942 = vadd.f32 0.0, %v3941
      %v3943 = vpop.f32.mrf.mxu0
      %3944 = vmatprep.mubr.bf16.mxu0 0
      %3945 = vmatmul.mubr.bf16.gmra.mxu0 %v3728
      %v3946 = vpop.f32.mrf.mxu0
      %v3947 = vadd.f32 0.0, %v3946
      %v3948 = vpop.f32.mrf.mxu0
      %v3949 = vpop.f32.mrf.mxu0
      %v3950 = vadd.f32 0.0, %v3949
      %v3951 = vpop.f32.mrf.mxu0
      %3952 = vmatprep.mubr.bf16.mxu0 0
      %3953 = vmatmul.mubr.bf16.gmra.mxu0 %v3729
      %v3954 = vpop.f32.mrf.mxu0
      %v3955 = vadd.f32 0.0, %v3954
      %v3956 = vpop.f32.mrf.mxu0
      %v3957 = vpop.f32.mrf.mxu0
      %v3958 = vadd.f32 0.0, %v3957
      %v3959 = vpop.f32.mrf.mxu0
      %3960 = vmatprep.mubr.bf16.mxu0 0
      %3961 = vmatmul.mubr.bf16.gmra.mxu0 %v3730
      %v3962 = vpop.f32.mrf.mxu0
      %v3963 = vadd.f32 0.0, %v3962
      %v3964 = vpop.f32.mrf.mxu0
      %v3965 = vpop.f32.mrf.mxu0
      %v3966 = vadd.f32 0.0, %v3965
      %v3967 = vpop.f32.mrf.mxu0
      %3968 = vmatprep.mubr.bf16.mxu0 0
      %3969 = vmatmul.mubr.bf16.gmra.mxu0 %v3731
      %v3970 = vpop.f32.mrf.mxu0
      %v3971 = vadd.f32 0.0, %v3970
      %v3972 = vpop.f32.mrf.mxu0
      %v3973 = vpop.f32.mrf.mxu0
      %v3974 = vadd.f32 0.0, %v3973
      %v3975 = vpop.f32.mrf.mxu0
      %3976 = vmatprep.mubr.bf16.mxu0 0
      %3977 = vmatmul.mubr.bf16.gmra.mxu0 %v3732
      %v3978 = vpop.f32.mrf.mxu0
      %v3979 = vadd.f32 0.0, %v3978
      %v3980 = vpop.f32.mrf.mxu0
      %v3981 = vpop.f32.mrf.mxu0
      %v3982 = vadd.f32 0.0, %v3981
      %v3983 = vpop.f32.mrf.mxu0
      %3984 = vmatprep.mubr.bf16.mxu0 0
      %3985 = vmatmul.mubr.bf16.gmra.mxu0 %v3733
      %v3986 = vpop.f32.mrf.mxu0
      %v3987 = vadd.f32 0.0, %v3986
      %v3988 = vpop.f32.mrf.mxu0
      %v3989 = vpop.f32.mrf.mxu0
      %v3990 = vadd.f32 0.0, %v3989
      %v3991 = vpop.f32.mrf.mxu0
      %3992 = vmatprep.mubr.bf16.mxu0 0
      %3993 = vmatmul.mubr.bf16.gmra.mxu0 %v3734
      %v3994 = vpop.f32.mrf.mxu0
      %v3995 = vadd.f32 0.0, %v3994
      %v3996 = vpop.f32.mrf.mxu0
      %v3997 = vpop.f32.mrf.mxu0
      %v3998 = vadd.f32 0.0, %v3997
      %v3999 = vpop.f32.mrf.mxu0
      %4000 = vmatprep.mubr.bf16.mxu0 0
      %4001 = vmatmul.mubr.bf16.gmra.mxu0 %v3735
      %v4002 = vpop.f32.mrf.mxu0
      %v4003 = vadd.f32 0.0, %v4002
      %v4004 = vpop.f32.mrf.mxu0
      %v4005 = vpop.f32.mrf.mxu0
      %v4006 = vadd.f32 0.0, %v4005
      %v4007 = vpop.f32.mrf.mxu0
      %4008 = vmatprep.mubr.bf16.mxu0 0
      %4009 = vmatmul.mubr.bf16.gmra.mxu0 %v3736
      %v4010 = vpop.f32.mrf.mxu0
      %v4011 = vadd.f32 0.0, %v4010
      %v4012 = vpop.f32.mrf.mxu0
      %v4013 = vpop.f32.mrf.mxu0
      %v4014 = vadd.f32 0.0, %v4013
      %v4015 = vpop.f32.mrf.mxu0
      %4016 = vmatprep.mubr.bf16.mxu0 0
      %4017 = vmatmul.mubr.bf16.gmra.mxu0 %v3737
      %v4018 = vpop.f32.mrf.mxu0
      %v4019 = vadd.f32 0.0, %v4018
      %v4020 = vpop.f32.mrf.mxu0
      %v4021 = vpop.f32.mrf.mxu0
      %v4022 = vadd.f32 0.0, %v4021
      %v4023 = vpop.f32.mrf.mxu0
      %4024 = vmatprep.mubr.bf16.mxu0 0
      %4025 = vmatmul.mubr.bf16.gmra.mxu0 %v3738
      %v4026 = vpop.f32.mrf.mxu0
      %v4027 = vadd.f32 0.0, %v4026
      %v4028 = vpop.f32.mrf.mxu0
      %v4029 = vpop.f32.mrf.mxu0
      %v4030 = vadd.f32 0.0, %v4029
      %v4031 = vpop.f32.mrf.mxu0
      %4032 = vmatprep.mubr.bf16.mxu0 0
      %4033 = vmatmul.mubr.bf16.gmra.mxu0 %v3739
      %v4034 = vpop.f32.mrf.mxu0
      %v4035 = vadd.f32 0.0, %v4034
      %v4036 = vpop.f32.mrf.mxu0
      %v4037 = vpop.f32.mrf.mxu0
      %v4038 = vadd.f32 0.0, %v4037
      %v4039 = vpop.f32.mrf.mxu0
      %4040 = vmatprep.mubr.bf16.mxu0 0
      %4041 = vmatmul.mubr.bf16.gmra.mxu0 %v3740
      %v4042 = vpop.f32.mrf.mxu0
      %v4043 = vadd.f32 0.0, %v4042
      %v4044 = vpop.f32.mrf.mxu0
      %v4045 = vpop.f32.mrf.mxu0
      %v4046 = vadd.f32 0.0, %v4045
      %v4047 = vpop.f32.mrf.mxu0
      %4048 = vmatprep.mubr.bf16.mxu0 0
      %4049 = vmatmul.mubr.bf16.gmra.mxu0 %v3741
      %v4050 = vpop.f32.mrf.mxu0
      %v4051 = vadd.f32 0.0, %v4050
      %v4052 = vpop.f32.mrf.mxu0
      %v4053 = vpop.f32.mrf.mxu0
      %v4054 = vpop.f32.mrf.mxu0
      %4055 = vdwg.mxu0
      %v4056 = vadd.f32 %v3495, %v3851
      %v4057 = vadd.f32 %v3496, %v3854
      %v4058 = vadd.f32 %v3497, %v3859
      %v4059 = vadd.f32 %v3498, %v3862
      %v4060 = vadd.f32 %v3499, %v3867
      %v4061 = vadd.f32 %v3500, %v3870
      %v4062 = vadd.f32 %v3501, %v3875
      %v4063 = vadd.f32 %v3502, %v3878
      %v4064 = vadd.f32 %v3503, %v3883
      %v4065 = vadd.f32 %v3504, %v3886
      %v4066 = vadd.f32 %v3505, %v3891
      %v4067 = vadd.f32 %v3506, %v3894
      %v4068 = vadd.f32 %v3507, %v3899
      %v4069 = vadd.f32 %v3508, %v3902
      %v4070 = vadd.f32 %v3509, %v3907
      %v4071 = vadd.f32 %v3510, %v3910
      %v4072 = vadd.f32 %v3511, %v3915
      %v4073 = vadd.f32 %v3512, %v3918
      %v4074 = vadd.f32 %v3513, %v3923
      %v4075 = vadd.f32 %v3514, %v3926
      %v4076 = vadd.f32 %v3515, %v3931
      %v4077 = vadd.f32 %v3516, %v3934
      %v4078 = vadd.f32 %v3517, %v3939
      %v4079 = vadd.f32 %v3518, %v3942
      %v4080 = vadd.f32 %v3519, %v3947
      %v4081 = vadd.f32 %v3520, %v3950
      %v4082 = vadd.f32 %v3521, %v3955
      %v4083 = vadd.f32 %v3522, %v3958
      %v4084 = vadd.f32 %v3523, %v3963
      %v4085 = vadd.f32 %v3524, %v3966
      %v4086 = vadd.f32 %v3525, %v3971
      %v4087 = vadd.f32 %v3526, %v3974
      %v4088 = vadd.f32 %v3527, %v3979
      %v4089 = vadd.f32 %v3528, %v3982
      %v4090 = vadd.f32 %v3529, %v3987
      %v4091 = vadd.f32 %v3530, %v3990
      %v4092 = vadd.f32 %v3531, %v3995
      %v4093 = vadd.f32 %v3532, %v3998
      %v4094 = vadd.f32 %v3533, %v4003
      %v4095 = vadd.f32 %v3534, %v4006
      %v4096 = vadd.f32 %v3535, %v4011
      %v4097 = vadd.f32 %v3536, %v4014
      %v4098 = vadd.f32 %v3537, %v4019
      %v4099 = vadd.f32 %v3538, %v4022
      %v4100 = vadd.f32 %v3539, %v4027
      %v4101 = vadd.f32 %v3540, %v4030
      %v4102 = vadd.f32 %v3541, %v4035
      %v4103 = vadd.f32 %v3542, %v4038
      %v4104 = vadd.f32 %v3543, %v4043
      %v4105 = vadd.f32 %v3544, %v4046
      %v4106 = vadd.f32 %v3545, %v4051
      %v4107 = vld [vmem:[%s272 + $0x18] sm:$0xf]
      %v4108 = vld [vmem:[%s272 + $0x1c] sm:$0xf]
      %v4109 = vld [vmem:[%s272 + $0x20] sm:$0xf]
      %v4110 = vld [vmem:[%s272 + $0x24] sm:$0xf]
      %v4111 = vld [vmem:[%s272 + $0x28] sm:$0xf]
      %v4112 = vld [vmem:[%s272 + $0x2c] sm:$0xf]
      %v4113 = vld [vmem:[%s272 + $0x30] sm:$0xf]
      %v4114 = vld [vmem:[%s272 + $0x34] sm:$0xf]
      %v4115 = vld [vmem:[%s272 + $0x38] sm:$0xf]
      %v4116 = vld [vmem:[%s272 + $0x3c] sm:$0xf]
      %v4117 = vld [vmem:[%s272 + $0x40] sm:$0xf]
      %v4118 = vld [vmem:[%s272 + $0x44] sm:$0xf]
      %v4119 = vld [vmem:[%s272 + $0x48] sm:$0xf]
      %v4120 = vld [vmem:[%s272 + $0x4c] sm:$0xf]
      %v4121 = vld [vmem:[%s272 + $0x50] sm:$0xf]
      %v4122 = vld [vmem:[%s272 + $0x54] sm:$0xf]
      %v4123 = vld [vmem:[%s272 + $0x58] sm:$0xf]
      %v4124 = vld [vmem:[%s272 + $0x5c] sm:$0xf]
      %v4125 = vld [vmem:[%s272 + $0x60] sm:$0xf]
      %v4126 = vld [vmem:[%s272 + $0x64] sm:$0xf]
      %v4127 = vld [vmem:[%s272 + $0x68] sm:$0xf]
      %v4128 = vld [vmem:[%s272 + $0x6c] sm:$0xf]
      %v4129 = vld [vmem:[%s272 + $0x70] sm:$0xf]
      %v4130 = vld [vmem:[%s272 + $0x74] sm:$0xf]
      %v4131 = vld [vmem:[%s272 + $0x78] sm:$0xf]
      %v4132 = vld [vmem:[%s272 + $0x7c] sm:$0xf]
      %v4133 = vld [vmem:[%s272 + $0x80] sm:$0xf]
      %v4134 = vld [vmem:[%s272 + $0x84] sm:$0xf]
      %v4135 = vld [vmem:[%s272 + $0x88] sm:$0xf]
      %v4136 = vld [vmem:[%s272 + $0x8c] sm:$0xf]
      %v4137 = vld [vmem:[%s272 + $0x90] sm:$0xf]
      %v4138 = vld [vmem:[%s272 + $0x94] sm:$0xf]
      %v4139 = vld [vmem:[%s272 + $0x98] sm:$0xf]
      %v4140 = vld [vmem:[%s272 + $0x9c] sm:$0xf]
      %v4141 = vld [vmem:[%s272 + $0xa0] sm:$0xf]
      %v4142 = vld [vmem:[%s272 + $0xa4] sm:$0xf]
      %v4143 = vld [vmem:[%s272 + $0xa8] sm:$0xf]
      %v4144 = vld [vmem:[%s272 + $0xac] sm:$0xf]
      %v4145 = vld [vmem:[%s272 + $0xb0] sm:$0xf]
      %v4146 = vld [vmem:[%s272 + $0xb4] sm:$0xf]
      %v4147 = vld [vmem:[%s272 + $0xb8] sm:$0xf]
      %v4148 = vld [vmem:[%s272 + $0xbc] sm:$0xf]
      %v4149 = vld [vmem:[%s272 + $0xc0] sm:$0xf]
      %v4150 = vld [vmem:[%s272 + $0xc4] sm:$0xf]
      %v4151 = vld [vmem:[%s272 + $0xc8] sm:$0xf]
      %v4152 = vld [vmem:[%s272 + $0xcc] sm:$0xf]
      %v4153 = vld [vmem:[%s272 + $0xd0] sm:$0xf]
      %v4154 = vld [vmem:[%s272 + $0xd4] sm:$0xf]
      %v4155 = vld [vmem:[%s272 + $0xd8] sm:$0xf]
      %v4156 = vld [vmem:[%s272 + $0xdc] sm:$0xf]
      %v4157 = vld [vmem:[%s272 + $0xe0] sm:$0xf]
      %v4158 = vld [vmem:[%s272 + $0xe4] sm:$0x1]
      %s4159 = scalar_lea.vmem %s1, 448
      %v4160 = vld [vmem:[%s4159] sm:$0xf]
      %v4161 = vld [vmem:[%s4159 + $0x4] sm:$0xf]
      %v4162 = vld [vmem:[%s4159 + $0x8] sm:$0xf]
      %v4163 = vld [vmem:[%s4159 + $0xc] sm:$0xf]
      %v4164 = vld [vmem:[%s4159 + $0x10] sm:$0xf]
      %v4165 = vld [vmem:[%s4159 + $0x14] sm:$0xf]
      %v4166 = vld [vmem:[%s4159 + $0x18] sm:$0xf]
      %v4167 = vld [vmem:[%s4159 + $0x1c] sm:$0xf]
      %v4168 = vld [vmem:[%s4159 + $0x20] sm:$0xf]
      %v4169 = vld [vmem:[%s4159 + $0x24] sm:$0xf]
      %v4170 = vld [vmem:[%s4159 + $0x28] sm:$0xf]
      %v4171 = vld [vmem:[%s4159 + $0x2c] sm:$0xf]
      %v4172 = vld [vmem:[%s4159 + $0x30] sm:$0xf]
      %v4173 = vld [vmem:[%s4159 + $0x34] sm:$0xf]
      %v4174 = vld [vmem:[%s4159 + $0x38] sm:$0xf]
      %v4175 = vld [vmem:[%s4159 + $0x3c] sm:$0xf]
      %v4228 = vunpack.c.l.b16 %v4107
      %v4229 = vunpack.c.l.b16 %v4108
      %v4230 = vunpack.c.l.b16 %v4109
      %v4231 = vunpack.c.l.b16 %v4110
      %v4232 = vunpack.c.l.b16 %v4111
      %v4233 = vunpack.c.l.b16 %v4112
      %v4234 = vunpack.c.l.b16 %v4113
      %v4235 = vunpack.c.l.b16 %v4114
      %v4236 = vunpack.c.l.b16 %v4115
      %v4237 = vunpack.c.l.b16 %v4116
      %v4238 = vunpack.c.l.b16 %v4117
      %v4239 = vunpack.c.l.b16 %v4118
      %v4240 = vunpack.c.l.b16 %v4119
      %v4241 = vunpack.c.l.b16 %v4120
      %v4242 = vunpack.c.l.b16 %v4121
      %v4243 = vunpack.c.l.b16 %v4122
      %v4244 = vunpack.c.l.b16 %v4123
      %v4245 = vunpack.c.l.b16 %v4124
      %v4246 = vunpack.c.l.b16 %v4125
      %v4247 = vunpack.c.l.b16 %v4126
      %v4248 = vunpack.c.l.b16 %v4127
      %v4249 = vunpack.c.l.b16 %v4128
      %v4250 = vunpack.c.l.b16 %v4129
      %v4251 = vunpack.c.l.b16 %v4130
      %v4252 = vunpack.c.l.b16 %v4131
      %v4253 = vunpack.c.l.b16 %v4132
      %v4254 = vunpack.c.l.b16 %v4133
      %v4255 = vunpack.c.l.b16 %v4134
      %v4256 = vunpack.c.l.b16 %v4135
      %v4257 = vunpack.c.l.b16 %v4136
      %v4258 = vunpack.c.l.b16 %v4137
      %v4259 = vunpack.c.l.b16 %v4138
      %v4260 = vunpack.c.l.b16 %v4139
      %v4261 = vunpack.c.l.b16 %v4140
      %v4262 = vunpack.c.l.b16 %v4141
      %v4263 = vunpack.c.l.b16 %v4142
      %v4264 = vunpack.c.l.b16 %v4143
      %v4265 = vunpack.c.l.b16 %v4144
      %v4266 = vunpack.c.l.b16 %v4145
      %v4267 = vunpack.c.l.b16 %v4146
      %v4268 = vunpack.c.l.b16 %v4147
      %v4269 = vunpack.c.l.b16 %v4148
      %v4270 = vunpack.c.l.b16 %v4149
      %v4271 = vunpack.c.l.b16 %v4150
      %v4272 = vunpack.c.l.b16 %v4151
      %v4273 = vunpack.c.l.b16 %v4152
      %v4274 = vunpack.c.l.b16 %v4153
      %v4275 = vunpack.c.l.b16 %v4154
      %v4276 = vunpack.c.l.b16 %v4155
      %v4277 = vunpack.c.l.b16 %v4156
      %v4278 = vunpack.c.l.b16 %v4157
      %v4279 = vunpack.c.l.b16 %v4158
      %v4280 = vpack.c.b16 %v4229, %v4228
      %v4281 = vpack.c.b16 %v4231, %v4230
      %v4282 = vpack.c.b16 %v4233, %v4232
      %v4283 = vpack.c.b16 %v4235, %v4234
      %v4284 = vpack.c.b16 %v4237, %v4236
      %v4285 = vpack.c.b16 %v4239, %v4238
      %v4286 = vpack.c.b16 %v4241, %v4240
      %v4287 = vpack.c.b16 %v4243, %v4242
      %v4288 = vpack.c.b16 %v4245, %v4244
      %v4289 = vpack.c.b16 %v4247, %v4246
      %v4290 = vpack.c.b16 %v4249, %v4248
      %v4291 = vpack.c.b16 %v4251, %v4250
      %v4292 = vpack.c.b16 %v4253, %v4252
      %v4293 = vpack.c.b16 %v4255, %v4254
      %v4294 = vpack.c.b16 %v4257, %v4256
      %v4295 = vpack.c.b16 %v4259, %v4258
      %v4296 = vpack.c.b16 %v4261, %v4260
      %v4297 = vpack.c.b16 %v4263, %v4262
      %v4298 = vpack.c.b16 %v4265, %v4264
      %v4299 = vpack.c.b16 %v4267, %v4266
      %v4300 = vpack.c.b16 %v4269, %v4268
      %v4301 = vpack.c.b16 %v4271, %v4270
      %v4302 = vpack.c.b16 %v4273, %v4272
      %v4303 = vpack.c.b16 %v4275, %v4274
      %v4304 = vpack.c.b16 %v4277, %v4276
      %v4305 = vpack.c.b16 %v4279, %v4278
      %v4307 = vshrl.u32 %v4280, 16
      %v4309 = vshll.u32 %v4280, 16
      %v4311 = vrot.slane %v4309, 1
      %v4312 = vor.u32 %v4307, %v4311
      %v4314 = vshll.u32 %v4281, 16
      %v4316 = vrot.slane %v4314, 1
      %v4317 = vsel %vm502, %v4312, %v4316
      %v4318 = vshrl.u32 %v4281, 16
      %v4320 = vor.u32 %v4318, %v4316
      %v4322 = vshll.u32 %v4282, 16
      %v4324 = vrot.slane %v4322, 1
      %v4325 = vsel %vm502, %v4320, %v4324
      %v4326 = vshrl.u32 %v4282, 16
      %v4328 = vor.u32 %v4326, %v4324
      %v4330 = vshll.u32 %v4283, 16
      %v4332 = vrot.slane %v4330, 1
      %v4333 = vsel %vm502, %v4328, %v4332
      %v4334 = vshrl.u32 %v4283, 16
      %v4336 = vor.u32 %v4334, %v4332
      %v4338 = vshll.u32 %v4284, 16
      %v4340 = vrot.slane %v4338, 1
      %v4341 = vsel %vm502, %v4336, %v4340
      %v4342 = vshrl.u32 %v4284, 16
      %v4344 = vor.u32 %v4342, %v4340
      %v4346 = vshll.u32 %v4285, 16
      %v4348 = vrot.slane %v4346, 1
      %v4349 = vsel %vm502, %v4344, %v4348
      %v4350 = vshrl.u32 %v4285, 16
      %v4352 = vor.u32 %v4350, %v4348
      %v4354 = vshll.u32 %v4286, 16
      %v4356 = vrot.slane %v4354, 1
      %v4357 = vsel %vm502, %v4352, %v4356
      %v4358 = vshrl.u32 %v4286, 16
      %v4360 = vor.u32 %v4358, %v4356
      %v4362 = vshll.u32 %v4287, 16
      %v4364 = vrot.slane %v4362, 1
      %v4365 = vsel %vm502, %v4360, %v4364
      %v4366 = vshrl.u32 %v4287, 16
      %v4368 = vor.u32 %v4366, %v4364
      %v4370 = vshll.u32 %v4288, 16
      %v4372 = vrot.slane %v4370, 1
      %v4373 = vsel %vm502, %v4368, %v4372
      %v4374 = vshrl.u32 %v4288, 16
      %v4376 = vor.u32 %v4374, %v4372
      %v4378 = vshll.u32 %v4289, 16
      %v4380 = vrot.slane %v4378, 1
      %v4381 = vsel %vm502, %v4376, %v4380
      %v4382 = vshrl.u32 %v4289, 16
      %v4384 = vor.u32 %v4382, %v4380
      %v4386 = vshll.u32 %v4290, 16
      %v4388 = vrot.slane %v4386, 1
      %v4389 = vsel %vm502, %v4384, %v4388
      %v4390 = vshrl.u32 %v4290, 16
      %v4392 = vor.u32 %v4390, %v4388
      %v4394 = vshll.u32 %v4291, 16
      %v4396 = vrot.slane %v4394, 1
      %v4397 = vsel %vm502, %v4392, %v4396
      %v4398 = vshrl.u32 %v4291, 16
      %v4400 = vor.u32 %v4398, %v4396
      %v4402 = vshll.u32 %v4292, 16
      %v4404 = vrot.slane %v4402, 1
      %v4405 = vsel %vm502, %v4400, %v4404
      %v4406 = vshrl.u32 %v4292, 16
      %v4408 = vor.u32 %v4406, %v4404
      %v4410 = vshll.u32 %v4293, 16
      %v4412 = vrot.slane %v4410, 1
      %v4413 = vsel %vm502, %v4408, %v4412
      %v4414 = vshrl.u32 %v4293, 16
      %v4416 = vor.u32 %v4414, %v4412
      %v4418 = vshll.u32 %v4294, 16
      %v4420 = vrot.slane %v4418, 1
      %v4421 = vsel %vm502, %v4416, %v4420
      %v4422 = vshrl.u32 %v4294, 16
      %v4424 = vor.u32 %v4422, %v4420
      %v4426 = vshll.u32 %v4295, 16
      %v4428 = vrot.slane %v4426, 1
      %v4429 = vsel %vm502, %v4424, %v4428
      %v4430 = vshrl.u32 %v4295, 16
      %v4432 = vor.u32 %v4430, %v4428
      %v4434 = vshll.u32 %v4296, 16
      %v4436 = vrot.slane %v4434, 1
      %v4437 = vsel %vm502, %v4432, %v4436
      %v4438 = vshrl.u32 %v4296, 16
      %v4440 = vor.u32 %v4438, %v4436
      %v4442 = vshll.u32 %v4297, 16
      %v4444 = vrot.slane %v4442, 1
      %v4445 = vsel %vm502, %v4440, %v4444
      %v4446 = vshrl.u32 %v4297, 16
      %v4448 = vor.u32 %v4446, %v4444
      %v4450 = vshll.u32 %v4298, 16
      %v4452 = vrot.slane %v4450, 1
      %v4453 = vsel %vm502, %v4448, %v4452
      %v4454 = vshrl.u32 %v4298, 16
      %v4456 = vor.u32 %v4454, %v4452
      %v4458 = vshll.u32 %v4299, 16
      %v4460 = vrot.slane %v4458, 1
      %v4461 = vsel %vm502, %v4456, %v4460
      %v4462 = vshrl.u32 %v4299, 16
      %v4464 = vor.u32 %v4462, %v4460
      %v4466 = vshll.u32 %v4300, 16
      %v4468 = vrot.slane %v4466, 1
      %v4469 = vsel %vm502, %v4464, %v4468
      %v4470 = vshrl.u32 %v4300, 16
      %v4472 = vor.u32 %v4470, %v4468
      %v4474 = vshll.u32 %v4301, 16
      %v4476 = vrot.slane %v4474, 1
      %v4477 = vsel %vm502, %v4472, %v4476
      %v4478 = vshrl.u32 %v4301, 16
      %v4480 = vor.u32 %v4478, %v4476
      %v4482 = vshll.u32 %v4302, 16
      %v4484 = vrot.slane %v4482, 1
      %v4485 = vsel %vm502, %v4480, %v4484
      %v4486 = vshrl.u32 %v4302, 16
      %v4488 = vor.u32 %v4486, %v4484
      %v4490 = vshll.u32 %v4303, 16
      %v4492 = vrot.slane %v4490, 1
      %v4493 = vsel %vm502, %v4488, %v4492
      %v4494 = vshrl.u32 %v4303, 16
      %v4496 = vor.u32 %v4494, %v4492
      %v4498 = vshll.u32 %v4304, 16
      %v4500 = vrot.slane %v4498, 1
      %v4501 = vsel %vm502, %v4496, %v4500
      %v4502 = vshrl.u32 %v4304, 16
      %v4504 = vor.u32 %v4502, %v4500
      %v4506 = vshll.u32 %v4305, 16
      %v4508 = vrot.slane %v4506, 1
      %v4509 = vsel %vm502, %v4504, %v4508
      %v4510 = vshrl.u32 %v4305, 16
      %v4512 = vor.u32 %v4510, %v4508
      %v4555 = vunpack.c.l.b16 %v4160
      %v4556 = vunpack.c.l.b16 %v4161
      %v4557 = vunpack.c.l.b16 %v4162
      %v4558 = vunpack.c.l.b16 %v4163
      %v4559 = vunpack.c.l.b16 %v4164
      %v4560 = vunpack.c.l.b16 %v4165
      %v4561 = vunpack.c.l.b16 %v4166
      %v4562 = vunpack.c.l.b16 %v4167
      %v4563 = vunpack.c.l.b16 %v4168
      %v4564 = vunpack.c.l.b16 %v4169
      %v4565 = vunpack.c.l.b16 %v4170
      %v4566 = vunpack.c.l.b16 %v4171
      %v4567 = vunpack.c.l.b16 %v4172
      %v4568 = vunpack.c.l.b16 %v4173
      %v4569 = vunpack.c.l.b16 %v4174
      %v4570 = vunpack.c.l.b16 %v4175
      %v4571 = vpack.c.b16 %v4556, %v4555
      %v4572 = vpack.c.b16 %v4558, %v4557
      %v4573 = vpack.c.b16 %v4560, %v4559
      %v4574 = vpack.c.b16 %v4562, %v4561
      %v4575 = vpack.c.b16 %v4564, %v4563
      %v4576 = vpack.c.b16 %v4566, %v4565
      %v4577 = vpack.c.b16 %v4568, %v4567
      %v4578 = vpack.c.b16 %v4570, %v4569
      %4587 = vmatprep.subr.bf16.mxu0 0
      %4588 = vmatpush1.bf16.msra.mxu0 %v4578
      %4589 = vmatprep.subr.bf16.mxu0 0
      %4590 = vmatpush1.bf16.msra.mxu0 %v4577
      %4591 = vmatprep.subr.bf16.mxu0 0
      %4592 = vmatpush1.bf16.msra.mxu0 %v4576
      %4593 = vmatprep.subr.bf16.mxu0 0
      %4594 = vmatpush1.bf16.msra.mxu0 %v4575
      %4595 = vmatprep.subr.bf16.mxu0 0
      %4596 = vmatpush1.bf16.msra.mxu0 %v4574
      %4597 = vmatprep.subr.bf16.mxu0 0
      %4598 = vmatpush1.bf16.msra.mxu0 %v4573
      %4599 = vmatprep.subr.bf16.mxu0 0
      %4600 = vmatpush1.bf16.msra.mxu0 %v4572
      %4601 = vmatprep.subr.bf16.mxu0 0
      %4602 = vmatpush1.bf16.msra.mxu0 %v4571
      %4603 = vmatprep.subr.bf16.mxu0 0
      %4604 = vmatpush2.bf16.msra.mxu0 0
      %4605 = vmatprep.subr.bf16.mxu0 0
      %4606 = vmatpush2.bf16.msra.mxu0 0
      %4607 = vmatprep.subr.bf16.mxu0 0
      %4608 = vmatpush2.bf16.msra.mxu0 0
      %4609 = vmatprep.subr.bf16.mxu0 0
      %4610 = vmatpush2.bf16.msra.mxu0 0
      %4611 = vmatprep.subr.bf16.mxu0 0
      %4612 = vmatpush2.bf16.msra.mxu0 0
      %4613 = vmatprep.subr.bf16.mxu0 0
      %4614 = vmatpush2.bf16.msra.mxu0 0
      %4615 = vmatprep.subr.bf16.mxu0 0
      %4616 = vmatpush2.bf16.msra.mxu0 0
      %4617 = vmatprep.subr.bf16.mxu0 0
      %4618 = vmatpush2.bf16.msra.mxu0 0
      %4619 = vmatprep.mubr.bf16.mxu0 0
      %4620 = vmatmul.mubr.bf16.gmra.mxu0 %v4317
      %v4621 = vpop.f32.mrf.mxu0
      %v4622 = vadd.f32 0.0, %v4621
      %v4623 = vpop.f32.mrf.mxu0
      %v4624 = vpop.f32.mrf.mxu0
      %v4625 = vadd.f32 0.0, %v4624
      %v4626 = vpop.f32.mrf.mxu0
      %4627 = vmatprep.mubr.bf16.mxu0 0
      %4628 = vmatmul.mubr.bf16.gmra.mxu0 %v4325
      %v4629 = vpop.f32.mrf.mxu0
      %v4630 = vadd.f32 0.0, %v4629
      %v4631 = vpop.f32.mrf.mxu0
      %v4632 = vpop.f32.mrf.mxu0
      %v4633 = vadd.f32 0.0, %v4632
      %v4634 = vpop.f32.mrf.mxu0
      %4635 = vmatprep.mubr.bf16.mxu0 0
      %4636 = vmatmul.mubr.bf16.gmra.mxu0 %v4333
      %v4637 = vpop.f32.mrf.mxu0
      %v4638 = vadd.f32 0.0, %v4637
      %v4639 = vpop.f32.mrf.mxu0
      %v4640 = vpop.f32.mrf.mxu0
      %v4641 = vadd.f32 0.0, %v4640
      %v4642 = vpop.f32.mrf.mxu0
      %4643 = vmatprep.mubr.bf16.mxu0 0
      %4644 = vmatmul.mubr.bf16.gmra.mxu0 %v4341
      %v4645 = vpop.f32.mrf.mxu0
      %v4646 = vadd.f32 0.0, %v4645
      %v4647 = vpop.f32.mrf.mxu0
      %v4648 = vpop.f32.mrf.mxu0
      %v4649 = vadd.f32 0.0, %v4648
      %v4650 = vpop.f32.mrf.mxu0
      %4651 = vmatprep.mubr.bf16.mxu0 0
      %4652 = vmatmul.mubr.bf16.gmra.mxu0 %v4349
      %v4653 = vpop.f32.mrf.mxu0
      %v4654 = vadd.f32 0.0, %v4653
      %v4655 = vpop.f32.mrf.mxu0
      %v4656 = vpop.f32.mrf.mxu0
      %v4657 = vadd.f32 0.0, %v4656
      %v4658 = vpop.f32.mrf.mxu0
      %4659 = vmatprep.mubr.bf16.mxu0 0
      %4660 = vmatmul.mubr.bf16.gmra.mxu0 %v4357
      %v4661 = vpop.f32.mrf.mxu0
      %v4662 = vadd.f32 0.0, %v4661
      %v4663 = vpop.f32.mrf.mxu0
      %v4664 = vpop.f32.mrf.mxu0
      %v4665 = vadd.f32 0.0, %v4664
      %v4666 = vpop.f32.mrf.mxu0
      %4667 = vmatprep.mubr.bf16.mxu0 0
      %4668 = vmatmul.mubr.bf16.gmra.mxu0 %v4365
      %v4669 = vpop.f32.mrf.mxu0
      %v4670 = vadd.f32 0.0, %v4669
      %v4671 = vpop.f32.mrf.mxu0
      %v4672 = vpop.f32.mrf.mxu0
      %v4673 = vadd.f32 0.0, %v4672
      %v4674 = vpop.f32.mrf.mxu0
      %4675 = vmatprep.mubr.bf16.mxu0 0
      %4676 = vmatmul.mubr.bf16.gmra.mxu0 %v4373
      %v4677 = vpop.f32.mrf.mxu0
      %v4678 = vadd.f32 0.0, %v4677
      %v4679 = vpop.f32.mrf.mxu0
      %v4680 = vpop.f32.mrf.mxu0
      %v4681 = vadd.f32 0.0, %v4680
      %v4682 = vpop.f32.mrf.mxu0
      %4683 = vmatprep.mubr.bf16.mxu0 0
      %4684 = vmatmul.mubr.bf16.gmra.mxu0 %v4381
      %v4685 = vpop.f32.mrf.mxu0
      %v4686 = vadd.f32 0.0, %v4685
      %v4687 = vpop.f32.mrf.mxu0
      %v4688 = vpop.f32.mrf.mxu0
      %v4689 = vadd.f32 0.0, %v4688
      %v4690 = vpop.f32.mrf.mxu0
      %4691 = vmatprep.mubr.bf16.mxu0 0
      %4692 = vmatmul.mubr.bf16.gmra.mxu0 %v4389
      %v4693 = vpop.f32.mrf.mxu0
      %v4694 = vadd.f32 0.0, %v4693
      %v4695 = vpop.f32.mrf.mxu0
      %v4696 = vpop.f32.mrf.mxu0
      %v4697 = vadd.f32 0.0, %v4696
      %v4698 = vpop.f32.mrf.mxu0
      %4699 = vmatprep.mubr.bf16.mxu0 0
      %4700 = vmatmul.mubr.bf16.gmra.mxu0 %v4397
      %v4701 = vpop.f32.mrf.mxu0
      %v4702 = vadd.f32 0.0, %v4701
      %v4703 = vpop.f32.mrf.mxu0
      %v4704 = vpop.f32.mrf.mxu0
      %v4705 = vadd.f32 0.0, %v4704
      %v4706 = vpop.f32.mrf.mxu0
      %4707 = vmatprep.mubr.bf16.mxu0 0
      %4708 = vmatmul.mubr.bf16.gmra.mxu0 %v4405
      %v4709 = vpop.f32.mrf.mxu0
      %v4710 = vadd.f32 0.0, %v4709
      %v4711 = vpop.f32.mrf.mxu0
      %v4712 = vpop.f32.mrf.mxu0
      %v4713 = vadd.f32 0.0, %v4712
      %v4714 = vpop.f32.mrf.mxu0
      %4715 = vmatprep.mubr.bf16.mxu0 0
      %4716 = vmatmul.mubr.bf16.gmra.mxu0 %v4413
      %v4717 = vpop.f32.mrf.mxu0
      %v4718 = vadd.f32 0.0, %v4717
      %v4719 = vpop.f32.mrf.mxu0
      %v4720 = vpop.f32.mrf.mxu0
      %v4721 = vadd.f32 0.0, %v4720
      %v4722 = vpop.f32.mrf.mxu0
      %4723 = vmatprep.mubr.bf16.mxu0 0
      %4724 = vmatmul.mubr.bf16.gmra.mxu0 %v4421
      %v4725 = vpop.f32.mrf.mxu0
      %v4726 = vadd.f32 0.0, %v4725
      %v4727 = vpop.f32.mrf.mxu0
      %v4728 = vpop.f32.mrf.mxu0
      %v4729 = vadd.f32 0.0, %v4728
      %v4730 = vpop.f32.mrf.mxu0
      %4731 = vmatprep.mubr.bf16.mxu0 0
      %4732 = vmatmul.mubr.bf16.gmra.mxu0 %v4429
      %v4733 = vpop.f32.mrf.mxu0
      %v4734 = vadd.f32 0.0, %v4733
      %v4735 = vpop.f32.mrf.mxu0
      %v4736 = vpop.f32.mrf.mxu0
      %v4737 = vadd.f32 0.0, %v4736
      %v4738 = vpop.f32.mrf.mxu0
      %4739 = vmatprep.mubr.bf16.mxu0 0
      %4740 = vmatmul.mubr.bf16.gmra.mxu0 %v4437
      %v4741 = vpop.f32.mrf.mxu0
      %v4742 = vadd.f32 0.0, %v4741
      %v4743 = vpop.f32.mrf.mxu0
      %v4744 = vpop.f32.mrf.mxu0
      %v4745 = vadd.f32 0.0, %v4744
      %v4746 = vpop.f32.mrf.mxu0
      %4747 = vmatprep.mubr.bf16.mxu0 0
      %4748 = vmatmul.mubr.bf16.gmra.mxu0 %v4445
      %v4749 = vpop.f32.mrf.mxu0
      %v4750 = vadd.f32 0.0, %v4749
      %v4751 = vpop.f32.mrf.mxu0
      %v4752 = vpop.f32.mrf.mxu0
      %v4753 = vadd.f32 0.0, %v4752
      %v4754 = vpop.f32.mrf.mxu0
      %4755 = vmatprep.mubr.bf16.mxu0 0
      %4756 = vmatmul.mubr.bf16.gmra.mxu0 %v4453
      %v4757 = vpop.f32.mrf.mxu0
      %v4758 = vadd.f32 0.0, %v4757
      %v4759 = vpop.f32.mrf.mxu0
      %v4760 = vpop.f32.mrf.mxu0
      %v4761 = vadd.f32 0.0, %v4760
      %v4762 = vpop.f32.mrf.mxu0
      %4763 = vmatprep.mubr.bf16.mxu0 0
      %4764 = vmatmul.mubr.bf16.gmra.mxu0 %v4461
      %v4765 = vpop.f32.mrf.mxu0
      %v4766 = vadd.f32 0.0, %v4765
      %v4767 = vpop.f32.mrf.mxu0
      %v4768 = vpop.f32.mrf.mxu0
      %v4769 = vadd.f32 0.0, %v4768
      %v4770 = vpop.f32.mrf.mxu0
      %4771 = vmatprep.mubr.bf16.mxu0 0
      %4772 = vmatmul.mubr.bf16.gmra.mxu0 %v4469
      %v4773 = vpop.f32.mrf.mxu0
      %v4774 = vadd.f32 0.0, %v4773
      %v4775 = vpop.f32.mrf.mxu0
      %v4776 = vpop.f32.mrf.mxu0
      %v4777 = vadd.f32 0.0, %v4776
      %v4778 = vpop.f32.mrf.mxu0
      %4779 = vmatprep.mubr.bf16.mxu0 0
      %4780 = vmatmul.mubr.bf16.gmra.mxu0 %v4477
      %v4781 = vpop.f32.mrf.mxu0
      %v4782 = vadd.f32 0.0, %v4781
      %v4783 = vpop.f32.mrf.mxu0
      %v4784 = vpop.f32.mrf.mxu0
      %v4785 = vadd.f32 0.0, %v4784
      %v4786 = vpop.f32.mrf.mxu0
      %4787 = vmatprep.mubr.bf16.mxu0 0
      %4788 = vmatmul.mubr.bf16.gmra.mxu0 %v4485
      %v4789 = vpop.f32.mrf.mxu0
      %v4790 = vadd.f32 0.0, %v4789
      %v4791 = vpop.f32.mrf.mxu0
      %v4792 = vpop.f32.mrf.mxu0
      %v4793 = vadd.f32 0.0, %v4792
      %v4794 = vpop.f32.mrf.mxu0
      %4795 = vmatprep.mubr.bf16.mxu0 0
      %4796 = vmatmul.mubr.bf16.gmra.mxu0 %v4493
      %v4797 = vpop.f32.mrf.mxu0
      %v4798 = vadd.f32 0.0, %v4797
      %v4799 = vpop.f32.mrf.mxu0
      %v4800 = vpop.f32.mrf.mxu0
      %v4801 = vadd.f32 0.0, %v4800
      %v4802 = vpop.f32.mrf.mxu0
      %4803 = vmatprep.mubr.bf16.mxu0 0
      %4804 = vmatmul.mubr.bf16.gmra.mxu0 %v4501
      %v4805 = vpop.f32.mrf.mxu0
      %v4806 = vadd.f32 0.0, %v4805
      %v4807 = vpop.f32.mrf.mxu0
      %v4808 = vpop.f32.mrf.mxu0
      %v4809 = vadd.f32 0.0, %v4808
      %v4810 = vpop.f32.mrf.mxu0
      %4811 = vmatprep.mubr.bf16.mxu0 0
      %4812 = vmatmul.mubr.bf16.gmra.mxu0 %v4509
      %v4813 = vpop.f32.mrf.mxu0
      %v4814 = vadd.f32 0.0, %v4813
      %v4815 = vpop.f32.mrf.mxu0
      %v4816 = vpop.f32.mrf.mxu0
      %v4817 = vadd.f32 0.0, %v4816
      %v4818 = vpop.f32.mrf.mxu0
      %4819 = vmatprep.mubr.bf16.mxu0 0
      %4820 = vmatmul.mubr.bf16.gmra.mxu0 %v4512
      %v4821 = vpop.f32.mrf.mxu0
      %v4822 = vadd.f32 0.0, %v4821
      %v4823 = vpop.f32.mrf.mxu0
      %v4824 = vpop.f32.mrf.mxu0
      %v4825 = vpop.f32.mrf.mxu0
      %4826 = vdwg.mxu0
      %v4827 = vadd.f32 %v4056, %v4622
      %v4828 = vadd.f32 %v4057, %v4625
      %v4829 = vadd.f32 %v4058, %v4630
      %v4830 = vadd.f32 %v4059, %v4633
      %v4831 = vadd.f32 %v4060, %v4638
      %v4832 = vadd.f32 %v4061, %v4641
      %v4833 = vadd.f32 %v4062, %v4646
      %v4834 = vadd.f32 %v4063, %v4649
      %v4835 = vadd.f32 %v4064, %v4654
      %v4836 = vadd.f32 %v4065, %v4657
      %v4837 = vadd.f32 %v4066, %v4662
      %v4838 = vadd.f32 %v4067, %v4665
      %v4839 = vadd.f32 %v4068, %v4670
      %v4840 = vadd.f32 %v4069, %v4673
      %v4841 = vadd.f32 %v4070, %v4678
      %v4842 = vadd.f32 %v4071, %v4681
      %v4843 = vadd.f32 %v4072, %v4686
      %v4844 = vadd.f32 %v4073, %v4689
      %v4845 = vadd.f32 %v4074, %v4694
      %v4846 = vadd.f32 %v4075, %v4697
      %v4847 = vadd.f32 %v4076, %v4702
      %v4848 = vadd.f32 %v4077, %v4705
      %v4849 = vadd.f32 %v4078, %v4710
      %v4850 = vadd.f32 %v4079, %v4713
      %v4851 = vadd.f32 %v4080, %v4718
      %v4852 = vadd.f32 %v4081, %v4721
      %v4853 = vadd.f32 %v4082, %v4726
      %v4854 = vadd.f32 %v4083, %v4729
      %v4855 = vadd.f32 %v4084, %v4734
      %v4856 = vadd.f32 %v4085, %v4737
      %v4857 = vadd.f32 %v4086, %v4742
      %v4858 = vadd.f32 %v4087, %v4745
      %v4859 = vadd.f32 %v4088, %v4750
      %v4860 = vadd.f32 %v4089, %v4753
      %v4861 = vadd.f32 %v4090, %v4758
      %v4862 = vadd.f32 %v4091, %v4761
      %v4863 = vadd.f32 %v4092, %v4766
      %v4864 = vadd.f32 %v4093, %v4769
      %v4865 = vadd.f32 %v4094, %v4774
      %v4866 = vadd.f32 %v4095, %v4777
      %v4867 = vadd.f32 %v4096, %v4782
      %v4868 = vadd.f32 %v4097, %v4785
      %v4869 = vadd.f32 %v4098, %v4790
      %v4870 = vadd.f32 %v4099, %v4793
      %v4871 = vadd.f32 %v4100, %v4798
      %v4872 = vadd.f32 %v4101, %v4801
      %v4873 = vadd.f32 %v4102, %v4806
      %v4874 = vadd.f32 %v4103, %v4809
      %v4875 = vadd.f32 %v4104, %v4814
      %v4876 = vadd.f32 %v4105, %v4817
      %v4877 = vadd.f32 %v4106, %v4822
      %v4878 = vld [vmem:[%s272 + $0x18] sm:$0xe]
      %s4879 = scalar_lea.vmem %s1, 512
      %v4880 = vld [vmem:[%s4879] sm:$0xf]
      %v4881 = vld [vmem:[%s4879 + $0x4] sm:$0xf]
      %v4882 = vld [vmem:[%s4879 + $0x8] sm:$0xf]
      %v4883 = vld [vmem:[%s4879 + $0xc] sm:$0xf]
      %v4884 = vld [vmem:[%s4879 + $0x10] sm:$0xf]
      %v4885 = vld [vmem:[%s4879 + $0x14] sm:$0xf]
      %v4886 = vld [vmem:[%s4879 + $0x18] sm:$0xf]
      %v4887 = vld [vmem:[%s4879 + $0x1c] sm:$0xf]
      %v4888 = vld [vmem:[%s4879 + $0x20] sm:$0xf]
      %v4889 = vld [vmem:[%s4879 + $0x24] sm:$0xf]
      %v4890 = vld [vmem:[%s4879 + $0x28] sm:$0xf]
      %v4891 = vld [vmem:[%s4879 + $0x2c] sm:$0xf]
      %v4892 = vld [vmem:[%s4879 + $0x30] sm:$0xf]
      %v4893 = vld [vmem:[%s4879 + $0x34] sm:$0xf]
      %v4894 = vld [vmem:[%s4879 + $0x38] sm:$0xf]
      %v4895 = vld [vmem:[%s4879 + $0x3c] sm:$0xf]
      %v4897 = vunpack.c.l.b16 %v4878
      %v4898 = vpack.c.b16 %v4229, %v4897
      %v4899 = vrot.slane %v4898, 1
      %v4900 = vrot.slane %v4281, 1
      %v4901 = vsel %vm1360, %v4899, %v4900
      %v4902 = vrot.slane %v4282, 1
      %v4903 = vsel %vm1360, %v4900, %v4902
      %v4904 = vrot.slane %v4283, 1
      %v4905 = vsel %vm1360, %v4902, %v4904
      %v4906 = vrot.slane %v4284, 1
      %v4907 = vsel %vm1360, %v4904, %v4906
      %v4908 = vrot.slane %v4285, 1
      %v4909 = vsel %vm1360, %v4906, %v4908
      %v4910 = vrot.slane %v4286, 1
      %v4911 = vsel %vm1360, %v4908, %v4910
      %v4912 = vrot.slane %v4287, 1
      %v4913 = vsel %vm1360, %v4910, %v4912
      %v4914 = vrot.slane %v4288, 1
      %v4915 = vsel %vm1360, %v4912, %v4914
      %v4916 = vrot.slane %v4289, 1
      %v4917 = vsel %vm1360, %v4914, %v4916
      %v4918 = vrot.slane %v4290, 1
      %v4919 = vsel %vm1360, %v4916, %v4918
      %v4920 = vrot.slane %v4291, 1
      %v4921 = vsel %vm1360, %v4918, %v4920
      %v4922 = vrot.slane %v4292, 1
      %v4923 = vsel %vm1360, %v4920, %v4922
      %v4924 = vrot.slane %v4293, 1
      %v4925 = vsel %vm1360, %v4922, %v4924
      %v4926 = vrot.slane %v4294, 1
      %v4927 = vsel %vm1360, %v4924, %v4926
      %v4928 = vrot.slane %v4295, 1
      %v4929 = vsel %vm1360, %v4926, %v4928
      %v4930 = vrot.slane %v4296, 1
      %v4931 = vsel %vm1360, %v4928, %v4930
      %v4932 = vrot.slane %v4297, 1
      %v4933 = vsel %vm1360, %v4930, %v4932
      %v4934 = vrot.slane %v4298, 1
      %v4935 = vsel %vm1360, %v4932, %v4934
      %v4936 = vrot.slane %v4299, 1
      %v4937 = vsel %vm1360, %v4934, %v4936
      %v4938 = vrot.slane %v4300, 1
      %v4939 = vsel %vm1360, %v4936, %v4938
      %v4940 = vrot.slane %v4301, 1
      %v4941 = vsel %vm1360, %v4938, %v4940
      %v4942 = vrot.slane %v4302, 1
      %v4943 = vsel %vm1360, %v4940, %v4942
      %v4944 = vrot.slane %v4303, 1
      %v4945 = vsel %vm1360, %v4942, %v4944
      %v4946 = vrot.slane %v4304, 1
      %v4947 = vsel %vm1360, %v4944, %v4946
      %v4948 = vrot.slane %v4305, 1
      %v4949 = vsel %vm1360, %v4946, %v4948
      %v4992 = vunpack.c.l.b16 %v4880
      %v4993 = vunpack.c.l.b16 %v4881
      %v4994 = vunpack.c.l.b16 %v4882
      %v4995 = vunpack.c.l.b16 %v4883
      %v4996 = vunpack.c.l.b16 %v4884
      %v4997 = vunpack.c.l.b16 %v4885
      %v4998 = vunpack.c.l.b16 %v4886
      %v4999 = vunpack.c.l.b16 %v4887
      %v5000 = vunpack.c.l.b16 %v4888
      %v5001 = vunpack.c.l.b16 %v4889
      %v5002 = vunpack.c.l.b16 %v4890
      %v5003 = vunpack.c.l.b16 %v4891
      %v5004 = vunpack.c.l.b16 %v4892
      %v5005 = vunpack.c.l.b16 %v4893
      %v5006 = vunpack.c.l.b16 %v4894
      %v5007 = vunpack.c.l.b16 %v4895
      %v5008 = vpack.c.b16 %v4993, %v4992
      %v5009 = vpack.c.b16 %v4995, %v4994
      %v5010 = vpack.c.b16 %v4997, %v4996
      %v5011 = vpack.c.b16 %v4999, %v4998
      %v5012 = vpack.c.b16 %v5001, %v5000
      %v5013 = vpack.c.b16 %v5003, %v5002
      %v5014 = vpack.c.b16 %v5005, %v5004
      %v5015 = vpack.c.b16 %v5007, %v5006
      %5024 = vmatprep.subr.bf16.mxu0 0
      %5025 = vmatpush1.bf16.msra.mxu0 %v5015
      %5026 = vmatprep.subr.bf16.mxu0 0
      %5027 = vmatpush1.bf16.msra.mxu0 %v5014
      %5028 = vmatprep.subr.bf16.mxu0 0
      %5029 = vmatpush1.bf16.msra.mxu0 %v5013
      %5030 = vmatprep.subr.bf16.mxu0 0
      %5031 = vmatpush1.bf16.msra.mxu0 %v5012
      %5032 = vmatprep.subr.bf16.mxu0 0
      %5033 = vmatpush1.bf16.msra.mxu0 %v5011
      %5034 = vmatprep.subr.bf16.mxu0 0
      %5035 = vmatpush1.bf16.msra.mxu0 %v5010
      %5036 = vmatprep.subr.bf16.mxu0 0
      %5037 = vmatpush1.bf16.msra.mxu0 %v5009
      %5038 = vmatprep.subr.bf16.mxu0 0
      %5039 = vmatpush1.bf16.msra.mxu0 %v5008
      %5040 = vmatprep.subr.bf16.mxu0 0
      %5041 = vmatpush2.bf16.msra.mxu0 0
      %5042 = vmatprep.subr.bf16.mxu0 0
      %5043 = vmatpush2.bf16.msra.mxu0 0
      %5044 = vmatprep.subr.bf16.mxu0 0
      %5045 = vmatpush2.bf16.msra.mxu0 0
      %5046 = vmatprep.subr.bf16.mxu0 0
      %5047 = vmatpush2.bf16.msra.mxu0 0
      %5048 = vmatprep.subr.bf16.mxu0 0
      %5049 = vmatpush2.bf16.msra.mxu0 0
      %5050 = vmatprep.subr.bf16.mxu0 0
      %5051 = vmatpush2.bf16.msra.mxu0 0
      %5052 = vmatprep.subr.bf16.mxu0 0
      %5053 = vmatpush2.bf16.msra.mxu0 0
      %5054 = vmatprep.subr.bf16.mxu0 0
      %5055 = vmatpush2.bf16.msra.mxu0 0
      %5056 = vmatprep.mubr.bf16.mxu0 0
      %5057 = vmatmul.mubr.bf16.gmra.mxu0 %v4901
      %v5058 = vpop.f32.mrf.mxu0
      %v5059 = vadd.f32 0.0, %v5058
      %v5060 = vpop.f32.mrf.mxu0
      %v5061 = vpop.f32.mrf.mxu0
      %v5062 = vadd.f32 0.0, %v5061
      %v5063 = vpop.f32.mrf.mxu0
      %5064 = vmatprep.mubr.bf16.mxu0 0
      %5065 = vmatmul.mubr.bf16.gmra.mxu0 %v4903
      %v5066 = vpop.f32.mrf.mxu0
      %v5067 = vadd.f32 0.0, %v5066
      %v5068 = vpop.f32.mrf.mxu0
      %v5069 = vpop.f32.mrf.mxu0
      %v5070 = vadd.f32 0.0, %v5069
      %v5071 = vpop.f32.mrf.mxu0
      %5072 = vmatprep.mubr.bf16.mxu0 0
      %5073 = vmatmul.mubr.bf16.gmra.mxu0 %v4905
      %v5074 = vpop.f32.mrf.mxu0
      %v5075 = vadd.f32 0.0, %v5074
      %v5076 = vpop.f32.mrf.mxu0
      %v5077 = vpop.f32.mrf.mxu0
      %v5078 = vadd.f32 0.0, %v5077
      %v5079 = vpop.f32.mrf.mxu0
      %5080 = vmatprep.mubr.bf16.mxu0 0
      %5081 = vmatmul.mubr.bf16.gmra.mxu0 %v4907
      %v5082 = vpop.f32.mrf.mxu0
      %v5083 = vadd.f32 0.0, %v5082
      %v5084 = vpop.f32.mrf.mxu0
      %v5085 = vpop.f32.mrf.mxu0
      %v5086 = vadd.f32 0.0, %v5085
      %v5087 = vpop.f32.mrf.mxu0
      %5088 = vmatprep.mubr.bf16.mxu0 0
      %5089 = vmatmul.mubr.bf16.gmra.mxu0 %v4909
      %v5090 = vpop.f32.mrf.mxu0
      %v5091 = vadd.f32 0.0, %v5090
      %v5092 = vpop.f32.mrf.mxu0
      %v5093 = vpop.f32.mrf.mxu0
      %v5094 = vadd.f32 0.0, %v5093
      %v5095 = vpop.f32.mrf.mxu0
      %5096 = vmatprep.mubr.bf16.mxu0 0
      %5097 = vmatmul.mubr.bf16.gmra.mxu0 %v4911
      %v5098 = vpop.f32.mrf.mxu0
      %v5099 = vadd.f32 0.0, %v5098
      %v5100 = vpop.f32.mrf.mxu0
      %v5101 = vpop.f32.mrf.mxu0
      %v5102 = vadd.f32 0.0, %v5101
      %v5103 = vpop.f32.mrf.mxu0
      %5104 = vmatprep.mubr.bf16.mxu0 0
      %5105 = vmatmul.mubr.bf16.gmra.mxu0 %v4913
      %v5106 = vpop.f32.mrf.mxu0
      %v5107 = vadd.f32 0.0, %v5106
      %v5108 = vpop.f32.mrf.mxu0
      %v5109 = vpop.f32.mrf.mxu0
      %v5110 = vadd.f32 0.0, %v5109
      %v5111 = vpop.f32.mrf.mxu0
      %5112 = vmatprep.mubr.bf16.mxu0 0
      %5113 = vmatmul.mubr.bf16.gmra.mxu0 %v4915
      %v5114 = vpop.f32.mrf.mxu0
      %v5115 = vadd.f32 0.0, %v5114
      %v5116 = vpop.f32.mrf.mxu0
      %v5117 = vpop.f32.mrf.mxu0
      %v5118 = vadd.f32 0.0, %v5117
      %v5119 = vpop.f32.mrf.mxu0
      %5120 = vmatprep.mubr.bf16.mxu0 0
      %5121 = vmatmul.mubr.bf16.gmra.mxu0 %v4917
      %v5122 = vpop.f32.mrf.mxu0
      %v5123 = vadd.f32 0.0, %v5122
      %v5124 = vpop.f32.mrf.mxu0
      %v5125 = vpop.f32.mrf.mxu0
      %v5126 = vadd.f32 0.0, %v5125
      %v5127 = vpop.f32.mrf.mxu0
      %5128 = vmatprep.mubr.bf16.mxu0 0
      %5129 = vmatmul.mubr.bf16.gmra.mxu0 %v4919
      %v5130 = vpop.f32.mrf.mxu0
      %v5131 = vadd.f32 0.0, %v5130
      %v5132 = vpop.f32.mrf.mxu0
      %v5133 = vpop.f32.mrf.mxu0
      %v5134 = vadd.f32 0.0, %v5133
      %v5135 = vpop.f32.mrf.mxu0
      %5136 = vmatprep.mubr.bf16.mxu0 0
      %5137 = vmatmul.mubr.bf16.gmra.mxu0 %v4921
      %v5138 = vpop.f32.mrf.mxu0
      %v5139 = vadd.f32 0.0, %v5138
      %v5140 = vpop.f32.mrf.mxu0
      %v5141 = vpop.f32.mrf.mxu0
      %v5142 = vadd.f32 0.0, %v5141
      %v5143 = vpop.f32.mrf.mxu0
      %5144 = vmatprep.mubr.bf16.mxu0 0
      %5145 = vmatmul.mubr.bf16.gmra.mxu0 %v4923
      %v5146 = vpop.f32.mrf.mxu0
      %v5147 = vadd.f32 0.0, %v5146
      %v5148 = vpop.f32.mrf.mxu0
      %v5149 = vpop.f32.mrf.mxu0
      %v5150 = vadd.f32 0.0, %v5149
      %v5151 = vpop.f32.mrf.mxu0
      %5152 = vmatprep.mubr.bf16.mxu0 0
      %5153 = vmatmul.mubr.bf16.gmra.mxu0 %v4925
      %v5154 = vpop.f32.mrf.mxu0
      %v5155 = vadd.f32 0.0, %v5154
      %v5156 = vpop.f32.mrf.mxu0
      %v5157 = vpop.f32.mrf.mxu0
      %v5158 = vadd.f32 0.0, %v5157
      %v5159 = vpop.f32.mrf.mxu0
      %5160 = vmatprep.mubr.bf16.mxu0 0
      %5161 = vmatmul.mubr.bf16.gmra.mxu0 %v4927
      %v5162 = vpop.f32.mrf.mxu0
      %v5163 = vadd.f32 0.0, %v5162
      %v5164 = vpop.f32.mrf.mxu0
      %v5165 = vpop.f32.mrf.mxu0
      %v5166 = vadd.f32 0.0, %v5165
      %v5167 = vpop.f32.mrf.mxu0
      %5168 = vmatprep.mubr.bf16.mxu0 0
      %5169 = vmatmul.mubr.bf16.gmra.mxu0 %v4929
      %v5170 = vpop.f32.mrf.mxu0
      %v5171 = vadd.f32 0.0, %v5170
      %v5172 = vpop.f32.mrf.mxu0
      %v5173 = vpop.f32.mrf.mxu0
      %v5174 = vadd.f32 0.0, %v5173
      %v5175 = vpop.f32.mrf.mxu0
      %5176 = vmatprep.mubr.bf16.mxu0 0
      %5177 = vmatmul.mubr.bf16.gmra.mxu0 %v4931
      %v5178 = vpop.f32.mrf.mxu0
      %v5179 = vadd.f32 0.0, %v5178
      %v5180 = vpop.f32.mrf.mxu0
      %v5181 = vpop.f32.mrf.mxu0
      %v5182 = vadd.f32 0.0, %v5181
      %v5183 = vpop.f32.mrf.mxu0
      %5184 = vmatprep.mubr.bf16.mxu0 0
      %5185 = vmatmul.mubr.bf16.gmra.mxu0 %v4933
      %v5186 = vpop.f32.mrf.mxu0
      %v5187 = vadd.f32 0.0, %v5186
      %v5188 = vpop.f32.mrf.mxu0
      %v5189 = vpop.f32.mrf.mxu0
      %v5190 = vadd.f32 0.0, %v5189
      %v5191 = vpop.f32.mrf.mxu0
      %5192 = vmatprep.mubr.bf16.mxu0 0
      %5193 = vmatmul.mubr.bf16.gmra.mxu0 %v4935
      %v5194 = vpop.f32.mrf.mxu0
      %v5195 = vadd.f32 0.0, %v5194
      %v5196 = vpop.f32.mrf.mxu0
      %v5197 = vpop.f32.mrf.mxu0
      %v5198 = vadd.f32 0.0, %v5197
      %v5199 = vpop.f32.mrf.mxu0
      %5200 = vmatprep.mubr.bf16.mxu0 0
      %5201 = vmatmul.mubr.bf16.gmra.mxu0 %v4937
      %v5202 = vpop.f32.mrf.mxu0
      %v5203 = vadd.f32 0.0, %v5202
      %v5204 = vpop.f32.mrf.mxu0
      %v5205 = vpop.f32.mrf.mxu0
      %v5206 = vadd.f32 0.0, %v5205
      %v5207 = vpop.f32.mrf.mxu0
      %5208 = vmatprep.mubr.bf16.mxu0 0
      %5209 = vmatmul.mubr.bf16.gmra.mxu0 %v4939
      %v5210 = vpop.f32.mrf.mxu0
      %v5211 = vadd.f32 0.0, %v5210
      %v5212 = vpop.f32.mrf.mxu0
      %v5213 = vpop.f32.mrf.mxu0
      %v5214 = vadd.f32 0.0, %v5213
      %v5215 = vpop.f32.mrf.mxu0
      %5216 = vmatprep.mubr.bf16.mxu0 0
      %5217 = vmatmul.mubr.bf16.gmra.mxu0 %v4941
      %v5218 = vpop.f32.mrf.mxu0
      %v5219 = vadd.f32 0.0, %v5218
      %v5220 = vpop.f32.mrf.mxu0
      %v5221 = vpop.f32.mrf.mxu0
      %v5222 = vadd.f32 0.0, %v5221
      %v5223 = vpop.f32.mrf.mxu0
      %5224 = vmatprep.mubr.bf16.mxu0 0
      %5225 = vmatmul.mubr.bf16.gmra.mxu0 %v4943
      %v5226 = vpop.f32.mrf.mxu0
      %v5227 = vadd.f32 0.0, %v5226
      %v5228 = vpop.f32.mrf.mxu0
      %v5229 = vpop.f32.mrf.mxu0
      %v5230 = vadd.f32 0.0, %v5229
      %v5231 = vpop.f32.mrf.mxu0
      %5232 = vmatprep.mubr.bf16.mxu0 0
      %5233 = vmatmul.mubr.bf16.gmra.mxu0 %v4945
      %v5234 = vpop.f32.mrf.mxu0
      %v5235 = vadd.f32 0.0, %v5234
      %v5236 = vpop.f32.mrf.mxu0
      %v5237 = vpop.f32.mrf.mxu0
      %v5238 = vadd.f32 0.0, %v5237
      %v5239 = vpop.f32.mrf.mxu0
      %5240 = vmatprep.mubr.bf16.mxu0 0
      %5241 = vmatmul.mubr.bf16.gmra.mxu0 %v4947
      %v5242 = vpop.f32.mrf.mxu0
      %v5243 = vadd.f32 0.0, %v5242
      %v5244 = vpop.f32.mrf.mxu0
      %v5245 = vpop.f32.mrf.mxu0
      %v5246 = vadd.f32 0.0, %v5245
      %v5247 = vpop.f32.mrf.mxu0
      %5248 = vmatprep.mubr.bf16.mxu0 0
      %5249 = vmatmul.mubr.bf16.gmra.mxu0 %v4949
      %v5250 = vpop.f32.mrf.mxu0
      %v5251 = vadd.f32 0.0, %v5250
      %v5252 = vpop.f32.mrf.mxu0
      %v5253 = vpop.f32.mrf.mxu0
      %v5254 = vadd.f32 0.0, %v5253
      %v5255 = vpop.f32.mrf.mxu0
      %5256 = vmatprep.mubr.bf16.mxu0 0
      %5257 = vmatmul.mubr.bf16.gmra.mxu0 %v4948
      %v5258 = vpop.f32.mrf.mxu0
      %v5259 = vadd.f32 0.0, %v5258
      %v5260 = vpop.f32.mrf.mxu0
      %v5261 = vpop.f32.mrf.mxu0
      %v5262 = vpop.f32.mrf.mxu0
      %5263 = vdwg.mxu0
      %v5264 = vadd.f32 %v4827, %v5059
      %v5265 = vadd.f32 %v4828, %v5062
      %v5266 = vadd.f32 %v4829, %v5067
      %v5267 = vadd.f32 %v4830, %v5070
      %v5268 = vadd.f32 %v4831, %v5075
      %v5269 = vadd.f32 %v4832, %v5078
      %v5270 = vadd.f32 %v4833, %v5083
      %v5271 = vadd.f32 %v4834, %v5086
      %v5272 = vadd.f32 %v4835, %v5091
      %v5273 = vadd.f32 %v4836, %v5094
      %v5274 = vadd.f32 %v4837, %v5099
      %v5275 = vadd.f32 %v4838, %v5102
      %v5276 = vadd.f32 %v4839, %v5107
      %v5277 = vadd.f32 %v4840, %v5110
      %v5278 = vadd.f32 %v4841, %v5115
      %v5279 = vadd.f32 %v4842, %v5118
      %v5280 = vadd.f32 %v4843, %v5123
      %v5281 = vadd.f32 %v4844, %v5126
      %v5282 = vadd.f32 %v4845, %v5131
      %v5283 = vadd.f32 %v4846, %v5134
      %v5284 = vadd.f32 %v4847, %v5139
      %v5285 = vadd.f32 %v4848, %v5142
      %v5286 = vadd.f32 %v4849, %v5147
      %v5287 = vadd.f32 %v4850, %v5150
      %v5288 = vadd.f32 %v4851, %v5155
      %v5289 = vadd.f32 %v4852, %v5158
      %v5290 = vadd.f32 %v4853, %v5163
      %v5291 = vadd.f32 %v4854, %v5166
      %v5292 = vadd.f32 %v4855, %v5171
      %v5293 = vadd.f32 %v4856, %v5174
      %v5294 = vadd.f32 %v4857, %v5179
      %v5295 = vadd.f32 %v4858, %v5182
      %v5296 = vadd.f32 %v4859, %v5187
      %v5297 = vadd.f32 %v4860, %v5190
      %v5298 = vadd.f32 %v4861, %v5195
      %v5299 = vadd.f32 %v4862, %v5198
      %v5300 = vadd.f32 %v4863, %v5203
      %v5301 = vadd.f32 %v4864, %v5206
      %v5302 = vadd.f32 %v4865, %v5211
      %v5303 = vadd.f32 %v4866, %v5214
      %v5304 = vadd.f32 %v4867, %v5219
      %v5305 = vadd.f32 %v4868, %v5222
      %v5306 = vadd.f32 %v4869, %v5227
      %v5307 = vadd.f32 %v4870, %v5230
      %v5308 = vadd.f32 %v4871, %v5235
      %v5309 = vadd.f32 %v4872, %v5238
      %v5310 = vadd.f32 %v4873, %v5243
      %v5311 = vadd.f32 %v4874, %v5246
      %v5312 = vadd.f32 %v4875, %v5251
      %v5313 = vadd.f32 %v4876, %v5254
      %v5314 = vadd.f32 %v4877, %v5259
      %v5315 = vld [vmem:[%s2] sm:$0x1]
      %v5317 = vlaneseq
      %v5318 = vshrl.u32 %v5317, 7
      %v5319 = vsub.s32 0, %v5318
      %v5320 = vrot.slane %v5315, %v5319
      %v5322 = vadd.f32 %v5264, %v5320
      %v5323 = vadd.f32 %v5265, %v5320
      %v5324 = vadd.f32 %v5266, %v5320
      %v5325 = vadd.f32 %v5267, %v5320
      %v5326 = vadd.f32 %v5268, %v5320
      %v5327 = vadd.f32 %v5269, %v5320
      %v5328 = vadd.f32 %v5270, %v5320
      %v5329 = vadd.f32 %v5271, %v5320
      %v5330 = vadd.f32 %v5272, %v5320
      %v5331 = vadd.f32 %v5273, %v5320
      %v5332 = vadd.f32 %v5274, %v5320
      %v5333 = vadd.f32 %v5275, %v5320
      %v5334 = vadd.f32 %v5276, %v5320
      %v5335 = vadd.f32 %v5277, %v5320
      %v5336 = vadd.f32 %v5278, %v5320
      %v5337 = vadd.f32 %v5279, %v5320
      %v5338 = vadd.f32 %v5280, %v5320
      %v5339 = vadd.f32 %v5281, %v5320
      %v5340 = vadd.f32 %v5282, %v5320
      %v5341 = vadd.f32 %v5283, %v5320
      %v5342 = vadd.f32 %v5284, %v5320
      %v5343 = vadd.f32 %v5285, %v5320
      %v5344 = vadd.f32 %v5286, %v5320
      %v5345 = vadd.f32 %v5287, %v5320
      %v5346 = vadd.f32 %v5288, %v5320
      %v5347 = vadd.f32 %v5289, %v5320
      %v5348 = vadd.f32 %v5290, %v5320
      %v5349 = vadd.f32 %v5291, %v5320
      %v5350 = vadd.f32 %v5292, %v5320
      %v5351 = vadd.f32 %v5293, %v5320
      %v5352 = vadd.f32 %v5294, %v5320
      %v5353 = vadd.f32 %v5295, %v5320
      %v5354 = vadd.f32 %v5296, %v5320
      %v5355 = vadd.f32 %v5297, %v5320
      %v5356 = vadd.f32 %v5298, %v5320
      %v5357 = vadd.f32 %v5299, %v5320
      %v5358 = vadd.f32 %v5300, %v5320
      %v5359 = vadd.f32 %v5301, %v5320
      %v5360 = vadd.f32 %v5302, %v5320
      %v5361 = vadd.f32 %v5303, %v5320
      %v5362 = vadd.f32 %v5304, %v5320
      %v5363 = vadd.f32 %v5305, %v5320
      %v5364 = vadd.f32 %v5306, %v5320
      %v5365 = vadd.f32 %v5307, %v5320
      %v5366 = vadd.f32 %v5308, %v5320
      %v5367 = vadd.f32 %v5309, %v5320
      %v5368 = vadd.f32 %v5310, %v5320
      %v5369 = vadd.f32 %v5311, %v5320
      %v5370 = vadd.f32 %v5312, %v5320
      %v5371 = vadd.f32 %v5313, %v5320
      %v5372 = vadd.f32 %v5314, %v5320
      %v5373 = vmax.f32 %v5322, 0.0
      %v5374 = vmax.f32 %v5323, 0.0
      %v5375 = vmax.f32 %v5324, 0.0
      %v5376 = vmax.f32 %v5325, 0.0
      %v5377 = vmax.f32 %v5326, 0.0
      %v5378 = vmax.f32 %v5327, 0.0
      %v5379 = vmax.f32 %v5328, 0.0
      %v5380 = vmax.f32 %v5329, 0.0
      %v5381 = vmax.f32 %v5330, 0.0
      %v5382 = vmax.f32 %v5331, 0.0
      %v5383 = vmax.f32 %v5332, 0.0
      %v5384 = vmax.f32 %v5333, 0.0
      %v5385 = vmax.f32 %v5334, 0.0
      %v5386 = vmax.f32 %v5335, 0.0
      %v5387 = vmax.f32 %v5336, 0.0
      %v5388 = vmax.f32 %v5337, 0.0
      %v5389 = vmax.f32 %v5338, 0.0
      %v5390 = vmax.f32 %v5339, 0.0
      %v5391 = vmax.f32 %v5340, 0.0
      %v5392 = vmax.f32 %v5341, 0.0
      %v5393 = vmax.f32 %v5342, 0.0
      %v5394 = vmax.f32 %v5343, 0.0
      %v5395 = vmax.f32 %v5344, 0.0
      %v5396 = vmax.f32 %v5345, 0.0
      %v5397 = vmax.f32 %v5346, 0.0
      %v5398 = vmax.f32 %v5347, 0.0
      %v5399 = vmax.f32 %v5348, 0.0
      %v5400 = vmax.f32 %v5349, 0.0
      %v5401 = vmax.f32 %v5350, 0.0
      %v5402 = vmax.f32 %v5351, 0.0
      %v5403 = vmax.f32 %v5352, 0.0
      %v5404 = vmax.f32 %v5353, 0.0
      %v5405 = vmax.f32 %v5354, 0.0
      %v5406 = vmax.f32 %v5355, 0.0
      %v5407 = vmax.f32 %v5356, 0.0
      %v5408 = vmax.f32 %v5357, 0.0
      %v5409 = vmax.f32 %v5358, 0.0
      %v5410 = vmax.f32 %v5359, 0.0
      %v5411 = vmax.f32 %v5360, 0.0
      %v5412 = vmax.f32 %v5361, 0.0
      %v5413 = vmax.f32 %v5362, 0.0
      %v5414 = vmax.f32 %v5363, 0.0
      %v5415 = vmax.f32 %v5364, 0.0
      %v5416 = vmax.f32 %v5365, 0.0
      %v5417 = vmax.f32 %v5366, 0.0
      %v5418 = vmax.f32 %v5367, 0.0
      %v5419 = vmax.f32 %v5368, 0.0
      %v5420 = vmax.f32 %v5369, 0.0
      %v5421 = vmax.f32 %v5370, 0.0
      %v5422 = vmax.f32 %v5371, 0.0
      %v5423 = vmax.f32 %v5372, 0.0
      %v5424 = vld [vmem:[%s278] sm:$0xff]
      %v5425 = vld [vmem:[%s278 + $0x8] sm:$0xff]
      %v5426 = vld [vmem:[%s278 + $0x10] sm:$0xff]
      %v5427 = vld [vmem:[%s278 + $0x18] sm:$0xff]
      %v5428 = vld [vmem:[%s278 + $0x20] sm:$0xff]
      %v5429 = vld [vmem:[%s278 + $0x28] sm:$0xff]
      %v5430 = vld [vmem:[%s278 + $0x30] sm:$0xff]
      %v5431 = vld [vmem:[%s278 + $0x38] sm:$0xff]
      %v5432 = vld [vmem:[%s278 + $0x40] sm:$0xff]
      %v5433 = vld [vmem:[%s278 + $0x48] sm:$0xff]
      %v5434 = vld [vmem:[%s278 + $0x50] sm:$0xff]
      %v5435 = vld [vmem:[%s278 + $0x58] sm:$0xff]
      %v5436 = vld [vmem:[%s278 + $0x60] sm:$0xff]
      %v5437 = vld [vmem:[%s278 + $0x68] sm:$0xff]
      %v5438 = vld [vmem:[%s278 + $0x70] sm:$0xff]
      %v5439 = vld [vmem:[%s278 + $0x78] sm:$0xff]
      %v5440 = vld [vmem:[%s278 + $0x80] sm:$0xff]
      %v5441 = vld [vmem:[%s278 + $0x88] sm:$0xff]
      %v5442 = vld [vmem:[%s278 + $0x90] sm:$0xff]
      %v5443 = vld [vmem:[%s278 + $0x98] sm:$0xff]
      %v5444 = vld [vmem:[%s278 + $0xa0] sm:$0xff]
      %v5445 = vld [vmem:[%s278 + $0xa8] sm:$0xff]
      %v5446 = vld [vmem:[%s278 + $0xb0] sm:$0xff]
      %v5447 = vld [vmem:[%s278 + $0xb8] sm:$0xff]
      %v5448 = vld [vmem:[%s278 + $0xc0] sm:$0xff]
      %v5449 = vld [vmem:[%s278 + $0xc8] sm:$0xff]
      %v5450 = vld [vmem:[%s278 + $0xd0] sm:$0xff]
      %v5451 = vld [vmem:[%s278 + $0xd8] sm:$0xff]
      %v5452 = vld [vmem:[%s278 + $0xe0] sm:$0xff]
      %v5453 = vld [vmem:[%s278 + $0xe8] sm:$0xff]
      %v5454 = vld [vmem:[%s278 + $0xf0] sm:$0xff]
      %v5455 = vld [vmem:[%s278 + $0xf8] sm:$0xff]
      %v5456 = vld [vmem:[%s278 + $0x100] sm:$0xff]
      %v5457 = vld [vmem:[%s278 + $0x108] sm:$0xff]
      %v5458 = vld [vmem:[%s278 + $0x110] sm:$0xff]
      %v5459 = vld [vmem:[%s278 + $0x118] sm:$0xff]
      %v5460 = vld [vmem:[%s278 + $0x120] sm:$0xff]
      %v5461 = vld [vmem:[%s278 + $0x128] sm:$0xff]
      %v5462 = vld [vmem:[%s278 + $0x130] sm:$0xff]
      %v5463 = vld [vmem:[%s278 + $0x138] sm:$0xff]
      %v5464 = vld [vmem:[%s278 + $0x140] sm:$0xff]
      %v5465 = vld [vmem:[%s278 + $0x148] sm:$0xff]
      %v5466 = vld [vmem:[%s278 + $0x150] sm:$0xff]
      %v5467 = vld [vmem:[%s278 + $0x158] sm:$0xff]
      %v5468 = vld [vmem:[%s278 + $0x160] sm:$0xff]
      %v5469 = vld [vmem:[%s278 + $0x168] sm:$0xff]
      %v5470 = vld [vmem:[%s278 + $0x170] sm:$0xff]
      %v5471 = vld [vmem:[%s278 + $0x178] sm:$0xff]
      %v5472 = vld [vmem:[%s278 + $0x180] sm:$0xff]
      %v5473 = vld [vmem:[%s278 + $0x188] sm:$0xff]
      %v5474 = vld [vmem:[%s278 + $0x190] sm:$0xff]
      %v5475 = vsub.f32 %v5373, %v5424
      %v5476 = vsub.f32 %v5374, %v5425
      %v5477 = vsub.f32 %v5375, %v5426
      %v5478 = vsub.f32 %v5376, %v5427
      %v5479 = vsub.f32 %v5377, %v5428
      %v5480 = vsub.f32 %v5378, %v5429
      %v5481 = vsub.f32 %v5379, %v5430
      %v5482 = vsub.f32 %v5380, %v5431
      %v5483 = vsub.f32 %v5381, %v5432
      %v5484 = vsub.f32 %v5382, %v5433
      %v5485 = vsub.f32 %v5383, %v5434
      %v5486 = vsub.f32 %v5384, %v5435
      %v5487 = vsub.f32 %v5385, %v5436
      %v5488 = vsub.f32 %v5386, %v5437
      %v5489 = vsub.f32 %v5387, %v5438
      %v5490 = vsub.f32 %v5388, %v5439
      %v5491 = vsub.f32 %v5389, %v5440
      %v5492 = vsub.f32 %v5390, %v5441
      %v5493 = vsub.f32 %v5391, %v5442
      %v5494 = vsub.f32 %v5392, %v5443
      %v5495 = vsub.f32 %v5393, %v5444
      %v5496 = vsub.f32 %v5394, %v5445
      %v5497 = vsub.f32 %v5395, %v5446
      %v5498 = vsub.f32 %v5396, %v5447
      %v5499 = vsub.f32 %v5397, %v5448
      %v5500 = vsub.f32 %v5398, %v5449
      %v5501 = vsub.f32 %v5399, %v5450
      %v5502 = vsub.f32 %v5400, %v5451
      %v5503 = vsub.f32 %v5401, %v5452
      %v5504 = vsub.f32 %v5402, %v5453
      %v5505 = vsub.f32 %v5403, %v5454
      %v5506 = vsub.f32 %v5404, %v5455
      %v5507 = vsub.f32 %v5405, %v5456
      %v5508 = vsub.f32 %v5406, %v5457
      %v5509 = vsub.f32 %v5407, %v5458
      %v5510 = vsub.f32 %v5408, %v5459
      %v5511 = vsub.f32 %v5409, %v5460
      %v5512 = vsub.f32 %v5410, %v5461
      %v5513 = vsub.f32 %v5411, %v5462
      %v5514 = vsub.f32 %v5412, %v5463
      %v5515 = vsub.f32 %v5413, %v5464
      %v5516 = vsub.f32 %v5414, %v5465
      %v5517 = vsub.f32 %v5415, %v5466
      %v5518 = vsub.f32 %v5416, %v5467
      %v5519 = vsub.f32 %v5417, %v5468
      %v5520 = vsub.f32 %v5418, %v5469
      %v5521 = vsub.f32 %v5419, %v5470
      %v5522 = vsub.f32 %v5420, %v5471
      %v5523 = vsub.f32 %v5421, %v5472
      %v5524 = vsub.f32 %v5422, %v5473
      %v5525 = vsub.f32 %v5423, %v5474
      %v5526 = vld [vmem:[%s4] sm:$0xff]
      %v5527 = vld [vmem:[%s4 + $0x8] sm:$0xff]
      %v5528 = vld [vmem:[%s4 + $0x10] sm:$0xff]
      %v5529 = vld [vmem:[%s4 + $0x18] sm:$0xff]
      %v5530 = vld [vmem:[%s4 + $0x20] sm:$0xff]
      %v5531 = vld [vmem:[%s4 + $0x28] sm:$0xff]
      %v5532 = vld [vmem:[%s4 + $0x30] sm:$0xff]
      %v5533 = vld [vmem:[%s4 + $0x38] sm:$0xff]
      %v5534 = vld [vmem:[%s4 + $0x40] sm:$0xff]
      %v5535 = vld [vmem:[%s4 + $0x48] sm:$0xff]
      %v5536 = vld [vmem:[%s4 + $0x50] sm:$0xff]
      %v5537 = vld [vmem:[%s4 + $0x58] sm:$0xff]
      %v5538 = vld [vmem:[%s4 + $0x60] sm:$0xff]
      %v5539 = vld [vmem:[%s4 + $0x68] sm:$0xff]
      %v5540 = vld [vmem:[%s4 + $0x70] sm:$0xff]
      %v5541 = vld [vmem:[%s4 + $0x78] sm:$0xff]
      %v5542 = vld [vmem:[%s4 + $0x80] sm:$0xff]
      %v5543 = vld [vmem:[%s4 + $0x88] sm:$0xff]
      %v5544 = vld [vmem:[%s4 + $0x90] sm:$0xff]
      %v5545 = vld [vmem:[%s4 + $0x98] sm:$0xff]
      %v5546 = vld [vmem:[%s4 + $0xa0] sm:$0xff]
      %v5547 = vld [vmem:[%s4 + $0xa8] sm:$0xff]
      %v5548 = vld [vmem:[%s4 + $0xb0] sm:$0xff]
      %v5549 = vld [vmem:[%s4 + $0xb8] sm:$0xff]
      %v5550 = vld [vmem:[%s4 + $0xc0] sm:$0xff]
      %v5551 = vld [vmem:[%s4 + $0xc8] sm:$0xff]
      %v5552 = vld [vmem:[%s4 + $0xd0] sm:$0xff]
      %v5553 = vld [vmem:[%s4 + $0xd8] sm:$0xff]
      %v5554 = vld [vmem:[%s4 + $0xe0] sm:$0xff]
      %v5555 = vld [vmem:[%s4 + $0xe8] sm:$0xff]
      %v5556 = vld [vmem:[%s4 + $0xf0] sm:$0xff]
      %v5557 = vld [vmem:[%s4 + $0xf8] sm:$0xff]
      %v5558 = vld [vmem:[%s4 + $0x100] sm:$0xff]
      %v5559 = vld [vmem:[%s4 + $0x108] sm:$0xff]
      %v5560 = vld [vmem:[%s4 + $0x110] sm:$0xff]
      %v5561 = vld [vmem:[%s4 + $0x118] sm:$0xff]
      %v5562 = vld [vmem:[%s4 + $0x120] sm:$0xff]
      %v5563 = vld [vmem:[%s4 + $0x128] sm:$0xff]
      %v5564 = vld [vmem:[%s4 + $0x130] sm:$0xff]
      %v5565 = vld [vmem:[%s4 + $0x138] sm:$0xff]
      %v5566 = vld [vmem:[%s4 + $0x140] sm:$0xff]
      %v5567 = vld [vmem:[%s4 + $0x148] sm:$0xff]
      %v5568 = vld [vmem:[%s4 + $0x150] sm:$0xff]
      %v5569 = vld [vmem:[%s4 + $0x158] sm:$0xff]
      %v5570 = vld [vmem:[%s4 + $0x160] sm:$0xff]
      %v5571 = vld [vmem:[%s4 + $0x168] sm:$0xff]
      %v5572 = vld [vmem:[%s4 + $0x170] sm:$0xff]
      %v5573 = vld [vmem:[%s4 + $0x178] sm:$0xff]
      %v5574 = vld [vmem:[%s4 + $0x180] sm:$0xff]
      %v5575 = vld [vmem:[%s4 + $0x188] sm:$0xff]
      %v5576 = vld [vmem:[%s4 + $0x190] sm:$0xff]
      %5578 = vset.pattern.permute.xlu0 0
      %5579 = vperm.xlu0 %5578, %v5526
      %v5580 = vpop.permute.xlu0 %5579
      %5583 = vset.pattern.permute.xlu0 0
      %5584 = vperm.xlu0 %5583, %v5527
      %v5585 = vpop.permute.xlu0 %5584
      %5588 = vset.pattern.permute.xlu0 0
      %5589 = vperm.xlu0 %5588, %v5528
      %v5590 = vpop.permute.xlu0 %5589
      %5593 = vset.pattern.permute.xlu0 0
      %5594 = vperm.xlu0 %5593, %v5529
      %v5595 = vpop.permute.xlu0 %5594
      %5598 = vset.pattern.permute.xlu0 0
      %5599 = vperm.xlu0 %5598, %v5530
      %v5600 = vpop.permute.xlu0 %5599
      %5603 = vset.pattern.permute.xlu0 0
      %5604 = vperm.xlu0 %5603, %v5531
      %v5605 = vpop.permute.xlu0 %5604
      %5608 = vset.pattern.permute.xlu0 0
      %5609 = vperm.xlu0 %5608, %v5532
      %v5610 = vpop.permute.xlu0 %5609
      %5613 = vset.pattern.permute.xlu0 0
      %5614 = vperm.xlu0 %5613, %v5533
      %v5615 = vpop.permute.xlu0 %5614
      %5618 = vset.pattern.permute.xlu0 0
      %5619 = vperm.xlu0 %5618, %v5534
      %v5620 = vpop.permute.xlu0 %5619
      %5623 = vset.pattern.permute.xlu0 0
      %5624 = vperm.xlu0 %5623, %v5535
      %v5625 = vpop.permute.xlu0 %5624
      %5628 = vset.pattern.permute.xlu0 0
      %5629 = vperm.xlu0 %5628, %v5536
      %v5630 = vpop.permute.xlu0 %5629
      %5633 = vset.pattern.permute.xlu0 0
      %5634 = vperm.xlu0 %5633, %v5537
      %v5635 = vpop.permute.xlu0 %5634
      %5638 = vset.pattern.permute.xlu0 0
      %5639 = vperm.xlu0 %5638, %v5538
      %v5640 = vpop.permute.xlu0 %5639
      %5643 = vset.pattern.permute.xlu0 0
      %5644 = vperm.xlu0 %5643, %v5539
      %v5645 = vpop.permute.xlu0 %5644
      %5648 = vset.pattern.permute.xlu0 0
      %5649 = vperm.xlu0 %5648, %v5540
      %v5650 = vpop.permute.xlu0 %5649
      %5653 = vset.pattern.permute.xlu0 0
      %5654 = vperm.xlu0 %5653, %v5541
      %v5655 = vpop.permute.xlu0 %5654
      %5658 = vset.pattern.permute.xlu0 0
      %5659 = vperm.xlu0 %5658, %v5542
      %v5660 = vpop.permute.xlu0 %5659
      %5663 = vset.pattern.permute.xlu0 0
      %5664 = vperm.xlu0 %5663, %v5543
      %v5665 = vpop.permute.xlu0 %5664
      %5668 = vset.pattern.permute.xlu0 0
      %5669 = vperm.xlu0 %5668, %v5544
      %v5670 = vpop.permute.xlu0 %5669
      %5673 = vset.pattern.permute.xlu0 0
      %5674 = vperm.xlu0 %5673, %v5545
      %v5675 = vpop.permute.xlu0 %5674
      %5678 = vset.pattern.permute.xlu0 0
      %5679 = vperm.xlu0 %5678, %v5546
      %v5680 = vpop.permute.xlu0 %5679
      %5683 = vset.pattern.permute.xlu0 0
      %5684 = vperm.xlu0 %5683, %v5547
      %v5685 = vpop.permute.xlu0 %5684
      %5688 = vset.pattern.permute.xlu0 0
      %5689 = vperm.xlu0 %5688, %v5548
      %v5690 = vpop.permute.xlu0 %5689
      %5693 = vset.pattern.permute.xlu0 0
      %5694 = vperm.xlu0 %5693, %v5549
      %v5695 = vpop.permute.xlu0 %5694
      %5698 = vset.pattern.permute.xlu0 0
      %5699 = vperm.xlu0 %5698, %v5550
      %v5700 = vpop.permute.xlu0 %5699
      %5703 = vset.pattern.permute.xlu0 0
      %5704 = vperm.xlu0 %5703, %v5551
      %v5705 = vpop.permute.xlu0 %5704
      %5708 = vset.pattern.permute.xlu0 0
      %5709 = vperm.xlu0 %5708, %v5552
      %v5710 = vpop.permute.xlu0 %5709
      %5713 = vset.pattern.permute.xlu0 0
      %5714 = vperm.xlu0 %5713, %v5553
      %v5715 = vpop.permute.xlu0 %5714
      %5718 = vset.pattern.permute.xlu0 0
      %5719 = vperm.xlu0 %5718, %v5554
      %v5720 = vpop.permute.xlu0 %5719
      %5723 = vset.pattern.permute.xlu0 0
      %5724 = vperm.xlu0 %5723, %v5555
      %v5725 = vpop.permute.xlu0 %5724
      %5728 = vset.pattern.permute.xlu0 0
      %5729 = vperm.xlu0 %5728, %v5556
      %v5730 = vpop.permute.xlu0 %5729
      %5733 = vset.pattern.permute.xlu0 0
      %5734 = vperm.xlu0 %5733, %v5557
      %v5735 = vpop.permute.xlu0 %5734
      %5738 = vset.pattern.permute.xlu0 0
      %5739 = vperm.xlu0 %5738, %v5558
      %v5740 = vpop.permute.xlu0 %5739
      %5743 = vset.pattern.permute.xlu0 0
      %5744 = vperm.xlu0 %5743, %v5559
      %v5745 = vpop.permute.xlu0 %5744
      %5748 = vset.pattern.permute.xlu0 0
      %5749 = vperm.xlu0 %5748, %v5560
      %v5750 = vpop.permute.xlu0 %5749
      %5753 = vset.pattern.permute.xlu0 0
      %5754 = vperm.xlu0 %5753, %v5561
      %v5755 = vpop.permute.xlu0 %5754
      %5758 = vset.pattern.permute.xlu0 0
      %5759 = vperm.xlu0 %5758, %v5562
      %v5760 = vpop.permute.xlu0 %5759
      %5763 = vset.pattern.permute.xlu0 0
      %5764 = vperm.xlu0 %5763, %v5563
      %v5765 = vpop.permute.xlu0 %5764
      %5768 = vset.pattern.permute.xlu0 0
      %5769 = vperm.xlu0 %5768, %v5564
      %v5770 = vpop.permute.xlu0 %5769
      %5773 = vset.pattern.permute.xlu0 0
      %5774 = vperm.xlu0 %5773, %v5565
      %v5775 = vpop.permute.xlu0 %5774
      %5778 = vset.pattern.permute.xlu0 0
      %5779 = vperm.xlu0 %5778, %v5566
      %v5780 = vpop.permute.xlu0 %5779
      %5783 = vset.pattern.permute.xlu0 0
      %5784 = vperm.xlu0 %5783, %v5567
      %v5785 = vpop.permute.xlu0 %5784
      %5788 = vset.pattern.permute.xlu0 0
      %5789 = vperm.xlu0 %5788, %v5568
      %v5790 = vpop.permute.xlu0 %5789
      %5793 = vset.pattern.permute.xlu0 0
      %5794 = vperm.xlu0 %5793, %v5569
      %v5795 = vpop.permute.xlu0 %5794
      %5798 = vset.pattern.permute.xlu0 0
      %5799 = vperm.xlu0 %5798, %v5570
      %v5800 = vpop.permute.xlu0 %5799
      %5803 = vset.pattern.permute.xlu0 0
      %5804 = vperm.xlu0 %5803, %v5571
      %v5805 = vpop.permute.xlu0 %5804
      %5808 = vset.pattern.permute.xlu0 0
      %5809 = vperm.xlu0 %5808, %v5572
      %v5810 = vpop.permute.xlu0 %5809
      %5813 = vset.pattern.permute.xlu0 0
      %5814 = vperm.xlu0 %5813, %v5573
      %v5815 = vpop.permute.xlu0 %5814
      %5818 = vset.pattern.permute.xlu0 0
      %5819 = vperm.xlu0 %5818, %v5574
      %v5820 = vpop.permute.xlu0 %5819
      %5823 = vset.pattern.permute.xlu0 0
      %5824 = vperm.xlu0 %5823, %v5575
      %v5825 = vpop.permute.xlu0 %5824
      %5828 = vset.pattern.permute.xlu0 0
      %5829 = vperm.xlu0 %5828, %v5576
      %v5830 = vpop.permute.xlu0 %5829
      %v5832 = vmul.f32 %v5475, %v5580
      %v5833 = vmul.f32 %v5476, %v5585
      %v5834 = vmul.f32 %v5477, %v5590
      %v5835 = vmul.f32 %v5478, %v5595
      %v5836 = vmul.f32 %v5479, %v5600
      %v5837 = vmul.f32 %v5480, %v5605
      %v5838 = vmul.f32 %v5481, %v5610
      %v5839 = vmul.f32 %v5482, %v5615
      %v5840 = vmul.f32 %v5483, %v5620
      %v5841 = vmul.f32 %v5484, %v5625
      %v5842 = vmul.f32 %v5485, %v5630
      %v5843 = vmul.f32 %v5486, %v5635
      %v5844 = vmul.f32 %v5487, %v5640
      %v5845 = vmul.f32 %v5488, %v5645
      %v5846 = vmul.f32 %v5489, %v5650
      %v5847 = vmul.f32 %v5490, %v5655
      %v5848 = vmul.f32 %v5491, %v5660
      %v5849 = vmul.f32 %v5492, %v5665
      %v5850 = vmul.f32 %v5493, %v5670
      %v5851 = vmul.f32 %v5494, %v5675
      %v5852 = vmul.f32 %v5495, %v5680
      %v5853 = vmul.f32 %v5496, %v5685
      %v5854 = vmul.f32 %v5497, %v5690
      %v5855 = vmul.f32 %v5498, %v5695
      %v5856 = vmul.f32 %v5499, %v5700
      %v5857 = vmul.f32 %v5500, %v5705
      %v5858 = vmul.f32 %v5501, %v5710
      %v5859 = vmul.f32 %v5502, %v5715
      %v5860 = vmul.f32 %v5503, %v5720
      %v5861 = vmul.f32 %v5504, %v5725
      %v5862 = vmul.f32 %v5505, %v5730
      %v5863 = vmul.f32 %v5506, %v5735
      %v5864 = vmul.f32 %v5507, %v5740
      %v5865 = vmul.f32 %v5508, %v5745
      %v5866 = vmul.f32 %v5509, %v5750
      %v5867 = vmul.f32 %v5510, %v5755
      %v5868 = vmul.f32 %v5511, %v5760
      %v5869 = vmul.f32 %v5512, %v5765
      %v5870 = vmul.f32 %v5513, %v5770
      %v5871 = vmul.f32 %v5514, %v5775
      %v5872 = vmul.f32 %v5515, %v5780
      %v5873 = vmul.f32 %v5516, %v5785
      %v5874 = vmul.f32 %v5517, %v5790
      %v5875 = vmul.f32 %v5518, %v5795
      %v5876 = vmul.f32 %v5519, %v5800
      %v5877 = vmul.f32 %v5520, %v5805
      %v5878 = vmul.f32 %v5521, %v5810
      %v5879 = vmul.f32 %v5522, %v5815
      %v5880 = vmul.f32 %v5523, %v5820
      %v5881 = vmul.f32 %v5524, %v5825
      %v5882 = vmul.f32 %v5525, %v5830
      %v5883 = vmul.f32 %v5832, %v5832
      %v5884 = vmul.f32 %v5833, %v5833
      %v5885 = vmul.f32 %v5834, %v5834
      %v5886 = vmul.f32 %v5835, %v5835
      %v5887 = vmul.f32 %v5836, %v5836
      %v5888 = vmul.f32 %v5837, %v5837
      %v5889 = vmul.f32 %v5838, %v5838
      %v5890 = vmul.f32 %v5839, %v5839
      %v5891 = vmul.f32 %v5840, %v5840
      %v5892 = vmul.f32 %v5841, %v5841
      %v5893 = vmul.f32 %v5842, %v5842
      %v5894 = vmul.f32 %v5843, %v5843
      %v5895 = vmul.f32 %v5844, %v5844
      %v5896 = vmul.f32 %v5845, %v5845
      %v5897 = vmul.f32 %v5846, %v5846
      %v5898 = vmul.f32 %v5847, %v5847
      %v5899 = vmul.f32 %v5848, %v5848
      %v5900 = vmul.f32 %v5849, %v5849
      %v5901 = vmul.f32 %v5850, %v5850
      %v5902 = vmul.f32 %v5851, %v5851
      %v5903 = vmul.f32 %v5852, %v5852
      %v5904 = vmul.f32 %v5853, %v5853
      %v5905 = vmul.f32 %v5854, %v5854
      %v5906 = vmul.f32 %v5855, %v5855
      %v5907 = vmul.f32 %v5856, %v5856
      %v5908 = vmul.f32 %v5857, %v5857
      %v5909 = vmul.f32 %v5858, %v5858
      %v5910 = vmul.f32 %v5859, %v5859
      %v5911 = vmul.f32 %v5860, %v5860
      %v5912 = vmul.f32 %v5861, %v5861
      %v5913 = vmul.f32 %v5862, %v5862
      %v5914 = vmul.f32 %v5863, %v5863
      %v5915 = vmul.f32 %v5864, %v5864
      %v5916 = vmul.f32 %v5865, %v5865
      %v5917 = vmul.f32 %v5866, %v5866
      %v5918 = vmul.f32 %v5867, %v5867
      %v5919 = vmul.f32 %v5868, %v5868
      %v5920 = vmul.f32 %v5869, %v5869
      %v5921 = vmul.f32 %v5870, %v5870
      %v5922 = vmul.f32 %v5871, %v5871
      %v5923 = vmul.f32 %v5872, %v5872
      %v5924 = vmul.f32 %v5873, %v5873
      %v5925 = vmul.f32 %v5874, %v5874
      %v5926 = vmul.f32 %v5875, %v5875
      %v5927 = vmul.f32 %v5876, %v5876
      %v5928 = vmul.f32 %v5877, %v5877
      %v5929 = vmul.f32 %v5878, %v5878
      %v5930 = vmul.f32 %v5879, %v5879
      %v5931 = vmul.f32 %v5880, %v5880
      %v5932 = vmul.f32 %v5881, %v5881
      %v5933 = vmul.f32 %v5882, %v5882
      %v5934 = vadd.f32 %v5883, %v5884
      %v5935 = vadd.f32 %v5934, %v5885
      %v5936 = vadd.f32 %v5935, %v5886
      %v5937 = vadd.f32 %v5936, %v5887
      %v5938 = vadd.f32 %v5937, %v5888
      %v5939 = vadd.f32 %v5938, %v5889
      %v5940 = vadd.f32 %v5939, %v5890
      %v5941 = vadd.f32 %v5940, %v5891
      %v5942 = vadd.f32 %v5941, %v5892
      %v5943 = vadd.f32 %v5942, %v5893
      %v5944 = vadd.f32 %v5943, %v5894
      %v5945 = vadd.f32 %v5944, %v5895
      %v5946 = vadd.f32 %v5945, %v5896
      %v5947 = vadd.f32 %v5946, %v5897
      %v5948 = vadd.f32 %v5947, %v5898
      %v5949 = vadd.f32 %v5948, %v5899
      %v5950 = vadd.f32 %v5949, %v5900
      %v5951 = vadd.f32 %v5950, %v5901
      %v5952 = vadd.f32 %v5951, %v5902
      %v5953 = vadd.f32 %v5952, %v5903
      %v5954 = vadd.f32 %v5953, %v5904
      %v5955 = vadd.f32 %v5954, %v5905
      %v5956 = vadd.f32 %v5955, %v5906
      %v5957 = vadd.f32 %v5956, %v5907
      %v5958 = vadd.f32 %v5957, %v5908
      %v5959 = vadd.f32 %v5958, %v5909
      %v5960 = vadd.f32 %v5959, %v5910
      %v5961 = vadd.f32 %v5960, %v5911
      %v5962 = vadd.f32 %v5961, %v5912
      %v5963 = vadd.f32 %v5962, %v5913
      %v5964 = vadd.f32 %v5963, %v5914
      %v5965 = vadd.f32 %v5964, %v5915
      %v5966 = vadd.f32 %v5965, %v5916
      %v5967 = vadd.f32 %v5966, %v5917
      %v5968 = vadd.f32 %v5967, %v5918
      %v5969 = vadd.f32 %v5968, %v5919
      %v5970 = vadd.f32 %v5969, %v5920
      %v5971 = vadd.f32 %v5970, %v5921
      %v5972 = vadd.f32 %v5971, %v5922
      %v5973 = vadd.f32 %v5972, %v5923
      %v5974 = vadd.f32 %v5973, %v5924
      %v5975 = vadd.f32 %v5974, %v5925
      %v5976 = vadd.f32 %v5975, %v5926
      %v5977 = vadd.f32 %v5976, %v5927
      %v5978 = vadd.f32 %v5977, %v5928
      %v5979 = vadd.f32 %v5978, %v5929
      %v5980 = vadd.f32 %v5979, %v5930
      %v5981 = vadd.f32 %v5980, %v5931
      %v5982 = vadd.f32 %v5981, %v5932
      %v5983 = vadd.f32 %v5982, %v5933
      %v5984 = vrot.slane %v5983, 4
      %v5985 = vadd.f32 %v5983, %v5984
      %v5986 = vrot.slane %v5985, 2
      %v5987 = vadd.f32 %v5985, %v5986
      %v5988 = vrot.slane %v5987, 1
      %v5989 = vadd.f32 %v5987, %v5988
      %v5990 = vmul.f32 %v5989, 0.0034602077
      %v5991 = vld [vmem:[%s282] sm:$0x1]
      %v5992 = vmul.f32 %v5990, %v5991
      %5993 = vst [vmem:[%s285] sm:$0x1] %v5992
      %p5994 = scmp.lt.s32.totalorder %s17, 1
      %s5995 = scalar_select %p5994, %s17, 1
      %s5996 = scalar_lea.vmem %s6, %s5995
      // Predicated region
      $region45: #{pose_estimator_forward.3} parent=43 // pred_check
        %p5997 = pneg %p176
      $region46: #{pose_estimator_forward.3} parent=43 // pred_check_branch
        %5999 = sbr.rel (%p5997) target = $region48
      $region47: #{pose_estimator_forward.3} parent=43 // pred_region
        _
      $region48: #{pose_estimator_forward.3} parent=43 // pred_fallthru
        _
    $region44: #{pose_estimator_forward.3} parent=5 // pred_fallthru
      _
    %p6000 = scmp.le.s32.totalorder 2, %s12
    // Predicated region
    $region49: #{pose_estimator_forward.3} parent=5 // pred_check
      %p6001 = pneg %p6000
    $region50: #{pose_estimator_forward.3} parent=5 // pred_check_branch
      %6003 = sbr.rel (%p6001) target = $region52
    $region51: #{pose_estimator_forward.3} parent=5 // pred_region
      %s6004 = ssub.s32 %s12, 2
      // Predicated region
      $region53: #{pose_estimator_forward.3} parent=51 // pred_check
        %p6005 = pneg %p182
      $region54: #{pose_estimator_forward.3} parent=51 // pred_check_branch
        %6007 = sbr.rel (%p6005) target = $region56
      $region55: #{pose_estimator_forward.3} parent=51 // pred_region
        %p6008 = scmp.lt.s32.totalorder %s18, 1
        %s6009 = scalar_select %p6008, %s18, 1
        %s6010 = scalar_lea.vmem %s6, %s6009
      $region56: #{pose_estimator_forward.3} parent=51 // pred_fallthru
        _
    $region52: #{pose_estimator_forward.3} parent=5 // pred_fallthru
      _
  $region6: #{pose_estimator_forward.3} parent=0 // loop_footer
    %s16 = sadd.s32 1, %s12
  $region7: #{pose_estimator_forward.3} parent=0 // loop_footer_branch
    %11 = sbr.rel target = $region3
  $region8: #{pose_estimator_forward.3} parent=0 // loop_exit
    _

</llo_original>
